<compile_context>
chip_gen: v6e
topology: v6e:2x2x1
jax: 0.10.0
libtpu: 0.0.40
codegen_flags: <defaults>
</compile_context>

<pallas_src>
import functools

import jax
import jax.numpy as jnp
from jax.experimental import pallas as pl
from jax.experimental.pallas import tpu as pltpu


# ---------------------------------------------------------------------------
# Configuration (small shapes, consistent with the reference forward pass)
# ---------------------------------------------------------------------------
class CFG:
    traj_features = 6        # per-vector features of the trajectory polyline
    map_features = 8         # per-vector features of map polylines
    total_step = 16          # reference uses 49
    last_observe = 8         # observed steps
    T = total_step - last_observe   # predicted steps (=8)
    N = 8                    # number of candidate targets
    M = 4                    # number of selected targets
    K = 2                    # number of output trajectories
    P = 4                    # map polylines per sample
    Lmap = 18                # vectors per map polyline (reference value)
    Lmap_pad = 24            # padded to a sublane multiple; pad rows masked in-kernel
    HIDDEN = 32              # subgraph agg width (polyline feature = [agg|agg] = 64, folded)
    D = 64                   # global/context feature dim
    alpha = 0.01
    min_distance = 2.0


# ---------------------------------------------------------------------------
# Weight slab layout: every parameter lives in ONE (rows, 128) f32 slab so the
# kernel has a single weight DMA. Row starts are 8-aligned so all in-kernel
# static ref slices are sublane-aligned.
# ---------------------------------------------------------------------------
def _param_specs():
    H, D, T = CFG.HIDDEN, CFG.D, CFG.T
    specs = []
    for tag, cin in (("traj", CFG.traj_features), ("map", CFG.map_features)):
        specs += [(f"{tag}_w1", cin, H),
                  (f"{tag}_wz2", H, H), (f"{tag}_wa2", H, H),
                  (f"{tag}_wz3", H, H), (f"{tag}_wa3", H, H),
                  (f"{tag}_vec", 9, H)]           # rows: b1 g1 be1 b2 g2 be2 b3 g3 be3
    # Global attention: Wq applied to the ego row only; Wk/Wv kept separate.
    # The 64-row originals are folded (top+bottom 32-row halves summed) so the
    # kernel works on the 32-wide agg directly (== [agg|agg] @ W(64,*)).
    specs += [("attn_wq", H, D), ("attn_wk", H, D), ("attn_wv", H, D)]
    for tag, fin, dout in (("tp", 2, 3), ("me", 2, 2 * T), ("sc", 2 * T, 1)):
        specs += [(f"{tag}_wf", fin, D), (f"{tag}_wc", D, D),
                  (f"{tag}_w2", D, dout), (f"{tag}_vec", 2, D)]  # rows: b1, b2 (lanes :dout)
    return specs


_PARAM_SPECS = _param_specs()


def _round8(x):
    return (x + 7) // 8 * 8


def _build_layout():
    layout, r = {}, 0
    for name, rows, cols in _PARAM_SPECS:
        r = _round8(r)
        layout[name] = (r, rows, cols)
        r += rows
    return layout, _round8(r)


_LAYOUT, _SLAB_ROWS = _build_layout()


def init_params(key):
    """Deterministic random init, packed directly into the (R,128) weight slab."""
    # TODO(synk): exact Subgraph / GraphAttentionNet / head architectures were not
    # provided in the reference source; standard VectorNet/TNT structure is used.
    slab = jnp.zeros((_SLAB_ROWS, 128), jnp.float32)
    keys = jax.random.split(key, len(_PARAM_SPECS))
    for (name, rows, cols), kk in zip(_PARAM_SPECS, keys):
        r0, _, _ = _LAYOUT[name]
        if name.endswith("_vec"):
            v = jnp.zeros((rows, cols), jnp.float32)
            if name.startswith(("traj", "map")):
                v = v.at[1::3, :].set(1.0)        # LayerNorm gammas
        else:
            v = jax.random.normal(kk, (rows, cols), jnp.float32) / jnp.sqrt(
                jnp.float32(max(rows, 1)))
        slab = slab.at[r0:r0 + rows, :cols].set(v)
    return slab


# ---------------------------------------------------------------------------
# Single fused Pallas kernel: TNT forward for one batch block
# ---------------------------------------------------------------------------
def _tnt_kernel(traj_ref, map_ref, cand_ref, w_ref, out_ref):
    H, D, T = CFG.HIDDEN, CFG.D, CFG.T
    N, M, K, P = CFG.N, CFG.M, CFG.K, CFG.P
    P1 = P + 1
    tb = traj_ref.shape[0]

    def W(name):
        r0, nr, nc = _LAYOUT[name]
        return w_ref[r0:r0 + nr, :nc]              # static, sublane-aligned slice

    def ln_relu(z, g, be):
        # single-pass LayerNorm: independent sum / sum-of-squares reductions
        inv_n = 1.0 / z.shape[-1]
        mu = jnp.sum(z, axis=-1, keepdims=True) * inv_n
        ex2 = jnp.sum(z * z, axis=-1, keepdims=True) * inv_n
        var = ex2 - mu * mu
        return jnp.maximum((z - mu) * jax.lax.rsqrt(var + 1e-5) * g + be, 0.0)

    def subgraph(x, tag, valid_len):
        # VectorNet Subgraph with split weights: z @ Wz + (agg @ Wa) broadcast over L.
        npoly, L, C = x.shape
        vec = W(f"{tag}_vec")                      # (9, H)
        b1, g1, be1 = vec[0:1], vec[1:2], vec[2:3]
        b2, g2, be2 = vec[3:4], vec[4:5], vec[5:6]
        b3, g3, be3 = vec[6:7], vec[7:8], vec[8:9]

        if valid_len < L:                          # Lmap padded 18 -> 24: mask pad vectors
            vid = jax.lax.broadcasted_iota(jnp.int32, (1, L, 1), 1)
            valid = vid < valid_len
        else:
            valid = None

        def pool(z):
            if valid is None:
                return jnp.max(z, axis=1)
            return jnp.max(jnp.where(valid, z, jnp.float32(-1e30)), axis=1)

        z = jnp.dot(x.reshape(npoly * L, C), W(f"{tag}_w1"),
                    preferred_element_type=jnp.float32) + b1
        z = ln_relu(z, g1, be1).reshape(npoly, L, H)
        agg = pool(z)

        def layer(z, agg, wz, wa, b, g, be):
            zz = jnp.dot(z.reshape(npoly * L, H), wz,
                         preferred_element_type=jnp.float32).reshape(npoly, L, H)
            za = jnp.dot(agg, wa, preferred_element_type=jnp.float32)
            z = ln_relu(zz + za[:, None, :] + b, g, be)
            return z, pool(z)

        z, agg = layer(z, agg, W(f"{tag}_wz2"), W(f"{tag}_wa2"), b2, g2, be2)
        z, agg = layer(z, agg, W(f"{tag}_wz3"), W(f"{tag}_wa3"), b3, g3, be3)
        # polyline feature is [agg | agg]; the duplication is folded into every
        # downstream weight at init, so the 32-wide agg is returned directly.
        return agg                                  # (npoly, H)

    traj_x = traj_ref[:, :CFG.last_observe, :]      # observed window sliced in-kernel
    map_x = map_ref[...].reshape(tb * P, CFG.Lmap_pad, CFG.map_features)
    cand = cand_ref[...]                            # (tb, N, 2)

    traj_agg = subgraph(traj_x, "traj", CFG.last_observe)          # (tb, H)
    map_agg = subgraph(map_x, "map", CFG.Lmap).reshape(tb, P, H)   # (tb, P, H)

    # --- global graph attention (F.normalize rows, ego-row query only) ---
    # F.normalize of [agg|agg] over 64 lanes == agg / (sqrt(2) * ||agg||).
    feats = jnp.concatenate([traj_agg[:, None, :], map_agg], axis=1)   # (tb, P1, H)
    nrm2 = jnp.sum(feats * feats, axis=-1, keepdims=True)
    xn = feats * jax.lax.rsqrt(jnp.maximum(2.0 * nrm2, 1e-24))
    q = jnp.dot(xn[:, 0, :], W("attn_wq"), preferred_element_type=jnp.float32)  # (tb, D)
    xf = xn.reshape(tb * P1, H)
    k = jnp.dot(xf, W("attn_wk"), preferred_element_type=jnp.float32).reshape(tb, P1, D)
    v = jnp.dot(xf, W("attn_wv"), preferred_element_type=jnp.float32).reshape(tb, P1, D)
    s = jnp.sum(q[:, None, :] * k, axis=-1) * (1.0 / jnp.sqrt(jnp.float32(D)))
    s = s - jnp.max(s, axis=-1, keepdims=True)
    p = jnp.exp(s)
    attn = p * pl.reciprocal(jnp.sum(p, axis=-1, keepdims=True), approx=True)
    ctx = jnp.sum(attn[:, :, None] * v, axis=1)                    # (tb, D) global context

    def head(feat, tag, feat_on_mxu):
        # 2-layer MLP on concat([feat, ctx]) with split first-layer weights; the
        # context is broadcast in-kernel (replaces torch .repeat / gathers).
        rows, fin = feat.shape[1], feat.shape[2]
        wf, wc, w2, vec = W(f"{tag}_wf"), W(f"{tag}_wc"), W(f"{tag}_w2"), W(f"{tag}_vec")
        dout = w2.shape[1]
        b1, b2 = vec[0:1, :], vec[1:2, :dout]
        ctx_proj = jnp.dot(ctx, wc, preferred_element_type=jnp.float32)          # (tb, D)
        if feat_on_mxu:
            hf = jnp.dot(feat.reshape(tb * rows, fin), wf,
                         preferred_element_type=jnp.float32).reshape(tb, rows, D)
        else:
            # K=2 contraction stays on the VPU (skip the MXU push/pop latency)
            hf = feat[..., 0:1] * wf[0:1, :] + feat[..., 1:2] * wf[1:2, :]
        h = jnp.maximum(hf + ctx_proj[:, None, :] + b1, 0.0)
        out = jnp.dot(h.reshape(tb * rows, D), w2,
                      preferred_element_type=jnp.float32) + b2
        return out.reshape(tb, rows, dout)

    def topk_gather(values, feats_, kk):
        # in-kernel descending top-kk of `values` (tb, n); gathers rows of feats_ (tb, n, F)
        n = values.shape[-1]
        iota = jax.lax.broadcasted_iota(jnp.int32, values.shape, 1)
        work = values
        picks = []
        for _ in range(kk):
            mx = jnp.max(work, axis=-1, keepdims=True)
            first = jnp.min(jnp.where(work >= mx, iota, n), axis=-1, keepdims=True)
            onehot = (iota == first).astype(jnp.float32)
            picks.append(jnp.sum(onehot[:, :, None] * feats_, axis=1)[:, None, :])
            work = jnp.where(onehot > 0, jnp.float32(-1e30), work)
        return jnp.concatenate(picks, axis=1)                       # (tb, kk, F)

    # --- target predictor: forward_M (top-M candidates + predicted offsets) ---
    tp_out = head(cand, "tp", feat_on_mxu=False)                    # (tb, N, 3)
    logits = tp_out[..., 0]
    target_pts = cand + tp_out[..., 1:3]                            # (tb, N, 2)
    m_target = topk_gather(logits, target_pts, M)                   # (tb, M, 2)
    # M_x == context broadcast per sample (all repeated rows identical) -> no gather needed.

    # --- motion estimator: (target, context) -> 2*T coords ---
    m_traj = head(m_target, "me", feat_on_mxu=False)                # (tb, M, 2T)

    # --- trajectory scorer ---
    # TODO(synk): Trajectory_Scorer source not provided; alpha temperature not applied.
    score = head(m_traj, "sc", feat_on_mxu=True)[..., 0]            # (tb, M)
    sm = score - jnp.max(score, axis=-1, keepdims=True)
    ps = jnp.exp(sm)
    m_score = ps * pl.reciprocal(jnp.sum(ps, axis=-1, keepdims=True), approx=True)

    # --- select_top_K_trajectories ---
    # TODO(synk): reference applies greedy NMS with `min_distance` between trajectory
    # endpoints (data-dependent python loop); plain top-K by score is used here.
    k_traj = topk_gather(m_score, m_traj, K)                        # (tb, K, 2T)

    # single lane-dense output slab: [k_traj(32) | m_score(4) | zero pad -> 128 lanes]
    pad = jnp.zeros((tb, 128 - K * 2 * T - M), jnp.float32)
    out_ref[...] = jnp.concatenate(
        [k_traj.reshape(tb, K * 2 * T), m_score, pad], axis=-1).reshape(1, tb, 128)


# ---------------------------------------------------------------------------
# Full forward (inference / forward_val semantics) — one fused pallas_call
# ---------------------------------------------------------------------------
def _n_batch_blocks(B):
    # v7x has 2 TensorCores per chip: shard the batch across them via a parallel
    # grid axis. On 1-TC chips (v5e/v6e) keep a single grid step.
    try:
        kind = jax.devices()[0].device_kind.lower()
    except Exception:
        kind = ""
    return 2 if (B % 2 == 0 and ("v7" in kind or "7x" in kind)) else 1


@functools.partial(jax.jit, static_argnums=(4,))
def _tnt_forward_impl(trajectory_batch, vectormap_batch, candidate_targets, wslab, nb):
    """
    trajectory_batch : (B, total_step, 6)
    vectormap_batch  : (B, P, Lmap, map_features)
    candidate_targets: (B, N, 2)
    wslab            : (_SLAB_ROWS, 128) packed weights
    Returns: K_trajectories (B, K, T, 2), M_score (B, M), gt label (B, T, 2)
    """
    B = trajectory_batch.shape[0]
    tb = B // nb
    label = trajectory_batch[:, CFG.last_observe:, 2:4]             # (B, T, 2)
    # pad map polylines 18 -> 24 vectors so in-kernel reshapes are layout no-ops
    vm = jnp.pad(vectormap_batch,
                 ((0, 0), (0, 0), (0, CFG.Lmap_pad - CFG.Lmap), (0, 0)))

    out = pl.pallas_call(
        _tnt_kernel,
        out_shape=jax.ShapeDtypeStruct((nb, tb, 128), jnp.float32),
        grid=(nb,),
        in_specs=[
            pl.BlockSpec((tb, CFG.total_step, CFG.traj_features), lambda i: (i, 0, 0)),
            pl.BlockSpec((tb, CFG.P, CFG.Lmap_pad, CFG.map_features),
                         lambda i: (i, 0, 0, 0)),
            pl.BlockSpec((tb, CFG.N, 2), lambda i: (i, 0, 0)),
            pl.BlockSpec((_SLAB_ROWS, 128), lambda i: (0, 0)),      # weights stay resident
        ],
        out_specs=pl.BlockSpec((1, tb, 128), lambda i: (i, 0, 0)),
        compiler_params=pltpu.CompilerParams(dimension_semantics=("parallel",)),
    )(trajectory_batch, vm, candidate_targets, wslab)

    out = out.reshape(B, 128)
    k_traj = out[:, :CFG.K * 2 * CFG.T].reshape(B, CFG.K, CFG.T, 2)
    m_score = out[:, CFG.K * 2 * CFG.T:CFG.K * 2 * CFG.T + CFG.M]
    return k_traj, m_score, label


def tnt_forward(trajectory_batch, vectormap_batch, candidate_targets, wslab):
    nb = _n_batch_blocks(trajectory_batch.shape[0])
    return _tnt_forward_impl(trajectory_batch, vectormap_batch, candidate_targets,
                             wslab, nb)


# ---------------------------------------------------------------------------
if __name__ == "__main__":
    key = jax.random.PRNGKey(0)
    kp, kt, km, kc = jax.random.split(key, 4)

    wslab = init_params(kp)

    B = 2
    trajectory_batch = jax.random.normal(
        kt, (B, CFG.total_step, CFG.traj_features), jnp.float32)
    vectormap_batch = jax.random.normal(
        km, (B, CFG.P, CFG.Lmap, CFG.map_features), jnp.float32)
    candidate_targets = jax.random.normal(kc, (B, CFG.N, 2), jnp.float32) * 5.0

    k_traj, m_score, label = tnt_forward(trajectory_batch, vectormap_batch,
                                         candidate_targets, wslab)
    jax.block_until_ready((k_traj, m_score, label))

    assert k_traj.shape == (B, CFG.K, CFG.T, 2)
    assert m_score.shape == (B, CFG.M)
    assert label.shape == (B, CFG.T, 2)
    print("KERNEL_OK")
</pallas_src>

<mosaic_0001>
module attributes {stable_mosaic.version = 11 : i64} {
  func.func @_tnt_kernel(%arg0: i32, %arg1: memref<2x16x6xf32, #tpu.memory_space<vmem>>, %arg2: memref<2x4x24x8xf32, #tpu.memory_space<vmem>>, %arg3: memref<2x8x2xf32, #tpu.memory_space<vmem>>, %arg4: memref<840x128xf32, #tpu.memory_space<vmem>>, %arg5: memref<1x2x128xf32, #tpu.memory_space<vmem>>) attributes {dimension_semantics = [#tpu.dimension_semantics<parallel>], iteration_bounds = array<i64: 1>, scalar_prefetch = 0 : i64, scratch_operands = 0 : i64, tpu.core_type = #tpu.core_type<tc>, window_params = [{transform_indices = @transform_0, window_bounds = array<i64: 2, 16, 6>}, {transform_indices = @transform_1, window_bounds = array<i64: 2, 4, 24, 8>}, {transform_indices = @transform_2, window_bounds = array<i64: 2, 8, 2>}, {pipeline_mode = #tpu.pipeline_mode<synchronous>, transform_indices = @transform_3, window_bounds = array<i64: 840, 128>}, {transform_indices = @transform_4, window_bounds = array<i64: 1, 2, 128>}]} {
    %c0 = arith.constant 0 : index
    %c0_0 = arith.constant 0 : index
    %c0_1 = arith.constant 0 : index
    %0 = vector.load %arg1[%c0, %c0_0, %c0_1] : memref<2x16x6xf32, #tpu.memory_space<vmem>>, vector<2x8x6xf32>
    %c0_2 = arith.constant 0 : index
    %c0_3 = arith.constant 0 : index
    %c0_4 = arith.constant 0 : index
    %c0_5 = arith.constant 0 : index
    %1 = vector.load %arg2[%c0_2, %c0_3, %c0_4, %c0_5] : memref<2x4x24x8xf32, #tpu.memory_space<vmem>>, vector<2x4x24x8xf32>
    %2 = vector.shape_cast %1 : vector<2x4x24x8xf32> to vector<8x24x8xf32>
    %c0_6 = arith.constant 0 : index
    %c0_7 = arith.constant 0 : index
    %c0_8 = arith.constant 0 : index
    %3 = vector.load %arg3[%c0_6, %c0_7, %c0_8] : memref<2x8x2xf32, #tpu.memory_space<vmem>>, vector<2x8x2xf32>
    %c136 = arith.constant 136 : index
    %c0_9 = arith.constant 0 : index
    %4 = vector.load %arg4[%c136, %c0_9] : memref<840x128xf32, #tpu.memory_space<vmem>>, vector<9x32xf32>
    %5 = vector.extract_strided_slice %4 {offsets = [0, 0], sizes = [1, 32], strides = [1, 1]} : vector<9x32xf32> to vector<1x32xf32>
    %6 = vector.extract_strided_slice %4 {offsets = [1, 0], sizes = [1, 32], strides = [1, 1]} : vector<9x32xf32> to vector<1x32xf32>
    %7 = vector.extract_strided_slice %4 {offsets = [2, 0], sizes = [1, 32], strides = [1, 1]} : vector<9x32xf32> to vector<1x32xf32>
    %8 = vector.extract_strided_slice %4 {offsets = [3, 0], sizes = [1, 32], strides = [1, 1]} : vector<9x32xf32> to vector<1x32xf32>
    %9 = vector.extract_strided_slice %4 {offsets = [4, 0], sizes = [1, 32], strides = [1, 1]} : vector<9x32xf32> to vector<1x32xf32>
    %10 = vector.extract_strided_slice %4 {offsets = [5, 0], sizes = [1, 32], strides = [1, 1]} : vector<9x32xf32> to vector<1x32xf32>
    %11 = vector.extract_strided_slice %4 {offsets = [6, 0], sizes = [1, 32], strides = [1, 1]} : vector<9x32xf32> to vector<1x32xf32>
    %12 = vector.extract_strided_slice %4 {offsets = [7, 0], sizes = [1, 32], strides = [1, 1]} : vector<9x32xf32> to vector<1x32xf32>
    %13 = vector.extract_strided_slice %4 {offsets = [8, 0], sizes = [1, 32], strides = [1, 1]} : vector<9x32xf32> to vector<1x32xf32>
    %14 = vector.shape_cast %0 : vector<2x8x6xf32> to vector<16x6xf32>
    %c0_10 = arith.constant 0 : index
    %c0_11 = arith.constant 0 : index
    %15 = vector.load %arg4[%c0_10, %c0_11] : memref<840x128xf32, #tpu.memory_space<vmem>>, vector<6x32xf32>
    %cst = arith.constant dense<0.000000e+00> : vector<16x32xf32>
    %16 = tpu.matmul %14, %15, %cst {dimension_numbers = #tpu.dot_dimension_numbers<[1], [0], [0], [1], [0, 0, 1, 1], [], []>} : vector<16x6xf32>, vector<6x32xf32>, vector<16x32xf32> -> vector<16x32xf32>
    %17 = vector.broadcast %5 : vector<1x32xf32> to vector<16x32xf32>
    %18 = arith.addf %16, %17 : vector<16x32xf32>
    %cst_12 = arith.constant dense<0.000000e+00> : vector<16xf32>
    %19 = vector.multi_reduction <add>, %18, %cst_12 [1] : vector<16x32xf32> to vector<16xf32>
    %20 = vector.shape_cast %19 : vector<16xf32> to vector<16x1xf32>
    %cst_13 = arith.constant 3.125000e-02 : f32
    %21 = vector.broadcast %cst_13 : f32 to vector<16x1xf32>
    %22 = arith.mulf %20, %21 : vector<16x1xf32>
    %23 = arith.mulf %18, %18 : vector<16x32xf32>
    %cst_14 = arith.constant dense<0.000000e+00> : vector<16xf32>
    %24 = vector.multi_reduction <add>, %23, %cst_14 [1] : vector<16x32xf32> to vector<16xf32>
    %25 = vector.shape_cast %24 : vector<16xf32> to vector<16x1xf32>
    %cst_15 = arith.constant 3.125000e-02 : f32
    %26 = vector.broadcast %cst_15 : f32 to vector<16x1xf32>
    %27 = arith.mulf %25, %26 : vector<16x1xf32>
    %28 = arith.mulf %22, %22 : vector<16x1xf32>
    %29 = arith.subf %27, %28 : vector<16x1xf32>
    %30 = vector.broadcast %22 : vector<16x1xf32> to vector<16x32xf32>
    %31 = arith.subf %18, %30 : vector<16x32xf32>
    %cst_16 = arith.constant 9.99999974E-6 : f32
    %32 = vector.broadcast %cst_16 : f32 to vector<16x1xf32>
    %33 = arith.addf %29, %32 : vector<16x1xf32>
    %34 = math.rsqrt %33 : vector<16x1xf32>
    %35 = vector.broadcast %34 : vector<16x1xf32> to vector<16x32xf32>
    %36 = arith.mulf %31, %35 : vector<16x32xf32>
    %37 = vector.broadcast %6 : vector<1x32xf32> to vector<16x32xf32>
    %38 = arith.mulf %36, %37 : vector<16x32xf32>
    %39 = vector.broadcast %7 : vector<1x32xf32> to vector<16x32xf32>
    %40 = arith.addf %38, %39 : vector<16x32xf32>
    %cst_17 = arith.constant 0.000000e+00 : f32
    %41 = vector.broadcast %cst_17 : f32 to vector<16x32xf32>
    %42 = arith.maximumf %40, %41 : vector<16x32xf32>
    %43 = vector.shape_cast %42 : vector<16x32xf32> to vector<2x8x32xf32>
    %cst_18 = arith.constant dense<0xFF800000> : vector<2x32xf32>
    %44 = vector.multi_reduction <maximumf>, %43, %cst_18 [1] : vector<2x8x32xf32> to vector<2x32xf32>
    %c8 = arith.constant 8 : index
    %c0_19 = arith.constant 0 : index
    %45 = vector.load %arg4[%c8, %c0_19] : memref<840x128xf32, #tpu.memory_space<vmem>>, vector<32x32xf32>
    %c40 = arith.constant 40 : index
    %c0_20 = arith.constant 0 : index
    %46 = vector.load %arg4[%c40, %c0_20] : memref<840x128xf32, #tpu.memory_space<vmem>>, vector<32x32xf32>
    %47 = vector.shape_cast %43 : vector<2x8x32xf32> to vector<16x32xf32>
    %cst_21 = arith.constant dense<0.000000e+00> : vector<16x32xf32>
    %48 = tpu.matmul %47, %45, %cst_21 {dimension_numbers = #tpu.dot_dimension_numbers<[1], [0], [0], [1], [0, 0, 1, 1], [], []>} : vector<16x32xf32>, vector<32x32xf32>, vector<16x32xf32> -> vector<16x32xf32>
    %49 = vector.shape_cast %48 : vector<16x32xf32> to vector<2x8x32xf32>
    %cst_22 = arith.constant dense<0.000000e+00> : vector<2x32xf32>
    %50 = tpu.matmul %44, %46, %cst_22 {dimension_numbers = #tpu.dot_dimension_numbers<[1], [0], [0], [1], [0, 0, 1, 1], [], []>} : vector<2x32xf32>, vector<32x32xf32>, vector<2x32xf32> -> vector<2x32xf32>
    %51 = vector.shape_cast %50 : vector<2x32xf32> to vector<2x1x32xf32>
    %52 = vector.broadcast %51 : vector<2x1x32xf32> to vector<2x8x32xf32>
    %53 = arith.addf %49, %52 : vector<2x8x32xf32>
    %54 = vector.shape_cast %8 : vector<1x32xf32> to vector<1x1x32xf32>
    %55 = vector.broadcast %54 : vector<1x1x32xf32> to vector<2x8x32xf32>
    %56 = arith.addf %53, %55 : vector<2x8x32xf32>
    %cst_23 = arith.constant dense<0.000000e+00> : vector<2x8xf32>
    %57 = vector.multi_reduction <add>, %56, %cst_23 [2] : vector<2x8x32xf32> to vector<2x8xf32>
    %58 = vector.shape_cast %57 : vector<2x8xf32> to vector<2x8x1xf32>
    %cst_24 = arith.constant 3.125000e-02 : f32
    %59 = vector.broadcast %cst_24 : f32 to vector<2x8x1xf32>
    %60 = arith.mulf %58, %59 : vector<2x8x1xf32>
    %61 = arith.mulf %56, %56 : vector<2x8x32xf32>
    %cst_25 = arith.constant dense<0.000000e+00> : vector<2x8xf32>
    %62 = vector.multi_reduction <add>, %61, %cst_25 [2] : vector<2x8x32xf32> to vector<2x8xf32>
    %63 = vector.shape_cast %62 : vector<2x8xf32> to vector<2x8x1xf32>
    %cst_26 = arith.constant 3.125000e-02 : f32
    %64 = vector.broadcast %cst_26 : f32 to vector<2x8x1xf32>
    %65 = arith.mulf %63, %64 : vector<2x8x1xf32>
    %66 = arith.mulf %60, %60 : vector<2x8x1xf32>
    %67 = arith.subf %65, %66 : vector<2x8x1xf32>
    %68 = vector.broadcast %60 : vector<2x8x1xf32> to vector<2x8x32xf32>
    %69 = arith.subf %56, %68 : vector<2x8x32xf32>
    %cst_27 = arith.constant 9.99999974E-6 : f32
    %70 = vector.broadcast %cst_27 : f32 to vector<2x8x1xf32>
    %71 = arith.addf %67, %70 : vector<2x8x1xf32>
    %72 = math.rsqrt %71 : vector<2x8x1xf32>
    %73 = vector.broadcast %72 : vector<2x8x1xf32> to vector<2x8x32xf32>
    %74 = arith.mulf %69, %73 : vector<2x8x32xf32>
    %75 = vector.shape_cast %9 : vector<1x32xf32> to vector<1x1x32xf32>
    %76 = vector.broadcast %75 : vector<1x1x32xf32> to vector<2x8x32xf32>
    %77 = arith.mulf %74, %76 : vector<2x8x32xf32>
    %78 = vector.shape_cast %10 : vector<1x32xf32> to vector<1x1x32xf32>
    %79 = vector.broadcast %78 : vector<1x1x32xf32> to vector<2x8x32xf32>
    %80 = arith.addf %77, %79 : vector<2x8x32xf32>
    %cst_28 = arith.constant 0.000000e+00 : f32
    %81 = vector.broadcast %cst_28 : f32 to vector<2x8x32xf32>
    %82 = arith.maximumf %80, %81 : vector<2x8x32xf32>
    %cst_29 = arith.constant dense<0xFF800000> : vector<2x32xf32>
    %83 = vector.multi_reduction <maximumf>, %82, %cst_29 [1] : vector<2x8x32xf32> to vector<2x32xf32>
    %c72 = arith.constant 72 : index
    %c0_30 = arith.constant 0 : index
    %84 = vector.load %arg4[%c72, %c0_30] : memref<840x128xf32, #tpu.memory_space<vmem>>, vector<32x32xf32>
    %c104 = arith.constant 104 : index
    %c0_31 = arith.constant 0 : index
    %85 = vector.load %arg4[%c104, %c0_31] : memref<840x128xf32, #tpu.memory_space<vmem>>, vector<32x32xf32>
    %86 = vector.shape_cast %82 : vector<2x8x32xf32> to vector<16x32xf32>
    %cst_32 = arith.constant dense<0.000000e+00> : vector<16x32xf32>
    %87 = tpu.matmul %86, %84, %cst_32 {dimension_numbers = #tpu.dot_dimension_numbers<[1], [0], [0], [1], [0, 0, 1, 1], [], []>} : vector<16x32xf32>, vector<32x32xf32>, vector<16x32xf32> -> vector<16x32xf32>
    %88 = vector.shape_cast %87 : vector<16x32xf32> to vector<2x8x32xf32>
    %cst_33 = arith.constant dense<0.000000e+00> : vector<2x32xf32>
    %89 = tpu.matmul %83, %85, %cst_33 {dimension_numbers = #tpu.dot_dimension_numbers<[1], [0], [0], [1], [0, 0, 1, 1], [], []>} : vector<2x32xf32>, vector<32x32xf32>, vector<2x32xf32> -> vector<2x32xf32>
    %90 = vector.shape_cast %89 : vector<2x32xf32> to vector<2x1x32xf32>
    %91 = vector.broadcast %90 : vector<2x1x32xf32> to vector<2x8x32xf32>
    %92 = arith.addf %88, %91 : vector<2x8x32xf32>
    %93 = vector.shape_cast %11 : vector<1x32xf32> to vector<1x1x32xf32>
    %94 = vector.broadcast %93 : vector<1x1x32xf32> to vector<2x8x32xf32>
    %95 = arith.addf %92, %94 : vector<2x8x32xf32>
    %cst_34 = arith.constant dense<0.000000e+00> : vector<2x8xf32>
    %96 = vector.multi_reduction <add>, %95, %cst_34 [2] : vector<2x8x32xf32> to vector<2x8xf32>
    %97 = vector.shape_cast %96 : vector<2x8xf32> to vector<2x8x1xf32>
    %cst_35 = arith.constant 3.125000e-02 : f32
    %98 = vector.broadcast %cst_35 : f32 to vector<2x8x1xf32>
    %99 = arith.mulf %97, %98 : vector<2x8x1xf32>
    %100 = arith.mulf %95, %95 : vector<2x8x32xf32>
    %cst_36 = arith.constant dense<0.000000e+00> : vector<2x8xf32>
    %101 = vector.multi_reduction <add>, %100, %cst_36 [2] : vector<2x8x32xf32> to vector<2x8xf32>
    %102 = vector.shape_cast %101 : vector<2x8xf32> to vector<2x8x1xf32>
    %cst_37 = arith.constant 3.125000e-02 : f32
    %103 = vector.broadcast %cst_37 : f32 to vector<2x8x1xf32>
    %104 = arith.mulf %102, %103 : vector<2x8x1xf32>
    %105 = arith.mulf %99, %99 : vector<2x8x1xf32>
    %106 = arith.subf %104, %105 : vector<2x8x1xf32>
    %107 = vector.broadcast %99 : vector<2x8x1xf32> to vector<2x8x32xf32>
    %108 = arith.subf %95, %107 : vector<2x8x32xf32>
    %cst_38 = arith.constant 9.99999974E-6 : f32
    %109 = vector.broadcast %cst_38 : f32 to vector<2x8x1xf32>
    %110 = arith.addf %106, %109 : vector<2x8x1xf32>
    %111 = math.rsqrt %110 : vector<2x8x1xf32>
    %112 = vector.broadcast %111 : vector<2x8x1xf32> to vector<2x8x32xf32>
    %113 = arith.mulf %108, %112 : vector<2x8x32xf32>
    %114 = vector.shape_cast %12 : vector<1x32xf32> to vector<1x1x32xf32>
    %115 = vector.broadcast %114 : vector<1x1x32xf32> to vector<2x8x32xf32>
    %116 = arith.mulf %113, %115 : vector<2x8x32xf32>
    %117 = vector.shape_cast %13 : vector<1x32xf32> to vector<1x1x32xf32>
    %118 = vector.broadcast %117 : vector<1x1x32xf32> to vector<2x8x32xf32>
    %119 = arith.addf %116, %118 : vector<2x8x32xf32>
    %cst_39 = arith.constant 0.000000e+00 : f32
    %120 = vector.broadcast %cst_39 : f32 to vector<2x8x32xf32>
    %121 = arith.maximumf %119, %120 : vector<2x8x32xf32>
    %cst_40 = arith.constant dense<0xFF800000> : vector<2x32xf32>
    %122 = vector.multi_reduction <maximumf>, %121, %cst_40 [1] : vector<2x8x32xf32> to vector<2x32xf32>
    %c288 = arith.constant 288 : index
    %c0_41 = arith.constant 0 : index
    %123 = vector.load %arg4[%c288, %c0_41] : memref<840x128xf32, #tpu.memory_space<vmem>>, vector<9x32xf32>
    %124 = vector.extract_strided_slice %123 {offsets = [0, 0], sizes = [1, 32], strides = [1, 1]} : vector<9x32xf32> to vector<1x32xf32>
    %125 = vector.extract_strided_slice %123 {offsets = [1, 0], sizes = [1, 32], strides = [1, 1]} : vector<9x32xf32> to vector<1x32xf32>
    %126 = vector.extract_strided_slice %123 {offsets = [2, 0], sizes = [1, 32], strides = [1, 1]} : vector<9x32xf32> to vector<1x32xf32>
    %127 = vector.extract_strided_slice %123 {offsets = [3, 0], sizes = [1, 32], strides = [1, 1]} : vector<9x32xf32> to vector<1x32xf32>
    %128 = vector.extract_strided_slice %123 {offsets = [4, 0], sizes = [1, 32], strides = [1, 1]} : vector<9x32xf32> to vector<1x32xf32>
    %129 = vector.extract_strided_slice %123 {offsets = [5, 0], sizes = [1, 32], strides = [1, 1]} : vector<9x32xf32> to vector<1x32xf32>
    %130 = vector.extract_strided_slice %123 {offsets = [6, 0], sizes = [1, 32], strides = [1, 1]} : vector<9x32xf32> to vector<1x32xf32>
    %131 = vector.extract_strided_slice %123 {offsets = [7, 0], sizes = [1, 32], strides = [1, 1]} : vector<9x32xf32> to vector<1x32xf32>
    %132 = vector.extract_strided_slice %123 {offsets = [8, 0], sizes = [1, 32], strides = [1, 1]} : vector<9x32xf32> to vector<1x32xf32>
    %133 = tpu.iota {dimensions = array<i32: 1>} : vector<1x24x1xi32>
    %c18_i32 = arith.constant 18 : i32
    %134 = vector.broadcast %c18_i32 : i32 to vector<1x24x1xi32>
    %135 = arith.cmpi slt, %133, %134 : vector<1x24x1xi32>
    %136 = vector.shape_cast %2 : vector<8x24x8xf32> to vector<192x8xf32>
    %c152 = arith.constant 152 : index
    %c0_42 = arith.constant 0 : index
    %137 = vector.load %arg4[%c152, %c0_42] : memref<840x128xf32, #tpu.memory_space<vmem>>, vector<8x32xf32>
    %cst_43 = arith.constant dense<0.000000e+00> : vector<192x32xf32>
    %138 = tpu.matmul %136, %137, %cst_43 {dimension_numbers = #tpu.dot_dimension_numbers<[1], [0], [0], [1], [0, 0, 1, 1], [], []>} : vector<192x8xf32>, vector<8x32xf32>, vector<192x32xf32> -> vector<192x32xf32>
    %139 = vector.broadcast %124 : vector<1x32xf32> to vector<192x32xf32>
    %140 = arith.addf %138, %139 : vector<192x32xf32>
    %cst_44 = arith.constant dense<0.000000e+00> : vector<192xf32>
    %141 = vector.multi_reduction <add>, %140, %cst_44 [1] : vector<192x32xf32> to vector<192xf32>
    %142 = vector.shape_cast %141 : vector<192xf32> to vector<192x1xf32>
    %cst_45 = arith.constant 3.125000e-02 : f32
    %143 = vector.broadcast %cst_45 : f32 to vector<192x1xf32>
    %144 = arith.mulf %142, %143 : vector<192x1xf32>
    %145 = arith.mulf %140, %140 : vector<192x32xf32>
    %cst_46 = arith.constant dense<0.000000e+00> : vector<192xf32>
    %146 = vector.multi_reduction <add>, %145, %cst_46 [1] : vector<192x32xf32> to vector<192xf32>
    %147 = vector.shape_cast %146 : vector<192xf32> to vector<192x1xf32>
    %cst_47 = arith.constant 3.125000e-02 : f32
    %148 = vector.broadcast %cst_47 : f32 to vector<192x1xf32>
    %149 = arith.mulf %147, %148 : vector<192x1xf32>
    %150 = arith.mulf %144, %144 : vector<192x1xf32>
    %151 = arith.subf %149, %150 : vector<192x1xf32>
    %152 = vector.broadcast %144 : vector<192x1xf32> to vector<192x32xf32>
    %153 = arith.subf %140, %152 : vector<192x32xf32>
    %cst_48 = arith.constant 9.99999974E-6 : f32
    %154 = vector.broadcast %cst_48 : f32 to vector<192x1xf32>
    %155 = arith.addf %151, %154 : vector<192x1xf32>
    %156 = math.rsqrt %155 : vector<192x1xf32>
    %157 = vector.broadcast %156 : vector<192x1xf32> to vector<192x32xf32>
    %158 = arith.mulf %153, %157 : vector<192x32xf32>
    %159 = vector.broadcast %125 : vector<1x32xf32> to vector<192x32xf32>
    %160 = arith.mulf %158, %159 : vector<192x32xf32>
    %161 = vector.broadcast %126 : vector<1x32xf32> to vector<192x32xf32>
    %162 = arith.addf %160, %161 : vector<192x32xf32>
    %cst_49 = arith.constant 0.000000e+00 : f32
    %163 = vector.broadcast %cst_49 : f32 to vector<192x32xf32>
    %164 = arith.maximumf %162, %163 : vector<192x32xf32>
    %165 = vector.shape_cast %164 : vector<192x32xf32> to vector<8x24x32xf32>
    %cst_50 = arith.constant -1.000000e+30 : f32
    %166 = vector.shape_cast %135 : vector<1x24x1xi1> to vector<1x24x1xi1>
    %167 = vector.broadcast %166 : vector<1x24x1xi1> to vector<8x24x32xi1>
    %168 = vector.broadcast %cst_50 : f32 to vector<8x24x32xf32>
    %169 = arith.select %167, %165, %168 : vector<8x24x32xi1>, vector<8x24x32xf32>
    %cst_51 = arith.constant dense<0xFF800000> : vector<8x32xf32>
    %170 = vector.multi_reduction <maximumf>, %169, %cst_51 [1] : vector<8x24x32xf32> to vector<8x32xf32>
    %c160 = arith.constant 160 : index
    %c0_52 = arith.constant 0 : index
    %171 = vector.load %arg4[%c160, %c0_52] : memref<840x128xf32, #tpu.memory_space<vmem>>, vector<32x32xf32>
    %c192 = arith.constant 192 : index
    %c0_53 = arith.constant 0 : index
    %172 = vector.load %arg4[%c192, %c0_53] : memref<840x128xf32, #tpu.memory_space<vmem>>, vector<32x32xf32>
    %173 = vector.shape_cast %165 : vector<8x24x32xf32> to vector<192x32xf32>
    %cst_54 = arith.constant dense<0.000000e+00> : vector<192x32xf32>
    %174 = tpu.matmul %173, %171, %cst_54 {dimension_numbers = #tpu.dot_dimension_numbers<[1], [0], [0], [1], [0, 0, 1, 1], [], []>} : vector<192x32xf32>, vector<32x32xf32>, vector<192x32xf32> -> vector<192x32xf32>
    %175 = vector.shape_cast %174 : vector<192x32xf32> to vector<8x24x32xf32>
    %cst_55 = arith.constant dense<0.000000e+00> : vector<8x32xf32>
    %176 = tpu.matmul %170, %172, %cst_55 {dimension_numbers = #tpu.dot_dimension_numbers<[1], [0], [0], [1], [0, 0, 1, 1], [], []>} : vector<8x32xf32>, vector<32x32xf32>, vector<8x32xf32> -> vector<8x32xf32>
    %177 = vector.shape_cast %176 : vector<8x32xf32> to vector<8x1x32xf32>
    %178 = vector.broadcast %177 : vector<8x1x32xf32> to vector<8x24x32xf32>
    %179 = arith.addf %175, %178 : vector<8x24x32xf32>
    %180 = vector.shape_cast %127 : vector<1x32xf32> to vector<1x1x32xf32>
    %181 = vector.broadcast %180 : vector<1x1x32xf32> to vector<8x24x32xf32>
    %182 = arith.addf %179, %181 : vector<8x24x32xf32>
    %cst_56 = arith.constant dense<0.000000e+00> : vector<8x24xf32>
    %183 = vector.multi_reduction <add>, %182, %cst_56 [2] : vector<8x24x32xf32> to vector<8x24xf32>
    %184 = vector.shape_cast %183 : vector<8x24xf32> to vector<8x24x1xf32>
    %cst_57 = arith.constant 3.125000e-02 : f32
    %185 = vector.broadcast %cst_57 : f32 to vector<8x24x1xf32>
    %186 = arith.mulf %184, %185 : vector<8x24x1xf32>
    %187 = arith.mulf %182, %182 : vector<8x24x32xf32>
    %cst_58 = arith.constant dense<0.000000e+00> : vector<8x24xf32>
    %188 = vector.multi_reduction <add>, %187, %cst_58 [2] : vector<8x24x32xf32> to vector<8x24xf32>
    %189 = vector.shape_cast %188 : vector<8x24xf32> to vector<8x24x1xf32>
    %cst_59 = arith.constant 3.125000e-02 : f32
    %190 = vector.broadcast %cst_59 : f32 to vector<8x24x1xf32>
    %191 = arith.mulf %189, %190 : vector<8x24x1xf32>
    %192 = arith.mulf %186, %186 : vector<8x24x1xf32>
    %193 = arith.subf %191, %192 : vector<8x24x1xf32>
    %194 = vector.broadcast %186 : vector<8x24x1xf32> to vector<8x24x32xf32>
    %195 = arith.subf %182, %194 : vector<8x24x32xf32>
    %cst_60 = arith.constant 9.99999974E-6 : f32
    %196 = vector.broadcast %cst_60 : f32 to vector<8x24x1xf32>
    %197 = arith.addf %193, %196 : vector<8x24x1xf32>
    %198 = math.rsqrt %197 : vector<8x24x1xf32>
    %199 = vector.broadcast %198 : vector<8x24x1xf32> to vector<8x24x32xf32>
    %200 = arith.mulf %195, %199 : vector<8x24x32xf32>
    %201 = vector.shape_cast %128 : vector<1x32xf32> to vector<1x1x32xf32>
    %202 = vector.broadcast %201 : vector<1x1x32xf32> to vector<8x24x32xf32>
    %203 = arith.mulf %200, %202 : vector<8x24x32xf32>
    %204 = vector.shape_cast %129 : vector<1x32xf32> to vector<1x1x32xf32>
    %205 = vector.broadcast %204 : vector<1x1x32xf32> to vector<8x24x32xf32>
    %206 = arith.addf %203, %205 : vector<8x24x32xf32>
    %cst_61 = arith.constant 0.000000e+00 : f32
    %207 = vector.broadcast %cst_61 : f32 to vector<8x24x32xf32>
    %208 = arith.maximumf %206, %207 : vector<8x24x32xf32>
    %cst_62 = arith.constant -1.000000e+30 : f32
    %209 = vector.shape_cast %135 : vector<1x24x1xi1> to vector<1x24x1xi1>
    %210 = vector.broadcast %209 : vector<1x24x1xi1> to vector<8x24x32xi1>
    %211 = vector.broadcast %cst_62 : f32 to vector<8x24x32xf32>
    %212 = arith.select %210, %208, %211 : vector<8x24x32xi1>, vector<8x24x32xf32>
    %cst_63 = arith.constant dense<0xFF800000> : vector<8x32xf32>
    %213 = vector.multi_reduction <maximumf>, %212, %cst_63 [1] : vector<8x24x32xf32> to vector<8x32xf32>
    %c224 = arith.constant 224 : index
    %c0_64 = arith.constant 0 : index
    %214 = vector.load %arg4[%c224, %c0_64] : memref<840x128xf32, #tpu.memory_space<vmem>>, vector<32x32xf32>
    %c256 = arith.constant 256 : index
    %c0_65 = arith.constant 0 : index
    %215 = vector.load %arg4[%c256, %c0_65] : memref<840x128xf32, #tpu.memory_space<vmem>>, vector<32x32xf32>
    %216 = vector.shape_cast %208 : vector<8x24x32xf32> to vector<192x32xf32>
    %cst_66 = arith.constant dense<0.000000e+00> : vector<192x32xf32>
    %217 = tpu.matmul %216, %214, %cst_66 {dimension_numbers = #tpu.dot_dimension_numbers<[1], [0], [0], [1], [0, 0, 1, 1], [], []>} : vector<192x32xf32>, vector<32x32xf32>, vector<192x32xf32> -> vector<192x32xf32>
    %218 = vector.shape_cast %217 : vector<192x32xf32> to vector<8x24x32xf32>
    %cst_67 = arith.constant dense<0.000000e+00> : vector<8x32xf32>
    %219 = tpu.matmul %213, %215, %cst_67 {dimension_numbers = #tpu.dot_dimension_numbers<[1], [0], [0], [1], [0, 0, 1, 1], [], []>} : vector<8x32xf32>, vector<32x32xf32>, vector<8x32xf32> -> vector<8x32xf32>
    %220 = vector.shape_cast %219 : vector<8x32xf32> to vector<8x1x32xf32>
    %221 = vector.broadcast %220 : vector<8x1x32xf32> to vector<8x24x32xf32>
    %222 = arith.addf %218, %221 : vector<8x24x32xf32>
    %223 = vector.shape_cast %130 : vector<1x32xf32> to vector<1x1x32xf32>
    %224 = vector.broadcast %223 : vector<1x1x32xf32> to vector<8x24x32xf32>
    %225 = arith.addf %222, %224 : vector<8x24x32xf32>
    %cst_68 = arith.constant dense<0.000000e+00> : vector<8x24xf32>
    %226 = vector.multi_reduction <add>, %225, %cst_68 [2] : vector<8x24x32xf32> to vector<8x24xf32>
    %227 = vector.shape_cast %226 : vector<8x24xf32> to vector<8x24x1xf32>
    %cst_69 = arith.constant 3.125000e-02 : f32
    %228 = vector.broadcast %cst_69 : f32 to vector<8x24x1xf32>
    %229 = arith.mulf %227, %228 : vector<8x24x1xf32>
    %230 = arith.mulf %225, %225 : vector<8x24x32xf32>
    %cst_70 = arith.constant dense<0.000000e+00> : vector<8x24xf32>
    %231 = vector.multi_reduction <add>, %230, %cst_70 [2] : vector<8x24x32xf32> to vector<8x24xf32>
    %232 = vector.shape_cast %231 : vector<8x24xf32> to vector<8x24x1xf32>
    %cst_71 = arith.constant 3.125000e-02 : f32
    %233 = vector.broadcast %cst_71 : f32 to vector<8x24x1xf32>
    %234 = arith.mulf %232, %233 : vector<8x24x1xf32>
    %235 = arith.mulf %229, %229 : vector<8x24x1xf32>
    %236 = arith.subf %234, %235 : vector<8x24x1xf32>
    %237 = vector.broadcast %229 : vector<8x24x1xf32> to vector<8x24x32xf32>
    %238 = arith.subf %225, %237 : vector<8x24x32xf32>
    %cst_72 = arith.constant 9.99999974E-6 : f32
    %239 = vector.broadcast %cst_72 : f32 to vector<8x24x1xf32>
    %240 = arith.addf %236, %239 : vector<8x24x1xf32>
    %241 = math.rsqrt %240 : vector<8x24x1xf32>
    %242 = vector.broadcast %241 : vector<8x24x1xf32> to vector<8x24x32xf32>
    %243 = arith.mulf %238, %242 : vector<8x24x32xf32>
    %244 = vector.shape_cast %131 : vector<1x32xf32> to vector<1x1x32xf32>
    %245 = vector.broadcast %244 : vector<1x1x32xf32> to vector<8x24x32xf32>
    %246 = arith.mulf %243, %245 : vector<8x24x32xf32>
    %247 = vector.shape_cast %132 : vector<1x32xf32> to vector<1x1x32xf32>
    %248 = vector.broadcast %247 : vector<1x1x32xf32> to vector<8x24x32xf32>
    %249 = arith.addf %246, %248 : vector<8x24x32xf32>
    %cst_73 = arith.constant 0.000000e+00 : f32
    %250 = vector.broadcast %cst_73 : f32 to vector<8x24x32xf32>
    %251 = arith.maximumf %249, %250 : vector<8x24x32xf32>
    %cst_74 = arith.constant -1.000000e+30 : f32
    %252 = vector.shape_cast %135 : vector<1x24x1xi1> to vector<1x24x1xi1>
    %253 = vector.broadcast %252 : vector<1x24x1xi1> to vector<8x24x32xi1>
    %254 = vector.broadcast %cst_74 : f32 to vector<8x24x32xf32>
    %255 = arith.select %253, %251, %254 : vector<8x24x32xi1>, vector<8x24x32xf32>
    %cst_75 = arith.constant dense<0xFF800000> : vector<8x32xf32>
    %256 = vector.multi_reduction <maximumf>, %255, %cst_75 [1] : vector<8x24x32xf32> to vector<8x32xf32>
    %257 = vector.shape_cast %256 : vector<8x32xf32> to vector<2x4x32xf32>
    %258 = vector.shape_cast %122 : vector<2x32xf32> to vector<2x1x32xf32>
    %259 = tpu.concatenate %258, %257 in 1 : vector<2x1x32xf32>, vector<2x4x32xf32> -> vector<2x5x32xf32>
    %260 = arith.mulf %259, %259 : vector<2x5x32xf32>
    %cst_76 = arith.constant dense<0.000000e+00> : vector<2x5xf32>
    %261 = vector.multi_reduction <add>, %260, %cst_76 [2] : vector<2x5x32xf32> to vector<2x5xf32>
    %262 = vector.shape_cast %261 : vector<2x5xf32> to vector<2x5x1xf32>
    %cst_77 = arith.constant 2.000000e+00 : f32
    %263 = vector.broadcast %cst_77 : f32 to vector<2x5x1xf32>
    %264 = arith.mulf %263, %262 : vector<2x5x1xf32>
    %cst_78 = arith.constant 1.000000e-24 : f32
    %265 = vector.broadcast %cst_78 : f32 to vector<2x5x1xf32>
    %266 = arith.maximumf %264, %265 : vector<2x5x1xf32>
    %267 = math.rsqrt %266 : vector<2x5x1xf32>
    %268 = vector.broadcast %267 : vector<2x5x1xf32> to vector<2x5x32xf32>
    %269 = arith.mulf %259, %268 : vector<2x5x32xf32>
    %270 = vector.extract_strided_slice %269 {offsets = [0, 0, 0], sizes = [2, 1, 32], strides = [1, 1, 1]} : vector<2x5x32xf32> to vector<2x1x32xf32>
    %271 = vector.shape_cast %270 : vector<2x1x32xf32> to vector<2x32xf32>
    %c304 = arith.constant 304 : index
    %c0_79 = arith.constant 0 : index
    %272 = vector.load %arg4[%c304, %c0_79] : memref<840x128xf32, #tpu.memory_space<vmem>>, vector<32x64xf32>
    %cst_80 = arith.constant dense<0.000000e+00> : vector<2x64xf32>
    %273 = tpu.matmul %271, %272, %cst_80 {dimension_numbers = #tpu.dot_dimension_numbers<[1], [0], [0], [1], [0, 0, 1, 1], [], []>} : vector<2x32xf32>, vector<32x64xf32>, vector<2x64xf32> -> vector<2x64xf32>
    %274 = vector.shape_cast %269 : vector<2x5x32xf32> to vector<10x32xf32>
    %c336 = arith.constant 336 : index
    %c0_81 = arith.constant 0 : index
    %275 = vector.load %arg4[%c336, %c0_81] : memref<840x128xf32, #tpu.memory_space<vmem>>, vector<32x64xf32>
    %cst_82 = arith.constant dense<0.000000e+00> : vector<10x64xf32>
    %276 = tpu.matmul %274, %275, %cst_82 {dimension_numbers = #tpu.dot_dimension_numbers<[1], [0], [0], [1], [0, 0, 1, 1], [], []>} : vector<10x32xf32>, vector<32x64xf32>, vector<10x64xf32> -> vector<10x64xf32>
    %277 = vector.shape_cast %276 : vector<10x64xf32> to vector<2x5x64xf32>
    %c368 = arith.constant 368 : index
    %c0_83 = arith.constant 0 : index
    %278 = vector.load %arg4[%c368, %c0_83] : memref<840x128xf32, #tpu.memory_space<vmem>>, vector<32x64xf32>
    %cst_84 = arith.constant dense<0.000000e+00> : vector<10x64xf32>
    %279 = tpu.matmul %274, %278, %cst_84 {dimension_numbers = #tpu.dot_dimension_numbers<[1], [0], [0], [1], [0, 0, 1, 1], [], []>} : vector<10x32xf32>, vector<32x64xf32>, vector<10x64xf32> -> vector<10x64xf32>
    %280 = vector.shape_cast %279 : vector<10x64xf32> to vector<2x5x64xf32>
    %281 = vector.shape_cast %273 : vector<2x64xf32> to vector<2x1x64xf32>
    %282 = vector.broadcast %281 : vector<2x1x64xf32> to vector<2x5x64xf32>
    %283 = arith.mulf %282, %277 : vector<2x5x64xf32>
    %cst_85 = arith.constant dense<0.000000e+00> : vector<2x5xf32>
    %284 = vector.multi_reduction <add>, %283, %cst_85 [2] : vector<2x5x64xf32> to vector<2x5xf32>
    %cst_86 = arith.constant 6.400000e+01 : f32
    %285 = math.sqrt %cst_86 : f32
    %cst_87 = arith.constant 1.000000e+00 : f32
    %286 = arith.divf %cst_87, %285 : f32
    %287 = vector.broadcast %286 : f32 to vector<2x5xf32>
    %288 = arith.mulf %284, %287 : vector<2x5xf32>
    %cst_88 = arith.constant dense<0xFF800000> : vector<2xf32>
    %289 = vector.multi_reduction <maximumf>, %288, %cst_88 [1] : vector<2x5xf32> to vector<2xf32>
    %290 = vector.shape_cast %289 : vector<2xf32> to vector<2x1xf32>
    %291 = vector.broadcast %290 : vector<2x1xf32> to vector<2x5xf32>
    %292 = arith.subf %288, %291 : vector<2x5xf32>
    %293 = math.exp %292 : vector<2x5xf32>
    %cst_89 = arith.constant dense<0.000000e+00> : vector<2xf32>
    %294 = vector.multi_reduction <add>, %293, %cst_89 [1] : vector<2x5xf32> to vector<2xf32>
    %295 = vector.shape_cast %294 : vector<2xf32> to vector<2x1xf32>
    %296 = tpu.reciprocal %295 {approx = true} : vector<2x1xf32> -> vector<2x1xf32>
    %297 = vector.broadcast %296 : vector<2x1xf32> to vector<2x5xf32>
    %298 = arith.mulf %293, %297 : vector<2x5xf32>
    %299 = vector.shape_cast %298 : vector<2x5xf32> to vector<2x5x1xf32>
    %300 = vector.broadcast %299 : vector<2x5x1xf32> to vector<2x5x64xf32>
    %301 = arith.mulf %300, %280 : vector<2x5x64xf32>
    %cst_90 = arith.constant dense<0.000000e+00> : vector<2x64xf32>
    %302 = vector.multi_reduction <add>, %301, %cst_90 [1] : vector<2x5x64xf32> to vector<2x64xf32>
    %c400 = arith.constant 400 : index
    %c0_91 = arith.constant 0 : index
    %303 = vector.load %arg4[%c400, %c0_91] : memref<840x128xf32, #tpu.memory_space<vmem>>, vector<2x64xf32>
    %c408 = arith.constant 408 : index
    %c0_92 = arith.constant 0 : index
    %304 = vector.load %arg4[%c408, %c0_92] : memref<840x128xf32, #tpu.memory_space<vmem>>, vector<64x64xf32>
    %c472 = arith.constant 472 : index
    %c0_93 = arith.constant 0 : index
    %305 = vector.load %arg4[%c472, %c0_93] : memref<840x128xf32, #tpu.memory_space<vmem>>, vector<64x3xf32>
    %c536 = arith.constant 536 : index
    %c0_94 = arith.constant 0 : index
    %306 = vector.load %arg4[%c536, %c0_94] : memref<840x128xf32, #tpu.memory_space<vmem>>, vector<2x64xf32>
    %307 = vector.extract_strided_slice %306 {offsets = [0, 0], sizes = [1, 64], strides = [1, 1]} : vector<2x64xf32> to vector<1x64xf32>
    %308 = vector.extract_strided_slice %306 {offsets = [1, 0], sizes = [1, 3], strides = [1, 1]} : vector<2x64xf32> to vector<1x3xf32>
    %cst_95 = arith.constant dense<0.000000e+00> : vector<2x64xf32>
    %309 = tpu.matmul %302, %304, %cst_95 {dimension_numbers = #tpu.dot_dimension_numbers<[1], [0], [0], [1], [0, 0, 1, 1], [], []>} : vector<2x64xf32>, vector<64x64xf32>, vector<2x64xf32> -> vector<2x64xf32>
    %310 = vector.extract_strided_slice %3 {offsets = [0, 0, 0], sizes = [2, 8, 1], strides = [1, 1, 1]} : vector<2x8x2xf32> to vector<2x8x1xf32>
    %311 = vector.extract_strided_slice %303 {offsets = [0, 0], sizes = [1, 64], strides = [1, 1]} : vector<2x64xf32> to vector<1x64xf32>
    %312 = vector.shape_cast %311 : vector<1x64xf32> to vector<1x1x64xf32>
    %313 = vector.broadcast %310 : vector<2x8x1xf32> to vector<2x8x64xf32>
    %314 = vector.broadcast %312 : vector<1x1x64xf32> to vector<2x8x64xf32>
    %315 = arith.mulf %313, %314 : vector<2x8x64xf32>
    %316 = vector.extract_strided_slice %3 {offsets = [0, 0, 1], sizes = [2, 8, 1], strides = [1, 1, 1]} : vector<2x8x2xf32> to vector<2x8x1xf32>
    %317 = vector.extract_strided_slice %303 {offsets = [1, 0], sizes = [1, 64], strides = [1, 1]} : vector<2x64xf32> to vector<1x64xf32>
    %318 = vector.shape_cast %317 : vector<1x64xf32> to vector<1x1x64xf32>
    %319 = vector.broadcast %316 : vector<2x8x1xf32> to vector<2x8x64xf32>
    %320 = vector.broadcast %318 : vector<1x1x64xf32> to vector<2x8x64xf32>
    %321 = arith.mulf %319, %320 : vector<2x8x64xf32>
    %322 = arith.addf %315, %321 : vector<2x8x64xf32>
    %323 = vector.shape_cast %309 : vector<2x64xf32> to vector<2x1x64xf32>
    %324 = vector.broadcast %323 : vector<2x1x64xf32> to vector<2x8x64xf32>
    %325 = arith.addf %322, %324 : vector<2x8x64xf32>
    %326 = vector.shape_cast %307 : vector<1x64xf32> to vector<1x1x64xf32>
    %327 = vector.broadcast %326 : vector<1x1x64xf32> to vector<2x8x64xf32>
    %328 = arith.addf %325, %327 : vector<2x8x64xf32>
    %cst_96 = arith.constant 0.000000e+00 : f32
    %329 = vector.broadcast %cst_96 : f32 to vector<2x8x64xf32>
    %330 = arith.maximumf %328, %329 : vector<2x8x64xf32>
    %331 = vector.shape_cast %330 : vector<2x8x64xf32> to vector<16x64xf32>
    %cst_97 = arith.constant dense<0.000000e+00> : vector<16x3xf32>
    %332 = tpu.matmul %331, %305, %cst_97 {dimension_numbers = #tpu.dot_dimension_numbers<[1], [0], [0], [1], [0, 0, 1, 1], [], []>} : vector<16x64xf32>, vector<64x3xf32>, vector<16x3xf32> -> vector<16x3xf32>
    %333 = vector.broadcast %308 : vector<1x3xf32> to vector<16x3xf32>
    %334 = arith.addf %332, %333 : vector<16x3xf32>
    %335 = vector.shape_cast %334 : vector<16x3xf32> to vector<2x8x3xf32>
    %336 = vector.extract_strided_slice %335 {offsets = [0, 0, 0], sizes = [2, 8, 1], strides = [1, 1, 1]} : vector<2x8x3xf32> to vector<2x8x1xf32>
    %337 = vector.shape_cast %336 : vector<2x8x1xf32> to vector<2x8xf32>
    %338 = vector.extract_strided_slice %335 {offsets = [0, 0, 1], sizes = [2, 8, 2], strides = [1, 1, 1]} : vector<2x8x3xf32> to vector<2x8x2xf32>
    %339 = arith.addf %3, %338 : vector<2x8x2xf32>
    %340 = tpu.iota {dimensions = array<i32: 1>} : vector<2x8xi32>
    %cst_98 = arith.constant dense<0xFF800000> : vector<2xf32>
    %341 = vector.multi_reduction <maximumf>, %337, %cst_98 [1] : vector<2x8xf32> to vector<2xf32>
    %342 = vector.shape_cast %341 : vector<2xf32> to vector<2x1xf32>
    %343 = vector.broadcast %342 : vector<2x1xf32> to vector<2x8xf32>
    %344 = arith.cmpf oge, %337, %343 : vector<2x8xf32>
    %c8_i32 = arith.constant 8 : i32
    %345 = vector.broadcast %c8_i32 : i32 to vector<2x8xi32>
    %346 = arith.select %344, %340, %345 : vector<2x8xi1>, vector<2x8xi32>
    %cst_99 = arith.constant dense<2147483647> : vector<2xi32>
    %347 = vector.multi_reduction <minsi>, %346, %cst_99 [1] : vector<2x8xi32> to vector<2xi32>
    %348 = vector.shape_cast %347 : vector<2xi32> to vector<2x1xi32>
    %349 = vector.broadcast %348 : vector<2x1xi32> to vector<2x8xi32>
    %350 = arith.cmpi eq, %340, %349 : vector<2x8xi32>
    %351 = arith.extui %350 : vector<2x8xi1> to vector<2x8xi32>
    %352 = arith.sitofp %351 : vector<2x8xi32> to vector<2x8xf32>
    %353 = vector.shape_cast %352 : vector<2x8xf32> to vector<2x8x1xf32>
    %354 = vector.broadcast %353 : vector<2x8x1xf32> to vector<2x8x2xf32>
    %355 = arith.mulf %354, %339 : vector<2x8x2xf32>
    %cst_100 = arith.constant dense<0.000000e+00> : vector<2x2xf32>
    %356 = vector.multi_reduction <add>, %355, %cst_100 [1] : vector<2x8x2xf32> to vector<2x2xf32>
    %357 = vector.shape_cast %356 : vector<2x2xf32> to vector<2x1x2xf32>
    %cst_101 = arith.constant 0.000000e+00 : f32
    %358 = vector.broadcast %cst_101 : f32 to vector<2x8xf32>
    %359 = arith.cmpf ogt, %352, %358 : vector<2x8xf32>
    %cst_102 = arith.constant -1.000000e+30 : f32
    %360 = vector.broadcast %cst_102 : f32 to vector<2x8xf32>
    %361 = arith.select %359, %360, %337 : vector<2x8xi1>, vector<2x8xf32>
    %cst_103 = arith.constant dense<0xFF800000> : vector<2xf32>
    %362 = vector.multi_reduction <maximumf>, %361, %cst_103 [1] : vector<2x8xf32> to vector<2xf32>
    %363 = vector.shape_cast %362 : vector<2xf32> to vector<2x1xf32>
    %364 = vector.broadcast %363 : vector<2x1xf32> to vector<2x8xf32>
    %365 = arith.cmpf oge, %361, %364 : vector<2x8xf32>
    %c8_i32_104 = arith.constant 8 : i32
    %366 = vector.broadcast %c8_i32_104 : i32 to vector<2x8xi32>
    %367 = arith.select %365, %340, %366 : vector<2x8xi1>, vector<2x8xi32>
    %cst_105 = arith.constant dense<2147483647> : vector<2xi32>
    %368 = vector.multi_reduction <minsi>, %367, %cst_105 [1] : vector<2x8xi32> to vector<2xi32>
    %369 = vector.shape_cast %368 : vector<2xi32> to vector<2x1xi32>
    %370 = vector.broadcast %369 : vector<2x1xi32> to vector<2x8xi32>
    %371 = arith.cmpi eq, %340, %370 : vector<2x8xi32>
    %372 = arith.extui %371 : vector<2x8xi1> to vector<2x8xi32>
    %373 = arith.sitofp %372 : vector<2x8xi32> to vector<2x8xf32>
    %374 = vector.shape_cast %373 : vector<2x8xf32> to vector<2x8x1xf32>
    %375 = vector.broadcast %374 : vector<2x8x1xf32> to vector<2x8x2xf32>
    %376 = arith.mulf %375, %339 : vector<2x8x2xf32>
    %cst_106 = arith.constant dense<0.000000e+00> : vector<2x2xf32>
    %377 = vector.multi_reduction <add>, %376, %cst_106 [1] : vector<2x8x2xf32> to vector<2x2xf32>
    %378 = vector.shape_cast %377 : vector<2x2xf32> to vector<2x1x2xf32>
    %cst_107 = arith.constant 0.000000e+00 : f32
    %379 = vector.broadcast %cst_107 : f32 to vector<2x8xf32>
    %380 = arith.cmpf ogt, %373, %379 : vector<2x8xf32>
    %cst_108 = arith.constant -1.000000e+30 : f32
    %381 = vector.broadcast %cst_108 : f32 to vector<2x8xf32>
    %382 = arith.select %380, %381, %361 : vector<2x8xi1>, vector<2x8xf32>
    %cst_109 = arith.constant dense<0xFF800000> : vector<2xf32>
    %383 = vector.multi_reduction <maximumf>, %382, %cst_109 [1] : vector<2x8xf32> to vector<2xf32>
    %384 = vector.shape_cast %383 : vector<2xf32> to vector<2x1xf32>
    %385 = vector.broadcast %384 : vector<2x1xf32> to vector<2x8xf32>
    %386 = arith.cmpf oge, %382, %385 : vector<2x8xf32>
    %c8_i32_110 = arith.constant 8 : i32
    %387 = vector.broadcast %c8_i32_110 : i32 to vector<2x8xi32>
    %388 = arith.select %386, %340, %387 : vector<2x8xi1>, vector<2x8xi32>
    %cst_111 = arith.constant dense<2147483647> : vector<2xi32>
    %389 = vector.multi_reduction <minsi>, %388, %cst_111 [1] : vector<2x8xi32> to vector<2xi32>
    %390 = vector.shape_cast %389 : vector<2xi32> to vector<2x1xi32>
    %391 = vector.broadcast %390 : vector<2x1xi32> to vector<2x8xi32>
    %392 = arith.cmpi eq, %340, %391 : vector<2x8xi32>
    %393 = arith.extui %392 : vector<2x8xi1> to vector<2x8xi32>
    %394 = arith.sitofp %393 : vector<2x8xi32> to vector<2x8xf32>
    %395 = vector.shape_cast %394 : vector<2x8xf32> to vector<2x8x1xf32>
    %396 = vector.broadcast %395 : vector<2x8x1xf32> to vector<2x8x2xf32>
    %397 = arith.mulf %396, %339 : vector<2x8x2xf32>
    %cst_112 = arith.constant dense<0.000000e+00> : vector<2x2xf32>
    %398 = vector.multi_reduction <add>, %397, %cst_112 [1] : vector<2x8x2xf32> to vector<2x2xf32>
    %399 = vector.shape_cast %398 : vector<2x2xf32> to vector<2x1x2xf32>
    %cst_113 = arith.constant 0.000000e+00 : f32
    %400 = vector.broadcast %cst_113 : f32 to vector<2x8xf32>
    %401 = arith.cmpf ogt, %394, %400 : vector<2x8xf32>
    %cst_114 = arith.constant -1.000000e+30 : f32
    %402 = vector.broadcast %cst_114 : f32 to vector<2x8xf32>
    %403 = arith.select %401, %402, %382 : vector<2x8xi1>, vector<2x8xf32>
    %cst_115 = arith.constant dense<0xFF800000> : vector<2xf32>
    %404 = vector.multi_reduction <maximumf>, %403, %cst_115 [1] : vector<2x8xf32> to vector<2xf32>
    %405 = vector.shape_cast %404 : vector<2xf32> to vector<2x1xf32>
    %406 = vector.broadcast %405 : vector<2x1xf32> to vector<2x8xf32>
    %407 = arith.cmpf oge, %403, %406 : vector<2x8xf32>
    %c8_i32_116 = arith.constant 8 : i32
    %408 = vector.broadcast %c8_i32_116 : i32 to vector<2x8xi32>
    %409 = arith.select %407, %340, %408 : vector<2x8xi1>, vector<2x8xi32>
    %cst_117 = arith.constant dense<2147483647> : vector<2xi32>
    %410 = vector.multi_reduction <minsi>, %409, %cst_117 [1] : vector<2x8xi32> to vector<2xi32>
    %411 = vector.shape_cast %410 : vector<2xi32> to vector<2x1xi32>
    %412 = vector.broadcast %411 : vector<2x1xi32> to vector<2x8xi32>
    %413 = arith.cmpi eq, %340, %412 : vector<2x8xi32>
    %414 = arith.extui %413 : vector<2x8xi1> to vector<2x8xi32>
    %415 = arith.sitofp %414 : vector<2x8xi32> to vector<2x8xf32>
    %416 = vector.shape_cast %415 : vector<2x8xf32> to vector<2x8x1xf32>
    %417 = vector.broadcast %416 : vector<2x8x1xf32> to vector<2x8x2xf32>
    %418 = arith.mulf %417, %339 : vector<2x8x2xf32>
    %cst_118 = arith.constant dense<0.000000e+00> : vector<2x2xf32>
    %419 = vector.multi_reduction <add>, %418, %cst_118 [1] : vector<2x8x2xf32> to vector<2x2xf32>
    %420 = vector.shape_cast %419 : vector<2x2xf32> to vector<2x1x2xf32>
    %421 = tpu.concatenate %357, %378, %399, %420 in 1 : vector<2x1x2xf32>, vector<2x1x2xf32>, vector<2x1x2xf32>, vector<2x1x2xf32> -> vector<2x4x2xf32>
    %c544 = arith.constant 544 : index
    %c0_119 = arith.constant 0 : index
    %422 = vector.load %arg4[%c544, %c0_119] : memref<840x128xf32, #tpu.memory_space<vmem>>, vector<2x64xf32>
    %c552 = arith.constant 552 : index
    %c0_120 = arith.constant 0 : index
    %423 = vector.load %arg4[%c552, %c0_120] : memref<840x128xf32, #tpu.memory_space<vmem>>, vector<64x64xf32>
    %c616 = arith.constant 616 : index
    %c0_121 = arith.constant 0 : index
    %424 = vector.load %arg4[%c616, %c0_121] : memref<840x128xf32, #tpu.memory_space<vmem>>, vector<64x16xf32>
    %c680 = arith.constant 680 : index
    %c0_122 = arith.constant 0 : index
    %425 = vector.load %arg4[%c680, %c0_122] : memref<840x128xf32, #tpu.memory_space<vmem>>, vector<2x64xf32>
    %426 = vector.extract_strided_slice %425 {offsets = [0, 0], sizes = [1, 64], strides = [1, 1]} : vector<2x64xf32> to vector<1x64xf32>
    %427 = vector.extract_strided_slice %425 {offsets = [1, 0], sizes = [1, 16], strides = [1, 1]} : vector<2x64xf32> to vector<1x16xf32>
    %cst_123 = arith.constant dense<0.000000e+00> : vector<2x64xf32>
    %428 = tpu.matmul %302, %423, %cst_123 {dimension_numbers = #tpu.dot_dimension_numbers<[1], [0], [0], [1], [0, 0, 1, 1], [], []>} : vector<2x64xf32>, vector<64x64xf32>, vector<2x64xf32> -> vector<2x64xf32>
    %429 = vector.extract_strided_slice %421 {offsets = [0, 0, 0], sizes = [2, 4, 1], strides = [1, 1, 1]} : vector<2x4x2xf32> to vector<2x4x1xf32>
    %430 = vector.extract_strided_slice %422 {offsets = [0, 0], sizes = [1, 64], strides = [1, 1]} : vector<2x64xf32> to vector<1x64xf32>
    %431 = vector.shape_cast %430 : vector<1x64xf32> to vector<1x1x64xf32>
    %432 = vector.broadcast %429 : vector<2x4x1xf32> to vector<2x4x64xf32>
    %433 = vector.broadcast %431 : vector<1x1x64xf32> to vector<2x4x64xf32>
    %434 = arith.mulf %432, %433 : vector<2x4x64xf32>
    %435 = vector.extract_strided_slice %421 {offsets = [0, 0, 1], sizes = [2, 4, 1], strides = [1, 1, 1]} : vector<2x4x2xf32> to vector<2x4x1xf32>
    %436 = vector.extract_strided_slice %422 {offsets = [1, 0], sizes = [1, 64], strides = [1, 1]} : vector<2x64xf32> to vector<1x64xf32>
    %437 = vector.shape_cast %436 : vector<1x64xf32> to vector<1x1x64xf32>
    %438 = vector.broadcast %435 : vector<2x4x1xf32> to vector<2x4x64xf32>
    %439 = vector.broadcast %437 : vector<1x1x64xf32> to vector<2x4x64xf32>
    %440 = arith.mulf %438, %439 : vector<2x4x64xf32>
    %441 = arith.addf %434, %440 : vector<2x4x64xf32>
    %442 = vector.shape_cast %428 : vector<2x64xf32> to vector<2x1x64xf32>
    %443 = vector.broadcast %442 : vector<2x1x64xf32> to vector<2x4x64xf32>
    %444 = arith.addf %441, %443 : vector<2x4x64xf32>
    %445 = vector.shape_cast %426 : vector<1x64xf32> to vector<1x1x64xf32>
    %446 = vector.broadcast %445 : vector<1x1x64xf32> to vector<2x4x64xf32>
    %447 = arith.addf %444, %446 : vector<2x4x64xf32>
    %cst_124 = arith.constant 0.000000e+00 : f32
    %448 = vector.broadcast %cst_124 : f32 to vector<2x4x64xf32>
    %449 = arith.maximumf %447, %448 : vector<2x4x64xf32>
    %450 = vector.shape_cast %449 : vector<2x4x64xf32> to vector<8x64xf32>
    %cst_125 = arith.constant dense<0.000000e+00> : vector<8x16xf32>
    %451 = tpu.matmul %450, %424, %cst_125 {dimension_numbers = #tpu.dot_dimension_numbers<[1], [0], [0], [1], [0, 0, 1, 1], [], []>} : vector<8x64xf32>, vector<64x16xf32>, vector<8x16xf32> -> vector<8x16xf32>
    %452 = vector.broadcast %427 : vector<1x16xf32> to vector<8x16xf32>
    %453 = arith.addf %451, %452 : vector<8x16xf32>
    %454 = vector.shape_cast %453 : vector<8x16xf32> to vector<2x4x16xf32>
    %c688 = arith.constant 688 : index
    %c0_126 = arith.constant 0 : index
    %455 = vector.load %arg4[%c688, %c0_126] : memref<840x128xf32, #tpu.memory_space<vmem>>, vector<16x64xf32>
    %c704 = arith.constant 704 : index
    %c0_127 = arith.constant 0 : index
    %456 = vector.load %arg4[%c704, %c0_127] : memref<840x128xf32, #tpu.memory_space<vmem>>, vector<64x64xf32>
    %c768 = arith.constant 768 : index
    %c0_128 = arith.constant 0 : index
    %457 = vector.load %arg4[%c768, %c0_128] : memref<840x128xf32, #tpu.memory_space<vmem>>, vector<64x1xf32>
    %c832 = arith.constant 832 : index
    %c0_129 = arith.constant 0 : index
    %458 = vector.load %arg4[%c832, %c0_129] : memref<840x128xf32, #tpu.memory_space<vmem>>, vector<2x64xf32>
    %459 = vector.extract_strided_slice %458 {offsets = [0, 0], sizes = [1, 64], strides = [1, 1]} : vector<2x64xf32> to vector<1x64xf32>
    %460 = vector.extract_strided_slice %458 {offsets = [1, 0], sizes = [1, 1], strides = [1, 1]} : vector<2x64xf32> to vector<1x1xf32>
    %cst_130 = arith.constant dense<0.000000e+00> : vector<2x64xf32>
    %461 = tpu.matmul %302, %456, %cst_130 {dimension_numbers = #tpu.dot_dimension_numbers<[1], [0], [0], [1], [0, 0, 1, 1], [], []>} : vector<2x64xf32>, vector<64x64xf32>, vector<2x64xf32> -> vector<2x64xf32>
    %462 = vector.shape_cast %454 : vector<2x4x16xf32> to vector<8x16xf32>
    %cst_131 = arith.constant dense<0.000000e+00> : vector<8x64xf32>
    %463 = tpu.matmul %462, %455, %cst_131 {dimension_numbers = #tpu.dot_dimension_numbers<[1], [0], [0], [1], [0, 0, 1, 1], [], []>} : vector<8x16xf32>, vector<16x64xf32>, vector<8x64xf32> -> vector<8x64xf32>
    %464 = vector.shape_cast %463 : vector<8x64xf32> to vector<2x4x64xf32>
    %465 = vector.shape_cast %461 : vector<2x64xf32> to vector<2x1x64xf32>
    %466 = vector.broadcast %465 : vector<2x1x64xf32> to vector<2x4x64xf32>
    %467 = arith.addf %464, %466 : vector<2x4x64xf32>
    %468 = vector.shape_cast %459 : vector<1x64xf32> to vector<1x1x64xf32>
    %469 = vector.broadcast %468 : vector<1x1x64xf32> to vector<2x4x64xf32>
    %470 = arith.addf %467, %469 : vector<2x4x64xf32>
    %cst_132 = arith.constant 0.000000e+00 : f32
    %471 = vector.broadcast %cst_132 : f32 to vector<2x4x64xf32>
    %472 = arith.maximumf %470, %471 : vector<2x4x64xf32>
    %473 = vector.shape_cast %472 : vector<2x4x64xf32> to vector<8x64xf32>
    %cst_133 = arith.constant dense<0.000000e+00> : vector<8x1xf32>
    %474 = tpu.matmul %473, %457, %cst_133 {dimension_numbers = #tpu.dot_dimension_numbers<[1], [0], [0], [1], [0, 0, 1, 1], [], []>} : vector<8x64xf32>, vector<64x1xf32>, vector<8x1xf32> -> vector<8x1xf32>
    %475 = vector.broadcast %460 : vector<1x1xf32> to vector<8x1xf32>
    %476 = arith.addf %474, %475 : vector<8x1xf32>
    %477 = vector.shape_cast %476 : vector<8x1xf32> to vector<2x4x1xf32>
    %478 = vector.shape_cast %477 : vector<2x4x1xf32> to vector<2x4xf32>
    %cst_134 = arith.constant dense<0xFF800000> : vector<2xf32>
    %479 = vector.multi_reduction <maximumf>, %478, %cst_134 [1] : vector<2x4xf32> to vector<2xf32>
    %480 = vector.shape_cast %479 : vector<2xf32> to vector<2x1xf32>
    %481 = vector.broadcast %480 : vector<2x1xf32> to vector<2x4xf32>
    %482 = arith.subf %478, %481 : vector<2x4xf32>
    %483 = math.exp %482 : vector<2x4xf32>
    %cst_135 = arith.constant dense<0.000000e+00> : vector<2xf32>
    %484 = vector.multi_reduction <add>, %483, %cst_135 [1] : vector<2x4xf32> to vector<2xf32>
    %485 = vector.shape_cast %484 : vector<2xf32> to vector<2x1xf32>
    %486 = tpu.reciprocal %485 {approx = true} : vector<2x1xf32> -> vector<2x1xf32>
    %487 = vector.broadcast %486 : vector<2x1xf32> to vector<2x4xf32>
    %488 = arith.mulf %483, %487 : vector<2x4xf32>
    %489 = tpu.iota {dimensions = array<i32: 1>} : vector<2x4xi32>
    %cst_136 = arith.constant dense<0xFF800000> : vector<2xf32>
    %490 = vector.multi_reduction <maximumf>, %488, %cst_136 [1] : vector<2x4xf32> to vector<2xf32>
    %491 = vector.shape_cast %490 : vector<2xf32> to vector<2x1xf32>
    %492 = vector.broadcast %491 : vector<2x1xf32> to vector<2x4xf32>
    %493 = arith.cmpf oge, %488, %492 : vector<2x4xf32>
    %c4_i32 = arith.constant 4 : i32
    %494 = vector.broadcast %c4_i32 : i32 to vector<2x4xi32>
    %495 = arith.select %493, %489, %494 : vector<2x4xi1>, vector<2x4xi32>
    %cst_137 = arith.constant dense<2147483647> : vector<2xi32>
    %496 = vector.multi_reduction <minsi>, %495, %cst_137 [1] : vector<2x4xi32> to vector<2xi32>
    %497 = vector.shape_cast %496 : vector<2xi32> to vector<2x1xi32>
    %498 = vector.broadcast %497 : vector<2x1xi32> to vector<2x4xi32>
    %499 = arith.cmpi eq, %489, %498 : vector<2x4xi32>
    %500 = arith.extui %499 : vector<2x4xi1> to vector<2x4xi32>
    %501 = arith.sitofp %500 : vector<2x4xi32> to vector<2x4xf32>
    %502 = vector.shape_cast %501 : vector<2x4xf32> to vector<2x4x1xf32>
    %503 = vector.broadcast %502 : vector<2x4x1xf32> to vector<2x4x16xf32>
    %504 = arith.mulf %503, %454 : vector<2x4x16xf32>
    %cst_138 = arith.constant dense<0.000000e+00> : vector<2x16xf32>
    %505 = vector.multi_reduction <add>, %504, %cst_138 [1] : vector<2x4x16xf32> to vector<2x16xf32>
    %506 = vector.shape_cast %505 : vector<2x16xf32> to vector<2x1x16xf32>
    %cst_139 = arith.constant 0.000000e+00 : f32
    %507 = vector.broadcast %cst_139 : f32 to vector<2x4xf32>
    %508 = arith.cmpf ogt, %501, %507 : vector<2x4xf32>
    %cst_140 = arith.constant -1.000000e+30 : f32
    %509 = vector.broadcast %cst_140 : f32 to vector<2x4xf32>
    %510 = arith.select %508, %509, %488 : vector<2x4xi1>, vector<2x4xf32>
    %cst_141 = arith.constant dense<0xFF800000> : vector<2xf32>
    %511 = vector.multi_reduction <maximumf>, %510, %cst_141 [1] : vector<2x4xf32> to vector<2xf32>
    %512 = vector.shape_cast %511 : vector<2xf32> to vector<2x1xf32>
    %513 = vector.broadcast %512 : vector<2x1xf32> to vector<2x4xf32>
    %514 = arith.cmpf oge, %510, %513 : vector<2x4xf32>
    %c4_i32_142 = arith.constant 4 : i32
    %515 = vector.broadcast %c4_i32_142 : i32 to vector<2x4xi32>
    %516 = arith.select %514, %489, %515 : vector<2x4xi1>, vector<2x4xi32>
    %cst_143 = arith.constant dense<2147483647> : vector<2xi32>
    %517 = vector.multi_reduction <minsi>, %516, %cst_143 [1] : vector<2x4xi32> to vector<2xi32>
    %518 = vector.shape_cast %517 : vector<2xi32> to vector<2x1xi32>
    %519 = vector.broadcast %518 : vector<2x1xi32> to vector<2x4xi32>
    %520 = arith.cmpi eq, %489, %519 : vector<2x4xi32>
    %521 = arith.extui %520 : vector<2x4xi1> to vector<2x4xi32>
    %522 = arith.sitofp %521 : vector<2x4xi32> to vector<2x4xf32>
    %523 = vector.shape_cast %522 : vector<2x4xf32> to vector<2x4x1xf32>
    %524 = vector.broadcast %523 : vector<2x4x1xf32> to vector<2x4x16xf32>
    %525 = arith.mulf %524, %454 : vector<2x4x16xf32>
    %cst_144 = arith.constant dense<0.000000e+00> : vector<2x16xf32>
    %526 = vector.multi_reduction <add>, %525, %cst_144 [1] : vector<2x4x16xf32> to vector<2x16xf32>
    %527 = vector.shape_cast %526 : vector<2x16xf32> to vector<2x1x16xf32>
    %528 = tpu.concatenate %506, %527 in 1 : vector<2x1x16xf32>, vector<2x1x16xf32> -> vector<2x2x16xf32>
    %cst_145 = arith.constant 0.000000e+00 : f32
    %529 = vector.broadcast %cst_145 : f32 to vector<2x92xf32>
    %530 = vector.shape_cast %528 : vector<2x2x16xf32> to vector<2x32xf32>
    %531 = tpu.concatenate %530, %488, %529 in 1 : vector<2x32xf32>, vector<2x4xf32>, vector<2x92xf32> -> vector<2x128xf32>
    %532 = vector.shape_cast %531 : vector<2x128xf32> to vector<1x2x128xf32>
    %c0_146 = arith.constant 0 : index
    %c0_147 = arith.constant 0 : index
    %c0_148 = arith.constant 0 : index
    %533 = vector.load %arg5[%c0_146, %c0_147, %c0_148] : memref<1x2x128xf32, #tpu.memory_space<vmem>>, vector<1x2x128xf32>
    tpu.vector_store %arg5[%c0_146, %c0_147, %c0_148], %532 {strides = array<i32>} : memref<1x2x128xf32, #tpu.memory_space<vmem>>, vector<1x2x128xf32>,
    return
  }
  func.func @transform_0(%arg0: i32) -> (i32, i32, i32) {
    %c0_i32 = arith.constant 0 : i32
    %c0_i32_0 = arith.constant 0 : i32
    %c0_i32_1 = arith.constant 0 : i32
    return %arg0, %c0_i32, %c0_i32_0 : i32, i32, i32
  }
  func.func @transform_1(%arg0: i32) -> (i32, i32, i32, i32) {
    %c0_i32 = arith.constant 0 : i32
    %c0_i32_0 = arith.constant 0 : i32
    %c0_i32_1 = arith.constant 0 : i32
    %c0_i32_2 = arith.constant 0 : i32
    return %arg0, %c0_i32, %c0_i32_0, %c0_i32_1 : i32, i32, i32, i32
  }
  func.func @transform_2(%arg0: i32) -> (i32, i32, i32) {
    %c0_i32 = arith.constant 0 : i32
    %c0_i32_0 = arith.constant 0 : i32
    %c0_i32_1 = arith.constant 0 : i32
    return %arg0, %c0_i32, %c0_i32_0 : i32, i32, i32
  }
  func.func @transform_3(%arg0: i32) -> (i32, i32) {
    %c0_i32 = arith.constant 0 : i32
    %c0_i32_0 = arith.constant 0 : i32
    %c0_i32_1 = arith.constant 0 : i32
    return %c0_i32, %c0_i32_0 : i32, i32
  }
  func.func @transform_4(%arg0: i32) -> (i32, i32, i32) {
    %c0_i32 = arith.constant 0 : i32
    %c0_i32_0 = arith.constant 0 : i32
    %c0_i32_1 = arith.constant 0 : i32
    return %arg0, %c0_i32, %c0_i32_0 : i32, i32, i32
  }
}

</mosaic_0001>

<llo_original>
// kernel: _tnt_forward_impl.1
$region0: #{_tnt_forward_impl.1}
  #allocation0 [shape = 'u32[]', space=smem, size = 0x4, offset = 0x4, fixed_abs, tag = 'smem constant byte address 0x4 - core index']
  #allocation1 [shape = 'u32[144,128]{1,0:T(1,128)}', space=vmem, size = 0x12000, scoped, tag = 'internal scratch']
  %s0 = inlined_call_operand.vmem [shape: f32[2,16,6], index: 0, kind: input, shape index: {}]
  %s1 = inlined_call_operand.vmem [shape: f32[2,4,24,8], index: 1, kind: input, shape index: {}]
  %s2 = inlined_call_operand.vmem [shape: f32[2,8,2], index: 2, kind: input, shape index: {}]
  %s3 = inlined_call_operand.hbm [shape: f32[840,128], index: 3, kind: input, shape index: {}]
  %s4 = inlined_call_operand.vmem [shape: f32[1,2,128], index: 4, kind: output, shape index: {}]
  %s5 = sld [smem:[#allocation0]]
  $region30: #{_tnt_forward_impl.1} parent=0
    _
  %s7 = ssub.s32 1, %s5
  %s8 = scalar_select 0, %s7, %s5
  $region1: #{_tnt_forward_impl.1} parent=0
    #allocation2 [shape = 'u8[430080]{0}', space=vmem, size = 0x69000, scoped, tag = 'input window, operand 3, single buffered']
    #allocation3 [shape = 's32[1]{0}', space=sflag, size = 0x4, scoped, tag = 'scoped memory for _tnt_forward_impl.1']
    %9 = vsyncpa [#allocation3], 0
    // Predicated region
    $region2: #{_tnt_forward_impl.1} parent=1 // pred_check
      _
    $region3: #{_tnt_forward_impl.1} parent=1 // pred_check_branch
      %11 = sbr.rel (0) target = $region5
    $region4: #{_tnt_forward_impl.1} parent=1 // pred_region
      _
    $region5: #{_tnt_forward_impl.1} parent=1 // pred_fallthru
      _
    // Predicated region
    $region6: #{_tnt_forward_impl.1} parent=1 // pred_check
      _
    $region7: #{_tnt_forward_impl.1} parent=1 // pred_check_branch
      %13 = sbr.rel (0) target = $region9
    $region8: #{_tnt_forward_impl.1} parent=1 // pred_region
      _
    $region9: #{_tnt_forward_impl.1} parent=1 // pred_fallthru
      _
    // Predicated region
    $region10: #{_tnt_forward_impl.1} parent=1 // pred_check
      _
    $region11: #{_tnt_forward_impl.1} parent=1 // pred_check_branch
      %15 = sbr.rel (0) target = $region13
    $region12: #{_tnt_forward_impl.1} parent=1 // pred_region
      _
    $region13: #{_tnt_forward_impl.1} parent=1 // pred_fallthru
      _
    // Predicated region
    $region14: #{_tnt_forward_impl.1} parent=1 // pred_check
      _
    $region15: #{_tnt_forward_impl.1} parent=1 // pred_check_branch
      %17 = sbr.rel (0) target = $region17
    $region16: #{_tnt_forward_impl.1} parent=1 // pred_region
      %s19 = ssub.s32 13440, 13440
      %20 = vsyncadd [#allocation3], %s19
      %s21 = sshll.u32 [#allocation2], 4
      %s22 = int_to_ptr.vmem [resolvable:$true] %s21
      %27 = dma.hbm_to_vmem [thread:$0]  %s3, 13440, %s22, [#allocation3], 128, 128, 8
    $region17: #{_tnt_forward_impl.1} parent=1 // pred_fallthru
      _
    // Predicated region
    $region18: #{_tnt_forward_impl.1} parent=1 // pred_check
      _
    $region19: #{_tnt_forward_impl.1} parent=1 // pred_check_branch
      %29 = sbr.rel (0) target = $region21
    $region20: #{_tnt_forward_impl.1} parent=1 // pred_region
      %30 = dma.done [#allocation3], 13440
    $region21: #{_tnt_forward_impl.1} parent=1 // pred_fallthru
      _
    %v31 = vld [vmem:[%s0] sm:$0xff]
    %v32 = vld [vmem:[%s0 + $0x10] sm:$0xff]
    %v33 = vld [vmem:[%s1] sm:$0xff]
    %v34 = vld [vmem:[%s1 + $0x8] sm:$0xff]
    %v35 = vld [vmem:[%s1 + $0x10] sm:$0xff]
    %v36 = vld [vmem:[%s1 + $0x18] sm:$0xff]
    %v37 = vld [vmem:[%s1 + $0x20] sm:$0xff]
    %v38 = vld [vmem:[%s1 + $0x28] sm:$0xff]
    %v39 = vld [vmem:[%s1 + $0x30] sm:$0xff]
    %v40 = vld [vmem:[%s1 + $0x38] sm:$0xff]
    %v41 = vld [vmem:[%s1 + $0x40] sm:$0xff]
    %v42 = vld [vmem:[%s1 + $0x48] sm:$0xff]
    %v43 = vld [vmem:[%s1 + $0x50] sm:$0xff]
    %v44 = vld [vmem:[%s1 + $0x58] sm:$0xff]
    %v45 = vld [vmem:[%s1 + $0x60] sm:$0xff]
    %v46 = vld [vmem:[%s1 + $0x68] sm:$0xff]
    %v47 = vld [vmem:[%s1 + $0x70] sm:$0xff]
    %v48 = vld [vmem:[%s1 + $0x78] sm:$0xff]
    %v49 = vld [vmem:[%s1 + $0x80] sm:$0xff]
    %v50 = vld [vmem:[%s1 + $0x88] sm:$0xff]
    %v51 = vld [vmem:[%s1 + $0x90] sm:$0xff]
    %v52 = vld [vmem:[%s1 + $0x98] sm:$0xff]
    %v53 = vld [vmem:[%s1 + $0xa0] sm:$0xff]
    %v54 = vld [vmem:[%s1 + $0xa8] sm:$0xff]
    %v55 = vld [vmem:[%s1 + $0xb0] sm:$0xff]
    %v56 = vld [vmem:[%s1 + $0xb8] sm:$0xff]
    %v57 = vld [vmem:[%s2] sm:$0xff]
    %v58 = vld [vmem:[%s2 + $0x8] sm:$0xff]
    %v59 = vld [vmem:[#allocation2 + $0x88] sm:$0xff]
    %v60 = vld [vmem:[#allocation2 + $0x90] sm:$0x1]
    %v61 = vld [vmem:[#allocation2] sm:$0x3f]
    %v62 = vlaneseq
    %v63 = vshrl.u32 %v62, 7
    %v64 = vsub.s32 0, %v63
    %v65 = vrot.slane %v59, %v64
    %vm66 = vcmask 48128
    %v68 = vsel %vm66, %v31, 0
    %v71 = vsel %vm66, %v32, 0
    %vm73 = vcmask 1045504
    %v75 = vsel %vm73, %v61, 0
    %77 = vmatprep.subr.mxu0 0.0
    %78 = vmatpush1.msra.mxu0 0.0
    %79 = vmatprep.subr.mxu0 0.0
    %80 = vmatpush1.msra.mxu0 0.0
    %81 = vmatprep.subr.mxu0 0.0
    %82 = vmatpush1.msra.mxu0 0.0
    %83 = vmatprep.subr.mxu0 0.0
    %84 = vmatpush1.msra.mxu0 0.0
    %85 = vmatprep.subr.mxu0 0.0
    %86 = vmatpush1.msra.mxu0 0.0
    %87 = vmatprep.subr.mxu0 0.0
    %88 = vmatpush1.msra.mxu0 0.0
    %89 = vmatprep.subr.mxu0 0.0
    %90 = vmatpush1.msra.mxu0 0.0
    %91 = vmatprep.subr.mxu0 0.0
    %92 = vmatpush1.msra.mxu0 0.0
    %93 = vmatprep.subr.mxu0 0.0
    %94 = vmatpush1.msra.mxu0 0.0
    %95 = vmatprep.subr.mxu0 0.0
    %96 = vmatpush1.msra.mxu0 0.0
    %97 = vmatprep.subr.mxu0 0.0
    %98 = vmatpush1.msra.mxu0 0.0
    %99 = vmatprep.subr.mxu0 0.0
    %100 = vmatpush1.msra.mxu0 0.0
    %101 = vmatprep.subr.mxu0 0.0
    %102 = vmatpush1.msra.mxu0 0.0
    %103 = vmatprep.subr.mxu0 0.0
    %104 = vmatpush1.msra.mxu0 0.0
    %105 = vmatprep.subr.mxu0 0.0
    %106 = vmatpush1.msra.mxu0 0.0
    %107 = vmatprep.subr.mxu0 0.0
    %108 = vmatpush1.msra.mxu0 %v75
    %109 = vmatprep.subr.mxu0 0.0
    %110 = vmatpush2.msra.mxu0 0.0
    %111 = vmatprep.subr.mxu0 0.0
    %112 = vmatpush2.msra.mxu0 0.0
    %113 = vmatprep.subr.mxu0 0.0
    %114 = vmatpush2.msra.mxu0 0.0
    %115 = vmatprep.subr.mxu0 0.0
    %116 = vmatpush2.msra.mxu0 0.0
    %117 = vmatprep.subr.mxu0 0.0
    %118 = vmatpush2.msra.mxu0 0.0
    %119 = vmatprep.subr.mxu0 0.0
    %120 = vmatpush2.msra.mxu0 0.0
    %121 = vmatprep.subr.mxu0 0.0
    %122 = vmatpush2.msra.mxu0 0.0
    %123 = vmatprep.subr.mxu0 0.0
    %124 = vmatpush2.msra.mxu0 0.0
    %125 = vmatprep.subr.mxu0 0.0
    %126 = vmatpush2.msra.mxu0 0.0
    %127 = vmatprep.subr.mxu0 0.0
    %128 = vmatpush2.msra.mxu0 0.0
    %129 = vmatprep.subr.mxu0 0.0
    %130 = vmatpush2.msra.mxu0 0.0
    %131 = vmatprep.subr.mxu0 0.0
    %132 = vmatpush2.msra.mxu0 0.0
    %133 = vmatprep.subr.mxu0 0.0
    %134 = vmatpush2.msra.mxu0 0.0
    %135 = vmatprep.subr.mxu0 0.0
    %136 = vmatpush2.msra.mxu0 0.0
    %137 = vmatprep.subr.mxu0 0.0
    %138 = vmatpush2.msra.mxu0 0.0
    %139 = vmatprep.subr.mxu0 0.0
    %140 = vmatpush2.msra.mxu0 0.0
    %141 = vmatprep.mubr.f32.mxu0 0.0
    %142 = vmatmul.mubr.f32.gmra.mxu0 %v68
    %v143 = vpop.f32.mrf.mxu0
    %v144 = vadd.f32 %v65, %v143
    %v145 = vpop.f32.mrf.mxu0
    %146 = vmatprep.mubr.f32.mxu0 0.0
    %147 = vmatmul.mubr.f32.gmra.mxu0 %v71
    %v148 = vpop.f32.mrf.mxu0
    %v149 = vadd.f32 %v65, %v148
    %v150 = vpop.f32.mrf.mxu0
    %151 = vdwg.mxu0
    %vm152 = vcmask 261120
    %v153 = vsel %vm152, %v144, 0.0
    %154 = vadd.xlane.f32.xlu0 %v153
    %v155 = vpop.xlane.xlu0 %154
    %v156 = vsel %vm152, %v149, 0.0
    %157 = vadd.xlane.f32.xlu0 %v156
    %v158 = vpop.xlane.xlu0 %157
    %v159 = vmul.f32 %v155, 0.03125
    %v160 = vmul.f32 %v158, 0.03125
    %v161 = vmul.f32 %v144, %v144
    %v162 = vmul.f32 %v149, %v149
    %v163 = vsel %vm152, %v161, 0.0
    %164 = vadd.xlane.f32.xlu0 %v163
    %v165 = vpop.xlane.xlu0 %164
    %v166 = vsel %vm152, %v162, 0.0
    %167 = vadd.xlane.f32.xlu0 %v166
    %v168 = vpop.xlane.xlu0 %167
    %v169 = vmul.f32 %v165, 0.03125
    %v170 = vmul.f32 %v168, 0.03125
    %v171 = vmul.f32 %v159, %v159
    %v172 = vmul.f32 %v160, %v160
    %v173 = vsub.f32 %v169, %v171
    %v174 = vsub.f32 %v170, %v172
    %v175 = vsub.f32 %v144, %v159
    %v176 = vsub.f32 %v149, %v160
    %v177 = vadd.f32 %v173, 1e-05
    %v178 = vadd.f32 %v174, 1e-05
    %v179 = vrsqrt.pop %v177
    %v180 = vrsqrt.pop %v178
    %v181 = vmul.f32 %v175, %v179
    %v182 = vmul.f32 %v176, %v180
    %v183 = vlaneseq
    %v184 = vshrl.u32 %v183, 7
    %v185 = vsub.s32 1, %v184
    %v186 = vrot.slane %v59, %v185
    %v187 = vmul.f32 %v181, %v186
    %v188 = vmul.f32 %v182, %v186
    %v189 = vlaneseq
    %v190 = vshrl.u32 %v189, 7
    %v191 = vsub.s32 2, %v190
    %v192 = vrot.slane %v59, %v191
    %v193 = vadd.f32 %v187, %v192
    %v194 = vadd.f32 %v188, %v192
    %v195 = vmax.f32 %v193, 0.0
    %v196 = vmax.f32 %v194, 0.0
    %v197 = vsel %vm152, %v195, -inf
    %v198 = vrot.slane %v197, 4
    %v199 = vmax.f32 %v197, %v198
    %v200 = vrot.slane %v199, 2
    %v201 = vmax.f32 %v199, %v200
    %v202 = vrot.slane %v201, 1
    %v203 = vmax.f32 %v201, %v202
    %v204 = vsel %vm152, %v196, -inf
    %v205 = vrot.slane %v204, 4
    %v206 = vmax.f32 %v204, %v205
    %v207 = vrot.slane %v206, 2
    %v208 = vmax.f32 %v206, %v207
    %v209 = vrot.slane %v208, 1
    %v210 = vmax.f32 %v208, %v209
    %v211 = vld [vmem:[#allocation2 + $0x8] sm:$0xff]
    %v212 = vld [vmem:[#allocation2 + $0x10] sm:$0xff]
    %v213 = vld [vmem:[#allocation2 + $0x18] sm:$0xff]
    %v214 = vld [vmem:[#allocation2 + $0x20] sm:$0xff]
    %v215 = vld [vmem:[#allocation2 + $0x28] sm:$0xff]
    %v216 = vld [vmem:[#allocation2 + $0x30] sm:$0xff]
    %v217 = vld [vmem:[#allocation2 + $0x38] sm:$0xff]
    %v218 = vld [vmem:[#allocation2 + $0x40] sm:$0xff]
    %v220 = vsel %vm152, %v195, 0
    %v223 = vsel %vm152, %v196, 0
    %225 = vmatprep.subr.mxu0 0.0
    %226 = vmatpush1.msra.mxu0 0.0
    %227 = vmatprep.subr.mxu0 0.0
    %228 = vmatpush1.msra.mxu0 0.0
    %229 = vmatprep.subr.mxu0 0.0
    %230 = vmatpush1.msra.mxu0 0.0
    %231 = vmatprep.subr.mxu0 0.0
    %232 = vmatpush1.msra.mxu0 0.0
    %233 = vmatprep.subr.mxu0 0.0
    %234 = vmatpush1.msra.mxu0 0.0
    %235 = vmatprep.subr.mxu0 0.0
    %236 = vmatpush1.msra.mxu0 0.0
    %237 = vmatprep.subr.mxu0 0.0
    %238 = vmatpush1.msra.mxu0 0.0
    %239 = vmatprep.subr.mxu0 0.0
    %240 = vmatpush1.msra.mxu0 0.0
    %241 = vmatprep.subr.mxu0 0.0
    %242 = vmatpush1.msra.mxu0 0.0
    %243 = vmatprep.subr.mxu0 0.0
    %244 = vmatpush1.msra.mxu0 0.0
    %245 = vmatprep.subr.mxu0 0.0
    %246 = vmatpush1.msra.mxu0 0.0
    %247 = vmatprep.subr.mxu0 0.0
    %248 = vmatpush1.msra.mxu0 0.0
    %249 = vmatprep.subr.mxu0 0.0
    %250 = vmatpush1.msra.mxu0 %v214
    %251 = vmatprep.subr.mxu0 0.0
    %252 = vmatpush1.msra.mxu0 %v213
    %253 = vmatprep.subr.mxu0 0.0
    %254 = vmatpush1.msra.mxu0 %v212
    %255 = vmatprep.subr.mxu0 0.0
    %256 = vmatpush1.msra.mxu0 %v211
    %257 = vmatprep.subr.mxu0 0.0
    %258 = vmatpush2.msra.mxu0 0.0
    %259 = vmatprep.subr.mxu0 0.0
    %260 = vmatpush2.msra.mxu0 0.0
    %261 = vmatprep.subr.mxu0 0.0
    %262 = vmatpush2.msra.mxu0 0.0
    %263 = vmatprep.subr.mxu0 0.0
    %264 = vmatpush2.msra.mxu0 0.0
    %265 = vmatprep.subr.mxu0 0.0
    %266 = vmatpush2.msra.mxu0 0.0
    %267 = vmatprep.subr.mxu0 0.0
    %268 = vmatpush2.msra.mxu0 0.0
    %269 = vmatprep.subr.mxu0 0.0
    %270 = vmatpush2.msra.mxu0 0.0
    %271 = vmatprep.subr.mxu0 0.0
    %272 = vmatpush2.msra.mxu0 0.0
    %273 = vmatprep.subr.mxu0 0.0
    %274 = vmatpush2.msra.mxu0 0.0
    %275 = vmatprep.subr.mxu0 0.0
    %276 = vmatpush2.msra.mxu0 0.0
    %277 = vmatprep.subr.mxu0 0.0
    %278 = vmatpush2.msra.mxu0 0.0
    %279 = vmatprep.subr.mxu0 0.0
    %280 = vmatpush2.msra.mxu0 0.0
    %281 = vmatprep.subr.mxu0 0.0
    %282 = vmatpush2.msra.mxu0 0.0
    %283 = vmatprep.subr.mxu0 0.0
    %284 = vmatpush2.msra.mxu0 0.0
    %285 = vmatprep.subr.mxu0 0.0
    %286 = vmatpush2.msra.mxu0 0.0
    %287 = vmatprep.subr.mxu0 0.0
    %288 = vmatpush2.msra.mxu0 0.0
    %289 = vmatprep.mubr.f32.mxu0 0.0
    %290 = vmatmul.mubr.f32.gmra.mxu0 %v220
    %v291 = vpop.f32.mrf.mxu0
    %v292 = vadd.f32 0.0, %v291
    %v293 = vpop.f32.mrf.mxu0
    %294 = vmatprep.mubr.f32.mxu0 0.0
    %295 = vmatmul.mubr.f32.gmra.mxu0 %v223
    %v296 = vpop.f32.mrf.mxu0
    %v297 = vadd.f32 0.0, %v296
    %v298 = vpop.f32.mrf.mxu0
    %299 = vdwg.mxu0
    %vm302 = vcmask 1041409
    %v303 = vsel %vm302, %v210, %v203
    %v304 = vsel %vm152, %v303, 0
    %306 = vmatprep.subr.mxu0 0.0
    %307 = vmatpush1.msra.mxu0 0.0
    %308 = vmatprep.subr.mxu0 0.0
    %309 = vmatpush1.msra.mxu0 0.0
    %310 = vmatprep.subr.mxu0 0.0
    %311 = vmatpush1.msra.mxu0 0.0
    %312 = vmatprep.subr.mxu0 0.0
    %313 = vmatpush1.msra.mxu0 0.0
    %314 = vmatprep.subr.mxu0 0.0
    %315 = vmatpush1.msra.mxu0 0.0
    %316 = vmatprep.subr.mxu0 0.0
    %317 = vmatpush1.msra.mxu0 0.0
    %318 = vmatprep.subr.mxu0 0.0
    %319 = vmatpush1.msra.mxu0 0.0
    %320 = vmatprep.subr.mxu0 0.0
    %321 = vmatpush1.msra.mxu0 0.0
    %322 = vmatprep.subr.mxu0 0.0
    %323 = vmatpush1.msra.mxu0 0.0
    %324 = vmatprep.subr.mxu0 0.0
    %325 = vmatpush1.msra.mxu0 0.0
    %326 = vmatprep.subr.mxu0 0.0
    %327 = vmatpush1.msra.mxu0 0.0
    %328 = vmatprep.subr.mxu0 0.0
    %329 = vmatpush1.msra.mxu0 0.0
    %330 = vmatprep.subr.mxu0 0.0
    %331 = vmatpush1.msra.mxu0 %v218
    %332 = vmatprep.subr.mxu0 0.0
    %333 = vmatpush1.msra.mxu0 %v217
    %334 = vmatprep.subr.mxu0 0.0
    %335 = vmatpush1.msra.mxu0 %v216
    %336 = vmatprep.subr.mxu0 0.0
    %337 = vmatpush1.msra.mxu0 %v215
    %338 = vmatprep.subr.mxu0 0.0
    %339 = vmatpush2.msra.mxu0 0.0
    %340 = vmatprep.subr.mxu0 0.0
    %341 = vmatpush2.msra.mxu0 0.0
    %342 = vmatprep.subr.mxu0 0.0
    %343 = vmatpush2.msra.mxu0 0.0
    %344 = vmatprep.subr.mxu0 0.0
    %345 = vmatpush2.msra.mxu0 0.0
    %346 = vmatprep.subr.mxu0 0.0
    %347 = vmatpush2.msra.mxu0 0.0
    %348 = vmatprep.subr.mxu0 0.0
    %349 = vmatpush2.msra.mxu0 0.0
    %350 = vmatprep.subr.mxu0 0.0
    %351 = vmatpush2.msra.mxu0 0.0
    %352 = vmatprep.subr.mxu0 0.0
    %353 = vmatpush2.msra.mxu0 0.0
    %354 = vmatprep.subr.mxu0 0.0
    %355 = vmatpush2.msra.mxu0 0.0
    %356 = vmatprep.subr.mxu0 0.0
    %357 = vmatpush2.msra.mxu0 0.0
    %358 = vmatprep.subr.mxu0 0.0
    %359 = vmatpush2.msra.mxu0 0.0
    %360 = vmatprep.subr.mxu0 0.0
    %361 = vmatpush2.msra.mxu0 0.0
    %362 = vmatprep.subr.mxu0 0.0
    %363 = vmatpush2.msra.mxu0 0.0
    %364 = vmatprep.subr.mxu0 0.0
    %365 = vmatpush2.msra.mxu0 0.0
    %366 = vmatprep.subr.mxu0 0.0
    %367 = vmatpush2.msra.mxu0 0.0
    %368 = vmatprep.subr.mxu0 0.0
    %369 = vmatpush2.msra.mxu0 0.0
    %370 = vmatprep.mubr.f32.mxu0 0.0
    %371 = vmatmul.mubr.f32.gmra.mxu0 %v304
    %v372 = vpop.f32.mrf.mxu0
    %v373 = vadd.f32 0.0, %v372
    %v374 = vpop.f32.mrf.mxu0
    %375 = vdwg.mxu0
    %v378 = vunpack.c.l.s4 1966171168
    %v379 = vunpack.c.0.s8 %v378
    %v380 = vlaneseq
    %v381 = vshrl.u32 %v380, 7
    %v382 = vsub.s32 %v379, %v381
    %v383 = vrot.slane %v373, %v382
    %v384 = vcombine.high %v383, %v383
    %v386 = vunpack.c.l.s4 1966171168
    %v387 = vunpack.c.0.s8 %v386
    %v388 = vlaneseq
    %v389 = vshrl.u32 %v388, 7
    %v390 = vsub.s32 %v387, %v389
    %v391 = vrot.slane %v383, %v390
    %v393 = vunpack.c.l.s4 1966171168
    %v394 = vunpack.c.0.s8 %v393
    %v395 = vlaneseq
    %v396 = vshrl.u32 %v395, 7
    %v397 = vsub.s32 %v394, %v396
    %v398 = vrot.slane %v384, %v397
    %v399 = vlaneseq
    %v400 = vshrl.u32 %v399, 7
    %v401 = vsub.s32 0, %v400
    %v402 = vrot.slane %v391, %v401
    %v403 = vlaneseq
    %v404 = vshrl.u32 %v403, 7
    %v405 = vsub.s32 0, %v404
    %v406 = vrot.slane %v398, %v405
    %v409 = vadd.f32 %v292, %v402
    %v410 = vadd.f32 %v297, %v406
    %v411 = vlaneseq
    %v412 = vshrl.u32 %v411, 7
    %v413 = vsub.s32 3, %v412
    %v414 = vrot.slane %v59, %v413
    %v415 = vadd.f32 %v409, %v414
    %v416 = vadd.f32 %v410, %v414
    %v417 = vsel %vm152, %v415, 0.0
    %418 = vadd.xlane.f32.xlu0 %v417
    %v419 = vpop.xlane.xlu0 %418
    %v420 = vsel %vm152, %v416, 0.0
    %421 = vadd.xlane.f32.xlu0 %v420
    %v422 = vpop.xlane.xlu0 %421
    %v423 = vmul.f32 %v419, 0.03125
    %v424 = vmul.f32 %v422, 0.03125
    %v425 = vmul.f32 %v415, %v415
    %v426 = vmul.f32 %v416, %v416
    %v427 = vsel %vm152, %v425, 0.0
    %428 = vadd.xlane.f32.xlu0 %v427
    %v429 = vpop.xlane.xlu0 %428
    %v430 = vsel %vm152, %v426, 0.0
    %431 = vadd.xlane.f32.xlu0 %v430
    %v432 = vpop.xlane.xlu0 %431
    %v433 = vmul.f32 %v429, 0.03125
    %v434 = vmul.f32 %v432, 0.03125
    %v435 = vmul.f32 %v423, %v423
    %v436 = vmul.f32 %v424, %v424
    %v437 = vsub.f32 %v433, %v435
    %v438 = vsub.f32 %v434, %v436
    %v439 = vsub.f32 %v415, %v423
    %v440 = vsub.f32 %v416, %v424
    %v441 = vadd.f32 %v437, 1e-05
    %v442 = vadd.f32 %v438, 1e-05
    %v443 = vrsqrt.pop %v441
    %v444 = vrsqrt.pop %v442
    %v445 = vmul.f32 %v439, %v443
    %v446 = vmul.f32 %v440, %v444
    %v447 = vlaneseq
    %v448 = vshrl.u32 %v447, 7
    %v449 = vsub.s32 4, %v448
    %v450 = vrot.slane %v59, %v449
    %v451 = vmul.f32 %v445, %v450
    %v452 = vmul.f32 %v446, %v450
    %v453 = vlaneseq
    %v454 = vshrl.u32 %v453, 7
    %v455 = vsub.s32 5, %v454
    %v456 = vrot.slane %v59, %v455
    %v457 = vadd.f32 %v451, %v456
    %v458 = vadd.f32 %v452, %v456
    %v459 = vmax.f32 %v457, 0.0
    %v460 = vmax.f32 %v458, 0.0
    %v461 = vsel %vm152, %v459, -inf
    %v462 = vrot.slane %v461, 4
    %v463 = vmax.f32 %v461, %v462
    %v464 = vrot.slane %v463, 2
    %v465 = vmax.f32 %v463, %v464
    %v466 = vrot.slane %v465, 1
    %v467 = vmax.f32 %v465, %v466
    %v468 = vsel %vm152, %v460, -inf
    %v469 = vrot.slane %v468, 4
    %v470 = vmax.f32 %v468, %v469
    %v471 = vrot.slane %v470, 2
    %v472 = vmax.f32 %v470, %v471
    %v473 = vrot.slane %v472, 1
    %v474 = vmax.f32 %v472, %v473
    %v475 = vld [vmem:[#allocation2 + $0x48] sm:$0xff]
    %v476 = vld [vmem:[#allocation2 + $0x50] sm:$0xff]
    %v477 = vld [vmem:[#allocation2 + $0x58] sm:$0xff]
    %v478 = vld [vmem:[#allocation2 + $0x60] sm:$0xff]
    %v479 = vld [vmem:[#allocation2 + $0x68] sm:$0xff]
    %v480 = vld [vmem:[#allocation2 + $0x70] sm:$0xff]
    %v481 = vld [vmem:[#allocation2 + $0x78] sm:$0xff]
    %v482 = vld [vmem:[#allocation2 + $0x80] sm:$0xff]
    %v484 = vsel %vm152, %v459, 0
    %v487 = vsel %vm152, %v460, 0
    %489 = vmatprep.subr.mxu0 0.0
    %490 = vmatpush1.msra.mxu0 0.0
    %491 = vmatprep.subr.mxu0 0.0
    %492 = vmatpush1.msra.mxu0 0.0
    %493 = vmatprep.subr.mxu0 0.0
    %494 = vmatpush1.msra.mxu0 0.0
    %495 = vmatprep.subr.mxu0 0.0
    %496 = vmatpush1.msra.mxu0 0.0
    %497 = vmatprep.subr.mxu0 0.0
    %498 = vmatpush1.msra.mxu0 0.0
    %499 = vmatprep.subr.mxu0 0.0
    %500 = vmatpush1.msra.mxu0 0.0
    %501 = vmatprep.subr.mxu0 0.0
    %502 = vmatpush1.msra.mxu0 0.0
    %503 = vmatprep.subr.mxu0 0.0
    %504 = vmatpush1.msra.mxu0 0.0
    %505 = vmatprep.subr.mxu0 0.0
    %506 = vmatpush1.msra.mxu0 0.0
    %507 = vmatprep.subr.mxu0 0.0
    %508 = vmatpush1.msra.mxu0 0.0
    %509 = vmatprep.subr.mxu0 0.0
    %510 = vmatpush1.msra.mxu0 0.0
    %511 = vmatprep.subr.mxu0 0.0
    %512 = vmatpush1.msra.mxu0 0.0
    %513 = vmatprep.subr.mxu0 0.0
    %514 = vmatpush1.msra.mxu0 %v478
    %515 = vmatprep.subr.mxu0 0.0
    %516 = vmatpush1.msra.mxu0 %v477
    %517 = vmatprep.subr.mxu0 0.0
    %518 = vmatpush1.msra.mxu0 %v476
    %519 = vmatprep.subr.mxu0 0.0
    %520 = vmatpush1.msra.mxu0 %v475
    %521 = vmatprep.subr.mxu0 0.0
    %522 = vmatpush2.msra.mxu0 0.0
    %523 = vmatprep.subr.mxu0 0.0
    %524 = vmatpush2.msra.mxu0 0.0
    %525 = vmatprep.subr.mxu0 0.0
    %526 = vmatpush2.msra.mxu0 0.0
    %527 = vmatprep.subr.mxu0 0.0
    %528 = vmatpush2.msra.mxu0 0.0
    %529 = vmatprep.subr.mxu0 0.0
    %530 = vmatpush2.msra.mxu0 0.0
    %531 = vmatprep.subr.mxu0 0.0
    %532 = vmatpush2.msra.mxu0 0.0
    %533 = vmatprep.subr.mxu0 0.0
    %534 = vmatpush2.msra.mxu0 0.0
    %535 = vmatprep.subr.mxu0 0.0
    %536 = vmatpush2.msra.mxu0 0.0
    %537 = vmatprep.subr.mxu0 0.0
    %538 = vmatpush2.msra.mxu0 0.0
    %539 = vmatprep.subr.mxu0 0.0
    %540 = vmatpush2.msra.mxu0 0.0
    %541 = vmatprep.subr.mxu0 0.0
    %542 = vmatpush2.msra.mxu0 0.0
    %543 = vmatprep.subr.mxu0 0.0
    %544 = vmatpush2.msra.mxu0 0.0
    %545 = vmatprep.subr.mxu0 0.0
    %546 = vmatpush2.msra.mxu0 0.0
    %547 = vmatprep.subr.mxu0 0.0
    %548 = vmatpush2.msra.mxu0 0.0
    %549 = vmatprep.subr.mxu0 0.0
    %550 = vmatpush2.msra.mxu0 0.0
    %551 = vmatprep.subr.mxu0 0.0
    %552 = vmatpush2.msra.mxu0 0.0
    %553 = vmatprep.mubr.f32.mxu0 0.0
    %554 = vmatmul.mubr.f32.gmra.mxu0 %v484
    %v555 = vpop.f32.mrf.mxu0
    %v556 = vadd.f32 0.0, %v555
    %v557 = vpop.f32.mrf.mxu0
    %558 = vmatprep.mubr.f32.mxu0 0.0
    %559 = vmatmul.mubr.f32.gmra.mxu0 %v487
    %v560 = vpop.f32.mrf.mxu0
    %v561 = vadd.f32 0.0, %v560
    %v562 = vpop.f32.mrf.mxu0
    %563 = vdwg.mxu0
    %v566 = vsel %vm302, %v474, %v467
    %v567 = vsel %vm152, %v566, 0
    %569 = vmatprep.subr.mxu0 0.0
    %570 = vmatpush1.msra.mxu0 0.0
    %571 = vmatprep.subr.mxu0 0.0
    %572 = vmatpush1.msra.mxu0 0.0
    %573 = vmatprep.subr.mxu0 0.0
    %574 = vmatpush1.msra.mxu0 0.0
    %575 = vmatprep.subr.mxu0 0.0
    %576 = vmatpush1.msra.mxu0 0.0
    %577 = vmatprep.subr.mxu0 0.0
    %578 = vmatpush1.msra.mxu0 0.0
    %579 = vmatprep.subr.mxu0 0.0
    %580 = vmatpush1.msra.mxu0 0.0
    %581 = vmatprep.subr.mxu0 0.0
    %582 = vmatpush1.msra.mxu0 0.0
    %583 = vmatprep.subr.mxu0 0.0
    %584 = vmatpush1.msra.mxu0 0.0
    %585 = vmatprep.subr.mxu0 0.0
    %586 = vmatpush1.msra.mxu0 0.0
    %587 = vmatprep.subr.mxu0 0.0
    %588 = vmatpush1.msra.mxu0 0.0
    %589 = vmatprep.subr.mxu0 0.0
    %590 = vmatpush1.msra.mxu0 0.0
    %591 = vmatprep.subr.mxu0 0.0
    %592 = vmatpush1.msra.mxu0 0.0
    %593 = vmatprep.subr.mxu0 0.0
    %594 = vmatpush1.msra.mxu0 %v482
    %595 = vmatprep.subr.mxu0 0.0
    %596 = vmatpush1.msra.mxu0 %v481
    %597 = vmatprep.subr.mxu0 0.0
    %598 = vmatpush1.msra.mxu0 %v480
    %599 = vmatprep.subr.mxu0 0.0
    %600 = vmatpush1.msra.mxu0 %v479
    %601 = vmatprep.subr.mxu0 0.0
    %602 = vmatpush2.msra.mxu0 0.0
    %603 = vmatprep.subr.mxu0 0.0
    %604 = vmatpush2.msra.mxu0 0.0
    %605 = vmatprep.subr.mxu0 0.0
    %606 = vmatpush2.msra.mxu0 0.0
    %607 = vmatprep.subr.mxu0 0.0
    %608 = vmatpush2.msra.mxu0 0.0
    %609 = vmatprep.subr.mxu0 0.0
    %610 = vmatpush2.msra.mxu0 0.0
    %611 = vmatprep.subr.mxu0 0.0
    %612 = vmatpush2.msra.mxu0 0.0
    %613 = vmatprep.subr.mxu0 0.0
    %614 = vmatpush2.msra.mxu0 0.0
    %615 = vmatprep.subr.mxu0 0.0
    %616 = vmatpush2.msra.mxu0 0.0
    %617 = vmatprep.subr.mxu0 0.0
    %618 = vmatpush2.msra.mxu0 0.0
    %619 = vmatprep.subr.mxu0 0.0
    %620 = vmatpush2.msra.mxu0 0.0
    %621 = vmatprep.subr.mxu0 0.0
    %622 = vmatpush2.msra.mxu0 0.0
    %623 = vmatprep.subr.mxu0 0.0
    %624 = vmatpush2.msra.mxu0 0.0
    %625 = vmatprep.subr.mxu0 0.0
    %626 = vmatpush2.msra.mxu0 0.0
    %627 = vmatprep.subr.mxu0 0.0
    %628 = vmatpush2.msra.mxu0 0.0
    %629 = vmatprep.subr.mxu0 0.0
    %630 = vmatpush2.msra.mxu0 0.0
    %631 = vmatprep.subr.mxu0 0.0
    %632 = vmatpush2.msra.mxu0 0.0
    %633 = vmatprep.mubr.f32.mxu0 0.0
    %634 = vmatmul.mubr.f32.gmra.mxu0 %v567
    %v635 = vpop.f32.mrf.mxu0
    %v636 = vadd.f32 0.0, %v635
    %v637 = vpop.f32.mrf.mxu0
    %638 = vdwg.mxu0
    %v641 = vunpack.c.l.s4 1966171168
    %v642 = vunpack.c.0.s8 %v641
    %v643 = vlaneseq
    %v644 = vshrl.u32 %v643, 7
    %v645 = vsub.s32 %v642, %v644
    %v646 = vrot.slane %v636, %v645
    %v647 = vcombine.high %v646, %v646
    %v649 = vunpack.c.l.s4 1966171168
    %v650 = vunpack.c.0.s8 %v649
    %v651 = vlaneseq
    %v652 = vshrl.u32 %v651, 7
    %v653 = vsub.s32 %v650, %v652
    %v654 = vrot.slane %v646, %v653
    %v656 = vunpack.c.l.s4 1966171168
    %v657 = vunpack.c.0.s8 %v656
    %v658 = vlaneseq
    %v659 = vshrl.u32 %v658, 7
    %v660 = vsub.s32 %v657, %v659
    %v661 = vrot.slane %v647, %v660
    %v662 = vlaneseq
    %v663 = vshrl.u32 %v662, 7
    %v664 = vsub.s32 0, %v663
    %v665 = vrot.slane %v654, %v664
    %v666 = vlaneseq
    %v667 = vshrl.u32 %v666, 7
    %v668 = vsub.s32 0, %v667
    %v669 = vrot.slane %v661, %v668
    %v672 = vadd.f32 %v556, %v665
    %v673 = vadd.f32 %v561, %v669
    %v674 = vlaneseq
    %v675 = vshrl.u32 %v674, 7
    %v676 = vsub.s32 6, %v675
    %v677 = vrot.slane %v59, %v676
    %v678 = vadd.f32 %v672, %v677
    %v679 = vadd.f32 %v673, %v677
    %v680 = vsel %vm152, %v678, 0.0
    %681 = vadd.xlane.f32.xlu0 %v680
    %v682 = vpop.xlane.xlu0 %681
    %v683 = vsel %vm152, %v679, 0.0
    %684 = vadd.xlane.f32.xlu0 %v683
    %v685 = vpop.xlane.xlu0 %684
    %v686 = vmul.f32 %v682, 0.03125
    %v687 = vmul.f32 %v685, 0.03125
    %v688 = vmul.f32 %v678, %v678
    %v689 = vmul.f32 %v679, %v679
    %v690 = vsel %vm152, %v688, 0.0
    %691 = vadd.xlane.f32.xlu0 %v690
    %v692 = vpop.xlane.xlu0 %691
    %v693 = vsel %vm152, %v689, 0.0
    %694 = vadd.xlane.f32.xlu0 %v693
    %v695 = vpop.xlane.xlu0 %694
    %v696 = vmul.f32 %v692, 0.03125
    %v697 = vmul.f32 %v695, 0.03125
    %v698 = vmul.f32 %v686, %v686
    %v699 = vmul.f32 %v687, %v687
    %v700 = vsub.f32 %v696, %v698
    %v701 = vsub.f32 %v697, %v699
    %v702 = vsub.f32 %v678, %v686
    %v703 = vsub.f32 %v679, %v687
    %v704 = vadd.f32 %v700, 1e-05
    %v705 = vadd.f32 %v701, 1e-05
    %v706 = vrsqrt.pop %v704
    %v707 = vrsqrt.pop %v705
    %v708 = vmul.f32 %v702, %v706
    %v709 = vmul.f32 %v703, %v707
    %v710 = vlaneseq
    %v711 = vshrl.u32 %v710, 7
    %v712 = vsub.s32 7, %v711
    %v713 = vrot.slane %v59, %v712
    %v714 = vmul.f32 %v708, %v713
    %v715 = vmul.f32 %v709, %v713
    %v716 = vlaneseq
    %v717 = vshrl.u32 %v716, 7
    %v718 = vsub.s32 0, %v717
    %v719 = vrot.slane %v60, %v718
    %v720 = vadd.f32 %v714, %v719
    %v721 = vadd.f32 %v715, %v719
    %v722 = vmax.f32 %v720, 0.0
    %v723 = vmax.f32 %v721, 0.0
    %v724 = vsel %vm152, %v722, -inf
    %v725 = vrot.slane %v724, 4
    %v726 = vmax.f32 %v724, %v725
    %v727 = vrot.slane %v726, 2
    %v728 = vmax.f32 %v726, %v727
    %v729 = vrot.slane %v728, 1
    %v730 = vmax.f32 %v728, %v729
    %v731 = vsel %vm152, %v723, -inf
    %v732 = vrot.slane %v731, 4
    %v733 = vmax.f32 %v731, %v732
    %v734 = vrot.slane %v733, 2
    %v735 = vmax.f32 %v733, %v734
    %v736 = vrot.slane %v735, 1
    %v737 = vmax.f32 %v735, %v736
    %v738 = vld [vmem:[#allocation2 + $0x120] sm:$0xff]
    %v739 = vld [vmem:[#allocation2 + $0x128] sm:$0x1]
    %v740 = vlaneseq
    %v741 = vshrl.u32 %v740, 7
    %v742 = vadd.s32 %v741, 8
    %v743 = vadd.s32 %v741, 16
    %vm744 = vcmp.lt.s32.totalorder %v741, 18
    %vm745 = vcmp.lt.s32.totalorder %v742, 18
    %vm746 = vcmp.lt.s32.totalorder %v743, 18
    %v747 = vld [vmem:[#allocation2 + $0x98] sm:$0xff]
    %v748 = vlaneseq
    %v749 = vshrl.u32 %v748, 7
    %v750 = vsub.s32 0, %v749
    %v751 = vrot.slane %v738, %v750
    %vm752 = vcmask 64512
    %v754 = vsel %vm752, %v33, 0
    %v757 = vsel %vm752, %v34, 0
    %v760 = vsel %vm752, %v35, 0
    %v763 = vsel %vm752, %v36, 0
    %v766 = vsel %vm752, %v37, 0
    %v769 = vsel %vm752, %v38, 0
    %v772 = vsel %vm752, %v39, 0
    %v775 = vsel %vm752, %v40, 0
    %v778 = vsel %vm752, %v41, 0
    %v781 = vsel %vm752, %v42, 0
    %v784 = vsel %vm752, %v43, 0
    %v787 = vsel %vm752, %v44, 0
    %v790 = vsel %vm752, %v45, 0
    %v793 = vsel %vm752, %v46, 0
    %v796 = vsel %vm752, %v47, 0
    %v799 = vsel %vm752, %v48, 0
    %v802 = vsel %vm752, %v49, 0
    %v805 = vsel %vm752, %v50, 0
    %v808 = vsel %vm752, %v51, 0
    %v811 = vsel %vm752, %v52, 0
    %v814 = vsel %vm752, %v53, 0
    %v817 = vsel %vm752, %v54, 0
    %v820 = vsel %vm752, %v55, 0
    %v823 = vsel %vm752, %v56, 0
    %825 = vmatprep.subr.mxu0 0.0
    %826 = vmatpush1.msra.mxu0 0.0
    %827 = vmatprep.subr.mxu0 0.0
    %828 = vmatpush1.msra.mxu0 0.0
    %829 = vmatprep.subr.mxu0 0.0
    %830 = vmatpush1.msra.mxu0 0.0
    %831 = vmatprep.subr.mxu0 0.0
    %832 = vmatpush1.msra.mxu0 0.0
    %833 = vmatprep.subr.mxu0 0.0
    %834 = vmatpush1.msra.mxu0 0.0
    %835 = vmatprep.subr.mxu0 0.0
    %836 = vmatpush1.msra.mxu0 0.0
    %837 = vmatprep.subr.mxu0 0.0
    %838 = vmatpush1.msra.mxu0 0.0
    %839 = vmatprep.subr.mxu0 0.0
    %840 = vmatpush1.msra.mxu0 0.0
    %841 = vmatprep.subr.mxu0 0.0
    %842 = vmatpush1.msra.mxu0 0.0
    %843 = vmatprep.subr.mxu0 0.0
    %844 = vmatpush1.msra.mxu0 0.0
    %845 = vmatprep.subr.mxu0 0.0
    %846 = vmatpush1.msra.mxu0 0.0
    %847 = vmatprep.subr.mxu0 0.0
    %848 = vmatpush1.msra.mxu0 0.0
    %849 = vmatprep.subr.mxu0 0.0
    %850 = vmatpush1.msra.mxu0 0.0
    %851 = vmatprep.subr.mxu0 0.0
    %852 = vmatpush1.msra.mxu0 0.0
    %853 = vmatprep.subr.mxu0 0.0
    %854 = vmatpush1.msra.mxu0 0.0
    %855 = vmatprep.subr.mxu0 0.0
    %856 = vmatpush1.msra.mxu0 %v747
    %857 = vmatprep.subr.mxu0 0.0
    %858 = vmatpush2.msra.mxu0 0.0
    %859 = vmatprep.subr.mxu0 0.0
    %860 = vmatpush2.msra.mxu0 0.0
    %861 = vmatprep.subr.mxu0 0.0
    %862 = vmatpush2.msra.mxu0 0.0
    %863 = vmatprep.subr.mxu0 0.0
    %864 = vmatpush2.msra.mxu0 0.0
    %865 = vmatprep.subr.mxu0 0.0
    %866 = vmatpush2.msra.mxu0 0.0
    %867 = vmatprep.subr.mxu0 0.0
    %868 = vmatpush2.msra.mxu0 0.0
    %869 = vmatprep.subr.mxu0 0.0
    %870 = vmatpush2.msra.mxu0 0.0
    %871 = vmatprep.subr.mxu0 0.0
    %872 = vmatpush2.msra.mxu0 0.0
    %873 = vmatprep.subr.mxu0 0.0
    %874 = vmatpush2.msra.mxu0 0.0
    %875 = vmatprep.subr.mxu0 0.0
    %876 = vmatpush2.msra.mxu0 0.0
    %877 = vmatprep.subr.mxu0 0.0
    %878 = vmatpush2.msra.mxu0 0.0
    %879 = vmatprep.subr.mxu0 0.0
    %880 = vmatpush2.msra.mxu0 0.0
    %881 = vmatprep.subr.mxu0 0.0
    %882 = vmatpush2.msra.mxu0 0.0
    %883 = vmatprep.subr.mxu0 0.0
    %884 = vmatpush2.msra.mxu0 0.0
    %885 = vmatprep.subr.mxu0 0.0
    %886 = vmatpush2.msra.mxu0 0.0
    %887 = vmatprep.subr.mxu0 0.0
    %888 = vmatpush2.msra.mxu0 0.0
    %889 = vmatprep.mubr.f32.mxu0 0.0
    %890 = vmatmul.mubr.f32.gmra.mxu0 %v754
    %v891 = vpop.f32.mrf.mxu0
    %v892 = vadd.f32 %v751, %v891
    %v893 = vpop.f32.mrf.mxu0
    %894 = vmatprep.mubr.f32.mxu0 0.0
    %895 = vmatmul.mubr.f32.gmra.mxu0 %v757
    %v896 = vpop.f32.mrf.mxu0
    %v897 = vadd.f32 %v751, %v896
    %v898 = vpop.f32.mrf.mxu0
    %899 = vmatprep.mubr.f32.mxu0 0.0
    %900 = vmatmul.mubr.f32.gmra.mxu0 %v760
    %v901 = vpop.f32.mrf.mxu0
    %v902 = vadd.f32 %v751, %v901
    %v903 = vpop.f32.mrf.mxu0
    %904 = vmatprep.mubr.f32.mxu0 0.0
    %905 = vmatmul.mubr.f32.gmra.mxu0 %v763
    %v906 = vpop.f32.mrf.mxu0
    %v907 = vadd.f32 %v751, %v906
    %v908 = vpop.f32.mrf.mxu0
    %909 = vmatprep.mubr.f32.mxu0 0.0
    %910 = vmatmul.mubr.f32.gmra.mxu0 %v766
    %v911 = vpop.f32.mrf.mxu0
    %v912 = vadd.f32 %v751, %v911
    %v913 = vpop.f32.mrf.mxu0
    %914 = vmatprep.mubr.f32.mxu0 0.0
    %915 = vmatmul.mubr.f32.gmra.mxu0 %v769
    %v916 = vpop.f32.mrf.mxu0
    %v917 = vadd.f32 %v751, %v916
    %v918 = vpop.f32.mrf.mxu0
    %919 = vmatprep.mubr.f32.mxu0 0.0
    %920 = vmatmul.mubr.f32.gmra.mxu0 %v772
    %v921 = vpop.f32.mrf.mxu0
    %v922 = vadd.f32 %v751, %v921
    %v923 = vpop.f32.mrf.mxu0
    %924 = vmatprep.mubr.f32.mxu0 0.0
    %925 = vmatmul.mubr.f32.gmra.mxu0 %v775
    %v926 = vpop.f32.mrf.mxu0
    %v927 = vadd.f32 %v751, %v926
    %v928 = vpop.f32.mrf.mxu0
    %929 = vmatprep.mubr.f32.mxu0 0.0
    %930 = vmatmul.mubr.f32.gmra.mxu0 %v778
    %v931 = vpop.f32.mrf.mxu0
    %v932 = vadd.f32 %v751, %v931
    %v933 = vpop.f32.mrf.mxu0
    %934 = vmatprep.mubr.f32.mxu0 0.0
    %935 = vmatmul.mubr.f32.gmra.mxu0 %v781
    %v936 = vpop.f32.mrf.mxu0
    %v937 = vadd.f32 %v751, %v936
    %v938 = vpop.f32.mrf.mxu0
    %939 = vmatprep.mubr.f32.mxu0 0.0
    %940 = vmatmul.mubr.f32.gmra.mxu0 %v784
    %v941 = vpop.f32.mrf.mxu0
    %v942 = vadd.f32 %v751, %v941
    %v943 = vpop.f32.mrf.mxu0
    %944 = vmatprep.mubr.f32.mxu0 0.0
    %945 = vmatmul.mubr.f32.gmra.mxu0 %v787
    %v946 = vpop.f32.mrf.mxu0
    %v947 = vadd.f32 %v751, %v946
    %v948 = vpop.f32.mrf.mxu0
    %949 = vmatprep.mubr.f32.mxu0 0.0
    %950 = vmatmul.mubr.f32.gmra.mxu0 %v790
    %v951 = vpop.f32.mrf.mxu0
    %v952 = vadd.f32 %v751, %v951
    %v953 = vpop.f32.mrf.mxu0
    %954 = vmatprep.mubr.f32.mxu0 0.0
    %955 = vmatmul.mubr.f32.gmra.mxu0 %v793
    %v956 = vpop.f32.mrf.mxu0
    %v957 = vadd.f32 %v751, %v956
    %v958 = vpop.f32.mrf.mxu0
    %959 = vmatprep.mubr.f32.mxu0 0.0
    %960 = vmatmul.mubr.f32.gmra.mxu0 %v796
    %v961 = vpop.f32.mrf.mxu0
    %v962 = vadd.f32 %v751, %v961
    %v963 = vpop.f32.mrf.mxu0
    %964 = vmatprep.mubr.f32.mxu0 0.0
    %965 = vmatmul.mubr.f32.gmra.mxu0 %v799
    %v966 = vpop.f32.mrf.mxu0
    %v967 = vadd.f32 %v751, %v966
    %v968 = vpop.f32.mrf.mxu0
    %969 = vmatprep.mubr.f32.mxu0 0.0
    %970 = vmatmul.mubr.f32.gmra.mxu0 %v802
    %v971 = vpop.f32.mrf.mxu0
    %v972 = vadd.f32 %v751, %v971
    %v973 = vpop.f32.mrf.mxu0
    %974 = vmatprep.mubr.f32.mxu0 0.0
    %975 = vmatmul.mubr.f32.gmra.mxu0 %v805
    %v976 = vpop.f32.mrf.mxu0
    %v977 = vadd.f32 %v751, %v976
    %v978 = vpop.f32.mrf.mxu0
    %979 = vmatprep.mubr.f32.mxu0 0.0
    %980 = vmatmul.mubr.f32.gmra.mxu0 %v808
    %v981 = vpop.f32.mrf.mxu0
    %v982 = vadd.f32 %v751, %v981
    %v983 = vpop.f32.mrf.mxu0
    %984 = vmatprep.mubr.f32.mxu0 0.0
    %985 = vmatmul.mubr.f32.gmra.mxu0 %v811
    %v986 = vpop.f32.mrf.mxu0
    %v987 = vadd.f32 %v751, %v986
    %v988 = vpop.f32.mrf.mxu0
    %989 = vmatprep.mubr.f32.mxu0 0.0
    %990 = vmatmul.mubr.f32.gmra.mxu0 %v814
    %v991 = vpop.f32.mrf.mxu0
    %v992 = vadd.f32 %v751, %v991
    %v993 = vpop.f32.mrf.mxu0
    %994 = vmatprep.mubr.f32.mxu0 0.0
    %995 = vmatmul.mubr.f32.gmra.mxu0 %v817
    %v996 = vpop.f32.mrf.mxu0
    %v997 = vadd.f32 %v751, %v996
    %v998 = vpop.f32.mrf.mxu0
    %999 = vmatprep.mubr.f32.mxu0 0.0
    %1000 = vmatmul.mubr.f32.gmra.mxu0 %v820
    %v1001 = vpop.f32.mrf.mxu0
    %v1002 = vadd.f32 %v751, %v1001
    %v1003 = vpop.f32.mrf.mxu0
    %1004 = vmatprep.mubr.f32.mxu0 0.0
    %1005 = vmatmul.mubr.f32.gmra.mxu0 %v823
    %v1006 = vpop.f32.mrf.mxu0
    %v1007 = vadd.f32 %v751, %v1006
    %v1008 = vpop.f32.mrf.mxu0
    %1009 = vdwg.mxu0
    %v1010 = vsel %vm152, %v892, 0.0
    %1011 = vadd.xlane.f32.xlu0 %v1010
    %v1012 = vpop.xlane.xlu0 %1011
    %v1013 = vsel %vm152, %v897, 0.0
    %1014 = vadd.xlane.f32.xlu0 %v1013
    %v1015 = vpop.xlane.xlu0 %1014
    %v1016 = vsel %vm152, %v902, 0.0
    %1017 = vadd.xlane.f32.xlu0 %v1016
    %v1018 = vpop.xlane.xlu0 %1017
    %v1019 = vsel %vm152, %v907, 0.0
    %1020 = vadd.xlane.f32.xlu0 %v1019
    %v1021 = vpop.xlane.xlu0 %1020
    %v1022 = vsel %vm152, %v912, 0.0
    %1023 = vadd.xlane.f32.xlu0 %v1022
    %v1024 = vpop.xlane.xlu0 %1023
    %v1025 = vsel %vm152, %v917, 0.0
    %1026 = vadd.xlane.f32.xlu0 %v1025
    %v1027 = vpop.xlane.xlu0 %1026
    %v1028 = vsel %vm152, %v922, 0.0
    %1029 = vadd.xlane.f32.xlu0 %v1028
    %v1030 = vpop.xlane.xlu0 %1029
    %v1031 = vsel %vm152, %v927, 0.0
    %1032 = vadd.xlane.f32.xlu0 %v1031
    %v1033 = vpop.xlane.xlu0 %1032
    %v1034 = vsel %vm152, %v932, 0.0
    %1035 = vadd.xlane.f32.xlu0 %v1034
    %v1036 = vpop.xlane.xlu0 %1035
    %v1037 = vsel %vm152, %v937, 0.0
    %1038 = vadd.xlane.f32.xlu0 %v1037
    %v1039 = vpop.xlane.xlu0 %1038
    %v1040 = vsel %vm152, %v942, 0.0
    %1041 = vadd.xlane.f32.xlu0 %v1040
    %v1042 = vpop.xlane.xlu0 %1041
    %v1043 = vsel %vm152, %v947, 0.0
    %1044 = vadd.xlane.f32.xlu0 %v1043
    %v1045 = vpop.xlane.xlu0 %1044
    %v1046 = vsel %vm152, %v952, 0.0
    %1047 = vadd.xlane.f32.xlu0 %v1046
    %v1048 = vpop.xlane.xlu0 %1047
    %v1049 = vsel %vm152, %v957, 0.0
    %1050 = vadd.xlane.f32.xlu0 %v1049
    %v1051 = vpop.xlane.xlu0 %1050
    %v1052 = vsel %vm152, %v962, 0.0
    %1053 = vadd.xlane.f32.xlu0 %v1052
    %v1054 = vpop.xlane.xlu0 %1053
    %v1055 = vsel %vm152, %v967, 0.0
    %1056 = vadd.xlane.f32.xlu0 %v1055
    %v1057 = vpop.xlane.xlu0 %1056
    %v1058 = vsel %vm152, %v972, 0.0
    %1059 = vadd.xlane.f32.xlu0 %v1058
    %v1060 = vpop.xlane.xlu0 %1059
    %v1061 = vsel %vm152, %v977, 0.0
    %1062 = vadd.xlane.f32.xlu0 %v1061
    %v1063 = vpop.xlane.xlu0 %1062
    %v1064 = vsel %vm152, %v982, 0.0
    %1065 = vadd.xlane.f32.xlu0 %v1064
    %v1066 = vpop.xlane.xlu0 %1065
    %v1067 = vsel %vm152, %v987, 0.0
    %1068 = vadd.xlane.f32.xlu0 %v1067
    %v1069 = vpop.xlane.xlu0 %1068
    %v1070 = vsel %vm152, %v992, 0.0
    %1071 = vadd.xlane.f32.xlu0 %v1070
    %v1072 = vpop.xlane.xlu0 %1071
    %v1073 = vsel %vm152, %v997, 0.0
    %1074 = vadd.xlane.f32.xlu0 %v1073
    %v1075 = vpop.xlane.xlu0 %1074
    %v1076 = vsel %vm152, %v1002, 0.0
    %1077 = vadd.xlane.f32.xlu0 %v1076
    %v1078 = vpop.xlane.xlu0 %1077
    %v1079 = vsel %vm152, %v1007, 0.0
    %1080 = vadd.xlane.f32.xlu0 %v1079
    %v1081 = vpop.xlane.xlu0 %1080
    %v1082 = vmul.f32 %v1012, 0.03125
    %v1083 = vmul.f32 %v1015, 0.03125
    %v1084 = vmul.f32 %v1018, 0.03125
    %v1085 = vmul.f32 %v1021, 0.03125
    %v1086 = vmul.f32 %v1024, 0.03125
    %v1087 = vmul.f32 %v1027, 0.03125
    %v1088 = vmul.f32 %v1030, 0.03125
    %v1089 = vmul.f32 %v1033, 0.03125
    %v1090 = vmul.f32 %v1036, 0.03125
    %v1091 = vmul.f32 %v1039, 0.03125
    %v1092 = vmul.f32 %v1042, 0.03125
    %v1093 = vmul.f32 %v1045, 0.03125
    %v1094 = vmul.f32 %v1048, 0.03125
    %v1095 = vmul.f32 %v1051, 0.03125
    %v1096 = vmul.f32 %v1054, 0.03125
    %v1097 = vmul.f32 %v1057, 0.03125
    %v1098 = vmul.f32 %v1060, 0.03125
    %v1099 = vmul.f32 %v1063, 0.03125
    %v1100 = vmul.f32 %v1066, 0.03125
    %v1101 = vmul.f32 %v1069, 0.03125
    %v1102 = vmul.f32 %v1072, 0.03125
    %v1103 = vmul.f32 %v1075, 0.03125
    %v1104 = vmul.f32 %v1078, 0.03125
    %v1105 = vmul.f32 %v1081, 0.03125
    %v1106 = vmul.f32 %v892, %v892
    %v1107 = vmul.f32 %v897, %v897
    %v1108 = vmul.f32 %v902, %v902
    %v1109 = vmul.f32 %v907, %v907
    %v1110 = vmul.f32 %v912, %v912
    %v1111 = vmul.f32 %v917, %v917
    %v1112 = vmul.f32 %v922, %v922
    %v1113 = vmul.f32 %v927, %v927
    %v1114 = vmul.f32 %v932, %v932
    %v1115 = vmul.f32 %v937, %v937
    %v1116 = vmul.f32 %v942, %v942
    %v1117 = vmul.f32 %v947, %v947
    %v1118 = vmul.f32 %v952, %v952
    %v1119 = vmul.f32 %v957, %v957
    %v1120 = vmul.f32 %v962, %v962
    %v1121 = vmul.f32 %v967, %v967
    %v1122 = vmul.f32 %v972, %v972
    %v1123 = vmul.f32 %v977, %v977
    %v1124 = vmul.f32 %v982, %v982
    %v1125 = vmul.f32 %v987, %v987
    %v1126 = vmul.f32 %v992, %v992
    %v1127 = vmul.f32 %v997, %v997
    %v1128 = vmul.f32 %v1002, %v1002
    %v1129 = vmul.f32 %v1007, %v1007
    %v1130 = vsel %vm152, %v1106, 0.0
    %1131 = vadd.xlane.f32.xlu0 %v1130
    %v1132 = vpop.xlane.xlu0 %1131
    %v1133 = vsel %vm152, %v1107, 0.0
    %1134 = vadd.xlane.f32.xlu0 %v1133
    %v1135 = vpop.xlane.xlu0 %1134
    %v1136 = vsel %vm152, %v1108, 0.0
    %1137 = vadd.xlane.f32.xlu0 %v1136
    %v1138 = vpop.xlane.xlu0 %1137
    %v1139 = vsel %vm152, %v1109, 0.0
    %1140 = vadd.xlane.f32.xlu0 %v1139
    %v1141 = vpop.xlane.xlu0 %1140
    %v1142 = vsel %vm152, %v1110, 0.0
    %1143 = vadd.xlane.f32.xlu0 %v1142
    %v1144 = vpop.xlane.xlu0 %1143
    %v1145 = vsel %vm152, %v1111, 0.0
    %1146 = vadd.xlane.f32.xlu0 %v1145
    %v1147 = vpop.xlane.xlu0 %1146
    %v1148 = vsel %vm152, %v1112, 0.0
    %1149 = vadd.xlane.f32.xlu0 %v1148
    %v1150 = vpop.xlane.xlu0 %1149
    %v1151 = vsel %vm152, %v1113, 0.0
    %1152 = vadd.xlane.f32.xlu0 %v1151
    %v1153 = vpop.xlane.xlu0 %1152
    %v1154 = vsel %vm152, %v1114, 0.0
    %1155 = vadd.xlane.f32.xlu0 %v1154
    %v1156 = vpop.xlane.xlu0 %1155
    %v1157 = vsel %vm152, %v1115, 0.0
    %1158 = vadd.xlane.f32.xlu0 %v1157
    %v1159 = vpop.xlane.xlu0 %1158
    %v1160 = vsel %vm152, %v1116, 0.0
    %1161 = vadd.xlane.f32.xlu0 %v1160
    %v1162 = vpop.xlane.xlu0 %1161
    %v1163 = vsel %vm152, %v1117, 0.0
    %1164 = vadd.xlane.f32.xlu0 %v1163
    %v1165 = vpop.xlane.xlu0 %1164
    %v1166 = vsel %vm152, %v1118, 0.0
    %1167 = vadd.xlane.f32.xlu0 %v1166
    %v1168 = vpop.xlane.xlu0 %1167
    %v1169 = vsel %vm152, %v1119, 0.0
    %1170 = vadd.xlane.f32.xlu0 %v1169
    %v1171 = vpop.xlane.xlu0 %1170
    %v1172 = vsel %vm152, %v1120, 0.0
    %1173 = vadd.xlane.f32.xlu0 %v1172
    %v1174 = vpop.xlane.xlu0 %1173
    %v1175 = vsel %vm152, %v1121, 0.0
    %1176 = vadd.xlane.f32.xlu0 %v1175
    %v1177 = vpop.xlane.xlu0 %1176
    %v1178 = vsel %vm152, %v1122, 0.0
    %1179 = vadd.xlane.f32.xlu0 %v1178
    %v1180 = vpop.xlane.xlu0 %1179
    %v1181 = vsel %vm152, %v1123, 0.0
    %1182 = vadd.xlane.f32.xlu0 %v1181
    %v1183 = vpop.xlane.xlu0 %1182
    %v1184 = vsel %vm152, %v1124, 0.0
    %1185 = vadd.xlane.f32.xlu0 %v1184
    %v1186 = vpop.xlane.xlu0 %1185
    %v1187 = vsel %vm152, %v1125, 0.0
    %1188 = vadd.xlane.f32.xlu0 %v1187
    %v1189 = vpop.xlane.xlu0 %1188
    %v1190 = vsel %vm152, %v1126, 0.0
    %1191 = vadd.xlane.f32.xlu0 %v1190
    %v1192 = vpop.xlane.xlu0 %1191
    %v1193 = vsel %vm152, %v1127, 0.0
    %1194 = vadd.xlane.f32.xlu0 %v1193
    %v1195 = vpop.xlane.xlu0 %1194
    %v1196 = vsel %vm152, %v1128, 0.0
    %1197 = vadd.xlane.f32.xlu0 %v1196
    %v1198 = vpop.xlane.xlu0 %1197
    %v1199 = vsel %vm152, %v1129, 0.0
    %1200 = vadd.xlane.f32.xlu0 %v1199
    %v1201 = vpop.xlane.xlu0 %1200
    %v1202 = vmul.f32 %v1132, 0.03125
    %v1203 = vmul.f32 %v1135, 0.03125
    %v1204 = vmul.f32 %v1138, 0.03125
    %v1205 = vmul.f32 %v1141, 0.03125
    %v1206 = vmul.f32 %v1144, 0.03125
    %v1207 = vmul.f32 %v1147, 0.03125
    %v1208 = vmul.f32 %v1150, 0.03125
    %v1209 = vmul.f32 %v1153, 0.03125
    %v1210 = vmul.f32 %v1156, 0.03125
    %v1211 = vmul.f32 %v1159, 0.03125
    %v1212 = vmul.f32 %v1162, 0.03125
    %v1213 = vmul.f32 %v1165, 0.03125
    %v1214 = vmul.f32 %v1168, 0.03125
    %v1215 = vmul.f32 %v1171, 0.03125
    %v1216 = vmul.f32 %v1174, 0.03125
    %v1217 = vmul.f32 %v1177, 0.03125
    %v1218 = vmul.f32 %v1180, 0.03125
    %v1219 = vmul.f32 %v1183, 0.03125
    %v1220 = vmul.f32 %v1186, 0.03125
    %v1221 = vmul.f32 %v1189, 0.03125
    %v1222 = vmul.f32 %v1192, 0.03125
    %v1223 = vmul.f32 %v1195, 0.03125
    %v1224 = vmul.f32 %v1198, 0.03125
    %v1225 = vmul.f32 %v1201, 0.03125
    %v1226 = vmul.f32 %v1082, %v1082
    %v1227 = vmul.f32 %v1083, %v1083
    %v1228 = vmul.f32 %v1084, %v1084
    %v1229 = vmul.f32 %v1085, %v1085
    %v1230 = vmul.f32 %v1086, %v1086
    %v1231 = vmul.f32 %v1087, %v1087
    %v1232 = vmul.f32 %v1088, %v1088
    %v1233 = vmul.f32 %v1089, %v1089
    %v1234 = vmul.f32 %v1090, %v1090
    %v1235 = vmul.f32 %v1091, %v1091
    %v1236 = vmul.f32 %v1092, %v1092
    %v1237 = vmul.f32 %v1093, %v1093
    %v1238 = vmul.f32 %v1094, %v1094
    %v1239 = vmul.f32 %v1095, %v1095
    %v1240 = vmul.f32 %v1096, %v1096
    %v1241 = vmul.f32 %v1097, %v1097
    %v1242 = vmul.f32 %v1098, %v1098
    %v1243 = vmul.f32 %v1099, %v1099
    %v1244 = vmul.f32 %v1100, %v1100
    %v1245 = vmul.f32 %v1101, %v1101
    %v1246 = vmul.f32 %v1102, %v1102
    %v1247 = vmul.f32 %v1103, %v1103
    %v1248 = vmul.f32 %v1104, %v1104
    %v1249 = vmul.f32 %v1105, %v1105
    %v1250 = vsub.f32 %v1202, %v1226
    %v1251 = vsub.f32 %v1203, %v1227
    %v1252 = vsub.f32 %v1204, %v1228
    %v1253 = vsub.f32 %v1205, %v1229
    %v1254 = vsub.f32 %v1206, %v1230
    %v1255 = vsub.f32 %v1207, %v1231
    %v1256 = vsub.f32 %v1208, %v1232
    %v1257 = vsub.f32 %v1209, %v1233
    %v1258 = vsub.f32 %v1210, %v1234
    %v1259 = vsub.f32 %v1211, %v1235
    %v1260 = vsub.f32 %v1212, %v1236
    %v1261 = vsub.f32 %v1213, %v1237
    %v1262 = vsub.f32 %v1214, %v1238
    %v1263 = vsub.f32 %v1215, %v1239
    %v1264 = vsub.f32 %v1216, %v1240
    %v1265 = vsub.f32 %v1217, %v1241
    %v1266 = vsub.f32 %v1218, %v1242
    %v1267 = vsub.f32 %v1219, %v1243
    %v1268 = vsub.f32 %v1220, %v1244
    %v1269 = vsub.f32 %v1221, %v1245
    %v1270 = vsub.f32 %v1222, %v1246
    %v1271 = vsub.f32 %v1223, %v1247
    %v1272 = vsub.f32 %v1224, %v1248
    %v1273 = vsub.f32 %v1225, %v1249
    %v1274 = vsub.f32 %v892, %v1082
    %v1275 = vsub.f32 %v897, %v1083
    %v1276 = vsub.f32 %v902, %v1084
    %v1277 = vsub.f32 %v907, %v1085
    %v1278 = vsub.f32 %v912, %v1086
    %v1279 = vsub.f32 %v917, %v1087
    %v1280 = vsub.f32 %v922, %v1088
    %v1281 = vsub.f32 %v927, %v1089
    %v1282 = vsub.f32 %v932, %v1090
    %v1283 = vsub.f32 %v937, %v1091
    %v1284 = vsub.f32 %v942, %v1092
    %v1285 = vsub.f32 %v947, %v1093
    %v1286 = vsub.f32 %v952, %v1094
    %v1287 = vsub.f32 %v957, %v1095
    %v1288 = vsub.f32 %v962, %v1096
    %v1289 = vsub.f32 %v967, %v1097
    %v1290 = vsub.f32 %v972, %v1098
    %v1291 = vsub.f32 %v977, %v1099
    %v1292 = vsub.f32 %v982, %v1100
    %v1293 = vsub.f32 %v987, %v1101
    %v1294 = vsub.f32 %v992, %v1102
    %v1295 = vsub.f32 %v997, %v1103
    %v1296 = vsub.f32 %v1002, %v1104
    %v1297 = vsub.f32 %v1007, %v1105
    %v1298 = vadd.f32 %v1250, 1e-05
    %v1299 = vadd.f32 %v1251, 1e-05
    %v1300 = vadd.f32 %v1252, 1e-05
    %v1301 = vadd.f32 %v1253, 1e-05
    %v1302 = vadd.f32 %v1254, 1e-05
    %v1303 = vadd.f32 %v1255, 1e-05
    %v1304 = vadd.f32 %v1256, 1e-05
    %v1305 = vadd.f32 %v1257, 1e-05
    %v1306 = vadd.f32 %v1258, 1e-05
    %v1307 = vadd.f32 %v1259, 1e-05
    %v1308 = vadd.f32 %v1260, 1e-05
    %v1309 = vadd.f32 %v1261, 1e-05
    %v1310 = vadd.f32 %v1262, 1e-05
    %v1311 = vadd.f32 %v1263, 1e-05
    %v1312 = vadd.f32 %v1264, 1e-05
    %v1313 = vadd.f32 %v1265, 1e-05
    %v1314 = vadd.f32 %v1266, 1e-05
    %v1315 = vadd.f32 %v1267, 1e-05
    %v1316 = vadd.f32 %v1268, 1e-05
    %v1317 = vadd.f32 %v1269, 1e-05
    %v1318 = vadd.f32 %v1270, 1e-05
    %v1319 = vadd.f32 %v1271, 1e-05
    %v1320 = vadd.f32 %v1272, 1e-05
    %v1321 = vadd.f32 %v1273, 1e-05
    %v1322 = vrsqrt.pop %v1298
    %v1323 = vrsqrt.pop %v1299
    %v1324 = vrsqrt.pop %v1300
    %v1325 = vrsqrt.pop %v1301
    %v1326 = vrsqrt.pop %v1302
    %v1327 = vrsqrt.pop %v1303
    %v1328 = vrsqrt.pop %v1304
    %v1329 = vrsqrt.pop %v1305
    %v1330 = vrsqrt.pop %v1306
    %v1331 = vrsqrt.pop %v1307
    %v1332 = vrsqrt.pop %v1308
    %v1333 = vrsqrt.pop %v1309
    %v1334 = vrsqrt.pop %v1310
    %v1335 = vrsqrt.pop %v1311
    %v1336 = vrsqrt.pop %v1312
    %v1337 = vrsqrt.pop %v1313
    %v1338 = vrsqrt.pop %v1314
    %v1339 = vrsqrt.pop %v1315
    %v1340 = vrsqrt.pop %v1316
    %v1341 = vrsqrt.pop %v1317
    %v1342 = vrsqrt.pop %v1318
    %v1343 = vrsqrt.pop %v1319
    %v1344 = vrsqrt.pop %v1320
    %v1345 = vrsqrt.pop %v1321
    %v1346 = vmul.f32 %v1274, %v1322
    %v1347 = vmul.f32 %v1275, %v1323
    %v1348 = vmul.f32 %v1276, %v1324
    %v1349 = vmul.f32 %v1277, %v1325
    %v1350 = vmul.f32 %v1278, %v1326
    %v1351 = vmul.f32 %v1279, %v1327
    %v1352 = vmul.f32 %v1280, %v1328
    %v1353 = vmul.f32 %v1281, %v1329
    %v1354 = vmul.f32 %v1282, %v1330
    %v1355 = vmul.f32 %v1283, %v1331
    %v1356 = vmul.f32 %v1284, %v1332
    %v1357 = vmul.f32 %v1285, %v1333
    %v1358 = vmul.f32 %v1286, %v1334
    %v1359 = vmul.f32 %v1287, %v1335
    %v1360 = vmul.f32 %v1288, %v1336
    %v1361 = vmul.f32 %v1289, %v1337
    %v1362 = vmul.f32 %v1290, %v1338
    %v1363 = vmul.f32 %v1291, %v1339
    %v1364 = vmul.f32 %v1292, %v1340
    %v1365 = vmul.f32 %v1293, %v1341
    %v1366 = vmul.f32 %v1294, %v1342
    %v1367 = vmul.f32 %v1295, %v1343
    %v1368 = vmul.f32 %v1296, %v1344
    %v1369 = vmul.f32 %v1297, %v1345
    %v1370 = vlaneseq
    %v1371 = vshrl.u32 %v1370, 7
    %v1372 = vsub.s32 1, %v1371
    %v1373 = vrot.slane %v738, %v1372
    %v1374 = vmul.f32 %v1346, %v1373
    %v1375 = vmul.f32 %v1347, %v1373
    %v1376 = vmul.f32 %v1348, %v1373
    %v1377 = vmul.f32 %v1349, %v1373
    %v1378 = vmul.f32 %v1350, %v1373
    %v1379 = vmul.f32 %v1351, %v1373
    %v1380 = vmul.f32 %v1352, %v1373
    %v1381 = vmul.f32 %v1353, %v1373
    %v1382 = vmul.f32 %v1354, %v1373
    %v1383 = vmul.f32 %v1355, %v1373
    %v1384 = vmul.f32 %v1356, %v1373
    %v1385 = vmul.f32 %v1357, %v1373
    %v1386 = vmul.f32 %v1358, %v1373
    %v1387 = vmul.f32 %v1359, %v1373
    %v1388 = vmul.f32 %v1360, %v1373
    %v1389 = vmul.f32 %v1361, %v1373
    %v1390 = vmul.f32 %v1362, %v1373
    %v1391 = vmul.f32 %v1363, %v1373
    %v1392 = vmul.f32 %v1364, %v1373
    %v1393 = vmul.f32 %v1365, %v1373
    %v1394 = vmul.f32 %v1366, %v1373
    %v1395 = vmul.f32 %v1367, %v1373
    %v1396 = vmul.f32 %v1368, %v1373
    %v1397 = vmul.f32 %v1369, %v1373
    %v1398 = vlaneseq
    %v1399 = vshrl.u32 %v1398, 7
    %v1400 = vsub.s32 2, %v1399
    %v1401 = vrot.slane %v738, %v1400
    %v1402 = vadd.f32 %v1374, %v1401
    %v1403 = vadd.f32 %v1375, %v1401
    %v1404 = vadd.f32 %v1376, %v1401
    %v1405 = vadd.f32 %v1377, %v1401
    %v1406 = vadd.f32 %v1378, %v1401
    %v1407 = vadd.f32 %v1379, %v1401
    %v1408 = vadd.f32 %v1380, %v1401
    %v1409 = vadd.f32 %v1381, %v1401
    %v1410 = vadd.f32 %v1382, %v1401
    %v1411 = vadd.f32 %v1383, %v1401
    %v1412 = vadd.f32 %v1384, %v1401
    %v1413 = vadd.f32 %v1385, %v1401
    %v1414 = vadd.f32 %v1386, %v1401
    %v1415 = vadd.f32 %v1387, %v1401
    %v1416 = vadd.f32 %v1388, %v1401
    %v1417 = vadd.f32 %v1389, %v1401
    %v1418 = vadd.f32 %v1390, %v1401
    %v1419 = vadd.f32 %v1391, %v1401
    %v1420 = vadd.f32 %v1392, %v1401
    %v1421 = vadd.f32 %v1393, %v1401
    %v1422 = vadd.f32 %v1394, %v1401
    %v1423 = vadd.f32 %v1395, %v1401
    %v1424 = vadd.f32 %v1396, %v1401
    %v1425 = vadd.f32 %v1397, %v1401
    %v1426 = vmax.f32 %v1402, 0.0
    %v1427 = vmax.f32 %v1403, 0.0
    %v1428 = vmax.f32 %v1404, 0.0
    %v1429 = vmax.f32 %v1405, 0.0
    %v1430 = vmax.f32 %v1406, 0.0
    %v1431 = vmax.f32 %v1407, 0.0
    %v1432 = vmax.f32 %v1408, 0.0
    %v1433 = vmax.f32 %v1409, 0.0
    %v1434 = vmax.f32 %v1410, 0.0
    %v1435 = vmax.f32 %v1411, 0.0
    %v1436 = vmax.f32 %v1412, 0.0
    %v1437 = vmax.f32 %v1413, 0.0
    %v1438 = vmax.f32 %v1414, 0.0
    %v1439 = vmax.f32 %v1415, 0.0
    %v1440 = vmax.f32 %v1416, 0.0
    %v1441 = vmax.f32 %v1417, 0.0
    %v1442 = vmax.f32 %v1418, 0.0
    %v1443 = vmax.f32 %v1419, 0.0
    %v1444 = vmax.f32 %v1420, 0.0
    %v1445 = vmax.f32 %v1421, 0.0
    %v1446 = vmax.f32 %v1422, 0.0
    %v1447 = vmax.f32 %v1423, 0.0
    %v1448 = vmax.f32 %v1424, 0.0
    %v1449 = vmax.f32 %v1425, 0.0
    %v1450 = vsel %vm744, 1, 0
    %v1451 = vsel %vm745, 1, 0
    %v1452 = vsel %vm746, 1, 0
    %vm1453 = vcmp.eq.s32.totalorder %v1450, 1
    %vm1454 = vcmp.eq.s32.totalorder %v1451, 1
    %vm1455 = vcmp.eq.s32.totalorder %v1452, 1
    %v1456 = vsel %vm1453, %v1426, -1e+30
    %v1457 = vsel %vm1454, %v1427, -1e+30
    %v1458 = vsel %vm1455, %v1428, -1e+30
    %v1459 = vsel %vm1453, %v1429, -1e+30
    %v1460 = vsel %vm1454, %v1430, -1e+30
    %v1461 = vsel %vm1455, %v1431, -1e+30
    %v1462 = vsel %vm1453, %v1432, -1e+30
    %v1463 = vsel %vm1454, %v1433, -1e+30
    %v1464 = vsel %vm1455, %v1434, -1e+30
    %v1465 = vsel %vm1453, %v1435, -1e+30
    %v1466 = vsel %vm1454, %v1436, -1e+30
    %v1467 = vsel %vm1455, %v1437, -1e+30
    %v1468 = vsel %vm1453, %v1438, -1e+30
    %v1469 = vsel %vm1454, %v1439, -1e+30
    %v1470 = vsel %vm1455, %v1440, -1e+30
    %v1471 = vsel %vm1453, %v1441, -1e+30
    %v1472 = vsel %vm1454, %v1442, -1e+30
    %v1473 = vsel %vm1455, %v1443, -1e+30
    %v1474 = vsel %vm1453, %v1444, -1e+30
    %v1475 = vsel %vm1454, %v1445, -1e+30
    %v1476 = vsel %vm1455, %v1446, -1e+30
    %v1477 = vsel %vm1453, %v1447, -1e+30
    %v1478 = vsel %vm1454, %v1448, -1e+30
    %v1479 = vsel %vm1455, %v1449, -1e+30
    %v1480 = vsel %vm152, %v1456, -inf
    %v1481 = vsel %vm152, %v1457, -inf
    %v1482 = vmax.f32 %v1480, %v1481
    %v1483 = vsel %vm152, %v1458, -inf
    %v1484 = vmax.f32 %v1482, %v1483
    %v1485 = vrot.slane %v1484, 4
    %v1486 = vmax.f32 %v1484, %v1485
    %v1487 = vrot.slane %v1486, 2
    %v1488 = vmax.f32 %v1486, %v1487
    %v1489 = vrot.slane %v1488, 1
    %v1490 = vmax.f32 %v1488, %v1489
    %v1491 = vsel %vm152, %v1459, -inf
    %v1492 = vsel %vm152, %v1460, -inf
    %v1493 = vmax.f32 %v1491, %v1492
    %v1494 = vsel %vm152, %v1461, -inf
    %v1495 = vmax.f32 %v1493, %v1494
    %v1496 = vrot.slane %v1495, 4
    %v1497 = vmax.f32 %v1495, %v1496
    %v1498 = vrot.slane %v1497, 2
    %v1499 = vmax.f32 %v1497, %v1498
    %v1500 = vrot.slane %v1499, 1
    %v1501 = vmax.f32 %v1499, %v1500
    %v1502 = vsel %vm152, %v1462, -inf
    %v1503 = vsel %vm152, %v1463, -inf
    %v1504 = vmax.f32 %v1502, %v1503
    %v1505 = vsel %vm152, %v1464, -inf
    %v1506 = vmax.f32 %v1504, %v1505
    %v1507 = vrot.slane %v1506, 4
    %v1508 = vmax.f32 %v1506, %v1507
    %v1509 = vrot.slane %v1508, 2
    %v1510 = vmax.f32 %v1508, %v1509
    %v1511 = vrot.slane %v1510, 1
    %v1512 = vmax.f32 %v1510, %v1511
    %v1513 = vsel %vm152, %v1465, -inf
    %v1514 = vsel %vm152, %v1466, -inf
    %v1515 = vmax.f32 %v1513, %v1514
    %v1516 = vsel %vm152, %v1467, -inf
    %v1517 = vmax.f32 %v1515, %v1516
    %v1518 = vrot.slane %v1517, 4
    %v1519 = vmax.f32 %v1517, %v1518
    %v1520 = vrot.slane %v1519, 2
    %v1521 = vmax.f32 %v1519, %v1520
    %v1522 = vrot.slane %v1521, 1
    %v1523 = vmax.f32 %v1521, %v1522
    %v1524 = vsel %vm152, %v1468, -inf
    %v1525 = vsel %vm152, %v1469, -inf
    %v1526 = vmax.f32 %v1524, %v1525
    %v1527 = vsel %vm152, %v1470, -inf
    %v1528 = vmax.f32 %v1526, %v1527
    %v1529 = vrot.slane %v1528, 4
    %v1530 = vmax.f32 %v1528, %v1529
    %v1531 = vrot.slane %v1530, 2
    %v1532 = vmax.f32 %v1530, %v1531
    %v1533 = vrot.slane %v1532, 1
    %v1534 = vmax.f32 %v1532, %v1533
    %v1535 = vsel %vm152, %v1471, -inf
    %v1536 = vsel %vm152, %v1472, -inf
    %v1537 = vmax.f32 %v1535, %v1536
    %v1538 = vsel %vm152, %v1473, -inf
    %v1539 = vmax.f32 %v1537, %v1538
    %v1540 = vrot.slane %v1539, 4
    %v1541 = vmax.f32 %v1539, %v1540
    %v1542 = vrot.slane %v1541, 2
    %v1543 = vmax.f32 %v1541, %v1542
    %v1544 = vrot.slane %v1543, 1
    %v1545 = vmax.f32 %v1543, %v1544
    %v1546 = vsel %vm152, %v1474, -inf
    %v1547 = vsel %vm152, %v1475, -inf
    %v1548 = vmax.f32 %v1546, %v1547
    %v1549 = vsel %vm152, %v1476, -inf
    %v1550 = vmax.f32 %v1548, %v1549
    %v1551 = vrot.slane %v1550, 4
    %v1552 = vmax.f32 %v1550, %v1551
    %v1553 = vrot.slane %v1552, 2
    %v1554 = vmax.f32 %v1552, %v1553
    %v1555 = vrot.slane %v1554, 1
    %v1556 = vmax.f32 %v1554, %v1555
    %v1557 = vsel %vm152, %v1477, -inf
    %v1558 = vsel %vm152, %v1478, -inf
    %v1559 = vmax.f32 %v1557, %v1558
    %v1560 = vsel %vm152, %v1479, -inf
    %v1561 = vmax.f32 %v1559, %v1560
    %v1562 = vrot.slane %v1561, 4
    %v1563 = vmax.f32 %v1561, %v1562
    %v1564 = vrot.slane %v1563, 2
    %v1565 = vmax.f32 %v1563, %v1564
    %v1566 = vrot.slane %v1565, 1
    %v1567 = vmax.f32 %v1565, %v1566
    %v1568 = vld [vmem:[#allocation2 + $0xa0] sm:$0xff]
    %v1569 = vld [vmem:[#allocation2 + $0xa8] sm:$0xff]
    %v1570 = vld [vmem:[#allocation2 + $0xb0] sm:$0xff]
    %v1571 = vld [vmem:[#allocation2 + $0xb8] sm:$0xff]
    %v1572 = vld [vmem:[#allocation2 + $0xc0] sm:$0xff]
    %v1573 = vld [vmem:[#allocation2 + $0xc8] sm:$0xff]
    %v1574 = vld [vmem:[#allocation2 + $0xd0] sm:$0xff]
    %v1575 = vld [vmem:[#allocation2 + $0xd8] sm:$0xff]
    %v1577 = vsel %vm152, %v1426, 0
    %v1580 = vsel %vm152, %v1427, 0
    %v1583 = vsel %vm152, %v1428, 0
    %v1586 = vsel %vm152, %v1429, 0
    %v1589 = vsel %vm152, %v1430, 0
    %v1592 = vsel %vm152, %v1431, 0
    %v1595 = vsel %vm152, %v1432, 0
    %v1598 = vsel %vm152, %v1433, 0
    %v1601 = vsel %vm152, %v1434, 0
    %v1604 = vsel %vm152, %v1435, 0
    %v1607 = vsel %vm152, %v1436, 0
    %v1610 = vsel %vm152, %v1437, 0
    %v1613 = vsel %vm152, %v1438, 0
    %v1616 = vsel %vm152, %v1439, 0
    %v1619 = vsel %vm152, %v1440, 0
    %v1622 = vsel %vm152, %v1441, 0
    %v1625 = vsel %vm152, %v1442, 0
    %v1628 = vsel %vm152, %v1443, 0
    %v1631 = vsel %vm152, %v1444, 0
    %v1634 = vsel %vm152, %v1445, 0
    %v1637 = vsel %vm152, %v1446, 0
    %v1640 = vsel %vm152, %v1447, 0
    %v1643 = vsel %vm152, %v1448, 0
    %v1646 = vsel %vm152, %v1449, 0
    %1648 = vmatprep.subr.mxu0 0.0
    %1649 = vmatpush1.msra.mxu0 0.0
    %1650 = vmatprep.subr.mxu0 0.0
    %1651 = vmatpush1.msra.mxu0 0.0
    %1652 = vmatprep.subr.mxu0 0.0
    %1653 = vmatpush1.msra.mxu0 0.0
    %1654 = vmatprep.subr.mxu0 0.0
    %1655 = vmatpush1.msra.mxu0 0.0
    %1656 = vmatprep.subr.mxu0 0.0
    %1657 = vmatpush1.msra.mxu0 0.0
    %1658 = vmatprep.subr.mxu0 0.0
    %1659 = vmatpush1.msra.mxu0 0.0
    %1660 = vmatprep.subr.mxu0 0.0
    %1661 = vmatpush1.msra.mxu0 0.0
    %1662 = vmatprep.subr.mxu0 0.0
    %1663 = vmatpush1.msra.mxu0 0.0
    %1664 = vmatprep.subr.mxu0 0.0
    %1665 = vmatpush1.msra.mxu0 0.0
    %1666 = vmatprep.subr.mxu0 0.0
    %1667 = vmatpush1.msra.mxu0 0.0
    %1668 = vmatprep.subr.mxu0 0.0
    %1669 = vmatpush1.msra.mxu0 0.0
    %1670 = vmatprep.subr.mxu0 0.0
    %1671 = vmatpush1.msra.mxu0 0.0
    %1672 = vmatprep.subr.mxu0 0.0
    %1673 = vmatpush1.msra.mxu0 %v1571
    %1674 = vmatprep.subr.mxu0 0.0
    %1675 = vmatpush1.msra.mxu0 %v1570
    %1676 = vmatprep.subr.mxu0 0.0
    %1677 = vmatpush1.msra.mxu0 %v1569
    %1678 = vmatprep.subr.mxu0 0.0
    %1679 = vmatpush1.msra.mxu0 %v1568
    %1680 = vmatprep.subr.mxu0 0.0
    %1681 = vmatpush2.msra.mxu0 0.0
    %1682 = vmatprep.subr.mxu0 0.0
    %1683 = vmatpush2.msra.mxu0 0.0
    %1684 = vmatprep.subr.mxu0 0.0
    %1685 = vmatpush2.msra.mxu0 0.0
    %1686 = vmatprep.subr.mxu0 0.0
    %1687 = vmatpush2.msra.mxu0 0.0
    %1688 = vmatprep.subr.mxu0 0.0
    %1689 = vmatpush2.msra.mxu0 0.0
    %1690 = vmatprep.subr.mxu0 0.0
    %1691 = vmatpush2.msra.mxu0 0.0
    %1692 = vmatprep.subr.mxu0 0.0
    %1693 = vmatpush2.msra.mxu0 0.0
    %1694 = vmatprep.subr.mxu0 0.0
    %1695 = vmatpush2.msra.mxu0 0.0
    %1696 = vmatprep.subr.mxu0 0.0
    %1697 = vmatpush2.msra.mxu0 0.0
    %1698 = vmatprep.subr.mxu0 0.0
    %1699 = vmatpush2.msra.mxu0 0.0
    %1700 = vmatprep.subr.mxu0 0.0
    %1701 = vmatpush2.msra.mxu0 0.0
    %1702 = vmatprep.subr.mxu0 0.0
    %1703 = vmatpush2.msra.mxu0 0.0
    %1704 = vmatprep.subr.mxu0 0.0
    %1705 = vmatpush2.msra.mxu0 0.0
    %1706 = vmatprep.subr.mxu0 0.0
    %1707 = vmatpush2.msra.mxu0 0.0
    %1708 = vmatprep.subr.mxu0 0.0
    %1709 = vmatpush2.msra.mxu0 0.0
    %1710 = vmatprep.subr.mxu0 0.0
    %1711 = vmatpush2.msra.mxu0 0.0
    %1712 = vmatprep.mubr.f32.mxu0 0.0
    %1713 = vmatmul.mubr.f32.gmra.mxu0 %v1577
    %v1714 = vpop.f32.mrf.mxu0
    %v1715 = vadd.f32 0.0, %v1714
    %v1716 = vpop.f32.mrf.mxu0
    %1717 = vmatprep.mubr.f32.mxu0 0.0
    %1718 = vmatmul.mubr.f32.gmra.mxu0 %v1580
    %v1719 = vpop.f32.mrf.mxu0
    %v1720 = vadd.f32 0.0, %v1719
    %v1721 = vpop.f32.mrf.mxu0
    %1722 = vmatprep.mubr.f32.mxu0 0.0
    %1723 = vmatmul.mubr.f32.gmra.mxu0 %v1583
    %v1724 = vpop.f32.mrf.mxu0
    %v1725 = vadd.f32 0.0, %v1724
    %v1726 = vpop.f32.mrf.mxu0
    %1727 = vmatprep.mubr.f32.mxu0 0.0
    %1728 = vmatmul.mubr.f32.gmra.mxu0 %v1586
    %v1729 = vpop.f32.mrf.mxu0
    %v1730 = vadd.f32 0.0, %v1729
    %v1731 = vpop.f32.mrf.mxu0
    %1732 = vmatprep.mubr.f32.mxu0 0.0
    %1733 = vmatmul.mubr.f32.gmra.mxu0 %v1589
    %v1734 = vpop.f32.mrf.mxu0
    %v1735 = vadd.f32 0.0, %v1734
    %v1736 = vpop.f32.mrf.mxu0
    %1737 = vmatprep.mubr.f32.mxu0 0.0
    %1738 = vmatmul.mubr.f32.gmra.mxu0 %v1592
    %v1739 = vpop.f32.mrf.mxu0
    %v1740 = vadd.f32 0.0, %v1739
    %v1741 = vpop.f32.mrf.mxu0
    %1742 = vmatprep.mubr.f32.mxu0 0.0
    %1743 = vmatmul.mubr.f32.gmra.mxu0 %v1595
    %v1744 = vpop.f32.mrf.mxu0
    %v1745 = vadd.f32 0.0, %v1744
    %v1746 = vpop.f32.mrf.mxu0
    %1747 = vmatprep.mubr.f32.mxu0 0.0
    %1748 = vmatmul.mubr.f32.gmra.mxu0 %v1598
    %v1749 = vpop.f32.mrf.mxu0
    %v1750 = vadd.f32 0.0, %v1749
    %v1751 = vpop.f32.mrf.mxu0
    %1752 = vmatprep.mubr.f32.mxu0 0.0
    %1753 = vmatmul.mubr.f32.gmra.mxu0 %v1601
    %v1754 = vpop.f32.mrf.mxu0
    %v1755 = vadd.f32 0.0, %v1754
    %v1756 = vpop.f32.mrf.mxu0
    %1757 = vmatprep.mubr.f32.mxu0 0.0
    %1758 = vmatmul.mubr.f32.gmra.mxu0 %v1604
    %v1759 = vpop.f32.mrf.mxu0
    %v1760 = vadd.f32 0.0, %v1759
    %v1761 = vpop.f32.mrf.mxu0
    %1762 = vmatprep.mubr.f32.mxu0 0.0
    %1763 = vmatmul.mubr.f32.gmra.mxu0 %v1607
    %v1764 = vpop.f32.mrf.mxu0
    %v1765 = vadd.f32 0.0, %v1764
    %v1766 = vpop.f32.mrf.mxu0
    %1767 = vmatprep.mubr.f32.mxu0 0.0
    %1768 = vmatmul.mubr.f32.gmra.mxu0 %v1610
    %v1769 = vpop.f32.mrf.mxu0
    %v1770 = vadd.f32 0.0, %v1769
    %v1771 = vpop.f32.mrf.mxu0
    %1772 = vmatprep.mubr.f32.mxu0 0.0
    %1773 = vmatmul.mubr.f32.gmra.mxu0 %v1613
    %v1774 = vpop.f32.mrf.mxu0
    %v1775 = vadd.f32 0.0, %v1774
    %v1776 = vpop.f32.mrf.mxu0
    %1777 = vmatprep.mubr.f32.mxu0 0.0
    %1778 = vmatmul.mubr.f32.gmra.mxu0 %v1616
    %v1779 = vpop.f32.mrf.mxu0
    %v1780 = vadd.f32 0.0, %v1779
    %v1781 = vpop.f32.mrf.mxu0
    %1782 = vmatprep.mubr.f32.mxu0 0.0
    %1783 = vmatmul.mubr.f32.gmra.mxu0 %v1619
    %v1784 = vpop.f32.mrf.mxu0
    %v1785 = vadd.f32 0.0, %v1784
    %v1786 = vpop.f32.mrf.mxu0
    %1787 = vmatprep.mubr.f32.mxu0 0.0
    %1788 = vmatmul.mubr.f32.gmra.mxu0 %v1622
    %v1789 = vpop.f32.mrf.mxu0
    %v1790 = vadd.f32 0.0, %v1789
    %v1791 = vpop.f32.mrf.mxu0
    %1792 = vmatprep.mubr.f32.mxu0 0.0
    %1793 = vmatmul.mubr.f32.gmra.mxu0 %v1625
    %v1794 = vpop.f32.mrf.mxu0
    %v1795 = vadd.f32 0.0, %v1794
    %v1796 = vpop.f32.mrf.mxu0
    %1797 = vmatprep.mubr.f32.mxu0 0.0
    %1798 = vmatmul.mubr.f32.gmra.mxu0 %v1628
    %v1799 = vpop.f32.mrf.mxu0
    %v1800 = vadd.f32 0.0, %v1799
    %v1801 = vpop.f32.mrf.mxu0
    %1802 = vmatprep.mubr.f32.mxu0 0.0
    %1803 = vmatmul.mubr.f32.gmra.mxu0 %v1631
    %v1804 = vpop.f32.mrf.mxu0
    %v1805 = vadd.f32 0.0, %v1804
    %v1806 = vpop.f32.mrf.mxu0
    %1807 = vmatprep.mubr.f32.mxu0 0.0
    %1808 = vmatmul.mubr.f32.gmra.mxu0 %v1634
    %v1809 = vpop.f32.mrf.mxu0
    %v1810 = vadd.f32 0.0, %v1809
    %v1811 = vpop.f32.mrf.mxu0
    %1812 = vmatprep.mubr.f32.mxu0 0.0
    %1813 = vmatmul.mubr.f32.gmra.mxu0 %v1637
    %v1814 = vpop.f32.mrf.mxu0
    %v1815 = vadd.f32 0.0, %v1814
    %v1816 = vpop.f32.mrf.mxu0
    %1817 = vmatprep.mubr.f32.mxu0 0.0
    %1818 = vmatmul.mubr.f32.gmra.mxu0 %v1640
    %v1819 = vpop.f32.mrf.mxu0
    %v1820 = vadd.f32 0.0, %v1819
    %v1821 = vpop.f32.mrf.mxu0
    %1822 = vmatprep.mubr.f32.mxu0 0.0
    %1823 = vmatmul.mubr.f32.gmra.mxu0 %v1643
    %v1824 = vpop.f32.mrf.mxu0
    %v1825 = vadd.f32 0.0, %v1824
    %v1826 = vpop.f32.mrf.mxu0
    %1827 = vmatprep.mubr.f32.mxu0 0.0
    %1828 = vmatmul.mubr.f32.gmra.mxu0 %v1646
    %v1829 = vpop.f32.mrf.mxu0
    %v1830 = vadd.f32 0.0, %v1829
    %v1831 = vpop.f32.mrf.mxu0
    %1832 = vdwg.mxu0
    %v1841 = vsel %vm302, %v1501, %v1490
    %vm1842 = vcmask 1042434
    %v1843 = vsel %vm1842, %v1512, %v1841
    %vm1844 = vcmask 1043459
    %v1845 = vsel %vm1844, %v1523, %v1843
    %vm1846 = vcmask 1044484
    %v1847 = vsel %vm1846, %v1534, %v1845
    %vm1848 = vcmask 1045509
    %v1849 = vsel %vm1848, %v1545, %v1847
    %vm1850 = vcmask 1046534
    %v1851 = vsel %vm1850, %v1556, %v1849
    %vm1852 = vcmask 1047559
    %v1853 = vsel %vm1852, %v1567, %v1851
    %v1854 = vsel %vm152, %v1853, 0
    %1856 = vmatprep.subr.mxu0 0.0
    %1857 = vmatpush1.msra.mxu0 0.0
    %1858 = vmatprep.subr.mxu0 0.0
    %1859 = vmatpush1.msra.mxu0 0.0
    %1860 = vmatprep.subr.mxu0 0.0
    %1861 = vmatpush1.msra.mxu0 0.0
    %1862 = vmatprep.subr.mxu0 0.0
    %1863 = vmatpush1.msra.mxu0 0.0
    %1864 = vmatprep.subr.mxu0 0.0
    %1865 = vmatpush1.msra.mxu0 0.0
    %1866 = vmatprep.subr.mxu0 0.0
    %1867 = vmatpush1.msra.mxu0 0.0
    %1868 = vmatprep.subr.mxu0 0.0
    %1869 = vmatpush1.msra.mxu0 0.0
    %1870 = vmatprep.subr.mxu0 0.0
    %1871 = vmatpush1.msra.mxu0 0.0
    %1872 = vmatprep.subr.mxu0 0.0
    %1873 = vmatpush1.msra.mxu0 0.0
    %1874 = vmatprep.subr.mxu0 0.0
    %1875 = vmatpush1.msra.mxu0 0.0
    %1876 = vmatprep.subr.mxu0 0.0
    %1877 = vmatpush1.msra.mxu0 0.0
    %1878 = vmatprep.subr.mxu0 0.0
    %1879 = vmatpush1.msra.mxu0 0.0
    %1880 = vmatprep.subr.mxu0 0.0
    %1881 = vmatpush1.msra.mxu0 %v1575
    %1882 = vmatprep.subr.mxu0 0.0
    %1883 = vmatpush1.msra.mxu0 %v1574
    %1884 = vmatprep.subr.mxu0 0.0
    %1885 = vmatpush1.msra.mxu0 %v1573
    %1886 = vmatprep.subr.mxu0 0.0
    %1887 = vmatpush1.msra.mxu0 %v1572
    %1888 = vmatprep.subr.mxu0 0.0
    %1889 = vmatpush2.msra.mxu0 0.0
    %1890 = vmatprep.subr.mxu0 0.0
    %1891 = vmatpush2.msra.mxu0 0.0
    %1892 = vmatprep.subr.mxu0 0.0
    %1893 = vmatpush2.msra.mxu0 0.0
    %1894 = vmatprep.subr.mxu0 0.0
    %1895 = vmatpush2.msra.mxu0 0.0
    %1896 = vmatprep.subr.mxu0 0.0
    %1897 = vmatpush2.msra.mxu0 0.0
    %1898 = vmatprep.subr.mxu0 0.0
    %1899 = vmatpush2.msra.mxu0 0.0
    %1900 = vmatprep.subr.mxu0 0.0
    %1901 = vmatpush2.msra.mxu0 0.0
    %1902 = vmatprep.subr.mxu0 0.0
    %1903 = vmatpush2.msra.mxu0 0.0
    %1904 = vmatprep.subr.mxu0 0.0
    %1905 = vmatpush2.msra.mxu0 0.0
    %1906 = vmatprep.subr.mxu0 0.0
    %1907 = vmatpush2.msra.mxu0 0.0
    %1908 = vmatprep.subr.mxu0 0.0
    %1909 = vmatpush2.msra.mxu0 0.0
    %1910 = vmatprep.subr.mxu0 0.0
    %1911 = vmatpush2.msra.mxu0 0.0
    %1912 = vmatprep.subr.mxu0 0.0
    %1913 = vmatpush2.msra.mxu0 0.0
    %1914 = vmatprep.subr.mxu0 0.0
    %1915 = vmatpush2.msra.mxu0 0.0
    %1916 = vmatprep.subr.mxu0 0.0
    %1917 = vmatpush2.msra.mxu0 0.0
    %1918 = vmatprep.subr.mxu0 0.0
    %1919 = vmatpush2.msra.mxu0 0.0
    %1920 = vmatprep.mubr.f32.mxu0 0.0
    %1921 = vmatmul.mubr.f32.gmra.mxu0 %v1854
    %v1922 = vpop.f32.mrf.mxu0
    %v1923 = vadd.f32 0.0, %v1922
    %v1924 = vpop.f32.mrf.mxu0
    %1925 = vdwg.mxu0
    %v1927 = vcombine.high %v1923, %v1923
    %v1929 = vunpack.c.l.s4 1966171168
    %v1930 = vunpack.c.0.s8 %v1929
    %v1931 = vlaneseq
    %v1932 = vshrl.u32 %v1931, 7
    %v1933 = vsub.s32 %v1930, %v1932
    %v1934 = vrot.slane %v1923, %v1933
    %v1936 = vunpack.c.l.s4 1966171168
    %v1937 = vunpack.c.0.s8 %v1936
    %v1938 = vlaneseq
    %v1939 = vshrl.u32 %v1938, 7
    %v1940 = vsub.s32 %v1937, %v1939
    %v1941 = vrot.slane %v1927, %v1940
    %v1942 = vcombine.high %v1934, %v1934
    %v1943 = vcombine.high %v1941, %v1941
    %v1945 = vunpack.c.l.s4 1966171168
    %v1946 = vunpack.c.0.s8 %v1945
    %v1947 = vlaneseq
    %v1948 = vshrl.u32 %v1947, 7
    %v1949 = vsub.s32 %v1946, %v1948
    %v1950 = vrot.slane %v1934, %v1949
    %v1952 = vunpack.c.l.s4 1966171168
    %v1953 = vunpack.c.0.s8 %v1952
    %v1954 = vlaneseq
    %v1955 = vshrl.u32 %v1954, 7
    %v1956 = vsub.s32 %v1953, %v1955
    %v1957 = vrot.slane %v1941, %v1956
    %v1959 = vunpack.c.l.s4 1966171168
    %v1960 = vunpack.c.0.s8 %v1959
    %v1961 = vlaneseq
    %v1962 = vshrl.u32 %v1961, 7
    %v1963 = vsub.s32 %v1960, %v1962
    %v1964 = vrot.slane %v1942, %v1963
    %v1966 = vunpack.c.l.s4 1966171168
    %v1967 = vunpack.c.0.s8 %v1966
    %v1968 = vlaneseq
    %v1969 = vshrl.u32 %v1968, 7
    %v1970 = vsub.s32 %v1967, %v1969
    %v1971 = vrot.slane %v1943, %v1970
    %v1972 = vcombine.high %v1950, %v1950
    %v1973 = vcombine.high %v1957, %v1957
    %v1974 = vcombine.high %v1964, %v1964
    %v1975 = vcombine.high %v1971, %v1971
    %v1976 = vlaneseq
    %v1977 = vshrl.u32 %v1976, 7
    %v1978 = vsub.s32 0, %v1977
    %v1979 = vrot.slane %v1950, %v1978
    %v1980 = vlaneseq
    %v1981 = vshrl.u32 %v1980, 7
    %v1982 = vsub.s32 0, %v1981
    %v1983 = vrot.slane %v1964, %v1982
    %v1984 = vlaneseq
    %v1985 = vshrl.u32 %v1984, 7
    %v1986 = vsub.s32 0, %v1985
    %v1987 = vrot.slane %v1972, %v1986
    %v1988 = vlaneseq
    %v1989 = vshrl.u32 %v1988, 7
    %v1990 = vsub.s32 0, %v1989
    %v1991 = vrot.slane %v1974, %v1990
    %v1992 = vlaneseq
    %v1993 = vshrl.u32 %v1992, 7
    %v1994 = vsub.s32 0, %v1993
    %v1995 = vrot.slane %v1957, %v1994
    %v1996 = vlaneseq
    %v1997 = vshrl.u32 %v1996, 7
    %v1998 = vsub.s32 0, %v1997
    %v1999 = vrot.slane %v1971, %v1998
    %v2000 = vlaneseq
    %v2001 = vshrl.u32 %v2000, 7
    %v2002 = vsub.s32 0, %v2001
    %v2003 = vrot.slane %v1973, %v2002
    %v2004 = vlaneseq
    %v2005 = vshrl.u32 %v2004, 7
    %v2006 = vsub.s32 0, %v2005
    %v2007 = vrot.slane %v1975, %v2006
    %v2016 = vadd.f32 %v1715, %v1979
    %v2017 = vadd.f32 %v1720, %v1979
    %v2018 = vadd.f32 %v1725, %v1979
    %v2019 = vadd.f32 %v1730, %v1983
    %v2020 = vadd.f32 %v1735, %v1983
    %v2021 = vadd.f32 %v1740, %v1983
    %v2022 = vadd.f32 %v1745, %v1987
    %v2023 = vadd.f32 %v1750, %v1987
    %v2024 = vadd.f32 %v1755, %v1987
    %v2025 = vadd.f32 %v1760, %v1991
    %v2026 = vadd.f32 %v1765, %v1991
    %v2027 = vadd.f32 %v1770, %v1991
    %v2028 = vadd.f32 %v1775, %v1995
    %v2029 = vadd.f32 %v1780, %v1995
    %v2030 = vadd.f32 %v1785, %v1995
    %v2031 = vadd.f32 %v1790, %v1999
    %v2032 = vadd.f32 %v1795, %v1999
    %v2033 = vadd.f32 %v1800, %v1999
    %v2034 = vadd.f32 %v1805, %v2003
    %v2035 = vadd.f32 %v1810, %v2003
    %v2036 = vadd.f32 %v1815, %v2003
    %v2037 = vadd.f32 %v1820, %v2007
    %v2038 = vadd.f32 %v1825, %v2007
    %v2039 = vadd.f32 %v1830, %v2007
    %v2040 = vlaneseq
    %v2041 = vshrl.u32 %v2040, 7
    %v2042 = vsub.s32 3, %v2041
    %v2043 = vrot.slane %v738, %v2042
    %v2044 = vadd.f32 %v2016, %v2043
    %v2045 = vadd.f32 %v2017, %v2043
    %v2046 = vadd.f32 %v2018, %v2043
    %v2047 = vadd.f32 %v2019, %v2043
    %v2048 = vadd.f32 %v2020, %v2043
    %v2049 = vadd.f32 %v2021, %v2043
    %v2050 = vadd.f32 %v2022, %v2043
    %v2051 = vadd.f32 %v2023, %v2043
    %v2052 = vadd.f32 %v2024, %v2043
    %v2053 = vadd.f32 %v2025, %v2043
    %v2054 = vadd.f32 %v2026, %v2043
    %v2055 = vadd.f32 %v2027, %v2043
    %v2056 = vadd.f32 %v2028, %v2043
    %v2057 = vadd.f32 %v2029, %v2043
    %v2058 = vadd.f32 %v2030, %v2043
    %v2059 = vadd.f32 %v2031, %v2043
    %v2060 = vadd.f32 %v2032, %v2043
    %v2061 = vadd.f32 %v2033, %v2043
    %v2062 = vadd.f32 %v2034, %v2043
    %v2063 = vadd.f32 %v2035, %v2043
    %v2064 = vadd.f32 %v2036, %v2043
    %v2065 = vadd.f32 %v2037, %v2043
    %v2066 = vadd.f32 %v2038, %v2043
    %v2067 = vadd.f32 %v2039, %v2043
    %v2068 = vsel %vm152, %v2044, 0.0
    %2069 = vadd.xlane.f32.xlu0 %v2068
    %v2070 = vpop.xlane.xlu0 %2069
    %v2071 = vsel %vm152, %v2045, 0.0
    %2072 = vadd.xlane.f32.xlu0 %v2071
    %v2073 = vpop.xlane.xlu0 %2072
    %v2074 = vsel %vm152, %v2046, 0.0
    %2075 = vadd.xlane.f32.xlu0 %v2074
    %v2076 = vpop.xlane.xlu0 %2075
    %v2077 = vsel %vm152, %v2047, 0.0
    %2078 = vadd.xlane.f32.xlu0 %v2077
    %v2079 = vpop.xlane.xlu0 %2078
    %v2080 = vsel %vm152, %v2048, 0.0
    %2081 = vadd.xlane.f32.xlu0 %v2080
    %v2082 = vpop.xlane.xlu0 %2081
    %v2083 = vsel %vm152, %v2049, 0.0
    %2084 = vadd.xlane.f32.xlu0 %v2083
    %v2085 = vpop.xlane.xlu0 %2084
    %v2086 = vsel %vm152, %v2050, 0.0
    %2087 = vadd.xlane.f32.xlu0 %v2086
    %v2088 = vpop.xlane.xlu0 %2087
    %v2089 = vsel %vm152, %v2051, 0.0
    %2090 = vadd.xlane.f32.xlu0 %v2089
    %v2091 = vpop.xlane.xlu0 %2090
    %v2092 = vsel %vm152, %v2052, 0.0
    %2093 = vadd.xlane.f32.xlu0 %v2092
    %v2094 = vpop.xlane.xlu0 %2093
    %v2095 = vsel %vm152, %v2053, 0.0
    %2096 = vadd.xlane.f32.xlu0 %v2095
    %v2097 = vpop.xlane.xlu0 %2096
    %v2098 = vsel %vm152, %v2054, 0.0
    %2099 = vadd.xlane.f32.xlu0 %v2098
    %v2100 = vpop.xlane.xlu0 %2099
    %v2101 = vsel %vm152, %v2055, 0.0
    %2102 = vadd.xlane.f32.xlu0 %v2101
    %v2103 = vpop.xlane.xlu0 %2102
    %v2104 = vsel %vm152, %v2056, 0.0
    %2105 = vadd.xlane.f32.xlu0 %v2104
    %v2106 = vpop.xlane.xlu0 %2105
    %v2107 = vsel %vm152, %v2057, 0.0
    %2108 = vadd.xlane.f32.xlu0 %v2107
    %v2109 = vpop.xlane.xlu0 %2108
    %v2110 = vsel %vm152, %v2058, 0.0
    %2111 = vadd.xlane.f32.xlu0 %v2110
    %v2112 = vpop.xlane.xlu0 %2111
    %v2113 = vsel %vm152, %v2059, 0.0
    %2114 = vadd.xlane.f32.xlu0 %v2113
    %v2115 = vpop.xlane.xlu0 %2114
    %v2116 = vsel %vm152, %v2060, 0.0
    %2117 = vadd.xlane.f32.xlu0 %v2116
    %v2118 = vpop.xlane.xlu0 %2117
    %v2119 = vsel %vm152, %v2061, 0.0
    %2120 = vadd.xlane.f32.xlu0 %v2119
    %v2121 = vpop.xlane.xlu0 %2120
    %v2122 = vsel %vm152, %v2062, 0.0
    %2123 = vadd.xlane.f32.xlu0 %v2122
    %v2124 = vpop.xlane.xlu0 %2123
    %v2125 = vsel %vm152, %v2063, 0.0
    %2126 = vadd.xlane.f32.xlu0 %v2125
    %v2127 = vpop.xlane.xlu0 %2126
    %v2128 = vsel %vm152, %v2064, 0.0
    %2129 = vadd.xlane.f32.xlu0 %v2128
    %v2130 = vpop.xlane.xlu0 %2129
    %v2131 = vsel %vm152, %v2065, 0.0
    %2132 = vadd.xlane.f32.xlu0 %v2131
    %v2133 = vpop.xlane.xlu0 %2132
    %v2134 = vsel %vm152, %v2066, 0.0
    %2135 = vadd.xlane.f32.xlu0 %v2134
    %v2136 = vpop.xlane.xlu0 %2135
    %v2137 = vsel %vm152, %v2067, 0.0
    %2138 = vadd.xlane.f32.xlu0 %v2137
    %v2139 = vpop.xlane.xlu0 %2138
    %v2140 = vmul.f32 %v2070, 0.03125
    %v2141 = vmul.f32 %v2073, 0.03125
    %v2142 = vmul.f32 %v2076, 0.03125
    %v2143 = vmul.f32 %v2079, 0.03125
    %v2144 = vmul.f32 %v2082, 0.03125
    %v2145 = vmul.f32 %v2085, 0.03125
    %v2146 = vmul.f32 %v2088, 0.03125
    %v2147 = vmul.f32 %v2091, 0.03125
    %v2148 = vmul.f32 %v2094, 0.03125
    %v2149 = vmul.f32 %v2097, 0.03125
    %v2150 = vmul.f32 %v2100, 0.03125
    %v2151 = vmul.f32 %v2103, 0.03125
    %v2152 = vmul.f32 %v2106, 0.03125
    %v2153 = vmul.f32 %v2109, 0.03125
    %v2154 = vmul.f32 %v2112, 0.03125
    %v2155 = vmul.f32 %v2115, 0.03125
    %v2156 = vmul.f32 %v2118, 0.03125
    %v2157 = vmul.f32 %v2121, 0.03125
    %v2158 = vmul.f32 %v2124, 0.03125
    %v2159 = vmul.f32 %v2127, 0.03125
    %v2160 = vmul.f32 %v2130, 0.03125
    %v2161 = vmul.f32 %v2133, 0.03125
    %v2162 = vmul.f32 %v2136, 0.03125
    %v2163 = vmul.f32 %v2139, 0.03125
    %v2164 = vmul.f32 %v2044, %v2044
    %v2165 = vmul.f32 %v2045, %v2045
    %v2166 = vmul.f32 %v2046, %v2046
    %v2167 = vmul.f32 %v2047, %v2047
    %v2168 = vmul.f32 %v2048, %v2048
    %v2169 = vmul.f32 %v2049, %v2049
    %v2170 = vmul.f32 %v2050, %v2050
    %v2171 = vmul.f32 %v2051, %v2051
    %v2172 = vmul.f32 %v2052, %v2052
    %v2173 = vmul.f32 %v2053, %v2053
    %v2174 = vmul.f32 %v2054, %v2054
    %v2175 = vmul.f32 %v2055, %v2055
    %v2176 = vmul.f32 %v2056, %v2056
    %v2177 = vmul.f32 %v2057, %v2057
    %v2178 = vmul.f32 %v2058, %v2058
    %v2179 = vmul.f32 %v2059, %v2059
    %v2180 = vmul.f32 %v2060, %v2060
    %v2181 = vmul.f32 %v2061, %v2061
    %v2182 = vmul.f32 %v2062, %v2062
    %v2183 = vmul.f32 %v2063, %v2063
    %v2184 = vmul.f32 %v2064, %v2064
    %v2185 = vmul.f32 %v2065, %v2065
    %v2186 = vmul.f32 %v2066, %v2066
    %v2187 = vmul.f32 %v2067, %v2067
    %v2188 = vsel %vm152, %v2164, 0.0
    %2189 = vadd.xlane.f32.xlu0 %v2188
    %v2190 = vpop.xlane.xlu0 %2189
    %v2191 = vsel %vm152, %v2165, 0.0
    %2192 = vadd.xlane.f32.xlu0 %v2191
    %v2193 = vpop.xlane.xlu0 %2192
    %v2194 = vsel %vm152, %v2166, 0.0
    %2195 = vadd.xlane.f32.xlu0 %v2194
    %v2196 = vpop.xlane.xlu0 %2195
    %v2197 = vsel %vm152, %v2167, 0.0
    %2198 = vadd.xlane.f32.xlu0 %v2197
    %v2199 = vpop.xlane.xlu0 %2198
    %v2200 = vsel %vm152, %v2168, 0.0
    %2201 = vadd.xlane.f32.xlu0 %v2200
    %v2202 = vpop.xlane.xlu0 %2201
    %v2203 = vsel %vm152, %v2169, 0.0
    %2204 = vadd.xlane.f32.xlu0 %v2203
    %v2205 = vpop.xlane.xlu0 %2204
    %v2206 = vsel %vm152, %v2170, 0.0
    %2207 = vadd.xlane.f32.xlu0 %v2206
    %v2208 = vpop.xlane.xlu0 %2207
    %v2209 = vsel %vm152, %v2171, 0.0
    %2210 = vadd.xlane.f32.xlu0 %v2209
    %v2211 = vpop.xlane.xlu0 %2210
    %v2212 = vsel %vm152, %v2172, 0.0
    %2213 = vadd.xlane.f32.xlu0 %v2212
    %v2214 = vpop.xlane.xlu0 %2213
    %v2215 = vsel %vm152, %v2173, 0.0
    %2216 = vadd.xlane.f32.xlu0 %v2215
    %v2217 = vpop.xlane.xlu0 %2216
    %v2218 = vsel %vm152, %v2174, 0.0
    %2219 = vadd.xlane.f32.xlu0 %v2218
    %v2220 = vpop.xlane.xlu0 %2219
    %v2221 = vsel %vm152, %v2175, 0.0
    %2222 = vadd.xlane.f32.xlu0 %v2221
    %v2223 = vpop.xlane.xlu0 %2222
    %v2224 = vsel %vm152, %v2176, 0.0
    %2225 = vadd.xlane.f32.xlu0 %v2224
    %v2226 = vpop.xlane.xlu0 %2225
    %v2227 = vsel %vm152, %v2177, 0.0
    %2228 = vadd.xlane.f32.xlu0 %v2227
    %v2229 = vpop.xlane.xlu0 %2228
    %v2230 = vsel %vm152, %v2178, 0.0
    %2231 = vadd.xlane.f32.xlu0 %v2230
    %v2232 = vpop.xlane.xlu0 %2231
    %v2233 = vsel %vm152, %v2179, 0.0
    %2234 = vadd.xlane.f32.xlu0 %v2233
    %v2235 = vpop.xlane.xlu0 %2234
    %v2236 = vsel %vm152, %v2180, 0.0
    %2237 = vadd.xlane.f32.xlu0 %v2236
    %v2238 = vpop.xlane.xlu0 %2237
    %v2239 = vsel %vm152, %v2181, 0.0
    %2240 = vadd.xlane.f32.xlu0 %v2239
    %v2241 = vpop.xlane.xlu0 %2240
    %v2242 = vsel %vm152, %v2182, 0.0
    %2243 = vadd.xlane.f32.xlu0 %v2242
    %v2244 = vpop.xlane.xlu0 %2243
    %v2245 = vsel %vm152, %v2183, 0.0
    %2246 = vadd.xlane.f32.xlu0 %v2245
    %v2247 = vpop.xlane.xlu0 %2246
    %v2248 = vsel %vm152, %v2184, 0.0
    %2249 = vadd.xlane.f32.xlu0 %v2248
    %v2250 = vpop.xlane.xlu0 %2249
    %v2251 = vsel %vm152, %v2185, 0.0
    %2252 = vadd.xlane.f32.xlu0 %v2251
    %v2253 = vpop.xlane.xlu0 %2252
    %v2254 = vsel %vm152, %v2186, 0.0
    %2255 = vadd.xlane.f32.xlu0 %v2254
    %v2256 = vpop.xlane.xlu0 %2255
    %v2257 = vsel %vm152, %v2187, 0.0
    %2258 = vadd.xlane.f32.xlu0 %v2257
    %v2259 = vpop.xlane.xlu0 %2258
    %v2260 = vmul.f32 %v2190, 0.03125
    %v2261 = vmul.f32 %v2193, 0.03125
    %v2262 = vmul.f32 %v2196, 0.03125
    %v2263 = vmul.f32 %v2199, 0.03125
    %v2264 = vmul.f32 %v2202, 0.03125
    %v2265 = vmul.f32 %v2205, 0.03125
    %v2266 = vmul.f32 %v2208, 0.03125
    %v2267 = vmul.f32 %v2211, 0.03125
    %v2268 = vmul.f32 %v2214, 0.03125
    %v2269 = vmul.f32 %v2217, 0.03125
    %v2270 = vmul.f32 %v2220, 0.03125
    %v2271 = vmul.f32 %v2223, 0.03125
    %v2272 = vmul.f32 %v2226, 0.03125
    %v2273 = vmul.f32 %v2229, 0.03125
    %v2274 = vmul.f32 %v2232, 0.03125
    %v2275 = vmul.f32 %v2235, 0.03125
    %v2276 = vmul.f32 %v2238, 0.03125
    %v2277 = vmul.f32 %v2241, 0.03125
    %v2278 = vmul.f32 %v2244, 0.03125
    %v2279 = vmul.f32 %v2247, 0.03125
    %v2280 = vmul.f32 %v2250, 0.03125
    %v2281 = vmul.f32 %v2253, 0.03125
    %v2282 = vmul.f32 %v2256, 0.03125
    %v2283 = vmul.f32 %v2259, 0.03125
    %v2284 = vmul.f32 %v2140, %v2140
    %v2285 = vmul.f32 %v2141, %v2141
    %v2286 = vmul.f32 %v2142, %v2142
    %v2287 = vmul.f32 %v2143, %v2143
    %v2288 = vmul.f32 %v2144, %v2144
    %v2289 = vmul.f32 %v2145, %v2145
    %v2290 = vmul.f32 %v2146, %v2146
    %v2291 = vmul.f32 %v2147, %v2147
    %v2292 = vmul.f32 %v2148, %v2148
    %v2293 = vmul.f32 %v2149, %v2149
    %v2294 = vmul.f32 %v2150, %v2150
    %v2295 = vmul.f32 %v2151, %v2151
    %v2296 = vmul.f32 %v2152, %v2152
    %v2297 = vmul.f32 %v2153, %v2153
    %v2298 = vmul.f32 %v2154, %v2154
    %v2299 = vmul.f32 %v2155, %v2155
    %v2300 = vmul.f32 %v2156, %v2156
    %v2301 = vmul.f32 %v2157, %v2157
    %v2302 = vmul.f32 %v2158, %v2158
    %v2303 = vmul.f32 %v2159, %v2159
    %v2304 = vmul.f32 %v2160, %v2160
    %v2305 = vmul.f32 %v2161, %v2161
    %v2306 = vmul.f32 %v2162, %v2162
    %v2307 = vmul.f32 %v2163, %v2163
    %v2308 = vsub.f32 %v2260, %v2284
    %v2309 = vsub.f32 %v2261, %v2285
    %v2310 = vsub.f32 %v2262, %v2286
    %v2311 = vsub.f32 %v2263, %v2287
    %v2312 = vsub.f32 %v2264, %v2288
    %v2313 = vsub.f32 %v2265, %v2289
    %v2314 = vsub.f32 %v2266, %v2290
    %v2315 = vsub.f32 %v2267, %v2291
    %v2316 = vsub.f32 %v2268, %v2292
    %v2317 = vsub.f32 %v2269, %v2293
    %v2318 = vsub.f32 %v2270, %v2294
    %v2319 = vsub.f32 %v2271, %v2295
    %v2320 = vsub.f32 %v2272, %v2296
    %v2321 = vsub.f32 %v2273, %v2297
    %v2322 = vsub.f32 %v2274, %v2298
    %v2323 = vsub.f32 %v2275, %v2299
    %v2324 = vsub.f32 %v2276, %v2300
    %v2325 = vsub.f32 %v2277, %v2301
    %v2326 = vsub.f32 %v2278, %v2302
    %v2327 = vsub.f32 %v2279, %v2303
    %v2328 = vsub.f32 %v2280, %v2304
    %v2329 = vsub.f32 %v2281, %v2305
    %v2330 = vsub.f32 %v2282, %v2306
    %v2331 = vsub.f32 %v2283, %v2307
    %v2332 = vsub.f32 %v2044, %v2140
    %v2333 = vsub.f32 %v2045, %v2141
    %v2334 = vsub.f32 %v2046, %v2142
    %v2335 = vsub.f32 %v2047, %v2143
    %v2336 = vsub.f32 %v2048, %v2144
    %v2337 = vsub.f32 %v2049, %v2145
    %v2338 = vsub.f32 %v2050, %v2146
    %v2339 = vsub.f32 %v2051, %v2147
    %v2340 = vsub.f32 %v2052, %v2148
    %v2341 = vsub.f32 %v2053, %v2149
    %v2342 = vsub.f32 %v2054, %v2150
    %v2343 = vsub.f32 %v2055, %v2151
    %v2344 = vsub.f32 %v2056, %v2152
    %v2345 = vsub.f32 %v2057, %v2153
    %v2346 = vsub.f32 %v2058, %v2154
    %v2347 = vsub.f32 %v2059, %v2155
    %v2348 = vsub.f32 %v2060, %v2156
    %v2349 = vsub.f32 %v2061, %v2157
    %v2350 = vsub.f32 %v2062, %v2158
    %v2351 = vsub.f32 %v2063, %v2159
    %v2352 = vsub.f32 %v2064, %v2160
    %v2353 = vsub.f32 %v2065, %v2161
    %v2354 = vsub.f32 %v2066, %v2162
    %v2355 = vsub.f32 %v2067, %v2163
    %v2356 = vadd.f32 %v2308, 1e-05
    %v2357 = vadd.f32 %v2309, 1e-05
    %v2358 = vadd.f32 %v2310, 1e-05
    %v2359 = vadd.f32 %v2311, 1e-05
    %v2360 = vadd.f32 %v2312, 1e-05
    %v2361 = vadd.f32 %v2313, 1e-05
    %v2362 = vadd.f32 %v2314, 1e-05
    %v2363 = vadd.f32 %v2315, 1e-05
    %v2364 = vadd.f32 %v2316, 1e-05
    %v2365 = vadd.f32 %v2317, 1e-05
    %v2366 = vadd.f32 %v2318, 1e-05
    %v2367 = vadd.f32 %v2319, 1e-05
    %v2368 = vadd.f32 %v2320, 1e-05
    %v2369 = vadd.f32 %v2321, 1e-05
    %v2370 = vadd.f32 %v2322, 1e-05
    %v2371 = vadd.f32 %v2323, 1e-05
    %v2372 = vadd.f32 %v2324, 1e-05
    %v2373 = vadd.f32 %v2325, 1e-05
    %v2374 = vadd.f32 %v2326, 1e-05
    %v2375 = vadd.f32 %v2327, 1e-05
    %v2376 = vadd.f32 %v2328, 1e-05
    %v2377 = vadd.f32 %v2329, 1e-05
    %v2378 = vadd.f32 %v2330, 1e-05
    %v2379 = vadd.f32 %v2331, 1e-05
    %v2380 = vrsqrt.pop %v2356
    %v2381 = vrsqrt.pop %v2357
    %v2382 = vrsqrt.pop %v2358
    %v2383 = vrsqrt.pop %v2359
    %v2384 = vrsqrt.pop %v2360
    %v2385 = vrsqrt.pop %v2361
    %v2386 = vrsqrt.pop %v2362
    %v2387 = vrsqrt.pop %v2363
    %v2388 = vrsqrt.pop %v2364
    %v2389 = vrsqrt.pop %v2365
    %v2390 = vrsqrt.pop %v2366
    %v2391 = vrsqrt.pop %v2367
    %v2392 = vrsqrt.pop %v2368
    %v2393 = vrsqrt.pop %v2369
    %v2394 = vrsqrt.pop %v2370
    %v2395 = vrsqrt.pop %v2371
    %v2396 = vrsqrt.pop %v2372
    %v2397 = vrsqrt.pop %v2373
    %v2398 = vrsqrt.pop %v2374
    %v2399 = vrsqrt.pop %v2375
    %v2400 = vrsqrt.pop %v2376
    %v2401 = vrsqrt.pop %v2377
    %v2402 = vrsqrt.pop %v2378
    %v2403 = vrsqrt.pop %v2379
    %v2404 = vmul.f32 %v2332, %v2380
    %v2405 = vmul.f32 %v2333, %v2381
    %v2406 = vmul.f32 %v2334, %v2382
    %v2407 = vmul.f32 %v2335, %v2383
    %v2408 = vmul.f32 %v2336, %v2384
    %v2409 = vmul.f32 %v2337, %v2385
    %v2410 = vmul.f32 %v2338, %v2386
    %v2411 = vmul.f32 %v2339, %v2387
    %v2412 = vmul.f32 %v2340, %v2388
    %v2413 = vmul.f32 %v2341, %v2389
    %v2414 = vmul.f32 %v2342, %v2390
    %v2415 = vmul.f32 %v2343, %v2391
    %v2416 = vmul.f32 %v2344, %v2392
    %v2417 = vmul.f32 %v2345, %v2393
    %v2418 = vmul.f32 %v2346, %v2394
    %v2419 = vmul.f32 %v2347, %v2395
    %v2420 = vmul.f32 %v2348, %v2396
    %v2421 = vmul.f32 %v2349, %v2397
    %v2422 = vmul.f32 %v2350, %v2398
    %v2423 = vmul.f32 %v2351, %v2399
    %v2424 = vmul.f32 %v2352, %v2400
    %v2425 = vmul.f32 %v2353, %v2401
    %v2426 = vmul.f32 %v2354, %v2402
    %v2427 = vmul.f32 %v2355, %v2403
    %v2428 = vlaneseq
    %v2429 = vshrl.u32 %v2428, 7
    %v2430 = vsub.s32 4, %v2429
    %v2431 = vrot.slane %v738, %v2430
    %v2432 = vmul.f32 %v2404, %v2431
    %v2433 = vmul.f32 %v2405, %v2431
    %v2434 = vmul.f32 %v2406, %v2431
    %v2435 = vmul.f32 %v2407, %v2431
    %v2436 = vmul.f32 %v2408, %v2431
    %v2437 = vmul.f32 %v2409, %v2431
    %v2438 = vmul.f32 %v2410, %v2431
    %v2439 = vmul.f32 %v2411, %v2431
    %v2440 = vmul.f32 %v2412, %v2431
    %v2441 = vmul.f32 %v2413, %v2431
    %v2442 = vmul.f32 %v2414, %v2431
    %v2443 = vmul.f32 %v2415, %v2431
    %v2444 = vmul.f32 %v2416, %v2431
    %v2445 = vmul.f32 %v2417, %v2431
    %v2446 = vmul.f32 %v2418, %v2431
    %v2447 = vmul.f32 %v2419, %v2431
    %v2448 = vmul.f32 %v2420, %v2431
    %v2449 = vmul.f32 %v2421, %v2431
    %v2450 = vmul.f32 %v2422, %v2431
    %v2451 = vmul.f32 %v2423, %v2431
    %v2452 = vmul.f32 %v2424, %v2431
    %v2453 = vmul.f32 %v2425, %v2431
    %v2454 = vmul.f32 %v2426, %v2431
    %v2455 = vmul.f32 %v2427, %v2431
    %v2456 = vlaneseq
    %v2457 = vshrl.u32 %v2456, 7
    %v2458 = vsub.s32 5, %v2457
    %v2459 = vrot.slane %v738, %v2458
    %v2460 = vadd.f32 %v2432, %v2459
    %v2461 = vadd.f32 %v2433, %v2459
    %v2462 = vadd.f32 %v2434, %v2459
    %v2463 = vadd.f32 %v2435, %v2459
    %v2464 = vadd.f32 %v2436, %v2459
    %v2465 = vadd.f32 %v2437, %v2459
    %v2466 = vadd.f32 %v2438, %v2459
    %v2467 = vadd.f32 %v2439, %v2459
    %v2468 = vadd.f32 %v2440, %v2459
    %v2469 = vadd.f32 %v2441, %v2459
    %v2470 = vadd.f32 %v2442, %v2459
    %v2471 = vadd.f32 %v2443, %v2459
    %v2472 = vadd.f32 %v2444, %v2459
    %v2473 = vadd.f32 %v2445, %v2459
    %v2474 = vadd.f32 %v2446, %v2459
    %v2475 = vadd.f32 %v2447, %v2459
    %v2476 = vadd.f32 %v2448, %v2459
    %v2477 = vadd.f32 %v2449, %v2459
    %v2478 = vadd.f32 %v2450, %v2459
    %v2479 = vadd.f32 %v2451, %v2459
    %v2480 = vadd.f32 %v2452, %v2459
    %v2481 = vadd.f32 %v2453, %v2459
    %v2482 = vadd.f32 %v2454, %v2459
    %v2483 = vadd.f32 %v2455, %v2459
    %v2484 = vmax.f32 %v2460, 0.0
    %v2485 = vmax.f32 %v2461, 0.0
    %v2486 = vmax.f32 %v2462, 0.0
    %v2487 = vmax.f32 %v2463, 0.0
    %v2488 = vmax.f32 %v2464, 0.0
    %v2489 = vmax.f32 %v2465, 0.0
    %v2490 = vmax.f32 %v2466, 0.0
    %v2491 = vmax.f32 %v2467, 0.0
    %v2492 = vmax.f32 %v2468, 0.0
    %v2493 = vmax.f32 %v2469, 0.0
    %v2494 = vmax.f32 %v2470, 0.0
    %v2495 = vmax.f32 %v2471, 0.0
    %v2496 = vmax.f32 %v2472, 0.0
    %v2497 = vmax.f32 %v2473, 0.0
    %v2498 = vmax.f32 %v2474, 0.0
    %v2499 = vmax.f32 %v2475, 0.0
    %v2500 = vmax.f32 %v2476, 0.0
    %v2501 = vmax.f32 %v2477, 0.0
    %v2502 = vmax.f32 %v2478, 0.0
    %v2503 = vmax.f32 %v2479, 0.0
    %v2504 = vmax.f32 %v2480, 0.0
    %v2505 = vmax.f32 %v2481, 0.0
    %v2506 = vmax.f32 %v2482, 0.0
    %v2507 = vmax.f32 %v2483, 0.0
    %v2508 = vsel %vm1453, %v2484, -1e+30
    %v2509 = vsel %vm1454, %v2485, -1e+30
    %v2510 = vsel %vm1455, %v2486, -1e+30
    %v2511 = vsel %vm1453, %v2487, -1e+30
    %v2512 = vsel %vm1454, %v2488, -1e+30
    %v2513 = vsel %vm1455, %v2489, -1e+30
    %v2514 = vsel %vm1453, %v2490, -1e+30
    %v2515 = vsel %vm1454, %v2491, -1e+30
    %v2516 = vsel %vm1455, %v2492, -1e+30
    %v2517 = vsel %vm1453, %v2493, -1e+30
    %v2518 = vsel %vm1454, %v2494, -1e+30
    %v2519 = vsel %vm1455, %v2495, -1e+30
    %v2520 = vsel %vm1453, %v2496, -1e+30
    %v2521 = vsel %vm1454, %v2497, -1e+30
    %v2522 = vsel %vm1455, %v2498, -1e+30
    %v2523 = vsel %vm1453, %v2499, -1e+30
    %v2524 = vsel %vm1454, %v2500, -1e+30
    %v2525 = vsel %vm1455, %v2501, -1e+30
    %v2526 = vsel %vm1453, %v2502, -1e+30
    %v2527 = vsel %vm1454, %v2503, -1e+30
    %v2528 = vsel %vm1455, %v2504, -1e+30
    %v2529 = vsel %vm1453, %v2505, -1e+30
    %v2530 = vsel %vm1454, %v2506, -1e+30
    %v2531 = vsel %vm1455, %v2507, -1e+30
    %v2532 = vsel %vm152, %v2508, -inf
    %v2533 = vsel %vm152, %v2509, -inf
    %v2534 = vmax.f32 %v2532, %v2533
    %v2535 = vsel %vm152, %v2510, -inf
    %v2536 = vmax.f32 %v2534, %v2535
    %v2537 = vrot.slane %v2536, 4
    %v2538 = vmax.f32 %v2536, %v2537
    %v2539 = vrot.slane %v2538, 2
    %v2540 = vmax.f32 %v2538, %v2539
    %v2541 = vrot.slane %v2540, 1
    %v2542 = vmax.f32 %v2540, %v2541
    %v2543 = vsel %vm152, %v2511, -inf
    %v2544 = vsel %vm152, %v2512, -inf
    %v2545 = vmax.f32 %v2543, %v2544
    %v2546 = vsel %vm152, %v2513, -inf
    %v2547 = vmax.f32 %v2545, %v2546
    %v2548 = vrot.slane %v2547, 4
    %v2549 = vmax.f32 %v2547, %v2548
    %v2550 = vrot.slane %v2549, 2
    %v2551 = vmax.f32 %v2549, %v2550
    %v2552 = vrot.slane %v2551, 1
    %v2553 = vmax.f32 %v2551, %v2552
    %v2554 = vsel %vm152, %v2514, -inf
    %v2555 = vsel %vm152, %v2515, -inf
    %v2556 = vmax.f32 %v2554, %v2555
    %v2557 = vsel %vm152, %v2516, -inf
    %v2558 = vmax.f32 %v2556, %v2557
    %v2559 = vrot.slane %v2558, 4
    %v2560 = vmax.f32 %v2558, %v2559
    %v2561 = vrot.slane %v2560, 2
    %v2562 = vmax.f32 %v2560, %v2561
    %v2563 = vrot.slane %v2562, 1
    %v2564 = vmax.f32 %v2562, %v2563
    %v2565 = vsel %vm152, %v2517, -inf
    %v2566 = vsel %vm152, %v2518, -inf
    %v2567 = vmax.f32 %v2565, %v2566
    %v2568 = vsel %vm152, %v2519, -inf
    %v2569 = vmax.f32 %v2567, %v2568
    %v2570 = vrot.slane %v2569, 4
    %v2571 = vmax.f32 %v2569, %v2570
    %v2572 = vrot.slane %v2571, 2
    %v2573 = vmax.f32 %v2571, %v2572
    %v2574 = vrot.slane %v2573, 1
    %v2575 = vmax.f32 %v2573, %v2574
    %v2576 = vsel %vm152, %v2520, -inf
    %v2577 = vsel %vm152, %v2521, -inf
    %v2578 = vmax.f32 %v2576, %v2577
    %v2579 = vsel %vm152, %v2522, -inf
    %v2580 = vmax.f32 %v2578, %v2579
    %v2581 = vrot.slane %v2580, 4
    %v2582 = vmax.f32 %v2580, %v2581
    %v2583 = vrot.slane %v2582, 2
    %v2584 = vmax.f32 %v2582, %v2583
    %v2585 = vrot.slane %v2584, 1
    %v2586 = vmax.f32 %v2584, %v2585
    %v2587 = vsel %vm152, %v2523, -inf
    %v2588 = vsel %vm152, %v2524, -inf
    %v2589 = vmax.f32 %v2587, %v2588
    %v2590 = vsel %vm152, %v2525, -inf
    %v2591 = vmax.f32 %v2589, %v2590
    %v2592 = vrot.slane %v2591, 4
    %v2593 = vmax.f32 %v2591, %v2592
    %v2594 = vrot.slane %v2593, 2
    %v2595 = vmax.f32 %v2593, %v2594
    %v2596 = vrot.slane %v2595, 1
    %v2597 = vmax.f32 %v2595, %v2596
    %v2598 = vsel %vm152, %v2526, -inf
    %v2599 = vsel %vm152, %v2527, -inf
    %v2600 = vmax.f32 %v2598, %v2599
    %v2601 = vsel %vm152, %v2528, -inf
    %v2602 = vmax.f32 %v2600, %v2601
    %v2603 = vrot.slane %v2602, 4
    %v2604 = vmax.f32 %v2602, %v2603
    %v2605 = vrot.slane %v2604, 2
    %v2606 = vmax.f32 %v2604, %v2605
    %v2607 = vrot.slane %v2606, 1
    %v2608 = vmax.f32 %v2606, %v2607
    %v2609 = vsel %vm152, %v2529, -inf
    %v2610 = vsel %vm152, %v2530, -inf
    %v2611 = vmax.f32 %v2609, %v2610
    %v2612 = vsel %vm152, %v2531, -inf
    %v2613 = vmax.f32 %v2611, %v2612
    %v2614 = vrot.slane %v2613, 4
    %v2615 = vmax.f32 %v2613, %v2614
    %v2616 = vrot.slane %v2615, 2
    %v2617 = vmax.f32 %v2615, %v2616
    %v2618 = vrot.slane %v2617, 1
    %v2619 = vmax.f32 %v2617, %v2618
    %v2620 = vld [vmem:[#allocation2 + $0xe0] sm:$0xff]
    %v2621 = vld [vmem:[#allocation2 + $0xe8] sm:$0xff]
    %v2622 = vld [vmem:[#allocation2 + $0xf0] sm:$0xff]
    %v2623 = vld [vmem:[#allocation2 + $0xf8] sm:$0xff]
    %v2624 = vld [vmem:[#allocation2 + $0x100] sm:$0xff]
    %v2625 = vld [vmem:[#allocation2 + $0x108] sm:$0xff]
    %v2626 = vld [vmem:[#allocation2 + $0x110] sm:$0xff]
    %v2627 = vld [vmem:[#allocation2 + $0x118] sm:$0xff]
    %v2629 = vsel %vm152, %v2484, 0
    %v2632 = vsel %vm152, %v2485, 0
    %v2635 = vsel %vm152, %v2486, 0
    %v2638 = vsel %vm152, %v2487, 0
    %v2641 = vsel %vm152, %v2488, 0
    %v2644 = vsel %vm152, %v2489, 0
    %v2647 = vsel %vm152, %v2490, 0
    %v2650 = vsel %vm152, %v2491, 0
    %v2653 = vsel %vm152, %v2492, 0
    %v2656 = vsel %vm152, %v2493, 0
    %v2659 = vsel %vm152, %v2494, 0
    %v2662 = vsel %vm152, %v2495, 0
    %v2665 = vsel %vm152, %v2496, 0
    %v2668 = vsel %vm152, %v2497, 0
    %v2671 = vsel %vm152, %v2498, 0
    %v2674 = vsel %vm152, %v2499, 0
    %v2677 = vsel %vm152, %v2500, 0
    %v2680 = vsel %vm152, %v2501, 0
    %v2683 = vsel %vm152, %v2502, 0
    %v2686 = vsel %vm152, %v2503, 0
    %v2689 = vsel %vm152, %v2504, 0
    %v2692 = vsel %vm152, %v2505, 0
    %v2695 = vsel %vm152, %v2506, 0
    %v2698 = vsel %vm152, %v2507, 0
    %2700 = vmatprep.subr.mxu0 0.0
    %2701 = vmatpush1.msra.mxu0 0.0
    %2702 = vmatprep.subr.mxu0 0.0
    %2703 = vmatpush1.msra.mxu0 0.0
    %2704 = vmatprep.subr.mxu0 0.0
    %2705 = vmatpush1.msra.mxu0 0.0
    %2706 = vmatprep.subr.mxu0 0.0
    %2707 = vmatpush1.msra.mxu0 0.0
    %2708 = vmatprep.subr.mxu0 0.0
    %2709 = vmatpush1.msra.mxu0 0.0
    %2710 = vmatprep.subr.mxu0 0.0
    %2711 = vmatpush1.msra.mxu0 0.0
    %2712 = vmatprep.subr.mxu0 0.0
    %2713 = vmatpush1.msra.mxu0 0.0
    %2714 = vmatprep.subr.mxu0 0.0
    %2715 = vmatpush1.msra.mxu0 0.0
    %2716 = vmatprep.subr.mxu0 0.0
    %2717 = vmatpush1.msra.mxu0 0.0
    %2718 = vmatprep.subr.mxu0 0.0
    %2719 = vmatpush1.msra.mxu0 0.0
    %2720 = vmatprep.subr.mxu0 0.0
    %2721 = vmatpush1.msra.mxu0 0.0
    %2722 = vmatprep.subr.mxu0 0.0
    %2723 = vmatpush1.msra.mxu0 0.0
    %2724 = vmatprep.subr.mxu0 0.0
    %2725 = vmatpush1.msra.mxu0 %v2623
    %2726 = vmatprep.subr.mxu0 0.0
    %2727 = vmatpush1.msra.mxu0 %v2622
    %2728 = vmatprep.subr.mxu0 0.0
    %2729 = vmatpush1.msra.mxu0 %v2621
    %2730 = vmatprep.subr.mxu0 0.0
    %2731 = vmatpush1.msra.mxu0 %v2620
    %2732 = vmatprep.subr.mxu0 0.0
    %2733 = vmatpush2.msra.mxu0 0.0
    %2734 = vmatprep.subr.mxu0 0.0
    %2735 = vmatpush2.msra.mxu0 0.0
    %2736 = vmatprep.subr.mxu0 0.0
    %2737 = vmatpush2.msra.mxu0 0.0
    %2738 = vmatprep.subr.mxu0 0.0
    %2739 = vmatpush2.msra.mxu0 0.0
    %2740 = vmatprep.subr.mxu0 0.0
    %2741 = vmatpush2.msra.mxu0 0.0
    %2742 = vmatprep.subr.mxu0 0.0
    %2743 = vmatpush2.msra.mxu0 0.0
    %2744 = vmatprep.subr.mxu0 0.0
    %2745 = vmatpush2.msra.mxu0 0.0
    %2746 = vmatprep.subr.mxu0 0.0
    %2747 = vmatpush2.msra.mxu0 0.0
    %2748 = vmatprep.subr.mxu0 0.0
    %2749 = vmatpush2.msra.mxu0 0.0
    %2750 = vmatprep.subr.mxu0 0.0
    %2751 = vmatpush2.msra.mxu0 0.0
    %2752 = vmatprep.subr.mxu0 0.0
    %2753 = vmatpush2.msra.mxu0 0.0
    %2754 = vmatprep.subr.mxu0 0.0
    %2755 = vmatpush2.msra.mxu0 0.0
    %2756 = vmatprep.subr.mxu0 0.0
    %2757 = vmatpush2.msra.mxu0 0.0
    %2758 = vmatprep.subr.mxu0 0.0
    %2759 = vmatpush2.msra.mxu0 0.0
    %2760 = vmatprep.subr.mxu0 0.0
    %2761 = vmatpush2.msra.mxu0 0.0
    %2762 = vmatprep.subr.mxu0 0.0
    %2763 = vmatpush2.msra.mxu0 0.0
    %2764 = vmatprep.mubr.f32.mxu0 0.0
    %2765 = vmatmul.mubr.f32.gmra.mxu0 %v2629
    %v2766 = vpop.f32.mrf.mxu0
    %v2767 = vadd.f32 0.0, %v2766
    %v2768 = vpop.f32.mrf.mxu0
    %2769 = vmatprep.mubr.f32.mxu0 0.0
    %2770 = vmatmul.mubr.f32.gmra.mxu0 %v2632
    %v2771 = vpop.f32.mrf.mxu0
    %v2772 = vadd.f32 0.0, %v2771
    %v2773 = vpop.f32.mrf.mxu0
    %2774 = vmatprep.mubr.f32.mxu0 0.0
    %2775 = vmatmul.mubr.f32.gmra.mxu0 %v2635
    %v2776 = vpop.f32.mrf.mxu0
    %v2777 = vadd.f32 0.0, %v2776
    %v2778 = vpop.f32.mrf.mxu0
    %2779 = vmatprep.mubr.f32.mxu0 0.0
    %2780 = vmatmul.mubr.f32.gmra.mxu0 %v2638
    %v2781 = vpop.f32.mrf.mxu0
    %v2782 = vadd.f32 0.0, %v2781
    %v2783 = vpop.f32.mrf.mxu0
    %2784 = vmatprep.mubr.f32.mxu0 0.0
    %2785 = vmatmul.mubr.f32.gmra.mxu0 %v2641
    %v2786 = vpop.f32.mrf.mxu0
    %v2787 = vadd.f32 0.0, %v2786
    %v2788 = vpop.f32.mrf.mxu0
    %2789 = vmatprep.mubr.f32.mxu0 0.0
    %2790 = vmatmul.mubr.f32.gmra.mxu0 %v2644
    %v2791 = vpop.f32.mrf.mxu0
    %v2792 = vadd.f32 0.0, %v2791
    %v2793 = vpop.f32.mrf.mxu0
    %2794 = vmatprep.mubr.f32.mxu0 0.0
    %2795 = vmatmul.mubr.f32.gmra.mxu0 %v2647
    %v2796 = vpop.f32.mrf.mxu0
    %v2797 = vadd.f32 0.0, %v2796
    %v2798 = vpop.f32.mrf.mxu0
    %2799 = vmatprep.mubr.f32.mxu0 0.0
    %2800 = vmatmul.mubr.f32.gmra.mxu0 %v2650
    %v2801 = vpop.f32.mrf.mxu0
    %v2802 = vadd.f32 0.0, %v2801
    %v2803 = vpop.f32.mrf.mxu0
    %2804 = vmatprep.mubr.f32.mxu0 0.0
    %2805 = vmatmul.mubr.f32.gmra.mxu0 %v2653
    %v2806 = vpop.f32.mrf.mxu0
    %v2807 = vadd.f32 0.0, %v2806
    %v2808 = vpop.f32.mrf.mxu0
    %2809 = vmatprep.mubr.f32.mxu0 0.0
    %2810 = vmatmul.mubr.f32.gmra.mxu0 %v2656
    %v2811 = vpop.f32.mrf.mxu0
    %v2812 = vadd.f32 0.0, %v2811
    %v2813 = vpop.f32.mrf.mxu0
    %2814 = vmatprep.mubr.f32.mxu0 0.0
    %2815 = vmatmul.mubr.f32.gmra.mxu0 %v2659
    %v2816 = vpop.f32.mrf.mxu0
    %v2817 = vadd.f32 0.0, %v2816
    %v2818 = vpop.f32.mrf.mxu0
    %2819 = vmatprep.mubr.f32.mxu0 0.0
    %2820 = vmatmul.mubr.f32.gmra.mxu0 %v2662
    %v2821 = vpop.f32.mrf.mxu0
    %v2822 = vadd.f32 0.0, %v2821
    %v2823 = vpop.f32.mrf.mxu0
    %2824 = vmatprep.mubr.f32.mxu0 0.0
    %2825 = vmatmul.mubr.f32.gmra.mxu0 %v2665
    %v2826 = vpop.f32.mrf.mxu0
    %v2827 = vadd.f32 0.0, %v2826
    %v2828 = vpop.f32.mrf.mxu0
    %2829 = vmatprep.mubr.f32.mxu0 0.0
    %2830 = vmatmul.mubr.f32.gmra.mxu0 %v2668
    %v2831 = vpop.f32.mrf.mxu0
    %v2832 = vadd.f32 0.0, %v2831
    %v2833 = vpop.f32.mrf.mxu0
    %2834 = vmatprep.mubr.f32.mxu0 0.0
    %2835 = vmatmul.mubr.f32.gmra.mxu0 %v2671
    %v2836 = vpop.f32.mrf.mxu0
    %v2837 = vadd.f32 0.0, %v2836
    %v2838 = vpop.f32.mrf.mxu0
    %2839 = vmatprep.mubr.f32.mxu0 0.0
    %2840 = vmatmul.mubr.f32.gmra.mxu0 %v2674
    %v2841 = vpop.f32.mrf.mxu0
    %v2842 = vadd.f32 0.0, %v2841
    %v2843 = vpop.f32.mrf.mxu0
    %2844 = vmatprep.mubr.f32.mxu0 0.0
    %2845 = vmatmul.mubr.f32.gmra.mxu0 %v2677
    %v2846 = vpop.f32.mrf.mxu0
    %v2847 = vadd.f32 0.0, %v2846
    %v2848 = vpop.f32.mrf.mxu0
    %2849 = vmatprep.mubr.f32.mxu0 0.0
    %2850 = vmatmul.mubr.f32.gmra.mxu0 %v2680
    %v2851 = vpop.f32.mrf.mxu0
    %v2852 = vadd.f32 0.0, %v2851
    %v2853 = vpop.f32.mrf.mxu0
    %2854 = vmatprep.mubr.f32.mxu0 0.0
    %2855 = vmatmul.mubr.f32.gmra.mxu0 %v2683
    %v2856 = vpop.f32.mrf.mxu0
    %v2857 = vadd.f32 0.0, %v2856
    %v2858 = vpop.f32.mrf.mxu0
    %2859 = vmatprep.mubr.f32.mxu0 0.0
    %2860 = vmatmul.mubr.f32.gmra.mxu0 %v2686
    %v2861 = vpop.f32.mrf.mxu0
    %v2862 = vadd.f32 0.0, %v2861
    %v2863 = vpop.f32.mrf.mxu0
    %2864 = vmatprep.mubr.f32.mxu0 0.0
    %2865 = vmatmul.mubr.f32.gmra.mxu0 %v2689
    %v2866 = vpop.f32.mrf.mxu0
    %v2867 = vadd.f32 0.0, %v2866
    %v2868 = vpop.f32.mrf.mxu0
    %2869 = vmatprep.mubr.f32.mxu0 0.0
    %2870 = vmatmul.mubr.f32.gmra.mxu0 %v2692
    %v2871 = vpop.f32.mrf.mxu0
    %v2872 = vadd.f32 0.0, %v2871
    %v2873 = vpop.f32.mrf.mxu0
    %2874 = vmatprep.mubr.f32.mxu0 0.0
    %2875 = vmatmul.mubr.f32.gmra.mxu0 %v2695
    %v2876 = vpop.f32.mrf.mxu0
    %v2877 = vadd.f32 0.0, %v2876
    %v2878 = vpop.f32.mrf.mxu0
    %2879 = vmatprep.mubr.f32.mxu0 0.0
    %2880 = vmatmul.mubr.f32.gmra.mxu0 %v2698
    %v2881 = vpop.f32.mrf.mxu0
    %v2882 = vadd.f32 0.0, %v2881
    %v2883 = vpop.f32.mrf.mxu0
    %2884 = vdwg.mxu0
    %v2893 = vsel %vm302, %v2553, %v2542
    %v2894 = vsel %vm1842, %v2564, %v2893
    %v2895 = vsel %vm1844, %v2575, %v2894
    %v2896 = vsel %vm1846, %v2586, %v2895
    %v2897 = vsel %vm1848, %v2597, %v2896
    %v2898 = vsel %vm1850, %v2608, %v2897
    %v2899 = vsel %vm1852, %v2619, %v2898
    %v2900 = vsel %vm152, %v2899, 0
    %2902 = vmatprep.subr.mxu0 0.0
    %2903 = vmatpush1.msra.mxu0 0.0
    %2904 = vmatprep.subr.mxu0 0.0
    %2905 = vmatpush1.msra.mxu0 0.0
    %2906 = vmatprep.subr.mxu0 0.0
    %2907 = vmatpush1.msra.mxu0 0.0
    %2908 = vmatprep.subr.mxu0 0.0
    %2909 = vmatpush1.msra.mxu0 0.0
    %2910 = vmatprep.subr.mxu0 0.0
    %2911 = vmatpush1.msra.mxu0 0.0
    %2912 = vmatprep.subr.mxu0 0.0
    %2913 = vmatpush1.msra.mxu0 0.0
    %2914 = vmatprep.subr.mxu0 0.0
    %2915 = vmatpush1.msra.mxu0 0.0
    %2916 = vmatprep.subr.mxu0 0.0
    %2917 = vmatpush1.msra.mxu0 0.0
    %2918 = vmatprep.subr.mxu0 0.0
    %2919 = vmatpush1.msra.mxu0 0.0
    %2920 = vmatprep.subr.mxu0 0.0
    %2921 = vmatpush1.msra.mxu0 0.0
    %2922 = vmatprep.subr.mxu0 0.0
    %2923 = vmatpush1.msra.mxu0 0.0
    %2924 = vmatprep.subr.mxu0 0.0
    %2925 = vmatpush1.msra.mxu0 0.0
    %2926 = vmatprep.subr.mxu0 0.0
    %2927 = vmatpush1.msra.mxu0 %v2627
    %2928 = vmatprep.subr.mxu0 0.0
    %2929 = vmatpush1.msra.mxu0 %v2626
    %2930 = vmatprep.subr.mxu0 0.0
    %2931 = vmatpush1.msra.mxu0 %v2625
    %2932 = vmatprep.subr.mxu0 0.0
    %2933 = vmatpush1.msra.mxu0 %v2624
    %2934 = vmatprep.subr.mxu0 0.0
    %2935 = vmatpush2.msra.mxu0 0.0
    %2936 = vmatprep.subr.mxu0 0.0
    %2937 = vmatpush2.msra.mxu0 0.0
    %2938 = vmatprep.subr.mxu0 0.0
    %2939 = vmatpush2.msra.mxu0 0.0
    %2940 = vmatprep.subr.mxu0 0.0
    %2941 = vmatpush2.msra.mxu0 0.0
    %2942 = vmatprep.subr.mxu0 0.0
    %2943 = vmatpush2.msra.mxu0 0.0
    %2944 = vmatprep.subr.mxu0 0.0
    %2945 = vmatpush2.msra.mxu0 0.0
    %2946 = vmatprep.subr.mxu0 0.0
    %2947 = vmatpush2.msra.mxu0 0.0
    %2948 = vmatprep.subr.mxu0 0.0
    %2949 = vmatpush2.msra.mxu0 0.0
    %2950 = vmatprep.subr.mxu0 0.0
    %2951 = vmatpush2.msra.mxu0 0.0
    %2952 = vmatprep.subr.mxu0 0.0
    %2953 = vmatpush2.msra.mxu0 0.0
    %2954 = vmatprep.subr.mxu0 0.0
    %2955 = vmatpush2.msra.mxu0 0.0
    %2956 = vmatprep.subr.mxu0 0.0
    %2957 = vmatpush2.msra.mxu0 0.0
    %2958 = vmatprep.subr.mxu0 0.0
    %2959 = vmatpush2.msra.mxu0 0.0
    %2960 = vmatprep.subr.mxu0 0.0
    %2961 = vmatpush2.msra.mxu0 0.0
    %2962 = vmatprep.subr.mxu0 0.0
    %2963 = vmatpush2.msra.mxu0 0.0
    %2964 = vmatprep.subr.mxu0 0.0
    %2965 = vmatpush2.msra.mxu0 0.0
    %2966 = vmatprep.mubr.f32.mxu0 0.0
    %2967 = vmatmul.mubr.f32.gmra.mxu0 %v2900
    %v2968 = vpop.f32.mrf.mxu0
    %v2969 = vadd.f32 0.0, %v2968
    %v2970 = vpop.f32.mrf.mxu0
    %2971 = vdwg.mxu0
    %v2973 = vcombine.high %v2969, %v2969
    %v2975 = vunpack.c.l.s4 1966171168
    %v2976 = vunpack.c.0.s8 %v2975
    %v2977 = vlaneseq
    %v2978 = vshrl.u32 %v2977, 7
    %v2979 = vsub.s32 %v2976, %v2978
    %v2980 = vrot.slane %v2969, %v2979
    %v2982 = vunpack.c.l.s4 1966171168
    %v2983 = vunpack.c.0.s8 %v2982
    %v2984 = vlaneseq
    %v2985 = vshrl.u32 %v2984, 7
    %v2986 = vsub.s32 %v2983, %v2985
    %v2987 = vrot.slane %v2973, %v2986
    %v2988 = vcombine.high %v2980, %v2980
    %v2989 = vcombine.high %v2987, %v2987
    %v2991 = vunpack.c.l.s4 1966171168
    %v2992 = vunpack.c.0.s8 %v2991
    %v2993 = vlaneseq
    %v2994 = vshrl.u32 %v2993, 7
    %v2995 = vsub.s32 %v2992, %v2994
    %v2996 = vrot.slane %v2980, %v2995
    %v2998 = vunpack.c.l.s4 1966171168
    %v2999 = vunpack.c.0.s8 %v2998
    %v3000 = vlaneseq
    %v3001 = vshrl.u32 %v3000, 7
    %v3002 = vsub.s32 %v2999, %v3001
    %v3003 = vrot.slane %v2987, %v3002
    %v3005 = vunpack.c.l.s4 1966171168
    %v3006 = vunpack.c.0.s8 %v3005
    %v3007 = vlaneseq
    %v3008 = vshrl.u32 %v3007, 7
    %v3009 = vsub.s32 %v3006, %v3008
    %v3010 = vrot.slane %v2988, %v3009
    %v3012 = vunpack.c.l.s4 1966171168
    %v3013 = vunpack.c.0.s8 %v3012
    %v3014 = vlaneseq
    %v3015 = vshrl.u32 %v3014, 7
    %v3016 = vsub.s32 %v3013, %v3015
    %v3017 = vrot.slane %v2989, %v3016
    %v3018 = vcombine.high %v2996, %v2996
    %v3019 = vcombine.high %v3003, %v3003
    %v3020 = vcombine.high %v3010, %v3010
    %v3021 = vcombine.high %v3017, %v3017
    %v3022 = vlaneseq
    %v3023 = vshrl.u32 %v3022, 7
    %v3024 = vsub.s32 0, %v3023
    %v3025 = vrot.slane %v2996, %v3024
    %v3026 = vlaneseq
    %v3027 = vshrl.u32 %v3026, 7
    %v3028 = vsub.s32 0, %v3027
    %v3029 = vrot.slane %v3010, %v3028
    %v3030 = vlaneseq
    %v3031 = vshrl.u32 %v3030, 7
    %v3032 = vsub.s32 0, %v3031
    %v3033 = vrot.slane %v3018, %v3032
    %v3034 = vlaneseq
    %v3035 = vshrl.u32 %v3034, 7
    %v3036 = vsub.s32 0, %v3035
    %v3037 = vrot.slane %v3020, %v3036
    %v3038 = vlaneseq
    %v3039 = vshrl.u32 %v3038, 7
    %v3040 = vsub.s32 0, %v3039
    %v3041 = vrot.slane %v3003, %v3040
    %v3042 = vlaneseq
    %v3043 = vshrl.u32 %v3042, 7
    %v3044 = vsub.s32 0, %v3043
    %v3045 = vrot.slane %v3017, %v3044
    %v3046 = vlaneseq
    %v3047 = vshrl.u32 %v3046, 7
    %v3048 = vsub.s32 0, %v3047
    %v3049 = vrot.slane %v3019, %v3048
    %v3050 = vlaneseq
    %v3051 = vshrl.u32 %v3050, 7
    %v3052 = vsub.s32 0, %v3051
    %v3053 = vrot.slane %v3021, %v3052
    %v3062 = vadd.f32 %v2767, %v3025
    %v3063 = vadd.f32 %v2772, %v3025
    %v3064 = vadd.f32 %v2777, %v3025
    %v3065 = vadd.f32 %v2782, %v3029
    %v3066 = vadd.f32 %v2787, %v3029
    %v3067 = vadd.f32 %v2792, %v3029
    %v3068 = vadd.f32 %v2797, %v3033
    %v3069 = vadd.f32 %v2802, %v3033
    %v3070 = vadd.f32 %v2807, %v3033
    %v3071 = vadd.f32 %v2812, %v3037
    %v3072 = vadd.f32 %v2817, %v3037
    %v3073 = vadd.f32 %v2822, %v3037
    %v3074 = vadd.f32 %v2827, %v3041
    %v3075 = vadd.f32 %v2832, %v3041
    %v3076 = vadd.f32 %v2837, %v3041
    %v3077 = vadd.f32 %v2842, %v3045
    %v3078 = vadd.f32 %v2847, %v3045
    %v3079 = vadd.f32 %v2852, %v3045
    %v3080 = vadd.f32 %v2857, %v3049
    %v3081 = vadd.f32 %v2862, %v3049
    %v3082 = vadd.f32 %v2867, %v3049
    %v3083 = vadd.f32 %v2872, %v3053
    %v3084 = vadd.f32 %v2877, %v3053
    %v3085 = vadd.f32 %v2882, %v3053
    %v3086 = vlaneseq
    %v3087 = vshrl.u32 %v3086, 7
    %v3088 = vsub.s32 6, %v3087
    %v3089 = vrot.slane %v738, %v3088
    %v3090 = vadd.f32 %v3062, %v3089
    %v3091 = vadd.f32 %v3063, %v3089
    %v3092 = vadd.f32 %v3064, %v3089
    %v3093 = vadd.f32 %v3065, %v3089
    %v3094 = vadd.f32 %v3066, %v3089
    %v3095 = vadd.f32 %v3067, %v3089
    %v3096 = vadd.f32 %v3068, %v3089
    %v3097 = vadd.f32 %v3069, %v3089
    %v3098 = vadd.f32 %v3070, %v3089
    %v3099 = vadd.f32 %v3071, %v3089
    %v3100 = vadd.f32 %v3072, %v3089
    %v3101 = vadd.f32 %v3073, %v3089
    %v3102 = vadd.f32 %v3074, %v3089
    %v3103 = vadd.f32 %v3075, %v3089
    %v3104 = vadd.f32 %v3076, %v3089
    %v3105 = vadd.f32 %v3077, %v3089
    %v3106 = vadd.f32 %v3078, %v3089
    %v3107 = vadd.f32 %v3079, %v3089
    %v3108 = vadd.f32 %v3080, %v3089
    %v3109 = vadd.f32 %v3081, %v3089
    %v3110 = vadd.f32 %v3082, %v3089
    %v3111 = vadd.f32 %v3083, %v3089
    %v3112 = vadd.f32 %v3084, %v3089
    %v3113 = vadd.f32 %v3085, %v3089
    %v3114 = vsel %vm152, %v3090, 0.0
    %3115 = vadd.xlane.f32.xlu0 %v3114
    %v3116 = vpop.xlane.xlu0 %3115
    %v3117 = vsel %vm152, %v3091, 0.0
    %3118 = vadd.xlane.f32.xlu0 %v3117
    %v3119 = vpop.xlane.xlu0 %3118
    %v3120 = vsel %vm152, %v3092, 0.0
    %3121 = vadd.xlane.f32.xlu0 %v3120
    %v3122 = vpop.xlane.xlu0 %3121
    %v3123 = vsel %vm152, %v3093, 0.0
    %3124 = vadd.xlane.f32.xlu0 %v3123
    %v3125 = vpop.xlane.xlu0 %3124
    %v3126 = vsel %vm152, %v3094, 0.0
    %3127 = vadd.xlane.f32.xlu0 %v3126
    %v3128 = vpop.xlane.xlu0 %3127
    %v3129 = vsel %vm152, %v3095, 0.0
    %3130 = vadd.xlane.f32.xlu0 %v3129
    %v3131 = vpop.xlane.xlu0 %3130
    %v3132 = vsel %vm152, %v3096, 0.0
    %3133 = vadd.xlane.f32.xlu0 %v3132
    %v3134 = vpop.xlane.xlu0 %3133
    %v3135 = vsel %vm152, %v3097, 0.0
    %3136 = vadd.xlane.f32.xlu0 %v3135
    %v3137 = vpop.xlane.xlu0 %3136
    %v3138 = vsel %vm152, %v3098, 0.0
    %3139 = vadd.xlane.f32.xlu0 %v3138
    %v3140 = vpop.xlane.xlu0 %3139
    %v3141 = vsel %vm152, %v3099, 0.0
    %3142 = vadd.xlane.f32.xlu0 %v3141
    %v3143 = vpop.xlane.xlu0 %3142
    %v3144 = vsel %vm152, %v3100, 0.0
    %3145 = vadd.xlane.f32.xlu0 %v3144
    %v3146 = vpop.xlane.xlu0 %3145
    %v3147 = vsel %vm152, %v3101, 0.0
    %3148 = vadd.xlane.f32.xlu0 %v3147
    %v3149 = vpop.xlane.xlu0 %3148
    %v3150 = vsel %vm152, %v3102, 0.0
    %3151 = vadd.xlane.f32.xlu0 %v3150
    %v3152 = vpop.xlane.xlu0 %3151
    %v3153 = vsel %vm152, %v3103, 0.0
    %3154 = vadd.xlane.f32.xlu0 %v3153
    %v3155 = vpop.xlane.xlu0 %3154
    %v3156 = vsel %vm152, %v3104, 0.0
    %3157 = vadd.xlane.f32.xlu0 %v3156
    %v3158 = vpop.xlane.xlu0 %3157
    %v3159 = vsel %vm152, %v3105, 0.0
    %3160 = vadd.xlane.f32.xlu0 %v3159
    %v3161 = vpop.xlane.xlu0 %3160
    %v3162 = vsel %vm152, %v3106, 0.0
    %3163 = vadd.xlane.f32.xlu0 %v3162
    %v3164 = vpop.xlane.xlu0 %3163
    %v3165 = vsel %vm152, %v3107, 0.0
    %3166 = vadd.xlane.f32.xlu0 %v3165
    %v3167 = vpop.xlane.xlu0 %3166
    %v3168 = vsel %vm152, %v3108, 0.0
    %3169 = vadd.xlane.f32.xlu0 %v3168
    %v3170 = vpop.xlane.xlu0 %3169
    %v3171 = vsel %vm152, %v3109, 0.0
    %3172 = vadd.xlane.f32.xlu0 %v3171
    %v3173 = vpop.xlane.xlu0 %3172
    %v3174 = vsel %vm152, %v3110, 0.0
    %3175 = vadd.xlane.f32.xlu0 %v3174
    %v3176 = vpop.xlane.xlu0 %3175
    %v3177 = vsel %vm152, %v3111, 0.0
    %3178 = vadd.xlane.f32.xlu0 %v3177
    %v3179 = vpop.xlane.xlu0 %3178
    %v3180 = vsel %vm152, %v3112, 0.0
    %3181 = vadd.xlane.f32.xlu0 %v3180
    %v3182 = vpop.xlane.xlu0 %3181
    %v3183 = vsel %vm152, %v3113, 0.0
    %3184 = vadd.xlane.f32.xlu0 %v3183
    %v3185 = vpop.xlane.xlu0 %3184
    %v3186 = vmul.f32 %v3116, 0.03125
    %v3187 = vmul.f32 %v3119, 0.03125
    %v3188 = vmul.f32 %v3122, 0.03125
    %v3189 = vmul.f32 %v3125, 0.03125
    %v3190 = vmul.f32 %v3128, 0.03125
    %v3191 = vmul.f32 %v3131, 0.03125
    %v3192 = vmul.f32 %v3134, 0.03125
    %v3193 = vmul.f32 %v3137, 0.03125
    %v3194 = vmul.f32 %v3140, 0.03125
    %v3195 = vmul.f32 %v3143, 0.03125
    %v3196 = vmul.f32 %v3146, 0.03125
    %v3197 = vmul.f32 %v3149, 0.03125
    %v3198 = vmul.f32 %v3152, 0.03125
    %v3199 = vmul.f32 %v3155, 0.03125
    %v3200 = vmul.f32 %v3158, 0.03125
    %v3201 = vmul.f32 %v3161, 0.03125
    %v3202 = vmul.f32 %v3164, 0.03125
    %v3203 = vmul.f32 %v3167, 0.03125
    %v3204 = vmul.f32 %v3170, 0.03125
    %v3205 = vmul.f32 %v3173, 0.03125
    %v3206 = vmul.f32 %v3176, 0.03125
    %v3207 = vmul.f32 %v3179, 0.03125
    %v3208 = vmul.f32 %v3182, 0.03125
    %v3209 = vmul.f32 %v3185, 0.03125
    %v3210 = vmul.f32 %v3090, %v3090
    %v3211 = vmul.f32 %v3091, %v3091
    %v3212 = vmul.f32 %v3092, %v3092
    %v3213 = vmul.f32 %v3093, %v3093
    %v3214 = vmul.f32 %v3094, %v3094
    %v3215 = vmul.f32 %v3095, %v3095
    %v3216 = vmul.f32 %v3096, %v3096
    %v3217 = vmul.f32 %v3097, %v3097
    %v3218 = vmul.f32 %v3098, %v3098
    %v3219 = vmul.f32 %v3099, %v3099
    %v3220 = vmul.f32 %v3100, %v3100
    %v3221 = vmul.f32 %v3101, %v3101
    %v3222 = vmul.f32 %v3102, %v3102
    %v3223 = vmul.f32 %v3103, %v3103
    %v3224 = vmul.f32 %v3104, %v3104
    %v3225 = vmul.f32 %v3105, %v3105
    %v3226 = vmul.f32 %v3106, %v3106
    %v3227 = vmul.f32 %v3107, %v3107
    %v3228 = vmul.f32 %v3108, %v3108
    %v3229 = vmul.f32 %v3109, %v3109
    %v3230 = vmul.f32 %v3110, %v3110
    %v3231 = vmul.f32 %v3111, %v3111
    %v3232 = vmul.f32 %v3112, %v3112
    %v3233 = vmul.f32 %v3113, %v3113
    %v3234 = vsel %vm152, %v3210, 0.0
    %3235 = vadd.xlane.f32.xlu0 %v3234
    %v3236 = vpop.xlane.xlu0 %3235
    %v3237 = vsel %vm152, %v3211, 0.0
    %3238 = vadd.xlane.f32.xlu0 %v3237
    %v3239 = vpop.xlane.xlu0 %3238
    %v3240 = vsel %vm152, %v3212, 0.0
    %3241 = vadd.xlane.f32.xlu0 %v3240
    %v3242 = vpop.xlane.xlu0 %3241
    %v3243 = vsel %vm152, %v3213, 0.0
    %3244 = vadd.xlane.f32.xlu0 %v3243
    %v3245 = vpop.xlane.xlu0 %3244
    %v3246 = vsel %vm152, %v3214, 0.0
    %3247 = vadd.xlane.f32.xlu0 %v3246
    %v3248 = vpop.xlane.xlu0 %3247
    %v3249 = vsel %vm152, %v3215, 0.0
    %3250 = vadd.xlane.f32.xlu0 %v3249
    %v3251 = vpop.xlane.xlu0 %3250
    %v3252 = vsel %vm152, %v3216, 0.0
    %3253 = vadd.xlane.f32.xlu0 %v3252
    %v3254 = vpop.xlane.xlu0 %3253
    %v3255 = vsel %vm152, %v3217, 0.0
    %3256 = vadd.xlane.f32.xlu0 %v3255
    %v3257 = vpop.xlane.xlu0 %3256
    %v3258 = vsel %vm152, %v3218, 0.0
    %3259 = vadd.xlane.f32.xlu0 %v3258
    %v3260 = vpop.xlane.xlu0 %3259
    %v3261 = vsel %vm152, %v3219, 0.0
    %3262 = vadd.xlane.f32.xlu0 %v3261
    %v3263 = vpop.xlane.xlu0 %3262
    %v3264 = vsel %vm152, %v3220, 0.0
    %3265 = vadd.xlane.f32.xlu0 %v3264
    %v3266 = vpop.xlane.xlu0 %3265
    %v3267 = vsel %vm152, %v3221, 0.0
    %3268 = vadd.xlane.f32.xlu0 %v3267
    %v3269 = vpop.xlane.xlu0 %3268
    %v3270 = vsel %vm152, %v3222, 0.0
    %3271 = vadd.xlane.f32.xlu0 %v3270
    %v3272 = vpop.xlane.xlu0 %3271
    %v3273 = vsel %vm152, %v3223, 0.0
    %3274 = vadd.xlane.f32.xlu0 %v3273
    %v3275 = vpop.xlane.xlu0 %3274
    %v3276 = vsel %vm152, %v3224, 0.0
    %3277 = vadd.xlane.f32.xlu0 %v3276
    %v3278 = vpop.xlane.xlu0 %3277
    %v3279 = vsel %vm152, %v3225, 0.0
    %3280 = vadd.xlane.f32.xlu0 %v3279
    %v3281 = vpop.xlane.xlu0 %3280
    %v3282 = vsel %vm152, %v3226, 0.0
    %3283 = vadd.xlane.f32.xlu0 %v3282
    %v3284 = vpop.xlane.xlu0 %3283
    %v3285 = vsel %vm152, %v3227, 0.0
    %3286 = vadd.xlane.f32.xlu0 %v3285
    %v3287 = vpop.xlane.xlu0 %3286
    %v3288 = vsel %vm152, %v3228, 0.0
    %3289 = vadd.xlane.f32.xlu0 %v3288
    %v3290 = vpop.xlane.xlu0 %3289
    %v3291 = vsel %vm152, %v3229, 0.0
    %3292 = vadd.xlane.f32.xlu0 %v3291
    %v3293 = vpop.xlane.xlu0 %3292
    %v3294 = vsel %vm152, %v3230, 0.0
    %3295 = vadd.xlane.f32.xlu0 %v3294
    %v3296 = vpop.xlane.xlu0 %3295
    %v3297 = vsel %vm152, %v3231, 0.0
    %3298 = vadd.xlane.f32.xlu0 %v3297
    %v3299 = vpop.xlane.xlu0 %3298
    %v3300 = vsel %vm152, %v3232, 0.0
    %3301 = vadd.xlane.f32.xlu0 %v3300
    %v3302 = vpop.xlane.xlu0 %3301
    %v3303 = vsel %vm152, %v3233, 0.0
    %3304 = vadd.xlane.f32.xlu0 %v3303
    %v3305 = vpop.xlane.xlu0 %3304
    %v3306 = vmul.f32 %v3236, 0.03125
    %v3307 = vmul.f32 %v3239, 0.03125
    %v3308 = vmul.f32 %v3242, 0.03125
    %v3309 = vmul.f32 %v3245, 0.03125
    %v3310 = vmul.f32 %v3248, 0.03125
    %v3311 = vmul.f32 %v3251, 0.03125
    %v3312 = vmul.f32 %v3254, 0.03125
    %v3313 = vmul.f32 %v3257, 0.03125
    %v3314 = vmul.f32 %v3260, 0.03125
    %v3315 = vmul.f32 %v3263, 0.03125
    %v3316 = vmul.f32 %v3266, 0.03125
    %v3317 = vmul.f32 %v3269, 0.03125
    %v3318 = vmul.f32 %v3272, 0.03125
    %v3319 = vmul.f32 %v3275, 0.03125
    %v3320 = vmul.f32 %v3278, 0.03125
    %v3321 = vmul.f32 %v3281, 0.03125
    %v3322 = vmul.f32 %v3284, 0.03125
    %v3323 = vmul.f32 %v3287, 0.03125
    %v3324 = vmul.f32 %v3290, 0.03125
    %v3325 = vmul.f32 %v3293, 0.03125
    %v3326 = vmul.f32 %v3296, 0.03125
    %v3327 = vmul.f32 %v3299, 0.03125
    %v3328 = vmul.f32 %v3302, 0.03125
    %v3329 = vmul.f32 %v3305, 0.03125
    %v3330 = vmul.f32 %v3186, %v3186
    %v3331 = vmul.f32 %v3187, %v3187
    %v3332 = vmul.f32 %v3188, %v3188
    %v3333 = vmul.f32 %v3189, %v3189
    %v3334 = vmul.f32 %v3190, %v3190
    %v3335 = vmul.f32 %v3191, %v3191
    %v3336 = vmul.f32 %v3192, %v3192
    %v3337 = vmul.f32 %v3193, %v3193
    %v3338 = vmul.f32 %v3194, %v3194
    %v3339 = vmul.f32 %v3195, %v3195
    %v3340 = vmul.f32 %v3196, %v3196
    %v3341 = vmul.f32 %v3197, %v3197
    %v3342 = vmul.f32 %v3198, %v3198
    %v3343 = vmul.f32 %v3199, %v3199
    %v3344 = vmul.f32 %v3200, %v3200
    %v3345 = vmul.f32 %v3201, %v3201
    %v3346 = vmul.f32 %v3202, %v3202
    %v3347 = vmul.f32 %v3203, %v3203
    %v3348 = vmul.f32 %v3204, %v3204
    %v3349 = vmul.f32 %v3205, %v3205
    %v3350 = vmul.f32 %v3206, %v3206
    %v3351 = vmul.f32 %v3207, %v3207
    %v3352 = vmul.f32 %v3208, %v3208
    %v3353 = vmul.f32 %v3209, %v3209
    %v3354 = vsub.f32 %v3306, %v3330
    %v3355 = vsub.f32 %v3307, %v3331
    %v3356 = vsub.f32 %v3308, %v3332
    %v3357 = vsub.f32 %v3309, %v3333
    %v3358 = vsub.f32 %v3310, %v3334
    %v3359 = vsub.f32 %v3311, %v3335
    %v3360 = vsub.f32 %v3312, %v3336
    %v3361 = vsub.f32 %v3313, %v3337
    %v3362 = vsub.f32 %v3314, %v3338
    %v3363 = vsub.f32 %v3315, %v3339
    %v3364 = vsub.f32 %v3316, %v3340
    %v3365 = vsub.f32 %v3317, %v3341
    %v3366 = vsub.f32 %v3318, %v3342
    %v3367 = vsub.f32 %v3319, %v3343
    %v3368 = vsub.f32 %v3320, %v3344
    %v3369 = vsub.f32 %v3321, %v3345
    %v3370 = vsub.f32 %v3322, %v3346
    %v3371 = vsub.f32 %v3323, %v3347
    %v3372 = vsub.f32 %v3324, %v3348
    %v3373 = vsub.f32 %v3325, %v3349
    %v3374 = vsub.f32 %v3326, %v3350
    %v3375 = vsub.f32 %v3327, %v3351
    %v3376 = vsub.f32 %v3328, %v3352
    %v3377 = vsub.f32 %v3329, %v3353
    %v3378 = vsub.f32 %v3090, %v3186
    %v3379 = vsub.f32 %v3091, %v3187
    %v3380 = vsub.f32 %v3092, %v3188
    %v3381 = vsub.f32 %v3093, %v3189
    %v3382 = vsub.f32 %v3094, %v3190
    %v3383 = vsub.f32 %v3095, %v3191
    %v3384 = vsub.f32 %v3096, %v3192
    %v3385 = vsub.f32 %v3097, %v3193
    %v3386 = vsub.f32 %v3098, %v3194
    %v3387 = vsub.f32 %v3099, %v3195
    %v3388 = vsub.f32 %v3100, %v3196
    %v3389 = vsub.f32 %v3101, %v3197
    %v3390 = vsub.f32 %v3102, %v3198
    %v3391 = vsub.f32 %v3103, %v3199
    %v3392 = vsub.f32 %v3104, %v3200
    %v3393 = vsub.f32 %v3105, %v3201
    %v3394 = vsub.f32 %v3106, %v3202
    %v3395 = vsub.f32 %v3107, %v3203
    %v3396 = vsub.f32 %v3108, %v3204
    %v3397 = vsub.f32 %v3109, %v3205
    %v3398 = vsub.f32 %v3110, %v3206
    %v3399 = vsub.f32 %v3111, %v3207
    %v3400 = vsub.f32 %v3112, %v3208
    %v3401 = vsub.f32 %v3113, %v3209
    %v3402 = vadd.f32 %v3354, 1e-05
    %v3403 = vadd.f32 %v3355, 1e-05
    %v3404 = vadd.f32 %v3356, 1e-05
    %v3405 = vadd.f32 %v3357, 1e-05
    %v3406 = vadd.f32 %v3358, 1e-05
    %v3407 = vadd.f32 %v3359, 1e-05
    %v3408 = vadd.f32 %v3360, 1e-05
    %v3409 = vadd.f32 %v3361, 1e-05
    %v3410 = vadd.f32 %v3362, 1e-05
    %v3411 = vadd.f32 %v3363, 1e-05
    %v3412 = vadd.f32 %v3364, 1e-05
    %v3413 = vadd.f32 %v3365, 1e-05
    %v3414 = vadd.f32 %v3366, 1e-05
    %v3415 = vadd.f32 %v3367, 1e-05
    %v3416 = vadd.f32 %v3368, 1e-05
    %v3417 = vadd.f32 %v3369, 1e-05
    %v3418 = vadd.f32 %v3370, 1e-05
    %v3419 = vadd.f32 %v3371, 1e-05
    %v3420 = vadd.f32 %v3372, 1e-05
    %v3421 = vadd.f32 %v3373, 1e-05
    %v3422 = vadd.f32 %v3374, 1e-05
    %v3423 = vadd.f32 %v3375, 1e-05
    %v3424 = vadd.f32 %v3376, 1e-05
    %v3425 = vadd.f32 %v3377, 1e-05
    %v3426 = vrsqrt.pop %v3402
    %v3427 = vrsqrt.pop %v3403
    %v3428 = vrsqrt.pop %v3404
    %v3429 = vrsqrt.pop %v3405
    %v3430 = vrsqrt.pop %v3406
    %v3431 = vrsqrt.pop %v3407
    %v3432 = vrsqrt.pop %v3408
    %v3433 = vrsqrt.pop %v3409
    %v3434 = vrsqrt.pop %v3410
    %v3435 = vrsqrt.pop %v3411
    %v3436 = vrsqrt.pop %v3412
    %v3437 = vrsqrt.pop %v3413
    %v3438 = vrsqrt.pop %v3414
    %v3439 = vrsqrt.pop %v3415
    %v3440 = vrsqrt.pop %v3416
    %v3441 = vrsqrt.pop %v3417
    %v3442 = vrsqrt.pop %v3418
    %v3443 = vrsqrt.pop %v3419
    %v3444 = vrsqrt.pop %v3420
    %v3445 = vrsqrt.pop %v3421
    %v3446 = vrsqrt.pop %v3422
    %v3447 = vrsqrt.pop %v3423
    %v3448 = vrsqrt.pop %v3424
    %v3449 = vrsqrt.pop %v3425
    %v3450 = vmul.f32 %v3378, %v3426
    %v3451 = vmul.f32 %v3379, %v3427
    %v3452 = vmul.f32 %v3380, %v3428
    %v3453 = vmul.f32 %v3381, %v3429
    %v3454 = vmul.f32 %v3382, %v3430
    %v3455 = vmul.f32 %v3383, %v3431
    %v3456 = vmul.f32 %v3384, %v3432
    %v3457 = vmul.f32 %v3385, %v3433
    %v3458 = vmul.f32 %v3386, %v3434
    %v3459 = vmul.f32 %v3387, %v3435
    %v3460 = vmul.f32 %v3388, %v3436
    %v3461 = vmul.f32 %v3389, %v3437
    %v3462 = vmul.f32 %v3390, %v3438
    %v3463 = vmul.f32 %v3391, %v3439
    %v3464 = vmul.f32 %v3392, %v3440
    %v3465 = vmul.f32 %v3393, %v3441
    %v3466 = vmul.f32 %v3394, %v3442
    %v3467 = vmul.f32 %v3395, %v3443
    %v3468 = vmul.f32 %v3396, %v3444
    %v3469 = vmul.f32 %v3397, %v3445
    %v3470 = vmul.f32 %v3398, %v3446
    %v3471 = vmul.f32 %v3399, %v3447
    %v3472 = vmul.f32 %v3400, %v3448
    %v3473 = vmul.f32 %v3401, %v3449
    %v3474 = vlaneseq
    %v3475 = vshrl.u32 %v3474, 7
    %v3476 = vsub.s32 7, %v3475
    %v3477 = vrot.slane %v738, %v3476
    %v3478 = vmul.f32 %v3450, %v3477
    %v3479 = vmul.f32 %v3451, %v3477
    %v3480 = vmul.f32 %v3452, %v3477
    %v3481 = vmul.f32 %v3453, %v3477
    %v3482 = vmul.f32 %v3454, %v3477
    %v3483 = vmul.f32 %v3455, %v3477
    %v3484 = vmul.f32 %v3456, %v3477
    %v3485 = vmul.f32 %v3457, %v3477
    %v3486 = vmul.f32 %v3458, %v3477
    %v3487 = vmul.f32 %v3459, %v3477
    %v3488 = vmul.f32 %v3460, %v3477
    %v3489 = vmul.f32 %v3461, %v3477
    %v3490 = vmul.f32 %v3462, %v3477
    %v3491 = vmul.f32 %v3463, %v3477
    %v3492 = vmul.f32 %v3464, %v3477
    %v3493 = vmul.f32 %v3465, %v3477
    %v3494 = vmul.f32 %v3466, %v3477
    %v3495 = vmul.f32 %v3467, %v3477
    %v3496 = vmul.f32 %v3468, %v3477
    %v3497 = vmul.f32 %v3469, %v3477
    %v3498 = vmul.f32 %v3470, %v3477
    %v3499 = vmul.f32 %v3471, %v3477
    %v3500 = vmul.f32 %v3472, %v3477
    %v3501 = vmul.f32 %v3473, %v3477
    %v3502 = vlaneseq
    %v3503 = vshrl.u32 %v3502, 7
    %v3504 = vsub.s32 0, %v3503
    %v3505 = vrot.slane %v739, %v3504
    %v3506 = vadd.f32 %v3478, %v3505
    %v3507 = vadd.f32 %v3479, %v3505
    %v3508 = vadd.f32 %v3480, %v3505
    %v3509 = vadd.f32 %v3481, %v3505
    %v3510 = vadd.f32 %v3482, %v3505
    %v3511 = vadd.f32 %v3483, %v3505
    %v3512 = vadd.f32 %v3484, %v3505
    %v3513 = vadd.f32 %v3485, %v3505
    %v3514 = vadd.f32 %v3486, %v3505
    %v3515 = vadd.f32 %v3487, %v3505
    %v3516 = vadd.f32 %v3488, %v3505
    %v3517 = vadd.f32 %v3489, %v3505
    %v3518 = vadd.f32 %v3490, %v3505
    %v3519 = vadd.f32 %v3491, %v3505
    %v3520 = vadd.f32 %v3492, %v3505
    %v3521 = vadd.f32 %v3493, %v3505
    %v3522 = vadd.f32 %v3494, %v3505
    %v3523 = vadd.f32 %v3495, %v3505
    %v3524 = vadd.f32 %v3496, %v3505
    %v3525 = vadd.f32 %v3497, %v3505
    %v3526 = vadd.f32 %v3498, %v3505
    %v3527 = vadd.f32 %v3499, %v3505
    %v3528 = vadd.f32 %v3500, %v3505
    %v3529 = vadd.f32 %v3501, %v3505
    %v3530 = vmax.f32 %v3506, 0.0
    %v3531 = vmax.f32 %v3507, 0.0
    %v3532 = vmax.f32 %v3508, 0.0
    %v3533 = vmax.f32 %v3509, 0.0
    %v3534 = vmax.f32 %v3510, 0.0
    %v3535 = vmax.f32 %v3511, 0.0
    %v3536 = vmax.f32 %v3512, 0.0
    %v3537 = vmax.f32 %v3513, 0.0
    %v3538 = vmax.f32 %v3514, 0.0
    %v3539 = vmax.f32 %v3515, 0.0
    %v3540 = vmax.f32 %v3516, 0.0
    %v3541 = vmax.f32 %v3517, 0.0
    %v3542 = vmax.f32 %v3518, 0.0
    %v3543 = vmax.f32 %v3519, 0.0
    %v3544 = vmax.f32 %v3520, 0.0
    %v3545 = vmax.f32 %v3521, 0.0
    %v3546 = vmax.f32 %v3522, 0.0
    %v3547 = vmax.f32 %v3523, 0.0
    %v3548 = vmax.f32 %v3524, 0.0
    %v3549 = vmax.f32 %v3525, 0.0
    %v3550 = vmax.f32 %v3526, 0.0
    %v3551 = vmax.f32 %v3527, 0.0
    %v3552 = vmax.f32 %v3528, 0.0
    %v3553 = vmax.f32 %v3529, 0.0
    %v3554 = vsel %vm1453, %v3530, -1e+30
    %v3555 = vsel %vm1454, %v3531, -1e+30
    %v3556 = vsel %vm1455, %v3532, -1e+30
    %v3557 = vsel %vm1453, %v3533, -1e+30
    %v3558 = vsel %vm1454, %v3534, -1e+30
    %v3559 = vsel %vm1455, %v3535, -1e+30
    %v3560 = vsel %vm1453, %v3536, -1e+30
    %v3561 = vsel %vm1454, %v3537, -1e+30
    %v3562 = vsel %vm1455, %v3538, -1e+30
    %v3563 = vsel %vm1453, %v3539, -1e+30
    %v3564 = vsel %vm1454, %v3540, -1e+30
    %v3565 = vsel %vm1455, %v3541, -1e+30
    %v3566 = vsel %vm1453, %v3542, -1e+30
    %v3567 = vsel %vm1454, %v3543, -1e+30
    %v3568 = vsel %vm1455, %v3544, -1e+30
    %v3569 = vsel %vm1453, %v3545, -1e+30
    %v3570 = vsel %vm1454, %v3546, -1e+30
    %v3571 = vsel %vm1455, %v3547, -1e+30
    %v3572 = vsel %vm1453, %v3548, -1e+30
    %v3573 = vsel %vm1454, %v3549, -1e+30
    %v3574 = vsel %vm1455, %v3550, -1e+30
    %v3575 = vsel %vm1453, %v3551, -1e+30
    %v3576 = vsel %vm1454, %v3552, -1e+30
    %v3577 = vsel %vm1455, %v3553, -1e+30
    %v3578 = vsel %vm152, %v3554, -inf
    %v3579 = vsel %vm152, %v3555, -inf
    %v3580 = vmax.f32 %v3578, %v3579
    %v3581 = vsel %vm152, %v3556, -inf
    %v3582 = vmax.f32 %v3580, %v3581
    %v3583 = vrot.slane %v3582, 4
    %v3584 = vmax.f32 %v3582, %v3583
    %v3585 = vrot.slane %v3584, 2
    %v3586 = vmax.f32 %v3584, %v3585
    %v3587 = vrot.slane %v3586, 1
    %v3588 = vmax.f32 %v3586, %v3587
    %v3589 = vsel %vm152, %v3557, -inf
    %v3590 = vsel %vm152, %v3558, -inf
    %v3591 = vmax.f32 %v3589, %v3590
    %v3592 = vsel %vm152, %v3559, -inf
    %v3593 = vmax.f32 %v3591, %v3592
    %v3594 = vrot.slane %v3593, 4
    %v3595 = vmax.f32 %v3593, %v3594
    %v3596 = vrot.slane %v3595, 2
    %v3597 = vmax.f32 %v3595, %v3596
    %v3598 = vrot.slane %v3597, 1
    %v3599 = vmax.f32 %v3597, %v3598
    %v3600 = vsel %vm152, %v3560, -inf
    %v3601 = vsel %vm152, %v3561, -inf
    %v3602 = vmax.f32 %v3600, %v3601
    %v3603 = vsel %vm152, %v3562, -inf
    %v3604 = vmax.f32 %v3602, %v3603
    %v3605 = vrot.slane %v3604, 4
    %v3606 = vmax.f32 %v3604, %v3605
    %v3607 = vrot.slane %v3606, 2
    %v3608 = vmax.f32 %v3606, %v3607
    %v3609 = vrot.slane %v3608, 1
    %v3610 = vmax.f32 %v3608, %v3609
    %v3611 = vsel %vm152, %v3563, -inf
    %v3612 = vsel %vm152, %v3564, -inf
    %v3613 = vmax.f32 %v3611, %v3612
    %v3614 = vsel %vm152, %v3565, -inf
    %v3615 = vmax.f32 %v3613, %v3614
    %v3616 = vrot.slane %v3615, 4
    %v3617 = vmax.f32 %v3615, %v3616
    %v3618 = vrot.slane %v3617, 2
    %v3619 = vmax.f32 %v3617, %v3618
    %v3620 = vrot.slane %v3619, 1
    %v3621 = vmax.f32 %v3619, %v3620
    %v3622 = vsel %vm152, %v3566, -inf
    %v3623 = vsel %vm152, %v3567, -inf
    %v3624 = vmax.f32 %v3622, %v3623
    %v3625 = vsel %vm152, %v3568, -inf
    %v3626 = vmax.f32 %v3624, %v3625
    %v3627 = vrot.slane %v3626, 4
    %v3628 = vmax.f32 %v3626, %v3627
    %v3629 = vrot.slane %v3628, 2
    %v3630 = vmax.f32 %v3628, %v3629
    %v3631 = vrot.slane %v3630, 1
    %v3632 = vmax.f32 %v3630, %v3631
    %v3633 = vsel %vm152, %v3569, -inf
    %v3634 = vsel %vm152, %v3570, -inf
    %v3635 = vmax.f32 %v3633, %v3634
    %v3636 = vsel %vm152, %v3571, -inf
    %v3637 = vmax.f32 %v3635, %v3636
    %v3638 = vrot.slane %v3637, 4
    %v3639 = vmax.f32 %v3637, %v3638
    %v3640 = vrot.slane %v3639, 2
    %v3641 = vmax.f32 %v3639, %v3640
    %v3642 = vrot.slane %v3641, 1
    %v3643 = vmax.f32 %v3641, %v3642
    %v3644 = vsel %vm152, %v3572, -inf
    %v3645 = vsel %vm152, %v3573, -inf
    %v3646 = vmax.f32 %v3644, %v3645
    %v3647 = vsel %vm152, %v3574, -inf
    %v3648 = vmax.f32 %v3646, %v3647
    %v3649 = vrot.slane %v3648, 4
    %v3650 = vmax.f32 %v3648, %v3649
    %v3651 = vrot.slane %v3650, 2
    %v3652 = vmax.f32 %v3650, %v3651
    %v3653 = vrot.slane %v3652, 1
    %v3654 = vmax.f32 %v3652, %v3653
    %v3655 = vsel %vm152, %v3575, -inf
    %v3656 = vsel %vm152, %v3576, -inf
    %v3657 = vmax.f32 %v3655, %v3656
    %v3658 = vsel %vm152, %v3577, -inf
    %v3659 = vmax.f32 %v3657, %v3658
    %v3660 = vrot.slane %v3659, 4
    %v3661 = vmax.f32 %v3659, %v3660
    %v3662 = vrot.slane %v3661, 2
    %v3663 = vmax.f32 %v3661, %v3662
    %v3664 = vrot.slane %v3663, 1
    %v3665 = vmax.f32 %v3663, %v3664
    %v3674 = vsel %vm1842, %v3599, %v3588
    %v3675 = vsel %vm1844, %v3610, %v3674
    %v3676 = vsel %vm1846, %v3621, %v3675
    %v3677 = vsel %vm1842, %v3643, %v3632
    %v3678 = vsel %vm1844, %v3654, %v3677
    %v3679 = vsel %vm1846, %v3665, %v3678
    %vm3682 = vcmask 1040384
    %v3683 = vsel %vm3682, %v730, %v3676
    %v3684 = vsel %vm3682, %v737, %v3679
    %v3685 = vmul.f32 %v3683, %v3683
    %v3686 = vmul.f32 %v3684, %v3684
    %vm3687 = vcmask 258048
    %v3688 = vsel %vm3687, %v3685, 0.0
    %3689 = vadd.xlane.f32.xlu0 %v3688
    %v3690 = vpop.xlane.xlu0 %3689
    %v3691 = vsel %vm3687, %v3686, 0.0
    %3692 = vadd.xlane.f32.xlu0 %v3691
    %v3693 = vpop.xlane.xlu0 %3692
    %v3694 = vmul.f32 %v3690, 2.0
    %v3695 = vmul.f32 %v3693, 2.0
    %v3696 = vmax.f32 %v3694, 1e-24
    %v3697 = vmax.f32 %v3695, 1e-24
    %v3698 = vrsqrt.pop %v3696
    %v3699 = vrsqrt.pop %v3697
    %v3700 = vmul.f32 %v3683, %v3698
    %v3701 = vmul.f32 %v3684, %v3699
    %v3702 = vld [vmem:[#allocation2 + $0x130] sm:$0xff]
    %v3703 = vld [vmem:[#allocation2 + $0x138] sm:$0xff]
    %v3704 = vld [vmem:[#allocation2 + $0x140] sm:$0xff]
    %v3705 = vld [vmem:[#allocation2 + $0x148] sm:$0xff]
    %v3708 = vrot.slane %v3701, 7
    %v3709 = vsel %vm302, %v3708, %v3700
    %v3710 = vsel %vm152, %v3709, 0
    %3712 = vmatprep.subr.mxu0 0.0
    %3713 = vmatpush1.msra.mxu0 0.0
    %3714 = vmatprep.subr.mxu0 0.0
    %3715 = vmatpush1.msra.mxu0 0.0
    %3716 = vmatprep.subr.mxu0 0.0
    %3717 = vmatpush1.msra.mxu0 0.0
    %3718 = vmatprep.subr.mxu0 0.0
    %3719 = vmatpush1.msra.mxu0 0.0
    %3720 = vmatprep.subr.mxu0 0.0
    %3721 = vmatpush1.msra.mxu0 0.0
    %3722 = vmatprep.subr.mxu0 0.0
    %3723 = vmatpush1.msra.mxu0 0.0
    %3724 = vmatprep.subr.mxu0 0.0
    %3725 = vmatpush1.msra.mxu0 0.0
    %3726 = vmatprep.subr.mxu0 0.0
    %3727 = vmatpush1.msra.mxu0 0.0
    %3728 = vmatprep.subr.mxu0 0.0
    %3729 = vmatpush1.msra.mxu0 0.0
    %3730 = vmatprep.subr.mxu0 0.0
    %3731 = vmatpush1.msra.mxu0 0.0
    %3732 = vmatprep.subr.mxu0 0.0
    %3733 = vmatpush1.msra.mxu0 0.0
    %3734 = vmatprep.subr.mxu0 0.0
    %3735 = vmatpush1.msra.mxu0 0.0
    %3736 = vmatprep.subr.mxu0 0.0
    %3737 = vmatpush1.msra.mxu0 %v3705
    %3738 = vmatprep.subr.mxu0 0.0
    %3739 = vmatpush1.msra.mxu0 %v3704
    %3740 = vmatprep.subr.mxu0 0.0
    %3741 = vmatpush1.msra.mxu0 %v3703
    %3742 = vmatprep.subr.mxu0 0.0
    %3743 = vmatpush1.msra.mxu0 %v3702
    %3744 = vmatprep.subr.mxu0 0.0
    %3745 = vmatpush2.msra.mxu0 0.0
    %3746 = vmatprep.subr.mxu0 0.0
    %3747 = vmatpush2.msra.mxu0 0.0
    %3748 = vmatprep.subr.mxu0 0.0
    %3749 = vmatpush2.msra.mxu0 0.0
    %3750 = vmatprep.subr.mxu0 0.0
    %3751 = vmatpush2.msra.mxu0 0.0
    %3752 = vmatprep.subr.mxu0 0.0
    %3753 = vmatpush2.msra.mxu0 0.0
    %3754 = vmatprep.subr.mxu0 0.0
    %3755 = vmatpush2.msra.mxu0 0.0
    %3756 = vmatprep.subr.mxu0 0.0
    %3757 = vmatpush2.msra.mxu0 0.0
    %3758 = vmatprep.subr.mxu0 0.0
    %3759 = vmatpush2.msra.mxu0 0.0
    %3760 = vmatprep.subr.mxu0 0.0
    %3761 = vmatpush2.msra.mxu0 0.0
    %3762 = vmatprep.subr.mxu0 0.0
    %3763 = vmatpush2.msra.mxu0 0.0
    %3764 = vmatprep.subr.mxu0 0.0
    %3765 = vmatpush2.msra.mxu0 0.0
    %3766 = vmatprep.subr.mxu0 0.0
    %3767 = vmatpush2.msra.mxu0 0.0
    %3768 = vmatprep.subr.mxu0 0.0
    %3769 = vmatpush2.msra.mxu0 0.0
    %3770 = vmatprep.subr.mxu0 0.0
    %3771 = vmatpush2.msra.mxu0 0.0
    %3772 = vmatprep.subr.mxu0 0.0
    %3773 = vmatpush2.msra.mxu0 0.0
    %3774 = vmatprep.subr.mxu0 0.0
    %3775 = vmatpush2.msra.mxu0 0.0
    %3776 = vmatprep.mubr.f32.mxu0 0.0
    %3777 = vmatmul.mubr.f32.gmra.mxu0 %v3710
    %v3778 = vpop.f32.mrf.mxu0
    %v3779 = vadd.f32 0.0, %v3778
    %v3780 = vpop.f32.mrf.mxu0
    %3781 = vdwg.mxu0
    %v3782 = vcombine.high %v3700, %v3700
    %v3784 = vunpack.c.l.s4 1966171168
    %v3785 = vunpack.c.0.s8 %v3784
    %v3786 = vlaneseq
    %v3787 = vshrl.u32 %v3786, 7
    %v3788 = vsub.s32 %v3785, %v3787
    %v3789 = vrot.slane %v3700, %v3788
    %v3791 = vunpack.c.l.s4 1966171168
    %v3792 = vunpack.c.0.s8 %v3791
    %v3793 = vlaneseq
    %v3794 = vshrl.u32 %v3793, 7
    %v3795 = vsub.s32 %v3792, %v3794
    %v3796 = vrot.slane %v3782, %v3795
    %v3797 = vcombine.high %v3789, %v3789
    %v3799 = vunpack.c.l.s4 1966171168
    %v3800 = vunpack.c.0.s8 %v3799
    %v3801 = vlaneseq
    %v3802 = vshrl.u32 %v3801, 7
    %v3803 = vsub.s32 %v3800, %v3802
    %v3804 = vrot.slane %v3789, %v3803
    %v3806 = vunpack.c.l.s4 1966171168
    %v3807 = vunpack.c.0.s8 %v3806
    %v3808 = vlaneseq
    %v3809 = vshrl.u32 %v3808, 7
    %v3810 = vsub.s32 %v3807, %v3809
    %v3811 = vrot.slane %v3796, %v3810
    %v3813 = vunpack.c.l.s4 1966171168
    %v3814 = vunpack.c.0.s8 %v3813
    %v3815 = vlaneseq
    %v3816 = vshrl.u32 %v3815, 7
    %v3817 = vsub.s32 %v3814, %v3816
    %v3818 = vrot.slane %v3797, %v3817
    %v3819 = vcombine.high %v3804, %v3804
    %v3820 = vcombine.high %v3818, %v3818
    %v3821 = vcombine.high %v3701, %v3701
    %v3823 = vunpack.c.l.s4 1966171168
    %v3824 = vunpack.c.0.s8 %v3823
    %v3825 = vlaneseq
    %v3826 = vshrl.u32 %v3825, 7
    %v3827 = vsub.s32 %v3824, %v3826
    %v3828 = vrot.slane %v3701, %v3827
    %v3830 = vunpack.c.l.s4 1966171168
    %v3831 = vunpack.c.0.s8 %v3830
    %v3832 = vlaneseq
    %v3833 = vshrl.u32 %v3832, 7
    %v3834 = vsub.s32 %v3831, %v3833
    %v3835 = vrot.slane %v3821, %v3834
    %v3836 = vcombine.high %v3828, %v3828
    %v3838 = vunpack.c.l.s4 1966171168
    %v3839 = vunpack.c.0.s8 %v3838
    %v3840 = vlaneseq
    %v3841 = vshrl.u32 %v3840, 7
    %v3842 = vsub.s32 %v3839, %v3841
    %v3843 = vrot.slane %v3828, %v3842
    %v3845 = vunpack.c.l.s4 1966171168
    %v3846 = vunpack.c.0.s8 %v3845
    %v3847 = vlaneseq
    %v3848 = vshrl.u32 %v3847, 7
    %v3849 = vsub.s32 %v3846, %v3848
    %v3850 = vrot.slane %v3835, %v3849
    %v3852 = vunpack.c.l.s4 1966171168
    %v3853 = vunpack.c.0.s8 %v3852
    %v3854 = vlaneseq
    %v3855 = vshrl.u32 %v3854, 7
    %v3856 = vsub.s32 %v3853, %v3855
    %v3857 = vrot.slane %v3836, %v3856
    %v3858 = vcombine.high %v3843, %v3843
    %v3859 = vcombine.high %v3857, %v3857
    %v3860 = vld [vmem:[#allocation2 + $0x150] sm:$0xff]
    %v3861 = vld [vmem:[#allocation2 + $0x158] sm:$0xff]
    %v3862 = vld [vmem:[#allocation2 + $0x160] sm:$0xff]
    %v3863 = vld [vmem:[#allocation2 + $0x168] sm:$0xff]
    %v3864 = vcombine.low %v3804, %v3818
    %v3865 = vcombine.low %v3819, %v3820
    %v3866 = vcombine.low %v3811, %v3843
    %v3867 = vcombine.low %v3857, %v3858
    %v3869 = vunpack.c.l.s4 1966171168
    %v3870 = vunpack.c.0.s8 %v3869
    %v3871 = vlaneseq
    %v3872 = vshrl.u32 %v3871, 7
    %v3873 = vsub.s32 %v3870, %v3872
    %v3874 = vrot.slane %v3864, %v3873
    %v3876 = vunpack.c.l.s4 1966171168
    %v3877 = vunpack.c.0.s8 %v3876
    %v3878 = vlaneseq
    %v3879 = vshrl.u32 %v3878, 7
    %v3880 = vsub.s32 %v3877, %v3879
    %v3881 = vrot.slane %v3865, %v3880
    %v3883 = vunpack.c.l.s4 1966171168
    %v3884 = vunpack.c.0.s8 %v3883
    %v3885 = vlaneseq
    %v3886 = vshrl.u32 %v3885, 7
    %v3887 = vsub.s32 %v3884, %v3886
    %v3888 = vrot.slane %v3866, %v3887
    %v3890 = vunpack.c.l.s4 1966171168
    %v3891 = vunpack.c.0.s8 %v3890
    %v3892 = vlaneseq
    %v3893 = vshrl.u32 %v3892, 7
    %v3894 = vsub.s32 %v3891, %v3893
    %v3895 = vrot.slane %v3867, %v3894
    %v3896 = vcombine.low %v3874, %v3881
    %v3897 = vcombine.low %v3888, %v3895
    %v3899 = vunpack.c.l.s4 1966171168
    %v3900 = vunpack.c.0.s8 %v3899
    %v3901 = vlaneseq
    %v3902 = vshrl.u32 %v3901, 7
    %v3903 = vsub.s32 %v3900, %v3902
    %v3904 = vrot.slane %v3896, %v3903
    %v3906 = vunpack.c.l.s4 1966171168
    %v3907 = vunpack.c.0.s8 %v3906
    %v3908 = vlaneseq
    %v3909 = vshrl.u32 %v3908, 7
    %v3910 = vsub.s32 %v3907, %v3909
    %v3911 = vrot.slane %v3897, %v3910
    %v3912 = vcombine.low %v3904, %v3911
    %v3913 = vcombine.low %v3859, %v3850
    %v3915 = vunpack.c.l.s4 1966171168
    %v3916 = vunpack.c.0.s8 %v3915
    %v3917 = vlaneseq
    %v3918 = vshrl.u32 %v3917, 7
    %v3919 = vsub.s32 %v3916, %v3918
    %v3920 = vrot.slane %v3913, %v3919
    %v3922 = vunpack.c.l.s4 1966171168
    %v3923 = vunpack.c.0.s8 %v3922
    %v3924 = vlaneseq
    %v3925 = vshrl.u32 %v3924, 7
    %v3926 = vsub.s32 %v3923, %v3925
    %v3927 = vrot.slane %v3920, %v3926
    %v3928 = vsel %vm152, %v3912, 0
    %v3930 = vsel %vm152, %v3927, 0
    %3932 = vmatprep.subr.mxu0 0.0
    %3933 = vmatpush1.msra.mxu0 0.0
    %3934 = vmatprep.subr.mxu0 0.0
    %3935 = vmatpush1.msra.mxu0 0.0
    %3936 = vmatprep.subr.mxu0 0.0
    %3937 = vmatpush1.msra.mxu0 0.0
    %3938 = vmatprep.subr.mxu0 0.0
    %3939 = vmatpush1.msra.mxu0 0.0
    %3940 = vmatprep.subr.mxu0 0.0
    %3941 = vmatpush1.msra.mxu0 0.0
    %3942 = vmatprep.subr.mxu0 0.0
    %3943 = vmatpush1.msra.mxu0 0.0
    %3944 = vmatprep.subr.mxu0 0.0
    %3945 = vmatpush1.msra.mxu0 0.0
    %3946 = vmatprep.subr.mxu0 0.0
    %3947 = vmatpush1.msra.mxu0 0.0
    %3948 = vmatprep.subr.mxu0 0.0
    %3949 = vmatpush1.msra.mxu0 0.0
    %3950 = vmatprep.subr.mxu0 0.0
    %3951 = vmatpush1.msra.mxu0 0.0
    %3952 = vmatprep.subr.mxu0 0.0
    %3953 = vmatpush1.msra.mxu0 0.0
    %3954 = vmatprep.subr.mxu0 0.0
    %3955 = vmatpush1.msra.mxu0 0.0
    %3956 = vmatprep.subr.mxu0 0.0
    %3957 = vmatpush1.msra.mxu0 %v3863
    %3958 = vmatprep.subr.mxu0 0.0
    %3959 = vmatpush1.msra.mxu0 %v3862
    %3960 = vmatprep.subr.mxu0 0.0
    %3961 = vmatpush1.msra.mxu0 %v3861
    %3962 = vmatprep.subr.mxu0 0.0
    %3963 = vmatpush1.msra.mxu0 %v3860
    %3964 = vmatprep.subr.mxu0 0.0
    %3965 = vmatpush2.msra.mxu0 0.0
    %3966 = vmatprep.subr.mxu0 0.0
    %3967 = vmatpush2.msra.mxu0 0.0
    %3968 = vmatprep.subr.mxu0 0.0
    %3969 = vmatpush2.msra.mxu0 0.0
    %3970 = vmatprep.subr.mxu0 0.0
    %3971 = vmatpush2.msra.mxu0 0.0
    %3972 = vmatprep.subr.mxu0 0.0
    %3973 = vmatpush2.msra.mxu0 0.0
    %3974 = vmatprep.subr.mxu0 0.0
    %3975 = vmatpush2.msra.mxu0 0.0
    %3976 = vmatprep.subr.mxu0 0.0
    %3977 = vmatpush2.msra.mxu0 0.0
    %3978 = vmatprep.subr.mxu0 0.0
    %3979 = vmatpush2.msra.mxu0 0.0
    %3980 = vmatprep.subr.mxu0 0.0
    %3981 = vmatpush2.msra.mxu0 0.0
    %3982 = vmatprep.subr.mxu0 0.0
    %3983 = vmatpush2.msra.mxu0 0.0
    %3984 = vmatprep.subr.mxu0 0.0
    %3985 = vmatpush2.msra.mxu0 0.0
    %3986 = vmatprep.subr.mxu0 0.0
    %3987 = vmatpush2.msra.mxu0 0.0
    %3988 = vmatprep.subr.mxu0 0.0
    %3989 = vmatpush2.msra.mxu0 0.0
    %3990 = vmatprep.subr.mxu0 0.0
    %3991 = vmatpush2.msra.mxu0 0.0
    %3992 = vmatprep.subr.mxu0 0.0
    %3993 = vmatpush2.msra.mxu0 0.0
    %3994 = vmatprep.subr.mxu0 0.0
    %3995 = vmatpush2.msra.mxu0 0.0
    %3996 = vmatprep.mubr.f32.mxu0 0.0
    %3997 = vmatmul.mubr.f32.gmra.mxu0 %v3928
    %v3998 = vpop.f32.mrf.mxu0
    %v3999 = vadd.f32 0.0, %v3998
    %v4000 = vpop.f32.mrf.mxu0
    %4001 = vmatprep.mubr.f32.mxu0 0.0
    %4002 = vmatmul.mubr.f32.gmra.mxu0 %v3930
    %v4003 = vpop.f32.mrf.mxu0
    %v4004 = vadd.f32 0.0, %v4003
    %v4005 = vpop.f32.mrf.mxu0
    %4006 = vdwg.mxu0
    %v4009 = vcombine.high %v3999, %v3999
    %v4011 = vunpack.c.l.s4 1966171168
    %v4012 = vunpack.c.0.s8 %v4011
    %v4013 = vlaneseq
    %v4014 = vshrl.u32 %v4013, 7
    %v4015 = vsub.s32 %v4012, %v4014
    %v4016 = vrot.slane %v3999, %v4015
    %v4018 = vunpack.c.l.s4 1966171168
    %v4019 = vunpack.c.0.s8 %v4018
    %v4020 = vlaneseq
    %v4021 = vshrl.u32 %v4020, 7
    %v4022 = vsub.s32 %v4019, %v4021
    %v4023 = vrot.slane %v4009, %v4022
    %v4024 = vcombine.high %v4016, %v4016
    %v4025 = vcombine.high %v4023, %v4023
    %v4027 = vunpack.c.l.s4 1966171168
    %v4028 = vunpack.c.0.s8 %v4027
    %v4029 = vlaneseq
    %v4030 = vshrl.u32 %v4029, 7
    %v4031 = vsub.s32 %v4028, %v4030
    %v4032 = vrot.slane %v4016, %v4031
    %v4034 = vunpack.c.l.s4 1966171168
    %v4035 = vunpack.c.0.s8 %v4034
    %v4036 = vlaneseq
    %v4037 = vshrl.u32 %v4036, 7
    %v4038 = vsub.s32 %v4035, %v4037
    %v4039 = vrot.slane %v4023, %v4038
    %v4041 = vunpack.c.l.s4 1966171168
    %v4042 = vunpack.c.0.s8 %v4041
    %v4043 = vlaneseq
    %v4044 = vshrl.u32 %v4043, 7
    %v4045 = vsub.s32 %v4042, %v4044
    %v4046 = vrot.slane %v4024, %v4045
    %v4048 = vunpack.c.l.s4 1966171168
    %v4049 = vunpack.c.0.s8 %v4048
    %v4050 = vlaneseq
    %v4051 = vshrl.u32 %v4050, 7
    %v4052 = vsub.s32 %v4049, %v4051
    %v4053 = vrot.slane %v4025, %v4052
    %v4054 = vcombine.high %v4032, %v4032
    %v4055 = vcombine.high %v4039, %v4039
    %v4056 = vcombine.high %v4046, %v4046
    %v4057 = vcombine.high %v4053, %v4053
    %v4059 = vunpack.c.l.s4 1966171168
    %v4060 = vunpack.c.0.s8 %v4059
    %v4061 = vlaneseq
    %v4062 = vshrl.u32 %v4061, 7
    %v4063 = vsub.s32 %v4060, %v4062
    %v4064 = vrot.slane %v4004, %v4063
    %v4065 = vcombine.high %v4064, %v4064
    %v4067 = vunpack.c.l.s4 1966171168
    %v4068 = vunpack.c.0.s8 %v4067
    %v4069 = vlaneseq
    %v4070 = vshrl.u32 %v4069, 7
    %v4071 = vsub.s32 %v4068, %v4070
    %v4072 = vrot.slane %v4064, %v4071
    %v4074 = vunpack.c.l.s4 1966171168
    %v4075 = vunpack.c.0.s8 %v4074
    %v4076 = vlaneseq
    %v4077 = vshrl.u32 %v4076, 7
    %v4078 = vsub.s32 %v4075, %v4077
    %v4079 = vrot.slane %v4065, %v4078
    %v4080 = vld [vmem:[#allocation2 + $0x170] sm:$0xff]
    %v4081 = vld [vmem:[#allocation2 + $0x178] sm:$0xff]
    %v4082 = vld [vmem:[#allocation2 + $0x180] sm:$0xff]
    %v4083 = vld [vmem:[#allocation2 + $0x188] sm:$0xff]
    %4084 = vmatprep.subr.mxu0 0.0
    %4085 = vmatpush1.msra.mxu0 0.0
    %4086 = vmatprep.subr.mxu0 0.0
    %4087 = vmatpush1.msra.mxu0 0.0
    %4088 = vmatprep.subr.mxu0 0.0
    %4089 = vmatpush1.msra.mxu0 0.0
    %4090 = vmatprep.subr.mxu0 0.0
    %4091 = vmatpush1.msra.mxu0 0.0
    %4092 = vmatprep.subr.mxu0 0.0
    %4093 = vmatpush1.msra.mxu0 0.0
    %4094 = vmatprep.subr.mxu0 0.0
    %4095 = vmatpush1.msra.mxu0 0.0
    %4096 = vmatprep.subr.mxu0 0.0
    %4097 = vmatpush1.msra.mxu0 0.0
    %4098 = vmatprep.subr.mxu0 0.0
    %4099 = vmatpush1.msra.mxu0 0.0
    %4100 = vmatprep.subr.mxu0 0.0
    %4101 = vmatpush1.msra.mxu0 0.0
    %4102 = vmatprep.subr.mxu0 0.0
    %4103 = vmatpush1.msra.mxu0 0.0
    %4104 = vmatprep.subr.mxu0 0.0
    %4105 = vmatpush1.msra.mxu0 0.0
    %4106 = vmatprep.subr.mxu0 0.0
    %4107 = vmatpush1.msra.mxu0 0.0
    %4108 = vmatprep.subr.mxu0 0.0
    %4109 = vmatpush1.msra.mxu0 %v4083
    %4110 = vmatprep.subr.mxu0 0.0
    %4111 = vmatpush1.msra.mxu0 %v4082
    %4112 = vmatprep.subr.mxu0 0.0
    %4113 = vmatpush1.msra.mxu0 %v4081
    %4114 = vmatprep.subr.mxu0 0.0
    %4115 = vmatpush1.msra.mxu0 %v4080
    %4116 = vmatprep.subr.mxu0 0.0
    %4117 = vmatpush2.msra.mxu0 0.0
    %4118 = vmatprep.subr.mxu0 0.0
    %4119 = vmatpush2.msra.mxu0 0.0
    %4120 = vmatprep.subr.mxu0 0.0
    %4121 = vmatpush2.msra.mxu0 0.0
    %4122 = vmatprep.subr.mxu0 0.0
    %4123 = vmatpush2.msra.mxu0 0.0
    %4124 = vmatprep.subr.mxu0 0.0
    %4125 = vmatpush2.msra.mxu0 0.0
    %4126 = vmatprep.subr.mxu0 0.0
    %4127 = vmatpush2.msra.mxu0 0.0
    %4128 = vmatprep.subr.mxu0 0.0
    %4129 = vmatpush2.msra.mxu0 0.0
    %4130 = vmatprep.subr.mxu0 0.0
    %4131 = vmatpush2.msra.mxu0 0.0
    %4132 = vmatprep.subr.mxu0 0.0
    %4133 = vmatpush2.msra.mxu0 0.0
    %4134 = vmatprep.subr.mxu0 0.0
    %4135 = vmatpush2.msra.mxu0 0.0
    %4136 = vmatprep.subr.mxu0 0.0
    %4137 = vmatpush2.msra.mxu0 0.0
    %4138 = vmatprep.subr.mxu0 0.0
    %4139 = vmatpush2.msra.mxu0 0.0
    %4140 = vmatprep.subr.mxu0 0.0
    %4141 = vmatpush2.msra.mxu0 0.0
    %4142 = vmatprep.subr.mxu0 0.0
    %4143 = vmatpush2.msra.mxu0 0.0
    %4144 = vmatprep.subr.mxu0 0.0
    %4145 = vmatpush2.msra.mxu0 0.0
    %4146 = vmatprep.subr.mxu0 0.0
    %4147 = vmatpush2.msra.mxu0 0.0
    %4148 = vmatprep.mubr.f32.mxu0 0.0
    %4149 = vmatmul.mubr.f32.gmra.mxu0 %v3928
    %v4150 = vpop.f32.mrf.mxu0
    %v4151 = vadd.f32 0.0, %v4150
    %v4152 = vpop.f32.mrf.mxu0
    %4153 = vmatprep.mubr.f32.mxu0 0.0
    %4154 = vmatmul.mubr.f32.gmra.mxu0 %v3930
    %v4155 = vpop.f32.mrf.mxu0
    %v4156 = vadd.f32 0.0, %v4155
    %v4157 = vpop.f32.mrf.mxu0
    %4158 = vdwg.mxu0
    %v4161 = vcombine.high %v4151, %v4151
    %v4163 = vunpack.c.l.s4 1966171168
    %v4164 = vunpack.c.0.s8 %v4163
    %v4165 = vlaneseq
    %v4166 = vshrl.u32 %v4165, 7
    %v4167 = vsub.s32 %v4164, %v4166
    %v4168 = vrot.slane %v4151, %v4167
    %v4170 = vunpack.c.l.s4 1966171168
    %v4171 = vunpack.c.0.s8 %v4170
    %v4172 = vlaneseq
    %v4173 = vshrl.u32 %v4172, 7
    %v4174 = vsub.s32 %v4171, %v4173
    %v4175 = vrot.slane %v4161, %v4174
    %v4176 = vcombine.high %v4168, %v4168
    %v4177 = vcombine.high %v4175, %v4175
    %v4179 = vunpack.c.l.s4 1966171168
    %v4180 = vunpack.c.0.s8 %v4179
    %v4181 = vlaneseq
    %v4182 = vshrl.u32 %v4181, 7
    %v4183 = vsub.s32 %v4180, %v4182
    %v4184 = vrot.slane %v4168, %v4183
    %v4186 = vunpack.c.l.s4 1966171168
    %v4187 = vunpack.c.0.s8 %v4186
    %v4188 = vlaneseq
    %v4189 = vshrl.u32 %v4188, 7
    %v4190 = vsub.s32 %v4187, %v4189
    %v4191 = vrot.slane %v4175, %v4190
    %v4193 = vunpack.c.l.s4 1966171168
    %v4194 = vunpack.c.0.s8 %v4193
    %v4195 = vlaneseq
    %v4196 = vshrl.u32 %v4195, 7
    %v4197 = vsub.s32 %v4194, %v4196
    %v4198 = vrot.slane %v4176, %v4197
    %v4200 = vunpack.c.l.s4 1966171168
    %v4201 = vunpack.c.0.s8 %v4200
    %v4202 = vlaneseq
    %v4203 = vshrl.u32 %v4202, 7
    %v4204 = vsub.s32 %v4201, %v4203
    %v4205 = vrot.slane %v4177, %v4204
    %v4206 = vcombine.high %v4184, %v4184
    %v4207 = vcombine.high %v4191, %v4191
    %v4208 = vcombine.high %v4198, %v4198
    %v4209 = vcombine.high %v4205, %v4205
    %v4211 = vunpack.c.l.s4 1966171168
    %v4212 = vunpack.c.0.s8 %v4211
    %v4213 = vlaneseq
    %v4214 = vshrl.u32 %v4213, 7
    %v4215 = vsub.s32 %v4212, %v4214
    %v4216 = vrot.slane %v4156, %v4215
    %v4217 = vcombine.high %v4216, %v4216
    %v4219 = vunpack.c.l.s4 1966171168
    %v4220 = vunpack.c.0.s8 %v4219
    %v4221 = vlaneseq
    %v4222 = vshrl.u32 %v4221, 7
    %v4223 = vsub.s32 %v4220, %v4222
    %v4224 = vrot.slane %v4216, %v4223
    %v4226 = vunpack.c.l.s4 1966171168
    %v4227 = vunpack.c.0.s8 %v4226
    %v4228 = vlaneseq
    %v4229 = vshrl.u32 %v4228, 7
    %v4230 = vsub.s32 %v4227, %v4229
    %v4231 = vrot.slane %v4217, %v4230
    %v4234 = vunpack.c.l.s4 1966171168
    %v4235 = vunpack.c.0.s8 %v4234
    %v4236 = vlaneseq
    %v4237 = vshrl.u32 %v4236, 7
    %v4238 = vsub.s32 %v4235, %v4237
    %v4239 = vrot.slane %v3779, %v4238
    %v4240 = vcombine.high %v4239, %v4239
    %v4242 = vunpack.c.l.s4 1966171168
    %v4243 = vunpack.c.0.s8 %v4242
    %v4244 = vlaneseq
    %v4245 = vshrl.u32 %v4244, 7
    %v4246 = vsub.s32 %v4243, %v4245
    %v4247 = vrot.slane %v4239, %v4246
    %v4249 = vunpack.c.l.s4 1966171168
    %v4250 = vunpack.c.0.s8 %v4249
    %v4251 = vlaneseq
    %v4252 = vshrl.u32 %v4251, 7
    %v4253 = vsub.s32 %v4250, %v4252
    %v4254 = vrot.slane %v4240, %v4253
    %v4255 = vlaneseq
    %v4256 = vshrl.u32 %v4255, 7
    %v4257 = vsub.s32 0, %v4256
    %v4258 = vrot.slane %v4247, %v4257
    %v4259 = vlaneseq
    %v4260 = vshrl.u32 %v4259, 7
    %v4261 = vsub.s32 0, %v4260
    %v4262 = vrot.slane %v4254, %v4261
    %v4265 = vcombine.low %v4032, %v4046
    %v4266 = vcombine.low %v4054, %v4056
    %v4268 = vunpack.c.l.s4 1966171168
    %v4269 = vunpack.c.0.s8 %v4268
    %v4270 = vlaneseq
    %v4271 = vshrl.u32 %v4270, 7
    %v4272 = vsub.s32 %v4269, %v4271
    %v4273 = vrot.slane %v4265, %v4272
    %v4275 = vunpack.c.l.s4 1966171168
    %v4276 = vunpack.c.0.s8 %v4275
    %v4277 = vlaneseq
    %v4278 = vshrl.u32 %v4277, 7
    %v4279 = vsub.s32 %v4276, %v4278
    %v4280 = vrot.slane %v4266, %v4279
    %v4282 = vunpack.c.l.s4 1966171168
    %v4283 = vunpack.c.0.s8 %v4282
    %v4284 = vlaneseq
    %v4285 = vshrl.u32 %v4284, 7
    %v4286 = vsub.s32 %v4283, %v4285
    %v4287 = vrot.slane %v4039, %v4286
    %v4288 = vcombine.low %v4273, %v4280
    %v4290 = vunpack.c.l.s4 1966171168
    %v4291 = vunpack.c.0.s8 %v4290
    %v4292 = vlaneseq
    %v4293 = vshrl.u32 %v4292, 7
    %v4294 = vsub.s32 %v4291, %v4293
    %v4295 = vrot.slane %v4288, %v4294
    %v4297 = vunpack.c.l.s4 1966171168
    %v4298 = vunpack.c.0.s8 %v4297
    %v4299 = vlaneseq
    %v4300 = vshrl.u32 %v4299, 7
    %v4301 = vsub.s32 %v4298, %v4300
    %v4302 = vrot.slane %v4287, %v4301
    %v4303 = vcombine.low %v4295, %v4302
    %v4304 = vcombine.low %v4053, %v4055
    %v4305 = vcombine.low %v4057, %v4072
    %v4307 = vunpack.c.l.s4 1966171168
    %v4308 = vunpack.c.0.s8 %v4307
    %v4309 = vlaneseq
    %v4310 = vshrl.u32 %v4309, 7
    %v4311 = vsub.s32 %v4308, %v4310
    %v4312 = vrot.slane %v4304, %v4311
    %v4314 = vunpack.c.l.s4 1966171168
    %v4315 = vunpack.c.0.s8 %v4314
    %v4316 = vlaneseq
    %v4317 = vshrl.u32 %v4316, 7
    %v4318 = vsub.s32 %v4315, %v4317
    %v4319 = vrot.slane %v4305, %v4318
    %v4321 = vunpack.c.l.s4 1966171168
    %v4322 = vunpack.c.0.s8 %v4321
    %v4323 = vlaneseq
    %v4324 = vshrl.u32 %v4323, 7
    %v4325 = vsub.s32 %v4322, %v4324
    %v4326 = vrot.slane %v4079, %v4325
    %v4327 = vcombine.low %v4312, %v4319
    %v4329 = vunpack.c.l.s4 1966171168
    %v4330 = vunpack.c.0.s8 %v4329
    %v4331 = vlaneseq
    %v4332 = vshrl.u32 %v4331, 7
    %v4333 = vsub.s32 %v4330, %v4332
    %v4334 = vrot.slane %v4327, %v4333
    %v4336 = vunpack.c.l.s4 1966171168
    %v4337 = vunpack.c.0.s8 %v4336
    %v4338 = vlaneseq
    %v4339 = vshrl.u32 %v4338, 7
    %v4340 = vsub.s32 %v4337, %v4339
    %v4341 = vrot.slane %v4326, %v4340
    %v4342 = vcombine.low %v4334, %v4341
    %v4345 = vmul.f32 %v4258, %v4303
    %v4346 = vmul.f32 %v4262, %v4342
    %vm4347 = vcmask 520192
    %v4348 = vsel %vm4347, %v4345, 0.0
    %4349 = vadd.xlane.f32.xlu0 %v4348
    %v4350 = vpop.xlane.xlu0 %4349
    %v4351 = vsel %vm4347, %v4346, 0.0
    %4352 = vadd.xlane.f32.xlu0 %v4351
    %v4353 = vpop.xlane.xlu0 %4352
    %v4354 = vmul.f32 %v4350, 0.125
    %v4355 = vmul.f32 %v4353, 0.125
    %v4358 = vlaneseq
    %v4359 = vand.u32 %v4358, 127
    %v4360 = vlaneseq
    %v4361 = vshrl.u32 %v4360, 7
    %v4362 = vsub.s32 %v4359, %v4361
    %v4363 = vrot.slane %v4354, %v4362
    %v4364 = vlaneseq
    %v4365 = vshrl.u32 %v4364, 7
    %v4366 = vsub.s32 %v4359, %v4365
    %v4367 = vrot.slane %v4355, %v4366
    %v4368 = vsel %vm302, %v4367, %v4363
    %vm4370 = vcmask 33792
    %v4371 = vsel %vm4370, %v4368, -inf
    %4372 = vmax.xlane.f32.xlu0 %v4371
    %v4373 = vpop.xlane.xlu0 %4372
    %v4375 = vlaneseq
    %v4376 = vshrl.u32 %v4375, 7
    %v4377 = vsub.s32 0, %v4376
    %v4378 = vrot.slane %v4373, %v4377
    %v4379 = vlaneseq
    %v4380 = vshrl.u32 %v4379, 7
    %v4381 = vsub.s32 1, %v4380
    %v4382 = vrot.slane %v4373, %v4381
    %v4385 = vsub.f32 %v4354, %v4378
    %v4386 = vsub.f32 %v4355, %v4382
    %v4387 = vmul.f32 %v4385, 1.442695
    %v4388 = vpow.pop %v4387
    %v4389 = vmul.f32 %v4386, 1.442695
    %v4390 = vpow.pop %v4389
    %4393 = vset.pattern.permute.xlu0 0
    %4394 = vperm.xlu0 %4393, %v4388
    %v4395 = vpop.permute.xlu0 %4394
    %4396 = vset.pattern.permute.xlu0 0
    %4397 = vperm.xlu0 %4396, %v4390
    %v4398 = vpop.permute.xlu0 %4397
    %v4399 = vlaneseq
    %v4400 = vshrl.u32 %v4399, 7
    %v4401 = vsub.s32 %v4359, %v4400
    %v4402 = vrot.slane %v4395, %v4401
    %v4403 = vlaneseq
    %v4404 = vshrl.u32 %v4403, 7
    %v4405 = vsub.s32 %v4359, %v4404
    %v4406 = vrot.slane %v4398, %v4405
    %v4407 = vsel %vm302, %v4406, %v4402
    %v4409 = vsel %vm4370, %v4407, 0.0
    %4410 = vadd.xlane.f32.xlu0 %v4409
    %v4411 = vpop.xlane.xlu0 %4410
    %v4412 = vrcp.pop %v4411
    %v4414 = vlaneseq
    %v4415 = vshrl.u32 %v4414, 7
    %v4416 = vsub.s32 0, %v4415
    %v4417 = vrot.slane %v4412, %v4416
    %v4418 = vlaneseq
    %v4419 = vshrl.u32 %v4418, 7
    %v4420 = vsub.s32 1, %v4419
    %v4421 = vrot.slane %v4412, %v4420
    %v4424 = vmul.f32 %v4388, %v4417
    %v4425 = vmul.f32 %v4390, %v4421
    %4427 = vset.pattern.permute.xlu0 0
    %4428 = vperm.xlu0 %4427, %v4424
    %v4429 = vpop.permute.xlu0 %4428
    %4432 = vset.pattern.permute.xlu0 0
    %4433 = vperm.xlu0 %4432, %v4425
    %v4434 = vpop.permute.xlu0 %4433
    %v4436 = vcombine.low %v4184, %v4198
    %v4437 = vcombine.low %v4206, %v4208
    %v4439 = vunpack.c.l.s4 1966171168
    %v4440 = vunpack.c.0.s8 %v4439
    %v4441 = vlaneseq
    %v4442 = vshrl.u32 %v4441, 7
    %v4443 = vsub.s32 %v4440, %v4442
    %v4444 = vrot.slane %v4436, %v4443
    %v4446 = vunpack.c.l.s4 1966171168
    %v4447 = vunpack.c.0.s8 %v4446
    %v4448 = vlaneseq
    %v4449 = vshrl.u32 %v4448, 7
    %v4450 = vsub.s32 %v4447, %v4449
    %v4451 = vrot.slane %v4437, %v4450
    %v4453 = vunpack.c.l.s4 1966171168
    %v4454 = vunpack.c.0.s8 %v4453
    %v4455 = vlaneseq
    %v4456 = vshrl.u32 %v4455, 7
    %v4457 = vsub.s32 %v4454, %v4456
    %v4458 = vrot.slane %v4191, %v4457
    %v4459 = vcombine.low %v4444, %v4451
    %v4461 = vunpack.c.l.s4 1966171168
    %v4462 = vunpack.c.0.s8 %v4461
    %v4463 = vlaneseq
    %v4464 = vshrl.u32 %v4463, 7
    %v4465 = vsub.s32 %v4462, %v4464
    %v4466 = vrot.slane %v4459, %v4465
    %v4468 = vunpack.c.l.s4 1966171168
    %v4469 = vunpack.c.0.s8 %v4468
    %v4470 = vlaneseq
    %v4471 = vshrl.u32 %v4470, 7
    %v4472 = vsub.s32 %v4469, %v4471
    %v4473 = vrot.slane %v4458, %v4472
    %v4474 = vcombine.low %v4466, %v4473
    %v4475 = vcombine.low %v4205, %v4207
    %v4476 = vcombine.low %v4209, %v4224
    %v4478 = vunpack.c.l.s4 1966171168
    %v4479 = vunpack.c.0.s8 %v4478
    %v4480 = vlaneseq
    %v4481 = vshrl.u32 %v4480, 7
    %v4482 = vsub.s32 %v4479, %v4481
    %v4483 = vrot.slane %v4475, %v4482
    %v4485 = vunpack.c.l.s4 1966171168
    %v4486 = vunpack.c.0.s8 %v4485
    %v4487 = vlaneseq
    %v4488 = vshrl.u32 %v4487, 7
    %v4489 = vsub.s32 %v4486, %v4488
    %v4490 = vrot.slane %v4476, %v4489
    %v4492 = vunpack.c.l.s4 1966171168
    %v4493 = vunpack.c.0.s8 %v4492
    %v4494 = vlaneseq
    %v4495 = vshrl.u32 %v4494, 7
    %v4496 = vsub.s32 %v4493, %v4495
    %v4497 = vrot.slane %v4231, %v4496
    %v4498 = vcombine.low %v4483, %v4490
    %v4500 = vunpack.c.l.s4 1966171168
    %v4501 = vunpack.c.0.s8 %v4500
    %v4502 = vlaneseq
    %v4503 = vshrl.u32 %v4502, 7
    %v4504 = vsub.s32 %v4501, %v4503
    %v4505 = vrot.slane %v4498, %v4504
    %v4507 = vunpack.c.l.s4 1966171168
    %v4508 = vunpack.c.0.s8 %v4507
    %v4509 = vlaneseq
    %v4510 = vshrl.u32 %v4509, 7
    %v4511 = vsub.s32 %v4508, %v4510
    %v4512 = vrot.slane %v4497, %v4511
    %v4513 = vcombine.low %v4505, %v4512
    %v4516 = vmul.f32 %v4429, %v4474
    %v4517 = vmul.f32 %v4434, %v4513
    %v4518 = vsel %vm4347, %v4516, 0.0
    %v4519 = vrot.slane %v4518, 4
    %v4520 = vadd.f32 %v4518, %v4519
    %v4521 = vrot.slane %v4520, 2
    %v4522 = vadd.f32 %v4520, %v4521
    %v4523 = vrot.slane %v4522, 1
    %v4524 = vadd.f32 %v4522, %v4523
    %v4525 = vsel %vm4347, %v4517, 0.0
    %v4526 = vrot.slane %v4525, 4
    %v4527 = vadd.f32 %v4525, %v4526
    %v4528 = vrot.slane %v4527, 2
    %v4529 = vadd.f32 %v4527, %v4528
    %v4530 = vrot.slane %v4529, 1
    %v4531 = vadd.f32 %v4529, %v4530
    %v4532 = vld [vmem:[#allocation2 + $0x190] sm:$0x3]
    %v4533 = vld [vmem:[#allocation2 + $0x198] sm:$0xff]
    %v4534 = vld [vmem:[#allocation2 + $0x1a0] sm:$0xff]
    %v4535 = vld [vmem:[#allocation2 + $0x1a8] sm:$0xff]
    %v4536 = vld [vmem:[#allocation2 + $0x1b0] sm:$0xff]
    %v4537 = vld [vmem:[#allocation2 + $0x1b8] sm:$0xff]
    %v4538 = vld [vmem:[#allocation2 + $0x1c0] sm:$0xff]
    %v4539 = vld [vmem:[#allocation2 + $0x1c8] sm:$0xff]
    %v4540 = vld [vmem:[#allocation2 + $0x1d0] sm:$0xff]
    %v4541 = vld [vmem:[#allocation2 + $0x1d8] sm:$0xff]
    %v4542 = vld [vmem:[#allocation2 + $0x1e0] sm:$0xff]
    %v4543 = vld [vmem:[#allocation2 + $0x1e8] sm:$0xff]
    %v4544 = vld [vmem:[#allocation2 + $0x1f0] sm:$0xff]
    %v4545 = vld [vmem:[#allocation2 + $0x1f8] sm:$0xff]
    %v4546 = vld [vmem:[#allocation2 + $0x200] sm:$0xff]
    %v4547 = vld [vmem:[#allocation2 + $0x208] sm:$0xff]
    %v4548 = vld [vmem:[#allocation2 + $0x210] sm:$0xff]
    %v4549 = vld [vmem:[#allocation2 + $0x218] sm:$0x3]
    %v4552 = vsel %vm302, %v4531, %v4524
    %vm4553 = vcmask 523264
    %v4554 = vsel %vm4553, %v4552, 0
    %4556 = vmatprep.subr.mxu0 0.0
    %4557 = vmatpush1.msra.mxu0 0.0
    %4558 = vmatprep.subr.mxu0 0.0
    %4559 = vmatpush1.msra.mxu0 0.0
    %4560 = vmatprep.subr.mxu0 0.0
    %4561 = vmatpush1.msra.mxu0 0.0
    %4562 = vmatprep.subr.mxu0 0.0
    %4563 = vmatpush1.msra.mxu0 0.0
    %4564 = vmatprep.subr.mxu0 0.0
    %4565 = vmatpush1.msra.mxu0 0.0
    %4566 = vmatprep.subr.mxu0 0.0
    %4567 = vmatpush1.msra.mxu0 0.0
    %4568 = vmatprep.subr.mxu0 0.0
    %4569 = vmatpush1.msra.mxu0 0.0
    %4570 = vmatprep.subr.mxu0 0.0
    %4571 = vmatpush1.msra.mxu0 0.0
    %4572 = vmatprep.subr.mxu0 0.0
    %4573 = vmatpush1.msra.mxu0 %v4540
    %4574 = vmatprep.subr.mxu0 0.0
    %4575 = vmatpush1.msra.mxu0 %v4539
    %4576 = vmatprep.subr.mxu0 0.0
    %4577 = vmatpush1.msra.mxu0 %v4538
    %4578 = vmatprep.subr.mxu0 0.0
    %4579 = vmatpush1.msra.mxu0 %v4537
    %4580 = vmatprep.subr.mxu0 0.0
    %4581 = vmatpush1.msra.mxu0 %v4536
    %4582 = vmatprep.subr.mxu0 0.0
    %4583 = vmatpush1.msra.mxu0 %v4535
    %4584 = vmatprep.subr.mxu0 0.0
    %4585 = vmatpush1.msra.mxu0 %v4534
    %4586 = vmatprep.subr.mxu0 0.0
    %4587 = vmatpush1.msra.mxu0 %v4533
    %4588 = vmatprep.subr.mxu0 0.0
    %4589 = vmatpush2.msra.mxu0 0.0
    %4590 = vmatprep.subr.mxu0 0.0
    %4591 = vmatpush2.msra.mxu0 0.0
    %4592 = vmatprep.subr.mxu0 0.0
    %4593 = vmatpush2.msra.mxu0 0.0
    %4594 = vmatprep.subr.mxu0 0.0
    %4595 = vmatpush2.msra.mxu0 0.0
    %4596 = vmatprep.subr.mxu0 0.0
    %4597 = vmatpush2.msra.mxu0 0.0
    %4598 = vmatprep.subr.mxu0 0.0
    %4599 = vmatpush2.msra.mxu0 0.0
    %4600 = vmatprep.subr.mxu0 0.0
    %4601 = vmatpush2.msra.mxu0 0.0
    %4602 = vmatprep.subr.mxu0 0.0
    %4603 = vmatpush2.msra.mxu0 0.0
    %4604 = vmatprep.subr.mxu0 0.0
    %4605 = vmatpush2.msra.mxu0 0.0
    %4606 = vmatprep.subr.mxu0 0.0
    %4607 = vmatpush2.msra.mxu0 0.0
    %4608 = vmatprep.subr.mxu0 0.0
    %4609 = vmatpush2.msra.mxu0 0.0
    %4610 = vmatprep.subr.mxu0 0.0
    %4611 = vmatpush2.msra.mxu0 0.0
    %4612 = vmatprep.subr.mxu0 0.0
    %4613 = vmatpush2.msra.mxu0 0.0
    %4614 = vmatprep.subr.mxu0 0.0
    %4615 = vmatpush2.msra.mxu0 0.0
    %4616 = vmatprep.subr.mxu0 0.0
    %4617 = vmatpush2.msra.mxu0 0.0
    %4618 = vmatprep.subr.mxu0 0.0
    %4619 = vmatpush2.msra.mxu0 0.0
    %4620 = vmatprep.mubr.f32.mxu0 0.0
    %4621 = vmatmul.mubr.f32.gmra.mxu0 %v4554
    %v4622 = vpop.f32.mrf.mxu0
    %v4623 = vadd.f32 0.0, %v4622
    %v4624 = vpop.f32.mrf.mxu0
    %4625 = vdwg.mxu0
    %4627 = vset.pattern.permute.xlu0 0
    %4628 = vperm.xlu0 %4627, %v57
    %v4629 = vpop.permute.xlu0 %4628
    %4632 = vset.pattern.permute.xlu0 0
    %4633 = vperm.xlu0 %4632, %v58
    %v4634 = vpop.permute.xlu0 %4633
    %v4636 = vlaneseq
    %v4637 = vshrl.u32 %v4636, 7
    %v4638 = vsub.s32 0, %v4637
    %v4639 = vrot.slane %v4532, %v4638
    %v4640 = vmul.f32 %v4629, %v4639
    %v4641 = vmul.f32 %v4634, %v4639
    %4642 = vset.pattern.permute.xlu0 1
    %4643 = vperm.xlu0 %4642, %v57
    %v4644 = vpop.permute.xlu0 %4643
    %4646 = vset.pattern.permute.xlu0 1
    %4647 = vperm.xlu0 %4646, %v58
    %v4648 = vpop.permute.xlu0 %4647
    %v4650 = vlaneseq
    %v4651 = vshrl.u32 %v4650, 7
    %v4652 = vsub.s32 1, %v4651
    %v4653 = vrot.slane %v4532, %v4652
    %v4654 = vmul.f32 %v4644, %v4653
    %v4655 = vmul.f32 %v4648, %v4653
    %v4656 = vadd.f32 %v4640, %v4654
    %v4657 = vadd.f32 %v4641, %v4655
    %v4660 = vunpack.c.l.s4 1966171168
    %v4661 = vunpack.c.0.s8 %v4660
    %v4662 = vlaneseq
    %v4663 = vshrl.u32 %v4662, 7
    %v4664 = vsub.s32 %v4661, %v4663
    %v4665 = vrot.slane %v4623, %v4664
    %v4666 = vcombine.high %v4665, %v4665
    %v4668 = vunpack.c.l.s4 1966171168
    %v4669 = vunpack.c.0.s8 %v4668
    %v4670 = vlaneseq
    %v4671 = vshrl.u32 %v4670, 7
    %v4672 = vsub.s32 %v4669, %v4671
    %v4673 = vrot.slane %v4665, %v4672
    %v4675 = vunpack.c.l.s4 1966171168
    %v4676 = vunpack.c.0.s8 %v4675
    %v4677 = vlaneseq
    %v4678 = vshrl.u32 %v4677, 7
    %v4679 = vsub.s32 %v4676, %v4678
    %v4680 = vrot.slane %v4666, %v4679
    %v4681 = vlaneseq
    %v4682 = vshrl.u32 %v4681, 7
    %v4683 = vsub.s32 0, %v4682
    %v4684 = vrot.slane %v4673, %v4683
    %v4685 = vlaneseq
    %v4686 = vshrl.u32 %v4685, 7
    %v4687 = vsub.s32 0, %v4686
    %v4688 = vrot.slane %v4680, %v4687
    %v4691 = vadd.f32 %v4656, %v4684
    %v4692 = vadd.f32 %v4657, %v4688
    %v4693 = vlaneseq
    %v4694 = vshrl.u32 %v4693, 7
    %v4695 = vsub.s32 0, %v4694
    %v4696 = vrot.slane %v4549, %v4695
    %v4697 = vadd.f32 %v4691, %v4696
    %v4698 = vadd.f32 %v4692, %v4696
    %v4699 = vmax.f32 %v4697, 0.0
    %v4700 = vmax.f32 %v4698, 0.0
    %v4701 = vlaneseq
    %v4702 = vshrl.u32 %v4701, 7
    %v4703 = vsub.s32 1, %v4702
    %v4704 = vrot.slane %v4549, %v4703
    %v4706 = vsel %vm4553, %v4699, 0
    %v4709 = vsel %vm4553, %v4700, 0
    %4711 = vmatprep.subr.mxu0 0.0
    %4712 = vmatpush1.msra.mxu0 0.0
    %4713 = vmatprep.subr.mxu0 0.0
    %4714 = vmatpush1.msra.mxu0 0.0
    %4715 = vmatprep.subr.mxu0 0.0
    %4716 = vmatpush1.msra.mxu0 0.0
    %4717 = vmatprep.subr.mxu0 0.0
    %4718 = vmatpush1.msra.mxu0 0.0
    %4719 = vmatprep.subr.mxu0 0.0
    %4720 = vmatpush1.msra.mxu0 0.0
    %4721 = vmatprep.subr.mxu0 0.0
    %4722 = vmatpush1.msra.mxu0 0.0
    %4723 = vmatprep.subr.mxu0 0.0
    %4724 = vmatpush1.msra.mxu0 0.0
    %4725 = vmatprep.subr.mxu0 0.0
    %4726 = vmatpush1.msra.mxu0 0.0
    %4727 = vmatprep.subr.mxu0 0.0
    %4728 = vmatpush1.msra.mxu0 %v4548
    %4729 = vmatprep.subr.mxu0 0.0
    %4730 = vmatpush1.msra.mxu0 %v4547
    %4731 = vmatprep.subr.mxu0 0.0
    %4732 = vmatpush1.msra.mxu0 %v4546
    %4733 = vmatprep.subr.mxu0 0.0
    %4734 = vmatpush1.msra.mxu0 %v4545
    %4735 = vmatprep.subr.mxu0 0.0
    %4736 = vmatpush1.msra.mxu0 %v4544
    %4737 = vmatprep.subr.mxu0 0.0
    %4738 = vmatpush1.msra.mxu0 %v4543
    %4739 = vmatprep.subr.mxu0 0.0
    %4740 = vmatpush1.msra.mxu0 %v4542
    %4741 = vmatprep.subr.mxu0 0.0
    %4742 = vmatpush1.msra.mxu0 %v4541
    %4743 = vmatprep.subr.mxu0 0.0
    %4744 = vmatpush2.msra.mxu0 0.0
    %4745 = vmatprep.subr.mxu0 0.0
    %4746 = vmatpush2.msra.mxu0 0.0
    %4747 = vmatprep.subr.mxu0 0.0
    %4748 = vmatpush2.msra.mxu0 0.0
    %4749 = vmatprep.subr.mxu0 0.0
    %4750 = vmatpush2.msra.mxu0 0.0
    %4751 = vmatprep.subr.mxu0 0.0
    %4752 = vmatpush2.msra.mxu0 0.0
    %4753 = vmatprep.subr.mxu0 0.0
    %4754 = vmatpush2.msra.mxu0 0.0
    %4755 = vmatprep.subr.mxu0 0.0
    %4756 = vmatpush2.msra.mxu0 0.0
    %4757 = vmatprep.subr.mxu0 0.0
    %4758 = vmatpush2.msra.mxu0 0.0
    %4759 = vmatprep.subr.mxu0 0.0
    %4760 = vmatpush2.msra.mxu0 0.0
    %4761 = vmatprep.subr.mxu0 0.0
    %4762 = vmatpush2.msra.mxu0 0.0
    %4763 = vmatprep.subr.mxu0 0.0
    %4764 = vmatpush2.msra.mxu0 0.0
    %4765 = vmatprep.subr.mxu0 0.0
    %4766 = vmatpush2.msra.mxu0 0.0
    %4767 = vmatprep.subr.mxu0 0.0
    %4768 = vmatpush2.msra.mxu0 0.0
    %4769 = vmatprep.subr.mxu0 0.0
    %4770 = vmatpush2.msra.mxu0 0.0
    %4771 = vmatprep.subr.mxu0 0.0
    %4772 = vmatpush2.msra.mxu0 0.0
    %4773 = vmatprep.subr.mxu0 0.0
    %4774 = vmatpush2.msra.mxu0 0.0
    %4775 = vmatprep.mubr.f32.mxu0 0.0
    %4776 = vmatmul.mubr.f32.gmra.mxu0 %v4706
    %v4777 = vpop.f32.mrf.mxu0
    %v4778 = vadd.f32 %v4704, %v4777
    %v4779 = vpop.f32.mrf.mxu0
    %4780 = vmatprep.mubr.f32.mxu0 0.0
    %4781 = vmatmul.mubr.f32.gmra.mxu0 %v4709
    %v4782 = vpop.f32.mrf.mxu0
    %v4783 = vadd.f32 %v4704, %v4782
    %v4784 = vpop.f32.mrf.mxu0
    %4785 = vdwg.mxu0
    %4788 = vrot.lane.b32.xlu0 %v4778, 127
    %v4789 = vpop.permute.xlu0 %4788
    %4790 = vrot.lane.b32.xlu0 %v4783, 127
    %v4791 = vpop.permute.xlu0 %4790
    %v4794 = vadd.f32 %v57, %v4789
    %v4795 = vadd.f32 %v58, %v4791
    %4796 = vset.pattern.permute.xlu0 0
    %4797 = vperm.xlu0 %4796, %v4778
    %v4798 = vpop.permute.xlu0 %4797
    %4799 = vset.pattern.permute.xlu0 0
    %4800 = vperm.xlu0 %4799, %v4783
    %v4801 = vpop.permute.xlu0 %4800
    %v4802 = vlaneseq
    %v4803 = vshrl.u32 %v4802, 7
    %v4804 = vsub.s32 %v4359, %v4803
    %v4805 = vrot.slane %v4798, %v4804
    %v4806 = vlaneseq
    %v4807 = vshrl.u32 %v4806, 7
    %v4808 = vsub.s32 %v4359, %v4807
    %v4809 = vrot.slane %v4801, %v4808
    %v4810 = vsel %vm302, %v4809, %v4805
    %vm4812 = vcmask 58368
    %v4813 = vsel %vm4812, %v4810, -inf
    %4814 = vmax.xlane.f32.xlu0 %v4813
    %v4815 = vpop.xlane.xlu0 %4814
    %v4817 = vlaneseq
    %v4818 = vshrl.u32 %v4817, 7
    %v4819 = vsub.s32 0, %v4818
    %v4820 = vrot.slane %v4815, %v4819
    %v4821 = vlaneseq
    %v4822 = vshrl.u32 %v4821, 7
    %v4823 = vsub.s32 1, %v4822
    %v4824 = vrot.slane %v4815, %v4823
    %vm4827 = vcmp.ge.f32.partialorder %v4778, %v4820
    %vm4828 = vcmp.ge.f32.partialorder %v4783, %v4824
    %4830 = vbcast.lane.b32.xlu0 %v4359, 256
    %v4831 = vpop.permute.xlu0 %4830
    %v4832 = vsel %vm4827, %v4831, 8
    %v4833 = vsel %vm4828, %v4831, 8
    %4834 = vset.pattern.permute.xlu0 0
    %4835 = vperm.xlu0 %4834, %v4832
    %v4836 = vpop.permute.xlu0 %4835
    %4837 = vset.pattern.permute.xlu0 0
    %4838 = vperm.xlu0 %4837, %v4833
    %v4839 = vpop.permute.xlu0 %4838
    %v4840 = vlaneseq
    %v4841 = vshrl.u32 %v4840, 7
    %v4842 = vsub.s32 %v4359, %v4841
    %v4843 = vrot.slane %v4836, %v4842
    %v4844 = vlaneseq
    %v4845 = vshrl.u32 %v4844, 7
    %v4846 = vsub.s32 %v4359, %v4845
    %v4847 = vrot.slane %v4839, %v4846
    %v4848 = vsel %vm302, %v4847, %v4843
    %v4849 = vsel %vm4812, %v4848, 2147483647
    %v4850 = vand.u32 %v4849, 65535
    %v4851 = vshra.s32 %v4849, 16
    %v4852 = vcvt.s32.f32 %v4850
    %v4853 = vcvt.s32.f32 %v4851
    %4854 = vmin.xlane.f32.xlu0 %v4853
    %v4855 = vpop.xlane.xlu0 %4854
    %vm4856 = vcmp.eq.f32.partialorder %v4853, %v4855
    %v4857 = vsel %vm4856, %v4852, inf
    %4858 = vmin.xlane.f32.xlu0 %v4857
    %v4859 = vpop.xlane.xlu0 %4858
    %v4860 = vcvt.f32.s32 %v4859
    %v4861 = vcvt.f32.s32 %v4855
    %v4862 = vshll.u32 %v4861, 16
    %v4863 = vadd.s32 %v4862, %v4860
    %vm4864 = vcmp.eq.s32.totalorder %v4359, %v4863
    %v4865 = vsel %vm4864, 1, 0
    %v4866 = vcvt.s32.f32 %v4865
    %v4867 = vlaneseq
    %v4868 = vshrl.u32 %v4867, 7
    %v4869 = vsub.s32 0, %v4868
    %v4870 = vrot.slane %v4866, %v4869
    %4872 = vbcast.lane.b32.xlu0 %v4870, 256
    %v4873 = vpop.permute.xlu0 %4872
    %v4874 = vlaneseq
    %v4875 = vshrl.u32 %v4874, 7
    %v4876 = vsub.s32 1, %v4875
    %v4877 = vrot.slane %v4866, %v4876
    %4879 = vbcast.lane.b32.xlu0 %v4877, 256
    %v4880 = vpop.permute.xlu0 %4879
    %v4881 = vmul.f32 %v4873, %v4794
    %v4882 = vmul.f32 %v4880, %v4795
    %vm4883 = vcmask 15360
    %v4884 = vsel %vm4883, %v4881, 0.0
    %v4885 = vrot.slane %v4884, 4
    %v4886 = vadd.f32 %v4884, %v4885
    %v4887 = vrot.slane %v4886, 2
    %v4888 = vadd.f32 %v4886, %v4887
    %v4889 = vrot.slane %v4888, 1
    %v4890 = vadd.f32 %v4888, %v4889
    %v4891 = vsel %vm4883, %v4882, 0.0
    %v4892 = vrot.slane %v4891, 4
    %v4893 = vadd.f32 %v4891, %v4892
    %v4894 = vrot.slane %v4893, 2
    %v4895 = vadd.f32 %v4893, %v4894
    %v4896 = vrot.slane %v4895, 1
    %v4897 = vadd.f32 %v4895, %v4896
    %vm4898 = vcmp.gt.f32.partialorder %v4866, 0.0
    %v4899 = vsel %vm4898, -1e+30, %v4810
    %v4900 = vsel %vm4812, %v4899, -inf
    %4901 = vmax.xlane.f32.xlu0 %v4900
    %v4902 = vpop.xlane.xlu0 %4901
    %vm4903 = vcmp.ge.f32.partialorder %v4899, %v4902
    %v4904 = vsel %vm4903, %v4359, 8
    %v4905 = vsel %vm4812, %v4904, 2147483647
    %v4906 = vand.u32 %v4905, 65535
    %v4907 = vshra.s32 %v4905, 16
    %v4908 = vcvt.s32.f32 %v4906
    %v4909 = vcvt.s32.f32 %v4907
    %4910 = vmin.xlane.f32.xlu0 %v4909
    %v4911 = vpop.xlane.xlu0 %4910
    %vm4912 = vcmp.eq.f32.partialorder %v4909, %v4911
    %v4913 = vsel %vm4912, %v4908, inf
    %4914 = vmin.xlane.f32.xlu0 %v4913
    %v4915 = vpop.xlane.xlu0 %4914
    %v4916 = vcvt.f32.s32 %v4915
    %v4917 = vcvt.f32.s32 %v4911
    %v4918 = vshll.u32 %v4917, 16
    %v4919 = vadd.s32 %v4918, %v4916
    %vm4920 = vcmp.eq.s32.totalorder %v4359, %v4919
    %v4921 = vsel %vm4920, 1, 0
    %v4922 = vcvt.s32.f32 %v4921
    %v4923 = vlaneseq
    %v4924 = vshrl.u32 %v4923, 7
    %v4925 = vsub.s32 0, %v4924
    %v4926 = vrot.slane %v4922, %v4925
    %4928 = vbcast.lane.b32.xlu0 %v4926, 256
    %v4929 = vpop.permute.xlu0 %4928
    %v4930 = vlaneseq
    %v4931 = vshrl.u32 %v4930, 7
    %v4932 = vsub.s32 1, %v4931
    %v4933 = vrot.slane %v4922, %v4932
    %4935 = vbcast.lane.b32.xlu0 %v4933, 256
    %v4936 = vpop.permute.xlu0 %4935
    %v4937 = vmul.f32 %v4929, %v4794
    %v4938 = vmul.f32 %v4936, %v4795
    %v4939 = vsel %vm4883, %v4937, 0.0
    %v4940 = vrot.slane %v4939, 4
    %v4941 = vadd.f32 %v4939, %v4940
    %v4942 = vrot.slane %v4941, 2
    %v4943 = vadd.f32 %v4941, %v4942
    %v4944 = vrot.slane %v4943, 1
    %v4945 = vadd.f32 %v4943, %v4944
    %v4946 = vsel %vm4883, %v4938, 0.0
    %v4947 = vrot.slane %v4946, 4
    %v4948 = vadd.f32 %v4946, %v4947
    %v4949 = vrot.slane %v4948, 2
    %v4950 = vadd.f32 %v4948, %v4949
    %v4951 = vrot.slane %v4950, 1
    %v4952 = vadd.f32 %v4950, %v4951
    %vm4953 = vcmp.gt.f32.partialorder %v4922, 0.0
    %v4954 = vsel %vm4953, -1e+30, %v4899
    %v4955 = vsel %vm4812, %v4954, -inf
    %4956 = vmax.xlane.f32.xlu0 %v4955
    %v4957 = vpop.xlane.xlu0 %4956
    %vm4958 = vcmp.ge.f32.partialorder %v4954, %v4957
    %v4959 = vsel %vm4958, %v4359, 8
    %v4960 = vsel %vm4812, %v4959, 2147483647
    %v4961 = vand.u32 %v4960, 65535
    %v4962 = vshra.s32 %v4960, 16
    %v4963 = vcvt.s32.f32 %v4961
    %v4964 = vcvt.s32.f32 %v4962
    %4965 = vmin.xlane.f32.xlu0 %v4964
    %v4966 = vpop.xlane.xlu0 %4965
    %vm4967 = vcmp.eq.f32.partialorder %v4964, %v4966
    %v4968 = vsel %vm4967, %v4963, inf
    %4969 = vmin.xlane.f32.xlu0 %v4968
    %v4970 = vpop.xlane.xlu0 %4969
    %v4971 = vcvt.f32.s32 %v4970
    %v4972 = vcvt.f32.s32 %v4966
    %v4973 = vshll.u32 %v4972, 16
    %v4974 = vadd.s32 %v4973, %v4971
    %vm4975 = vcmp.eq.s32.totalorder %v4359, %v4974
    %v4976 = vsel %vm4975, 1, 0
    %v4977 = vcvt.s32.f32 %v4976
    %v4978 = vlaneseq
    %v4979 = vshrl.u32 %v4978, 7
    %v4980 = vsub.s32 0, %v4979
    %v4981 = vrot.slane %v4977, %v4980
    %4983 = vbcast.lane.b32.xlu0 %v4981, 256
    %v4984 = vpop.permute.xlu0 %4983
    %v4985 = vlaneseq
    %v4986 = vshrl.u32 %v4985, 7
    %v4987 = vsub.s32 1, %v4986
    %v4988 = vrot.slane %v4977, %v4987
    %4990 = vbcast.lane.b32.xlu0 %v4988, 256
    %v4991 = vpop.permute.xlu0 %4990
    %v4992 = vmul.f32 %v4984, %v4794
    %v4993 = vmul.f32 %v4991, %v4795
    %v4994 = vsel %vm4883, %v4992, 0.0
    %v4995 = vrot.slane %v4994, 4
    %v4996 = vadd.f32 %v4994, %v4995
    %v4997 = vrot.slane %v4996, 2
    %v4998 = vadd.f32 %v4996, %v4997
    %v4999 = vrot.slane %v4998, 1
    %v5000 = vadd.f32 %v4998, %v4999
    %v5001 = vsel %vm4883, %v4993, 0.0
    %v5002 = vrot.slane %v5001, 4
    %v5003 = vadd.f32 %v5001, %v5002
    %v5004 = vrot.slane %v5003, 2
    %v5005 = vadd.f32 %v5003, %v5004
    %v5006 = vrot.slane %v5005, 1
    %v5007 = vadd.f32 %v5005, %v5006
    %vm5008 = vcmp.gt.f32.partialorder %v4977, 0.0
    %v5009 = vsel %vm5008, -1e+30, %v4954
    %v5010 = vsel %vm4812, %v5009, -inf
    %5011 = vmax.xlane.f32.xlu0 %v5010
    %v5012 = vpop.xlane.xlu0 %5011
    %vm5013 = vcmp.ge.f32.partialorder %v5009, %v5012
    %v5014 = vsel %vm5013, %v4359, 8
    %v5015 = vsel %vm4812, %v5014, 2147483647
    %v5016 = vand.u32 %v5015, 65535
    %v5017 = vshra.s32 %v5015, 16
    %v5018 = vcvt.s32.f32 %v5016
    %v5019 = vcvt.s32.f32 %v5017
    %5020 = vmin.xlane.f32.xlu0 %v5019
    %v5021 = vpop.xlane.xlu0 %5020
    %vm5022 = vcmp.eq.f32.partialorder %v5019, %v5021
    %v5023 = vsel %vm5022, %v5018, inf
    %5024 = vmin.xlane.f32.xlu0 %v5023
    %v5025 = vpop.xlane.xlu0 %5024
    %v5026 = vcvt.f32.s32 %v5025
    %v5027 = vcvt.f32.s32 %v5021
    %v5028 = vshll.u32 %v5027, 16
    %v5029 = vadd.s32 %v5028, %v5026
    %vm5030 = vcmp.eq.s32.totalorder %v4359, %v5029
    %v5031 = vsel %vm5030, 1, 0
    %v5032 = vcvt.s32.f32 %v5031
    %v5033 = vlaneseq
    %v5034 = vshrl.u32 %v5033, 7
    %v5035 = vsub.s32 0, %v5034
    %v5036 = vrot.slane %v5032, %v5035
    %5038 = vbcast.lane.b32.xlu0 %v5036, 256
    %v5039 = vpop.permute.xlu0 %5038
    %v5040 = vlaneseq
    %v5041 = vshrl.u32 %v5040, 7
    %v5042 = vsub.s32 1, %v5041
    %v5043 = vrot.slane %v5032, %v5042
    %5045 = vbcast.lane.b32.xlu0 %v5043, 256
    %v5046 = vpop.permute.xlu0 %5045
    %v5047 = vmul.f32 %v5039, %v4794
    %v5048 = vmul.f32 %v5046, %v4795
    %v5049 = vsel %vm4883, %v5047, 0.0
    %v5050 = vrot.slane %v5049, 4
    %v5051 = vadd.f32 %v5049, %v5050
    %v5052 = vrot.slane %v5051, 2
    %v5053 = vadd.f32 %v5051, %v5052
    %v5054 = vrot.slane %v5053, 1
    %v5055 = vadd.f32 %v5053, %v5054
    %v5056 = vsel %vm4883, %v5048, 0.0
    %v5057 = vrot.slane %v5056, 4
    %v5058 = vadd.f32 %v5056, %v5057
    %v5059 = vrot.slane %v5058, 2
    %v5060 = vadd.f32 %v5058, %v5059
    %v5061 = vrot.slane %v5060, 1
    %v5062 = vadd.f32 %v5060, %v5061
    %v5063 = vsel %vm3682, %v4890, %v4945
    %v5064 = vsel %vm3682, %v4897, %v4952
    %vm5065 = vcmask 1041408
    %v5066 = vsel %vm5065, %v5063, %v5000
    %v5067 = vsel %vm5065, %v5064, %v5007
    %vm5068 = vcmask 1042432
    %v5069 = vsel %vm5068, %v5066, %v5055
    %v5070 = vsel %vm5068, %v5067, %v5062
    %v5071 = vld [vmem:[#allocation2 + $0x220] sm:$0x3]
    %v5072 = vld [vmem:[#allocation2 + $0x228] sm:$0xff]
    %v5073 = vld [vmem:[#allocation2 + $0x230] sm:$0xff]
    %v5074 = vld [vmem:[#allocation2 + $0x238] sm:$0xff]
    %v5075 = vld [vmem:[#allocation2 + $0x240] sm:$0xff]
    %v5076 = vld [vmem:[#allocation2 + $0x248] sm:$0xff]
    %v5077 = vld [vmem:[#allocation2 + $0x250] sm:$0xff]
    %v5078 = vld [vmem:[#allocation2 + $0x258] sm:$0xff]
    %v5079 = vld [vmem:[#allocation2 + $0x260] sm:$0xff]
    %v5080 = vld [vmem:[#allocation2 + $0x268] sm:$0xff]
    %v5081 = vld [vmem:[#allocation2 + $0x270] sm:$0xff]
    %v5082 = vld [vmem:[#allocation2 + $0x278] sm:$0xff]
    %v5083 = vld [vmem:[#allocation2 + $0x280] sm:$0xff]
    %v5084 = vld [vmem:[#allocation2 + $0x288] sm:$0xff]
    %v5085 = vld [vmem:[#allocation2 + $0x290] sm:$0xff]
    %v5086 = vld [vmem:[#allocation2 + $0x298] sm:$0xff]
    %v5087 = vld [vmem:[#allocation2 + $0x2a0] sm:$0xff]
    %v5088 = vld [vmem:[#allocation2 + $0x2a8] sm:$0x3]
    %5089 = vmatprep.subr.mxu0 0.0
    %5090 = vmatpush1.msra.mxu0 0.0
    %5091 = vmatprep.subr.mxu0 0.0
    %5092 = vmatpush1.msra.mxu0 0.0
    %5093 = vmatprep.subr.mxu0 0.0
    %5094 = vmatpush1.msra.mxu0 0.0
    %5095 = vmatprep.subr.mxu0 0.0
    %5096 = vmatpush1.msra.mxu0 0.0
    %5097 = vmatprep.subr.mxu0 0.0
    %5098 = vmatpush1.msra.mxu0 0.0
    %5099 = vmatprep.subr.mxu0 0.0
    %5100 = vmatpush1.msra.mxu0 0.0
    %5101 = vmatprep.subr.mxu0 0.0
    %5102 = vmatpush1.msra.mxu0 0.0
    %5103 = vmatprep.subr.mxu0 0.0
    %5104 = vmatpush1.msra.mxu0 0.0
    %5105 = vmatprep.subr.mxu0 0.0
    %5106 = vmatpush1.msra.mxu0 %v5079
    %5107 = vmatprep.subr.mxu0 0.0
    %5108 = vmatpush1.msra.mxu0 %v5078
    %5109 = vmatprep.subr.mxu0 0.0
    %5110 = vmatpush1.msra.mxu0 %v5077
    %5111 = vmatprep.subr.mxu0 0.0
    %5112 = vmatpush1.msra.mxu0 %v5076
    %5113 = vmatprep.subr.mxu0 0.0
    %5114 = vmatpush1.msra.mxu0 %v5075
    %5115 = vmatprep.subr.mxu0 0.0
    %5116 = vmatpush1.msra.mxu0 %v5074
    %5117 = vmatprep.subr.mxu0 0.0
    %5118 = vmatpush1.msra.mxu0 %v5073
    %5119 = vmatprep.subr.mxu0 0.0
    %5120 = vmatpush1.msra.mxu0 %v5072
    %5121 = vmatprep.subr.mxu0 0.0
    %5122 = vmatpush2.msra.mxu0 0.0
    %5123 = vmatprep.subr.mxu0 0.0
    %5124 = vmatpush2.msra.mxu0 0.0
    %5125 = vmatprep.subr.mxu0 0.0
    %5126 = vmatpush2.msra.mxu0 0.0
    %5127 = vmatprep.subr.mxu0 0.0
    %5128 = vmatpush2.msra.mxu0 0.0
    %5129 = vmatprep.subr.mxu0 0.0
    %5130 = vmatpush2.msra.mxu0 0.0
    %5131 = vmatprep.subr.mxu0 0.0
    %5132 = vmatpush2.msra.mxu0 0.0
    %5133 = vmatprep.subr.mxu0 0.0
    %5134 = vmatpush2.msra.mxu0 0.0
    %5135 = vmatprep.subr.mxu0 0.0
    %5136 = vmatpush2.msra.mxu0 0.0
    %5137 = vmatprep.subr.mxu0 0.0
    %5138 = vmatpush2.msra.mxu0 0.0
    %5139 = vmatprep.subr.mxu0 0.0
    %5140 = vmatpush2.msra.mxu0 0.0
    %5141 = vmatprep.subr.mxu0 0.0
    %5142 = vmatpush2.msra.mxu0 0.0
    %5143 = vmatprep.subr.mxu0 0.0
    %5144 = vmatpush2.msra.mxu0 0.0
    %5145 = vmatprep.subr.mxu0 0.0
    %5146 = vmatpush2.msra.mxu0 0.0
    %5147 = vmatprep.subr.mxu0 0.0
    %5148 = vmatpush2.msra.mxu0 0.0
    %5149 = vmatprep.subr.mxu0 0.0
    %5150 = vmatpush2.msra.mxu0 0.0
    %5151 = vmatprep.subr.mxu0 0.0
    %5152 = vmatpush2.msra.mxu0 0.0
    %5153 = vmatprep.mubr.f32.mxu0 0.0
    %5154 = vmatmul.mubr.f32.gmra.mxu0 %v4554
    %v5155 = vpop.f32.mrf.mxu0
    %v5156 = vadd.f32 0.0, %v5155
    %v5157 = vpop.f32.mrf.mxu0
    %5158 = vdwg.mxu0
    %5160 = vset.pattern.permute.xlu0 0
    %5161 = vperm.xlu0 %5160, %v5069
    %v5162 = vpop.permute.xlu0 %5161
    %5165 = vset.pattern.permute.xlu0 0
    %5166 = vperm.xlu0 %5165, %v5070
    %v5167 = vpop.permute.xlu0 %5166
    %v5169 = vlaneseq
    %v5170 = vshrl.u32 %v5169, 7
    %v5171 = vsub.s32 0, %v5170
    %v5172 = vrot.slane %v5071, %v5171
    %v5173 = vmul.f32 %v5162, %v5172
    %v5174 = vmul.f32 %v5167, %v5172
    %5175 = vset.pattern.permute.xlu0 1
    %5176 = vperm.xlu0 %5175, %v5069
    %v5177 = vpop.permute.xlu0 %5176
    %5179 = vset.pattern.permute.xlu0 1
    %5180 = vperm.xlu0 %5179, %v5070
    %v5181 = vpop.permute.xlu0 %5180
    %v5183 = vlaneseq
    %v5184 = vshrl.u32 %v5183, 7
    %v5185 = vsub.s32 1, %v5184
    %v5186 = vrot.slane %v5071, %v5185
    %v5187 = vmul.f32 %v5177, %v5186
    %v5188 = vmul.f32 %v5181, %v5186
    %v5189 = vadd.f32 %v5173, %v5187
    %v5190 = vadd.f32 %v5174, %v5188
    %v5193 = vunpack.c.l.s4 1966171168
    %v5194 = vunpack.c.0.s8 %v5193
    %v5195 = vlaneseq
    %v5196 = vshrl.u32 %v5195, 7
    %v5197 = vsub.s32 %v5194, %v5196
    %v5198 = vrot.slane %v5156, %v5197
    %v5199 = vcombine.high %v5198, %v5198
    %v5201 = vunpack.c.l.s4 1966171168
    %v5202 = vunpack.c.0.s8 %v5201
    %v5203 = vlaneseq
    %v5204 = vshrl.u32 %v5203, 7
    %v5205 = vsub.s32 %v5202, %v5204
    %v5206 = vrot.slane %v5198, %v5205
    %v5208 = vunpack.c.l.s4 1966171168
    %v5209 = vunpack.c.0.s8 %v5208
    %v5210 = vlaneseq
    %v5211 = vshrl.u32 %v5210, 7
    %v5212 = vsub.s32 %v5209, %v5211
    %v5213 = vrot.slane %v5199, %v5212
    %v5214 = vlaneseq
    %v5215 = vshrl.u32 %v5214, 7
    %v5216 = vsub.s32 0, %v5215
    %v5217 = vrot.slane %v5206, %v5216
    %v5218 = vlaneseq
    %v5219 = vshrl.u32 %v5218, 7
    %v5220 = vsub.s32 0, %v5219
    %v5221 = vrot.slane %v5213, %v5220
    %v5224 = vadd.f32 %v5189, %v5217
    %v5225 = vadd.f32 %v5190, %v5221
    %v5226 = vlaneseq
    %v5227 = vshrl.u32 %v5226, 7
    %v5228 = vsub.s32 0, %v5227
    %v5229 = vrot.slane %v5088, %v5228
    %v5230 = vadd.f32 %v5224, %v5229
    %v5231 = vadd.f32 %v5225, %v5229
    %v5232 = vmax.f32 %v5230, 0.0
    %v5233 = vmax.f32 %v5231, 0.0
    %v5234 = vlaneseq
    %v5235 = vshrl.u32 %v5234, 7
    %v5236 = vsub.s32 1, %v5235
    %v5237 = vrot.slane %v5088, %v5236
    %v5240 = vcombine.low %v5232, %v5233
    %v5241 = vsel %vm4553, %v5240, 0
    %5243 = vmatprep.subr.mxu0 0.0
    %5244 = vmatpush1.msra.mxu0 0.0
    %5245 = vmatprep.subr.mxu0 0.0
    %5246 = vmatpush1.msra.mxu0 0.0
    %5247 = vmatprep.subr.mxu0 0.0
    %5248 = vmatpush1.msra.mxu0 0.0
    %5249 = vmatprep.subr.mxu0 0.0
    %5250 = vmatpush1.msra.mxu0 0.0
    %5251 = vmatprep.subr.mxu0 0.0
    %5252 = vmatpush1.msra.mxu0 0.0
    %5253 = vmatprep.subr.mxu0 0.0
    %5254 = vmatpush1.msra.mxu0 0.0
    %5255 = vmatprep.subr.mxu0 0.0
    %5256 = vmatpush1.msra.mxu0 0.0
    %5257 = vmatprep.subr.mxu0 0.0
    %5258 = vmatpush1.msra.mxu0 0.0
    %5259 = vmatprep.subr.mxu0 0.0
    %5260 = vmatpush1.msra.mxu0 %v5087
    %5261 = vmatprep.subr.mxu0 0.0
    %5262 = vmatpush1.msra.mxu0 %v5086
    %5263 = vmatprep.subr.mxu0 0.0
    %5264 = vmatpush1.msra.mxu0 %v5085
    %5265 = vmatprep.subr.mxu0 0.0
    %5266 = vmatpush1.msra.mxu0 %v5084
    %5267 = vmatprep.subr.mxu0 0.0
    %5268 = vmatpush1.msra.mxu0 %v5083
    %5269 = vmatprep.subr.mxu0 0.0
    %5270 = vmatpush1.msra.mxu0 %v5082
    %5271 = vmatprep.subr.mxu0 0.0
    %5272 = vmatpush1.msra.mxu0 %v5081
    %5273 = vmatprep.subr.mxu0 0.0
    %5274 = vmatpush1.msra.mxu0 %v5080
    %5275 = vmatprep.subr.mxu0 0.0
    %5276 = vmatpush2.msra.mxu0 0.0
    %5277 = vmatprep.subr.mxu0 0.0
    %5278 = vmatpush2.msra.mxu0 0.0
    %5279 = vmatprep.subr.mxu0 0.0
    %5280 = vmatpush2.msra.mxu0 0.0
    %5281 = vmatprep.subr.mxu0 0.0
    %5282 = vmatpush2.msra.mxu0 0.0
    %5283 = vmatprep.subr.mxu0 0.0
    %5284 = vmatpush2.msra.mxu0 0.0
    %5285 = vmatprep.subr.mxu0 0.0
    %5286 = vmatpush2.msra.mxu0 0.0
    %5287 = vmatprep.subr.mxu0 0.0
    %5288 = vmatpush2.msra.mxu0 0.0
    %5289 = vmatprep.subr.mxu0 0.0
    %5290 = vmatpush2.msra.mxu0 0.0
    %5291 = vmatprep.subr.mxu0 0.0
    %5292 = vmatpush2.msra.mxu0 0.0
    %5293 = vmatprep.subr.mxu0 0.0
    %5294 = vmatpush2.msra.mxu0 0.0
    %5295 = vmatprep.subr.mxu0 0.0
    %5296 = vmatpush2.msra.mxu0 0.0
    %5297 = vmatprep.subr.mxu0 0.0
    %5298 = vmatpush2.msra.mxu0 0.0
    %5299 = vmatprep.subr.mxu0 0.0
    %5300 = vmatpush2.msra.mxu0 0.0
    %5301 = vmatprep.subr.mxu0 0.0
    %5302 = vmatpush2.msra.mxu0 0.0
    %5303 = vmatprep.subr.mxu0 0.0
    %5304 = vmatpush2.msra.mxu0 0.0
    %5305 = vmatprep.subr.mxu0 0.0
    %5306 = vmatpush2.msra.mxu0 0.0
    %5307 = vmatprep.mubr.f32.mxu0 0.0
    %5308 = vmatmul.mubr.f32.gmra.mxu0 %v5241
    %v5309 = vpop.f32.mrf.mxu0
    %v5310 = vadd.f32 %v5237, %v5309
    %v5311 = vpop.f32.mrf.mxu0
    %5312 = vdwg.mxu0
    %v5314 = vcombine.high %v5310, %v5310
    %v5316 = vld [vmem:[#allocation2 + $0x2b0] sm:$0xff]
    %v5317 = vld [vmem:[#allocation2 + $0x2b8] sm:$0xff]
    %v5318 = vld [vmem:[#allocation2 + $0x2c0] sm:$0xff]
    %v5319 = vld [vmem:[#allocation2 + $0x2c8] sm:$0xff]
    %v5320 = vld [vmem:[#allocation2 + $0x2d0] sm:$0xff]
    %v5321 = vld [vmem:[#allocation2 + $0x2d8] sm:$0xff]
    %v5322 = vld [vmem:[#allocation2 + $0x2e0] sm:$0xff]
    %v5323 = vld [vmem:[#allocation2 + $0x2e8] sm:$0xff]
    %v5324 = vld [vmem:[#allocation2 + $0x2f0] sm:$0xff]
    %v5325 = vld [vmem:[#allocation2 + $0x2f8] sm:$0xff]
    %v5326 = vld [vmem:[#allocation2 + $0x300] sm:$0xff]
    %v5327 = vld [vmem:[#allocation2 + $0x308] sm:$0xff]
    %v5328 = vld [vmem:[#allocation2 + $0x310] sm:$0xff]
    %v5329 = vld [vmem:[#allocation2 + $0x318] sm:$0xff]
    %v5330 = vld [vmem:[#allocation2 + $0x320] sm:$0xff]
    %v5331 = vld [vmem:[#allocation2 + $0x328] sm:$0xff]
    %v5332 = vld [vmem:[#allocation2 + $0x330] sm:$0xff]
    %v5333 = vld [vmem:[#allocation2 + $0x338] sm:$0xff]
    %v5334 = vld [vmem:[#allocation2 + $0x340] sm:$0x3]
    %5335 = vmatprep.subr.mxu0 0.0
    %5336 = vmatpush1.msra.mxu0 0.0
    %5337 = vmatprep.subr.mxu0 0.0
    %5338 = vmatpush1.msra.mxu0 0.0
    %5339 = vmatprep.subr.mxu0 0.0
    %5340 = vmatpush1.msra.mxu0 0.0
    %5341 = vmatprep.subr.mxu0 0.0
    %5342 = vmatpush1.msra.mxu0 0.0
    %5343 = vmatprep.subr.mxu0 0.0
    %5344 = vmatpush1.msra.mxu0 0.0
    %5345 = vmatprep.subr.mxu0 0.0
    %5346 = vmatpush1.msra.mxu0 0.0
    %5347 = vmatprep.subr.mxu0 0.0
    %5348 = vmatpush1.msra.mxu0 0.0
    %5349 = vmatprep.subr.mxu0 0.0
    %5350 = vmatpush1.msra.mxu0 0.0
    %5351 = vmatprep.subr.mxu0 0.0
    %5352 = vmatpush1.msra.mxu0 %v5325
    %5353 = vmatprep.subr.mxu0 0.0
    %5354 = vmatpush1.msra.mxu0 %v5324
    %5355 = vmatprep.subr.mxu0 0.0
    %5356 = vmatpush1.msra.mxu0 %v5323
    %5357 = vmatprep.subr.mxu0 0.0
    %5358 = vmatpush1.msra.mxu0 %v5322
    %5359 = vmatprep.subr.mxu0 0.0
    %5360 = vmatpush1.msra.mxu0 %v5321
    %5361 = vmatprep.subr.mxu0 0.0
    %5362 = vmatpush1.msra.mxu0 %v5320
    %5363 = vmatprep.subr.mxu0 0.0
    %5364 = vmatpush1.msra.mxu0 %v5319
    %5365 = vmatprep.subr.mxu0 0.0
    %5366 = vmatpush1.msra.mxu0 %v5318
    %5367 = vmatprep.subr.mxu0 0.0
    %5368 = vmatpush2.msra.mxu0 0.0
    %5369 = vmatprep.subr.mxu0 0.0
    %5370 = vmatpush2.msra.mxu0 0.0
    %5371 = vmatprep.subr.mxu0 0.0
    %5372 = vmatpush2.msra.mxu0 0.0
    %5373 = vmatprep.subr.mxu0 0.0
    %5374 = vmatpush2.msra.mxu0 0.0
    %5375 = vmatprep.subr.mxu0 0.0
    %5376 = vmatpush2.msra.mxu0 0.0
    %5377 = vmatprep.subr.mxu0 0.0
    %5378 = vmatpush2.msra.mxu0 0.0
    %5379 = vmatprep.subr.mxu0 0.0
    %5380 = vmatpush2.msra.mxu0 0.0
    %5381 = vmatprep.subr.mxu0 0.0
    %5382 = vmatpush2.msra.mxu0 0.0
    %5383 = vmatprep.subr.mxu0 0.0
    %5384 = vmatpush2.msra.mxu0 0.0
    %5385 = vmatprep.subr.mxu0 0.0
    %5386 = vmatpush2.msra.mxu0 0.0
    %5387 = vmatprep.subr.mxu0 0.0
    %5388 = vmatpush2.msra.mxu0 0.0
    %5389 = vmatprep.subr.mxu0 0.0
    %5390 = vmatpush2.msra.mxu0 0.0
    %5391 = vmatprep.subr.mxu0 0.0
    %5392 = vmatpush2.msra.mxu0 0.0
    %5393 = vmatprep.subr.mxu0 0.0
    %5394 = vmatpush2.msra.mxu0 0.0
    %5395 = vmatprep.subr.mxu0 0.0
    %5396 = vmatpush2.msra.mxu0 0.0
    %5397 = vmatprep.subr.mxu0 0.0
    %5398 = vmatpush2.msra.mxu0 0.0
    %5399 = vmatprep.mubr.f32.mxu0 0.0
    %5400 = vmatmul.mubr.f32.gmra.mxu0 %v4554
    %v5401 = vpop.f32.mrf.mxu0
    %v5402 = vadd.f32 0.0, %v5401
    %v5403 = vpop.f32.mrf.mxu0
    %5404 = vdwg.mxu0
    %vm5405 = vcmask 130048
    %v5406 = vsel %vm5405, %v5310, 0
    %5408 = vmatprep.subr.mxu0 0.0
    %5409 = vmatpush1.msra.mxu0 0.0
    %5410 = vmatprep.subr.mxu0 0.0
    %5411 = vmatpush1.msra.mxu0 0.0
    %5412 = vmatprep.subr.mxu0 0.0
    %5413 = vmatpush1.msra.mxu0 0.0
    %5414 = vmatprep.subr.mxu0 0.0
    %5415 = vmatpush1.msra.mxu0 0.0
    %5416 = vmatprep.subr.mxu0 0.0
    %5417 = vmatpush1.msra.mxu0 0.0
    %5418 = vmatprep.subr.mxu0 0.0
    %5419 = vmatpush1.msra.mxu0 0.0
    %5420 = vmatprep.subr.mxu0 0.0
    %5421 = vmatpush1.msra.mxu0 0.0
    %5422 = vmatprep.subr.mxu0 0.0
    %5423 = vmatpush1.msra.mxu0 0.0
    %5424 = vmatprep.subr.mxu0 0.0
    %5425 = vmatpush1.msra.mxu0 0.0
    %5426 = vmatprep.subr.mxu0 0.0
    %5427 = vmatpush1.msra.mxu0 0.0
    %5428 = vmatprep.subr.mxu0 0.0
    %5429 = vmatpush1.msra.mxu0 0.0
    %5430 = vmatprep.subr.mxu0 0.0
    %5431 = vmatpush1.msra.mxu0 0.0
    %5432 = vmatprep.subr.mxu0 0.0
    %5433 = vmatpush1.msra.mxu0 0.0
    %5434 = vmatprep.subr.mxu0 0.0
    %5435 = vmatpush1.msra.mxu0 0.0
    %5436 = vmatprep.subr.mxu0 0.0
    %5437 = vmatpush1.msra.mxu0 %v5317
    %5438 = vmatprep.subr.mxu0 0.0
    %5439 = vmatpush1.msra.mxu0 %v5316
    %5440 = vmatprep.subr.mxu0 0.0
    %5441 = vmatpush2.msra.mxu0 0.0
    %5442 = vmatprep.subr.mxu0 0.0
    %5443 = vmatpush2.msra.mxu0 0.0
    %5444 = vmatprep.subr.mxu0 0.0
    %5445 = vmatpush2.msra.mxu0 0.0
    %5446 = vmatprep.subr.mxu0 0.0
    %5447 = vmatpush2.msra.mxu0 0.0
    %5448 = vmatprep.subr.mxu0 0.0
    %5449 = vmatpush2.msra.mxu0 0.0
    %5450 = vmatprep.subr.mxu0 0.0
    %5451 = vmatpush2.msra.mxu0 0.0
    %5452 = vmatprep.subr.mxu0 0.0
    %5453 = vmatpush2.msra.mxu0 0.0
    %5454 = vmatprep.subr.mxu0 0.0
    %5455 = vmatpush2.msra.mxu0 0.0
    %5456 = vmatprep.subr.mxu0 0.0
    %5457 = vmatpush2.msra.mxu0 0.0
    %5458 = vmatprep.subr.mxu0 0.0
    %5459 = vmatpush2.msra.mxu0 0.0
    %5460 = vmatprep.subr.mxu0 0.0
    %5461 = vmatpush2.msra.mxu0 0.0
    %5462 = vmatprep.subr.mxu0 0.0
    %5463 = vmatpush2.msra.mxu0 0.0
    %5464 = vmatprep.subr.mxu0 0.0
    %5465 = vmatpush2.msra.mxu0 0.0
    %5466 = vmatprep.subr.mxu0 0.0
    %5467 = vmatpush2.msra.mxu0 0.0
    %5468 = vmatprep.subr.mxu0 0.0
    %5469 = vmatpush2.msra.mxu0 0.0
    %5470 = vmatprep.subr.mxu0 0.0
    %5471 = vmatpush2.msra.mxu0 0.0
    %5472 = vmatprep.mubr.f32.mxu0 0.0
    %5473 = vmatmul.mubr.f32.gmra.mxu0 %v5406
    %v5474 = vpop.f32.mrf.mxu0
    %v5475 = vadd.f32 0.0, %v5474
    %v5476 = vpop.f32.mrf.mxu0
    %5477 = vdwg.mxu0
    %v5479 = vcombine.high %v5475, %v5475
    %v5483 = vunpack.c.l.s4 1966171168
    %v5484 = vunpack.c.0.s8 %v5483
    %v5485 = vlaneseq
    %v5486 = vshrl.u32 %v5485, 7
    %v5487 = vsub.s32 %v5484, %v5486
    %v5488 = vrot.slane %v5402, %v5487
    %v5489 = vcombine.high %v5488, %v5488
    %v5491 = vunpack.c.l.s4 1966171168
    %v5492 = vunpack.c.0.s8 %v5491
    %v5493 = vlaneseq
    %v5494 = vshrl.u32 %v5493, 7
    %v5495 = vsub.s32 %v5492, %v5494
    %v5496 = vrot.slane %v5488, %v5495
    %v5498 = vunpack.c.l.s4 1966171168
    %v5499 = vunpack.c.0.s8 %v5498
    %v5500 = vlaneseq
    %v5501 = vshrl.u32 %v5500, 7
    %v5502 = vsub.s32 %v5499, %v5501
    %v5503 = vrot.slane %v5489, %v5502
    %v5504 = vlaneseq
    %v5505 = vshrl.u32 %v5504, 7
    %v5506 = vsub.s32 0, %v5505
    %v5507 = vrot.slane %v5496, %v5506
    %v5508 = vlaneseq
    %v5509 = vshrl.u32 %v5508, 7
    %v5510 = vsub.s32 0, %v5509
    %v5511 = vrot.slane %v5503, %v5510
    %v5514 = vadd.f32 %v5475, %v5507
    %v5515 = vadd.f32 %v5479, %v5511
    %v5516 = vlaneseq
    %v5517 = vshrl.u32 %v5516, 7
    %v5518 = vsub.s32 0, %v5517
    %v5519 = vrot.slane %v5334, %v5518
    %v5520 = vadd.f32 %v5514, %v5519
    %v5521 = vadd.f32 %v5515, %v5519
    %v5522 = vmax.f32 %v5520, 0.0
    %v5523 = vmax.f32 %v5521, 0.0
    %v5524 = vlaneseq
    %v5525 = vshrl.u32 %v5524, 7
    %v5526 = vsub.s32 1, %v5525
    %v5527 = vrot.slane %v5334, %v5526
    %v5530 = vcombine.low %v5522, %v5523
    %v5531 = vsel %vm4553, %v5530, 0
    %5533 = vmatprep.subr.mxu0 0.0
    %5534 = vmatpush1.msra.mxu0 0.0
    %5535 = vmatprep.subr.mxu0 0.0
    %5536 = vmatpush1.msra.mxu0 0.0
    %5537 = vmatprep.subr.mxu0 0.0
    %5538 = vmatpush1.msra.mxu0 0.0
    %5539 = vmatprep.subr.mxu0 0.0
    %5540 = vmatpush1.msra.mxu0 0.0
    %5541 = vmatprep.subr.mxu0 0.0
    %5542 = vmatpush1.msra.mxu0 0.0
    %5543 = vmatprep.subr.mxu0 0.0
    %5544 = vmatpush1.msra.mxu0 0.0
    %5545 = vmatprep.subr.mxu0 0.0
    %5546 = vmatpush1.msra.mxu0 0.0
    %5547 = vmatprep.subr.mxu0 0.0
    %5548 = vmatpush1.msra.mxu0 0.0
    %5549 = vmatprep.subr.mxu0 0.0
    %5550 = vmatpush1.msra.mxu0 %v5333
    %5551 = vmatprep.subr.mxu0 0.0
    %5552 = vmatpush1.msra.mxu0 %v5332
    %5553 = vmatprep.subr.mxu0 0.0
    %5554 = vmatpush1.msra.mxu0 %v5331
    %5555 = vmatprep.subr.mxu0 0.0
    %5556 = vmatpush1.msra.mxu0 %v5330
    %5557 = vmatprep.subr.mxu0 0.0
    %5558 = vmatpush1.msra.mxu0 %v5329
    %5559 = vmatprep.subr.mxu0 0.0
    %5560 = vmatpush1.msra.mxu0 %v5328
    %5561 = vmatprep.subr.mxu0 0.0
    %5562 = vmatpush1.msra.mxu0 %v5327
    %5563 = vmatprep.subr.mxu0 0.0
    %5564 = vmatpush1.msra.mxu0 %v5326
    %5565 = vmatprep.subr.mxu0 0.0
    %5566 = vmatpush2.msra.mxu0 0.0
    %5567 = vmatprep.subr.mxu0 0.0
    %5568 = vmatpush2.msra.mxu0 0.0
    %5569 = vmatprep.subr.mxu0 0.0
    %5570 = vmatpush2.msra.mxu0 0.0
    %5571 = vmatprep.subr.mxu0 0.0
    %5572 = vmatpush2.msra.mxu0 0.0
    %5573 = vmatprep.subr.mxu0 0.0
    %5574 = vmatpush2.msra.mxu0 0.0
    %5575 = vmatprep.subr.mxu0 0.0
    %5576 = vmatpush2.msra.mxu0 0.0
    %5577 = vmatprep.subr.mxu0 0.0
    %5578 = vmatpush2.msra.mxu0 0.0
    %5579 = vmatprep.subr.mxu0 0.0
    %5580 = vmatpush2.msra.mxu0 0.0
    %5581 = vmatprep.subr.mxu0 0.0
    %5582 = vmatpush2.msra.mxu0 0.0
    %5583 = vmatprep.subr.mxu0 0.0
    %5584 = vmatpush2.msra.mxu0 0.0
    %5585 = vmatprep.subr.mxu0 0.0
    %5586 = vmatpush2.msra.mxu0 0.0
    %5587 = vmatprep.subr.mxu0 0.0
    %5588 = vmatpush2.msra.mxu0 0.0
    %5589 = vmatprep.subr.mxu0 0.0
    %5590 = vmatpush2.msra.mxu0 0.0
    %5591 = vmatprep.subr.mxu0 0.0
    %5592 = vmatpush2.msra.mxu0 0.0
    %5593 = vmatprep.subr.mxu0 0.0
    %5594 = vmatpush2.msra.mxu0 0.0
    %5595 = vmatprep.subr.mxu0 0.0
    %5596 = vmatpush2.msra.mxu0 0.0
    %5597 = vmatprep.mubr.f32.mxu0 0.0
    %5598 = vmatmul.mubr.f32.gmra.mxu0 %v5531
    %v5599 = vpop.f32.mrf.mxu0
    %v5600 = vadd.f32 %v5527, %v5599
    %v5601 = vpop.f32.mrf.mxu0
    %5602 = vdwg.mxu0
    %v5604 = vcombine.high %v5600, %v5600
    %5606 = vset.pattern.permute.xlu0 0
    %5607 = vperm.xlu0 %5606, %v5600
    %v5608 = vpop.permute.xlu0 %5607
    %5609 = vset.pattern.permute.xlu0 0
    %5610 = vperm.xlu0 %5609, %v5604
    %v5611 = vpop.permute.xlu0 %5610
    %v5612 = vlaneseq
    %v5613 = vshrl.u32 %v5612, 7
    %v5614 = vsub.s32 %v4359, %v5613
    %v5615 = vrot.slane %v5608, %v5614
    %v5616 = vlaneseq
    %v5617 = vshrl.u32 %v5616, 7
    %v5618 = vsub.s32 %v4359, %v5617
    %v5619 = vrot.slane %v5611, %v5618
    %v5620 = vsel %vm302, %v5619, %v5615
    %vm5622 = vcmask 25600
    %v5623 = vsel %vm5622, %v5620, -inf
    %5624 = vmax.xlane.f32.xlu0 %v5623
    %v5625 = vpop.xlane.xlu0 %5624
    %v5628 = vunpack.c.l.s4 839922192
    %v5629 = vunpack.c.0.s8 %v5628
    %v5630 = vlaneseq
    %v5631 = vshrl.u32 %v5630, 7
    %v5632 = vsub.s32 %v5629, %v5631
    %v5633 = vrot.slane %v5625, %v5632
    %v5634 = vlaneseq
    %v5635 = vshrl.u32 %v5634, 7
    %v5636 = vsub.s32 0, %v5635
    %v5637 = vrot.slane %v5633, %v5636
    %5639 = vbcast.lane.b32.xlu0 %v5637, 256
    %v5640 = vpop.permute.xlu0 %5639
    %v5641 = vlaneseq
    %v5642 = vshrl.u32 %v5641, 7
    %v5643 = vsub.s32 1, %v5642
    %v5644 = vrot.slane %v5633, %v5643
    %5646 = vbcast.lane.b32.xlu0 %v5644, 256
    %v5647 = vpop.permute.xlu0 %5646
    %v5650 = vsub.f32 %v5600, %v5640
    %v5651 = vsub.f32 %v5604, %v5647
    %v5652 = vmul.f32 %v5650, 1.442695
    %v5653 = vpow.pop %v5652
    %v5654 = vmul.f32 %v5651, 1.442695
    %v5655 = vpow.pop %v5654
    %5658 = vset.pattern.permute.xlu0 0
    %5659 = vperm.xlu0 %5658, %v5653
    %v5660 = vpop.permute.xlu0 %5659
    %5661 = vset.pattern.permute.xlu0 0
    %5662 = vperm.xlu0 %5661, %v5655
    %v5663 = vpop.permute.xlu0 %5662
    %v5664 = vlaneseq
    %v5665 = vshrl.u32 %v5664, 7
    %v5666 = vsub.s32 %v4359, %v5665
    %v5667 = vrot.slane %v5660, %v5666
    %v5668 = vlaneseq
    %v5669 = vshrl.u32 %v5668, 7
    %v5670 = vsub.s32 %v4359, %v5669
    %v5671 = vrot.slane %v5663, %v5670
    %v5672 = vsel %vm302, %v5671, %v5667
    %v5674 = vsel %vm5622, %v5672, 0.0
    %5675 = vadd.xlane.f32.xlu0 %v5674
    %v5676 = vpop.xlane.xlu0 %5675
    %v5677 = vrcp.pop %v5676
    %v5680 = vunpack.c.l.s4 839922192
    %v5681 = vunpack.c.0.s8 %v5680
    %v5682 = vlaneseq
    %v5683 = vshrl.u32 %v5682, 7
    %v5684 = vsub.s32 %v5681, %v5683
    %v5685 = vrot.slane %v5677, %v5684
    %v5686 = vlaneseq
    %v5687 = vshrl.u32 %v5686, 7
    %v5688 = vsub.s32 0, %v5687
    %v5689 = vrot.slane %v5685, %v5688
    %5691 = vbcast.lane.b32.xlu0 %v5689, 256
    %v5692 = vpop.permute.xlu0 %5691
    %v5693 = vlaneseq
    %v5694 = vshrl.u32 %v5693, 7
    %v5695 = vsub.s32 1, %v5694
    %v5696 = vrot.slane %v5685, %v5695
    %5698 = vbcast.lane.b32.xlu0 %v5696, 256
    %v5699 = vpop.permute.xlu0 %5698
    %v5702 = vmul.f32 %v5653, %v5692
    %v5703 = vmul.f32 %v5655, %v5699
    %5706 = vset.pattern.permute.xlu0 0
    %5707 = vperm.xlu0 %5706, %v5702
    %v5708 = vpop.permute.xlu0 %5707
    %5709 = vset.pattern.permute.xlu0 0
    %5710 = vperm.xlu0 %5709, %v5703
    %v5711 = vpop.permute.xlu0 %5710
    %v5712 = vlaneseq
    %v5713 = vshrl.u32 %v5712, 7
    %v5714 = vsub.s32 %v4359, %v5713
    %v5715 = vrot.slane %v5708, %v5714
    %v5716 = vlaneseq
    %v5717 = vshrl.u32 %v5716, 7
    %v5718 = vsub.s32 %v4359, %v5717
    %v5719 = vrot.slane %v5711, %v5718
    %v5720 = vsel %vm302, %v5719, %v5715
    %v5722 = vsel %vm5622, %v5720, -inf
    %5723 = vmax.xlane.f32.xlu0 %v5722
    %v5724 = vpop.xlane.xlu0 %5723
    %v5727 = vunpack.c.l.s4 839922192
    %v5728 = vunpack.c.0.s8 %v5727
    %v5729 = vlaneseq
    %v5730 = vshrl.u32 %v5729, 7
    %v5731 = vsub.s32 %v5728, %v5730
    %v5732 = vrot.slane %v5724, %v5731
    %v5733 = vlaneseq
    %v5734 = vshrl.u32 %v5733, 7
    %v5735 = vsub.s32 0, %v5734
    %v5736 = vrot.slane %v5732, %v5735
    %5738 = vbcast.lane.b32.xlu0 %v5736, 256
    %v5739 = vpop.permute.xlu0 %5738
    %v5740 = vlaneseq
    %v5741 = vshrl.u32 %v5740, 7
    %v5742 = vsub.s32 1, %v5741
    %v5743 = vrot.slane %v5732, %v5742
    %5745 = vbcast.lane.b32.xlu0 %v5743, 256
    %v5746 = vpop.permute.xlu0 %5745
    %vm5749 = vcmp.ge.f32.partialorder %v5702, %v5739
    %vm5750 = vcmp.ge.f32.partialorder %v5703, %v5746
    %v5751 = vlaneseq
    %v5752 = vshrl.u32 %v5751, 7
    %v5753 = vsub.s32 0, %v5752
    %v5754 = vrot.slane %v4359, %v5753
    %5756 = vbcast.lane.b32.xlu0 %v5754, 256
    %v5757 = vpop.permute.xlu0 %5756
    %v5758 = vlaneseq
    %v5759 = vshrl.u32 %v5758, 7
    %v5760 = vsub.s32 1, %v5759
    %v5761 = vrot.slane %v4359, %v5760
    %5763 = vbcast.lane.b32.xlu0 %v5761, 256
    %v5764 = vpop.permute.xlu0 %5763
    %v5765 = vsel %vm5749, %v5757, 4
    %v5766 = vsel %vm5750, %v5764, 4
    %5767 = vset.pattern.permute.xlu0 0
    %5768 = vperm.xlu0 %5767, %v5765
    %v5769 = vpop.permute.xlu0 %5768
    %5770 = vset.pattern.permute.xlu0 0
    %5771 = vperm.xlu0 %5770, %v5766
    %v5772 = vpop.permute.xlu0 %5771
    %v5773 = vlaneseq
    %v5774 = vshrl.u32 %v5773, 7
    %v5775 = vsub.s32 %v4359, %v5774
    %v5776 = vrot.slane %v5769, %v5775
    %v5777 = vlaneseq
    %v5778 = vshrl.u32 %v5777, 7
    %v5779 = vsub.s32 %v4359, %v5778
    %v5780 = vrot.slane %v5772, %v5779
    %v5781 = vsel %vm302, %v5780, %v5776
    %v5782 = vsel %vm5622, %v5781, 2147483647
    %v5783 = vand.u32 %v5782, 65535
    %v5784 = vshra.s32 %v5782, 16
    %v5785 = vcvt.s32.f32 %v5783
    %v5786 = vcvt.s32.f32 %v5784
    %5787 = vmin.xlane.f32.xlu0 %v5786
    %v5788 = vpop.xlane.xlu0 %5787
    %vm5789 = vcmp.eq.f32.partialorder %v5786, %v5788
    %v5790 = vsel %vm5789, %v5785, inf
    %5791 = vmin.xlane.f32.xlu0 %v5790
    %v5792 = vpop.xlane.xlu0 %5791
    %v5793 = vcvt.f32.s32 %v5792
    %v5794 = vcvt.f32.s32 %v5788
    %v5795 = vshll.u32 %v5794, 16
    %v5796 = vadd.s32 %v5795, %v5793
    %vm5797 = vcmp.eq.s32.totalorder %v4359, %v5796
    %v5798 = vsel %vm5797, 1, 0
    %v5799 = vcvt.s32.f32 %v5798
    %v5800 = vlaneseq
    %v5801 = vshrl.u32 %v5800, 7
    %v5802 = vsub.s32 0, %v5801
    %v5803 = vrot.slane %v5799, %v5802
    %5805 = vbcast.lane.b32.xlu0 %v5803, 256
    %v5806 = vpop.permute.xlu0 %5805
    %v5807 = vlaneseq
    %v5808 = vshrl.u32 %v5807, 7
    %v5809 = vsub.s32 1, %v5808
    %v5810 = vrot.slane %v5799, %v5809
    %5812 = vbcast.lane.b32.xlu0 %v5810, 256
    %v5813 = vpop.permute.xlu0 %5812
    %v5814 = vmul.f32 %v5806, %v5310
    %v5815 = vmul.f32 %v5813, %v5314
    %vm5816 = vcmask 125952
    %v5817 = vsel %vm5816, %v5814, 0.0
    %v5818 = vrot.slane %v5817, 4
    %v5819 = vadd.f32 %v5817, %v5818
    %v5820 = vrot.slane %v5819, 2
    %v5821 = vadd.f32 %v5819, %v5820
    %v5822 = vrot.slane %v5821, 1
    %v5823 = vadd.f32 %v5821, %v5822
    %v5824 = vsel %vm5816, %v5815, 0.0
    %v5825 = vrot.slane %v5824, 4
    %v5826 = vadd.f32 %v5824, %v5825
    %v5827 = vrot.slane %v5826, 2
    %v5828 = vadd.f32 %v5826, %v5827
    %v5829 = vrot.slane %v5828, 1
    %v5830 = vadd.f32 %v5828, %v5829
    %vm5831 = vcmp.gt.f32.partialorder %v5799, 0.0
    %v5832 = vsel %vm5831, -1e+30, %v5720
    %v5833 = vsel %vm5622, %v5832, -inf
    %5834 = vmax.xlane.f32.xlu0 %v5833
    %v5835 = vpop.xlane.xlu0 %5834
    %vm5836 = vcmp.ge.f32.partialorder %v5832, %v5835
    %v5837 = vsel %vm5836, %v4359, 4
    %v5838 = vsel %vm5622, %v5837, 2147483647
    %v5839 = vand.u32 %v5838, 65535
    %v5840 = vshra.s32 %v5838, 16
    %v5841 = vcvt.s32.f32 %v5839
    %v5842 = vcvt.s32.f32 %v5840
    %5843 = vmin.xlane.f32.xlu0 %v5842
    %v5844 = vpop.xlane.xlu0 %5843
    %vm5845 = vcmp.eq.f32.partialorder %v5842, %v5844
    %v5846 = vsel %vm5845, %v5841, inf
    %5847 = vmin.xlane.f32.xlu0 %v5846
    %v5848 = vpop.xlane.xlu0 %5847
    %v5849 = vcvt.f32.s32 %v5848
    %v5850 = vcvt.f32.s32 %v5844
    %v5851 = vshll.u32 %v5850, 16
    %v5852 = vadd.s32 %v5851, %v5849
    %vm5853 = vcmp.eq.s32.totalorder %v4359, %v5852
    %v5854 = vsel %vm5853, 1, 0
    %v5855 = vcvt.s32.f32 %v5854
    %v5856 = vlaneseq
    %v5857 = vshrl.u32 %v5856, 7
    %v5858 = vsub.s32 0, %v5857
    %v5859 = vrot.slane %v5855, %v5858
    %5861 = vbcast.lane.b32.xlu0 %v5859, 256
    %v5862 = vpop.permute.xlu0 %5861
    %v5863 = vlaneseq
    %v5864 = vshrl.u32 %v5863, 7
    %v5865 = vsub.s32 1, %v5864
    %v5866 = vrot.slane %v5855, %v5865
    %5868 = vbcast.lane.b32.xlu0 %v5866, 256
    %v5869 = vpop.permute.xlu0 %5868
    %v5870 = vmul.f32 %v5862, %v5310
    %v5871 = vmul.f32 %v5869, %v5314
    %v5872 = vsel %vm5816, %v5870, 0.0
    %v5873 = vrot.slane %v5872, 4
    %v5874 = vadd.f32 %v5872, %v5873
    %v5875 = vrot.slane %v5874, 2
    %v5876 = vadd.f32 %v5874, %v5875
    %v5877 = vrot.slane %v5876, 1
    %v5878 = vadd.f32 %v5876, %v5877
    %v5879 = vsel %vm5816, %v5871, 0.0
    %v5880 = vrot.slane %v5879, 4
    %v5881 = vadd.f32 %v5879, %v5880
    %v5882 = vrot.slane %v5881, 2
    %v5883 = vadd.f32 %v5881, %v5882
    %v5884 = vrot.slane %v5883, 1
    %v5885 = vadd.f32 %v5883, %v5884
    %v5886 = vsel %vm3682, %v5823, %v5878
    %v5887 = vsel %vm3682, %v5830, %v5885
    %v5888 = vcombine.low %v5886, %v5887
    %v5890 = vunpack.c.l.s4 1934713408
    %v5891 = vunpack.c.0.s8 %v5890
    %v5892 = vlaneseq
    %v5893 = vshrl.u32 %v5892, 7
    %v5894 = vsub.s32 %v5891, %v5893
    %v5895 = vrot.slane %v5888, %v5894
    %v5896 = vcombine.high %v5895, 0.0
    %5898 = vrot.lane.b32.xlu0 %v5896, 16
    %v5899 = vpop.permute.xlu0 %5898
    %v5901 = vsel %vm5405, %v5895, %v5899
    %v5902 = vadd.s32 %v4359, 4294967264
    %v5903 = vlaneseq
    %v5904 = vshrl.u32 %v5903, 7
    %v5905 = vsub.s32 %v5902, %v5904
    %v5906 = vrot.slane %v5708, %v5905
    %v5907 = vlaneseq
    %v5908 = vshrl.u32 %v5907, 7
    %v5909 = vsub.s32 %v5902, %v5908
    %v5910 = vrot.slane %v5711, %v5909
    %v5911 = vsel %vm302, %v5910, %v5906
    %v5913 = vsel %vm152, %v5901, %v5911
    %vm5914 = vcmask 293888
    %v5915 = vsel %vm5914, %v5913, 0.0
    %5916 = vst [vmem:[%s4] sm:$0x3] %v5915
    // Predicated region
    $region22: #{_tnt_forward_impl.1} parent=1 // pred_check
      _
    $region23: #{_tnt_forward_impl.1} parent=1 // pred_check_branch
      %5918 = sbr.rel (0) target = $region25
    $region24: #{_tnt_forward_impl.1} parent=1 // pred_region
      _
    $region25: #{_tnt_forward_impl.1} parent=1 // pred_fallthru
      _
    // Predicated region
    $region26: #{_tnt_forward_impl.1} parent=1 // pred_check
      _
    $region27: #{_tnt_forward_impl.1} parent=1 // pred_check_branch
      %5920 = sbr.rel (0) target = $region29
    $region28: #{_tnt_forward_impl.1} parent=1 // pred_region
      _
    $region29: #{_tnt_forward_impl.1} parent=1 // pred_fallthru
      _
    %5921 = vsyncpa [#allocation3], 1

</llo_original>
